<compile_context>
chip_gen: v6e
topology: v6e:2x2x1
jax: 0.10.0
libtpu: 0.0.40
codegen_flags: <defaults>
</compile_context>

<pallas_src>
import functools

import jax
import jax.numpy as jnp
from jax.experimental import pallas as pl
from jax.experimental.pallas import tpu as pltpu

C_IN = 512
KH = KW = 7
N_OUT = 1000
N_PAD = 1024                      # lane-dense output + clean 512/512 split across cores
K_TOTAL = C_IN * KH * KW          # 25088


def _fc_kernel(x_ref, w_ref, b_ref, o_ref):
    """One (n, k) tile of Y = X @ W^T + b, with W stored as (N, K) (trans_b dot).

    The output tile is f32 and resident across the k (reduction) axis, so we
    accumulate directly into it — no separate VMEM scratch needed.
    """
    k = pl.program_id(1)

    @pl.when(k == 0)
    def _():
        o_ref[...] = jnp.zeros_like(o_ref)

    # x: (B, tk) bf16, w: (tn, tk) bf16 -> contract on dim 1 of both -> (B, tn) f32.
    o_ref[...] += jax.lax.dot_general(
        x_ref[...],
        w_ref[...],
        dimension_numbers=(((1,), (1,)), ((), ())),
        preferred_element_type=jnp.float32,
    )

    @pl.when(k == pl.num_programs(1) - 1)
    def _():
        o_ref[...] += b_ref[...]


def prepare_head_params(weight, bias):
    """One-time parameter prep (call ONCE, outside the per-step forward):

    weight (1000, 512, 7, 7) f32 -> (1024, 25088) bf16   (contiguous reshape, zero-pad, cast;
                                                           no transpose -> no extra HBM pass per call)
    bias   (1000,)            f32 -> (1, 1024) f32
    """
    w2d = weight.reshape(N_OUT, K_TOTAL)                              # no data movement
    w2d = jnp.pad(w2d, ((0, N_PAD - N_OUT), (0, 0))).astype(jnp.bfloat16)
    b2d = jnp.pad(bias, (0, N_PAD - N_OUT)).reshape(1, N_PAD).astype(jnp.float32)
    return w2d, b2d


@functools.partial(jax.jit, static_argnames=("tk", "tn"))
def decoder_head(fmap, w_nk, b_row, *, tk=6272, tn=512):
    """Pallas implementation of  Conv2d(512,1000,k=7)(fmap)[:, :, 0, 0].

    fmap : (B, 512, 7, 7) float32
    w_nk : (1024, 25088) bfloat16  (from prepare_head_params)
    b_row: (1, 1024)     float32   (from prepare_head_params)
    returns: (B, 1000) float32
    """
    B = fmap.shape[0]
    assert fmap.shape[1:] == (C_IN, KH, KW)
    assert K_TOTAL % tk == 0 and tk % 128 == 0
    assert N_PAD % tn == 0 and tn % 128 == 0

    # Tiny per-call glue: flatten + cast activations (a few hundred KB at most).
    x2d = fmap.reshape(B, K_TOTAL).astype(jnp.bfloat16)               # (B, K)

    grid = (N_PAD // tn, K_TOTAL // tk)                               # (n, k); k is the reduction

    out = pl.pallas_call(
        _fc_kernel,
        out_shape=jax.ShapeDtypeStruct((B, N_PAD), jnp.float32),
        grid_spec=pltpu.PrefetchScalarGridSpec(
            num_scalar_prefetch=0,
            grid=grid,
            in_specs=[
                pl.BlockSpec((B, tk), lambda n, k: (0, k)),           # X tile (tiny)
                pl.BlockSpec((tn, tk), lambda n, k: (n, k)),          # W tile (the big stream)
                pl.BlockSpec((1, tn), lambda n, k: (0, n)),           # bias slice
            ],
            out_specs=pl.BlockSpec((B, tn), lambda n, k: (0, n)),
        ),
        compiler_params=pltpu.CompilerParams(
            # n-axis parallel -> v7x megacore streams half the weight per core;
            # k-axis is the sequential reduction.
            dimension_semantics=("parallel", "arbitrary"),
            vmem_limit_bytes=48 << 20,
        ),
    )(x2d, w_nk, b_row)

    return out[:, :N_OUT]


def stub_encoder(x, proj):
    """Deterministic stand-in for the external resnet18 encoder.

    x    : (B, 4, 16, 16)  -> fmap (B, 512, 7, 7)
    proj : (4, 512) fixed channel-projection matrix.
    """
    # crop 16->14, 2x2 average pool -> (B, 4, 7, 7)
    xc = x[:, :, :14, :14]
    B, C, H, W = xc.shape
    pooled = xc.reshape(B, C, 7, 2, 7, 2).mean(axis=(3, 5))
    # channel projection 4 -> 512
    fmap = jnp.einsum("bchw,cd->bdhw", pooled, proj)
    return fmap.astype(jnp.float32)


if __name__ == "__main__":
    key = jax.random.PRNGKey(0)
    k_x, k_w, k_b, k_p = jax.random.split(key, 4)

    # Example input to the (stubbed) encoder.
    x = jax.random.normal(k_x, (2, 4, 16, 16), dtype=jnp.float32)

    # Deterministic "checkpoint-free" parameters for layerp = Conv2d(512,1000,7).
    weight = 0.02 * jax.random.normal(k_w, (N_OUT, C_IN, KH, KW), dtype=jnp.float32)
    bias = 0.01 * jax.random.normal(k_b, (N_OUT,), dtype=jnp.float32)
    proj = jax.random.normal(k_p, (4, 512), dtype=jnp.float32) / jnp.sqrt(4.0)

    # One-time parameter prep (pad to N=1024, cast weight to bf16, keep (N, K) layout).
    w_nk, b_row = prepare_head_params(weight, bias)
    w_nk, b_row = jax.block_until_ready((w_nk, b_row))

    # Forward pass: encoder (plain-JAX stub) -> Pallas decoder head.
    fmap = stub_encoder(x, proj)                  # (2, 512, 7, 7)
    y = decoder_head(fmap, w_nk, b_row)           # (2, 1000)
    y = jax.block_until_ready(y)

    # Reference check against plain-JAX f32 math (same semantics as PyTorch conv+slice).
    # Tolerance relaxed for the bf16 weight/activation stream (f32 accumulation).
    ref = fmap.reshape(2, -1) @ weight.reshape(N_OUT, -1).T + bias[None, :]
    assert y.shape == (2, 1000)
    rel_err = float(jnp.max(jnp.abs(y - ref)) / (jnp.max(jnp.abs(ref)) + 1e-6))
    assert rel_err < 5e-2, f"relative error too high: {rel_err}"

    print("KERNEL_OK")
</pallas_src>

<mosaic_0001>
module attributes {stable_mosaic.version = 11 : i64} {
  func.func @_fc_kernel(%arg0: i32, %arg1: i32, %arg2: memref<2x6272xbf16, #tpu.memory_space<vmem>>, %arg3: memref<512x6272xbf16, #tpu.memory_space<vmem>>, %arg4: memref<1x512xf32, #tpu.memory_space<vmem>>, %arg5: memref<2x512xf32, #tpu.memory_space<vmem>>) attributes {dimension_semantics = [#tpu.dimension_semantics<parallel>, #tpu.dimension_semantics<arbitrary>], iteration_bounds = array<i64: 2, 4>, scalar_prefetch = 0 : i64, scratch_operands = 0 : i64, tpu.core_type = #tpu.core_type<tc>, window_params = [{transform_indices = @transform_0, window_bounds = array<i64: 2, 6272>}, {transform_indices = @transform_1, window_bounds = array<i64: 512, 6272>}, {transform_indices = @transform_2, window_bounds = array<i64: 1, 512>}, {transform_indices = @transform_3, window_bounds = array<i64: 2, 512>}]} {
    %c0_i32 = arith.constant 0 : i32
    %0 = arith.cmpi eq, %arg1, %c0_i32 : i32
    %1 = arith.extui %0 : i1 to i32
    %c0_i32_0 = arith.constant 0 : i32
    %2 = arith.cmpi ne, %1, %c0_i32_0 : i32
    scf.if %2 {
      %cst_9 = arith.constant 0.000000e+00 : f32
      %12 = vector.broadcast %cst_9 : f32 to vector<2x512xf32>
      %c0_10 = arith.constant 0 : index
      %c0_11 = arith.constant 0 : index
      %13 = vector.load %arg5[%c0_10, %c0_11] : memref<2x512xf32, #tpu.memory_space<vmem>>, vector<2x512xf32>
      tpu.vector_store %arg5[%c0_10, %c0_11], %12 {strides = array<i32>} : memref<2x512xf32, #tpu.memory_space<vmem>>, vector<2x512xf32>,
    } else {
    }
    %c0 = arith.constant 0 : index
    %c0_1 = arith.constant 0 : index
    %3 = vector.load %arg5[%c0, %c0_1] : memref<2x512xf32, #tpu.memory_space<vmem>>, vector<2x512xf32>
    %c0_2 = arith.constant 0 : index
    %c0_3 = arith.constant 0 : index
    %4 = vector.load %arg2[%c0_2, %c0_3] : memref<2x6272xbf16, #tpu.memory_space<vmem>>, vector<2x6272xbf16>
    %c0_4 = arith.constant 0 : index
    %c0_5 = arith.constant 0 : index
    %5 = vector.load %arg3[%c0_4, %c0_5] : memref<512x6272xbf16, #tpu.memory_space<vmem>>, vector<512x6272xbf16>
    %cst = arith.constant dense<0.000000e+00> : vector<2x512xf32>
    %6 = tpu.matmul %4, %5, %cst {dimension_numbers = #tpu.dot_dimension_numbers<[1], [1], [0], [0], [0, 0, 1, 0], [], []>} : vector<2x6272xbf16>, vector<512x6272xbf16>, vector<2x512xf32> -> vector<2x512xf32>
    %7 = arith.addf %3, %6 : vector<2x512xf32>
    %c0_6 = arith.constant 0 : index
    %c0_7 = arith.constant 0 : index
    %8 = vector.load %arg5[%c0_6, %c0_7] : memref<2x512xf32, #tpu.memory_space<vmem>>, vector<2x512xf32>
    tpu.vector_store %arg5[%c0_6, %c0_7], %7 {strides = array<i32>} : memref<2x512xf32, #tpu.memory_space<vmem>>, vector<2x512xf32>,
    %c3_i32 = arith.constant 3 : i32
    %9 = arith.cmpi eq, %arg1, %c3_i32 : i32
    %10 = arith.extui %9 : i1 to i32
    %c0_i32_8 = arith.constant 0 : i32
    %11 = arith.cmpi ne, %10, %c0_i32_8 : i32
    scf.if %11 {
      %c0_9 = arith.constant 0 : index
      %c0_10 = arith.constant 0 : index
      %12 = vector.load %arg5[%c0_9, %c0_10] : memref<2x512xf32, #tpu.memory_space<vmem>>, vector<2x512xf32>
      %c0_11 = arith.constant 0 : index
      %c0_12 = arith.constant 0 : index
      %13 = vector.load %arg4[%c0_11, %c0_12] : memref<1x512xf32, #tpu.memory_space<vmem>>, vector<1x512xf32>
      %14 = vector.broadcast %13 : vector<1x512xf32> to vector<2x512xf32>
      %15 = arith.addf %12, %14 : vector<2x512xf32>
      %c0_13 = arith.constant 0 : index
      %c0_14 = arith.constant 0 : index
      %16 = vector.load %arg5[%c0_13, %c0_14] : memref<2x512xf32, #tpu.memory_space<vmem>>, vector<2x512xf32>
      tpu.vector_store %arg5[%c0_13, %c0_14], %15 {strides = array<i32>} : memref<2x512xf32, #tpu.memory_space<vmem>>, vector<2x512xf32>,
    } else {
    }
    return
  }
  func.func @transform_0(%arg0: i32, %arg1: i32) -> (i32, i32) {
    %c0_i32 = arith.constant 0 : i32
    %c0_i32_0 = arith.constant 0 : i32
    return %c0_i32, %arg1 : i32, i32
  }
  func.func @transform_1(%arg0: i32, %arg1: i32) -> (i32, i32) {
    %c0_i32 = arith.constant 0 : i32
    return %arg0, %arg1 : i32, i32
  }
  func.func @transform_2(%arg0: i32, %arg1: i32) -> (i32, i32) {
    %c0_i32 = arith.constant 0 : i32
    %c0_i32_0 = arith.constant 0 : i32
    return %c0_i32, %arg0 : i32, i32
  }
  func.func @transform_3(%arg0: i32, %arg1: i32) -> (i32, i32) {
    %c0_i32 = arith.constant 0 : i32
    %c0_i32_0 = arith.constant 0 : i32
    return %c0_i32, %arg0 : i32, i32
  }
}

</mosaic_0001>

<llo_original>
// kernel: decoder_head.1
$region0: #{decoder_head.1}
  #allocation0 [shape = 'u32[]', space=smem, size = 0x4, offset = 0x4, fixed_abs, tag = 'smem constant byte address 0x4 - core index']
  #allocation1 [shape = 'u32[144,128]{1,0:T(1,128)}', space=vmem, size = 0x12000, scoped, tag = 'internal scratch']
  %s0 = inlined_call_operand.vmem [shape: bf16[2,25088], index: 0, kind: input, shape index: {}]
  %s1 = inlined_call_operand.hbm [shape: bf16[1024,25088], index: 1, kind: input, shape index: {}]
  %s2 = inlined_call_operand.hbm [shape: f32[1,1024], index: 2, kind: input, shape index: {}]
  %s3 = inlined_call_operand.hbm [shape: f32[2,1024], index: 3, kind: output, shape index: {}]
  %s4 = sld [smem:[#allocation0]]
  $region61: #{decoder_head.1} parent=0
    _
  %s6 = ssub.s32 1, %s4
  %s7 = scalar_select 0, %s6, %s4
  $region1: #{decoder_head.1} parent=0
    #allocation2 [shape = 'u8[12845056]{0}', space=vmem, size = 0xc40000, scoped, tag = 'input window, operand 1']
    #allocation3 [shape = 's32[2]{0}', space=sflag, size = 0x8, scoped, tag = 'scoped memory for decoder_head.1']
    #allocation4 [shape = 's32[2]{0}', space=sflag, size = 0x8, scoped, tag = 'scoped memory for decoder_head.1']
    #allocation5 [shape = 'u8[4096]{0}', space=vmem, size = 0x1000, scoped, tag = 'input window, operand 2']
    #allocation6 [shape = 's32[2]{0}', space=sflag, size = 0x8, scoped, tag = 'scoped memory for decoder_head.1']
    #allocation7 [shape = 'u8[8192]{0}', space=vmem, size = 0x2000, scoped, tag = 'output window, operand 0']
    %8 = vsyncpa [#allocation3], 0
    %s9 = scalar_lea.sflag [#allocation3], 1
    %10 = vsyncpa %s9, 0
    %11 = vsyncpa [#allocation6], 0
    %s12 = scalar_lea.sflag [#allocation6], 1
    %13 = vsyncpa %s12, 0
    %14 = vsyncpa [#allocation4], 0
    %s15 = scalar_lea.sflag [#allocation4], 1
    %16 = vsyncpa %s15, 0
    loop: start=0, step=1, limit=10
    $region2: #{decoder_head.1} parent=1 // loop_pre_header
      _
    $region3: #{decoder_head.1} parent=1 // loop_header
      %s18 = sphi 0, %s22
      %p19 = scmp.ge.s32.totalorder %s18, 10
      %s25 = sphi 0, %s37
      %s26 = sphi 0, %s33
      %s27 = sphi 0, %s25
      %s28 = sphi 0, %s26
      %s29 = sphi 0, %s27
      %s30 = sphi 0, %s28
      %s40 = sphi 0, %s42
      %s43 = sphi 0, %s40
      %s44 = sphi 0, %s43
      %s60 = sphi 0, %s44
      %s68 = sphi 0, %s70
      %s71 = sphi 0, %s68
      %s72 = sphi 0, %s71
      %s88 = sphi 0, %s72
      %s94 = sphi 0, %s96
      %s97 = sphi 0, %s94
      %s98 = sphi 0, %s97
      %s114 = sphi 0, %s98
      %s120 = sphi 0, %s122
      %s123 = sphi 0, %s120
      %s124 = sphi 0, %s123
      %s140 = sphi 0, %s124
    $region4: #{decoder_head.1} parent=1 // loop_header_branch
      %21 = sbr.rel (%p19) target = $region8
    $region5: #{decoder_head.1} parent=1 // loop_body
      %s23 = ssub.s32 %s18, 1
      %s24 = ssub.s32 %s18, 2
      %s31 = sadd.s32 1, %s26
      %p32 = scmp.ge.s32.totalorder %s31, 4
      %s33 = scalar_select %p32, 0, %s31
      %s34 = sadd.s32 1, %s25
      %s35 = scalar_select %p32, %s34, %s25
      %p36 = scmp.ge.s32.totalorder %s35, 2
      %s37 = scalar_select %p36, 0, %s35
      %s38 = ssub.s32 %s26, %s33
      %p39 = scmp.eq.s32.totalorder %s38, 0
      %s41 = sadd.s32 %s40, 1
      %s42 = scalar_select %p39, %s40, %s41
      %p45 = pneg %p39
      %p46 = scmp.eq.s32.totalorder %s18, 7
      %p47 = por %p45, %p46
      %p48 = scmp.ne.s32.totalorder %s40, %s43
      %p49 = scmp.eq.s32.totalorder %s18, 0
      %p50 = por %p48, %p49
      %p51 = scmp.ne.s32.totalorder %s40, %s43
      %p52 = scmp.eq.s32.totalorder %s23, 7
      %p53 = por %p51, %p52
      %p54 = scmp.ne.s32.totalorder %s43, %s44
      %p55 = scmp.eq.s32.totalorder %s23, 0
      %p56 = por %p54, %p55
      %p57 = scmp.ne.s32.totalorder %s43, %s44
      %p58 = scmp.eq.s32.totalorder %s24, 7
      %p59 = por %p57, %p58
      %p61 = scmp.ne.s32.totalorder %s44, %s60
      %p62 = scmp.eq.s32.totalorder %s24, 0
      %p63 = por %p61, %p62
      %s64 = ssub.s32 %s25, %s37
      %s65 = ssub.s32 %s26, %s33
      %s66 = sor.u32 %s64, %s65
      %p67 = scmp.eq.s32.totalorder %s66, 0
      %s69 = sadd.s32 %s68, 1
      %s70 = scalar_select %p67, %s68, %s69
      %p73 = pneg %p67
      %p74 = scmp.eq.s32.totalorder %s18, 7
      %p75 = por %p73, %p74
      %p76 = scmp.ne.s32.totalorder %s68, %s71
      %p77 = scmp.eq.s32.totalorder %s18, 0
      %p78 = por %p76, %p77
      %p79 = scmp.ne.s32.totalorder %s68, %s71
      %p80 = scmp.eq.s32.totalorder %s23, 7
      %p81 = por %p79, %p80
      %p82 = scmp.ne.s32.totalorder %s71, %s72
      %p83 = scmp.eq.s32.totalorder %s23, 0
      %p84 = por %p82, %p83
      %p85 = scmp.ne.s32.totalorder %s71, %s72
      %p86 = scmp.eq.s32.totalorder %s24, 7
      %p87 = por %p85, %p86
      %p89 = scmp.ne.s32.totalorder %s72, %s88
      %p90 = scmp.eq.s32.totalorder %s24, 0
      %p91 = por %p89, %p90
      %s92 = ssub.s32 %s25, %s37
      %p93 = scmp.eq.s32.totalorder %s92, 0
      %s95 = sadd.s32 %s94, 1
      %s96 = scalar_select %p93, %s94, %s95
      %p99 = pneg %p93
      %p100 = scmp.eq.s32.totalorder %s18, 7
      %p101 = por %p99, %p100
      %p102 = scmp.ne.s32.totalorder %s94, %s97
      %p103 = scmp.eq.s32.totalorder %s18, 0
      %p104 = por %p102, %p103
      %p105 = scmp.ne.s32.totalorder %s94, %s97
      %p106 = scmp.eq.s32.totalorder %s23, 7
      %p107 = por %p105, %p106
      %p108 = scmp.ne.s32.totalorder %s97, %s98
      %p109 = scmp.eq.s32.totalorder %s23, 0
      %p110 = por %p108, %p109
      %p111 = scmp.ne.s32.totalorder %s97, %s98
      %p112 = scmp.eq.s32.totalorder %s24, 7
      %p113 = por %p111, %p112
      %p115 = scmp.ne.s32.totalorder %s98, %s114
      %p116 = scmp.eq.s32.totalorder %s24, 0
      %p117 = por %p115, %p116
      %s118 = ssub.s32 %s25, %s37
      %p119 = scmp.eq.s32.totalorder %s118, 0
      %s121 = sadd.s32 %s120, 1
      %s122 = scalar_select %p119, %s120, %s121
      %p125 = pneg %p119
      %p126 = scmp.eq.s32.totalorder %s18, 7
      %p127 = por %p125, %p126
      %p128 = scmp.ne.s32.totalorder %s120, %s123
      %p129 = scmp.eq.s32.totalorder %s18, 0
      %p130 = por %p128, %p129
      %p131 = scmp.ne.s32.totalorder %s120, %s123
      %p132 = scmp.eq.s32.totalorder %s23, 7
      %p133 = por %p131, %p132
      %p134 = scmp.ne.s32.totalorder %s123, %s124
      %p135 = scmp.eq.s32.totalorder %s23, 0
      %p136 = por %p134, %p135
      %p137 = scmp.ne.s32.totalorder %s123, %s124
      %p138 = scmp.eq.s32.totalorder %s24, 7
      %p139 = por %p137, %p138
      %p141 = scmp.ne.s32.totalorder %s124, %s140
      %p142 = scmp.eq.s32.totalorder %s24, 0
      %p143 = por %p141, %p142
      %p144 = scmp.le.s32.totalorder 1, %s18
      %p145 = scmp.lt.s32.totalorder %s18, 9
      %p146 = pnand %p144, %p145
      %p147 = pneg %p146
      // Predicated region
      $region9: #{decoder_head.1} parent=5 // pred_check
        _
      $region10: #{decoder_head.1} parent=5 // pred_check_branch
        %149 = sbr.rel (%p146) target = $region12
      $region11: #{decoder_head.1} parent=5 // pred_region
        %s150 = ssub.s32 %s18, 1
      $region12: #{decoder_head.1} parent=5 // pred_fallthru
        _
      %p151 = scmp.lt.s32.totalorder %s18, 8
      // Predicated region
      $region13: #{decoder_head.1} parent=5 // pred_check
        %p152 = pneg %p151
      $region14: #{decoder_head.1} parent=5 // pred_check_branch
        %154 = sbr.rel (%p152) target = $region16
      $region15: #{decoder_head.1} parent=5 // pred_region
        // Predicated region
        $region17: #{decoder_head.1} parent=15 // pred_check
          %p155 = pneg %p50
        $region18: #{decoder_head.1} parent=15 // pred_check_branch
          %157 = sbr.rel (%p155) target = $region20
        $region19: #{decoder_head.1} parent=15 // pred_region
          %s158 = smul.u32 49, %s26
          %p159 = scmp.lt.s32.totalorder %s158, 195
          %s160 = scalar_select %p159, %s158, 195
          %s161 = scalar_lea.vmem %s0, %s160
          %s162 = smul.u32 49, %s26
        $region20: #{decoder_head.1} parent=15 // pred_fallthru
          _
        // Predicated region
        $region21: #{decoder_head.1} parent=15 // pred_check
          %p163 = pneg %p78
        $region22: #{decoder_head.1} parent=15 // pred_check_branch
          %165 = sbr.rel (%p163) target = $region24
        $region23: #{decoder_head.1} parent=15 // pred_region
          %s166 = sand.u32 %s68, 1
          %s167 = scalar_lea.sflag [#allocation3], %s166
          %s168 = sand.u32 %s68, 1
          %s169 = smul.addr %s168, 12544
          %s170 = scalar_lea.vmem [#allocation2], %s169
          %s171 = smul.u32 64, %s25
          %s172 = smul.u32 49, %s26
          %s174 = ssub.s32 200704, 200704
          %175 = vsyncadd %s167, %s174
          %s176 = smul.addr %s171, 196
          %s177 = sadd.s32 %s172, %s176
          %s178 = smul.addr %s177, 64
          %s179 = scalar_lea.hbm %s1, %s178
          %s180 = sshll.u32 %s170, 4
          %s181 = int_to_ptr.vmem [resolvable:$true] %s180
          %186 = dma.hbm_to_vmem [thread:$0]  %s179, 200704, %s181, %s167, 12544, 3136, 196
        $region24: #{decoder_head.1} parent=15 // pred_fallthru
          _
        // Predicated region
        $region25: #{decoder_head.1} parent=15 // pred_check
          %p187 = pneg %p104
        $region26: #{decoder_head.1} parent=15 // pred_check_branch
          %189 = sbr.rel (%p187) target = $region28
        $region27: #{decoder_head.1} parent=15 // pred_region
          %s190 = sand.u32 %s94, 1
          %s191 = scalar_lea.sflag [#allocation6], %s190
          %s192 = sand.u32 %s94, 1
          %s193 = smul.addr %s192, 4
          %s194 = scalar_lea.vmem [#allocation5], %s193
          %s195 = smul.u32 4, %s25
          %s197 = ssub.s32 64, 64
          %198 = vsyncadd %s191, %s197
          %s199 = smul.addr %s195, 16
          %s200 = scalar_lea.hbm %s2, %s199
          %s202 = sshll.u32 %s194, 4
          %s203 = int_to_ptr.vmem [resolvable:$true] %s202
          %205 = dma.hbm_to_vmem [thread:$0]  %s200, 64, %s203, %s191
        $region28: #{decoder_head.1} parent=15 // pred_fallthru
          _
      $region16: #{decoder_head.1} parent=5 // pred_fallthru
        _
      %p206 = scmp.le.s32.totalorder 1, %s18
      %p207 = scmp.lt.s32.totalorder %s18, 9
      %p208 = pnand %p206, %p207
      %p209 = pneg %p208
      // Predicated region
      $region29: #{decoder_head.1} parent=5 // pred_check
        _
      $region30: #{decoder_head.1} parent=5 // pred_check_branch
        %211 = sbr.rel (%p208) target = $region32
      $region31: #{decoder_head.1} parent=5 // pred_region
        %s212 = ssub.s32 %s18, 1
        %s213 = sand.u32 %s71, 1
        %s214 = scalar_lea.sflag [#allocation3], %s213
        %s215 = sand.u32 %s71, 1
        %s216 = smul.addr %s215, 12544
        %s217 = scalar_lea.vmem [#allocation2], %s216
        // Predicated region
        $region33: #{decoder_head.1} parent=31 // pred_check
          %p218 = pneg %p84
        $region34: #{decoder_head.1} parent=31 // pred_check_branch
          %220 = sbr.rel (%p218) target = $region36
        $region35: #{decoder_head.1} parent=31 // pred_region
          %221 = dma.done %s214, 200704
        $region36: #{decoder_head.1} parent=31 // pred_fallthru
          _
        %s222 = sand.u32 %s97, 1
        %s223 = scalar_lea.sflag [#allocation6], %s222
        %s224 = sand.u32 %s97, 1
        %s225 = smul.addr %s224, 4
        %s226 = scalar_lea.vmem [#allocation5], %s225
        // Predicated region
        $region37: #{decoder_head.1} parent=31 // pred_check
          %p227 = pneg %p110
        $region38: #{decoder_head.1} parent=31 // pred_check_branch
          %229 = sbr.rel (%p227) target = $region40
        $region39: #{decoder_head.1} parent=31 // pred_region
          %230 = dma.done %s223, 64
        $region40: #{decoder_head.1} parent=31 // pred_fallthru
          _
        %s231 = smul.u32 49, %s28
        %p232 = scmp.lt.s32.totalorder %s231, 195
        %s233 = scalar_select %p232, %s231, 195
        %s234 = scalar_lea.vmem %s0, %s233
        %p235 = pneg %p56
        %p236 = pneg %p53
        %s237 = sand.u32 %s71, 1
        %s238 = scalar_lea.sflag [#allocation3], %s237
        %s239 = sand.u32 %s71, 1
        %s240 = smul.addr %s239, 12544
        %s241 = scalar_lea.vmem [#allocation2], %s240
        %p242 = pneg %p84
        %p243 = pneg %p81
        %s244 = sand.u32 %s97, 1
        %s245 = scalar_lea.sflag [#allocation6], %s244
        %s246 = sand.u32 %s97, 1
        %s247 = smul.addr %s246, 4
        %s248 = scalar_lea.vmem [#allocation5], %s247
        %p249 = pneg %p110
        %p250 = pneg %p107
        %p251 = pneg %p136
        %p252 = pneg %p133
        %s253 = sand.u32 %s123, 1
        %s254 = scalar_lea.sflag [#allocation4], %s253
        %s255 = sand.u32 %s123, 1
        %s256 = smul.addr %s255, 8
        %s257 = scalar_lea.vmem [#allocation7], %s256
        %s258 = smul.u32 49, %s28
        %p259 = scmp.lt.s32.totalorder %s258, 195
        %s260 = scalar_select %p259, %s258, 195
        %s261 = scalar_lea.vmem %s0, %s260
        %s262 = smul.u32 49, %s28
        %s263 = smul.u32 64, %s27
        %s264 = smul.u32 49, %s28
        %s265 = smul.u32 4, %s27
        %s266 = smul.u32 4, %s27
        %p268 = scmp.eq.s32.totalorder %s28, 0
        // Predicated region
        $region41: #{decoder_head.1} parent=31 // pred_check
          %p269 = pneg %p268
        $region42: #{decoder_head.1} parent=31 // pred_check_branch
          %271 = sbr.rel (%p269) target = $region44
        $region43: #{decoder_head.1} parent=31 // pred_region
          %272 = vst [vmem:[%s257] sm:$0xff] 0.0
        $region44: #{decoder_head.1} parent=31 // pred_fallthru
          _
        %v273 = vld [vmem:[%s257] sm:$0xff]
        %v274 = vld [vmem:[%s261] sm:$0xff]
        %v275 = vld [vmem:[%s261 + $0x8] sm:$0xff]
        %v276 = vld [vmem:[%s261 + $0x10] sm:$0xff]
        %v277 = vld [vmem:[%s261 + $0x18] sm:$0xff]
        %v278 = vld [vmem:[%s261 + $0x20] sm:$0xff]
        %v279 = vld [vmem:[%s261 + $0x28] sm:$0xff]
        %v280 = vld [vmem:[%s261 + $0x30] sm:$0x1]
        %v281 = vld [vmem:[%s217] sm:$0xff]
        %v282 = vld [vmem:[%s217 + $0x8] sm:$0xff]
        %v283 = vld [vmem:[%s217 + $0x10] sm:$0xff]
        %v284 = vld [vmem:[%s217 + $0x18] sm:$0xff]
        %v285 = vld [vmem:[%s217 + $0x20] sm:$0xff]
        %v286 = vld [vmem:[%s217 + $0x28] sm:$0xff]
        %v287 = vld [vmem:[%s217 + $0x30] sm:$0xff]
        %v288 = vld [vmem:[%s217 + $0x38] sm:$0xff]
        %v289 = vld [vmem:[%s217 + $0x40] sm:$0xff]
        %v290 = vld [vmem:[%s217 + $0x48] sm:$0xff]
        %v291 = vld [vmem:[%s217 + $0x50] sm:$0xff]
        %v292 = vld [vmem:[%s217 + $0x58] sm:$0xff]
        %v293 = vld [vmem:[%s217 + $0x60] sm:$0xff]
        %v294 = vld [vmem:[%s217 + $0x68] sm:$0xff]
        %v295 = vld [vmem:[%s217 + $0x70] sm:$0xff]
        %v296 = vld [vmem:[%s217 + $0x78] sm:$0xff]
        %v297 = vld [vmem:[%s217 + $0x80] sm:$0xff]
        %v298 = vld [vmem:[%s217 + $0x88] sm:$0xff]
        %v299 = vld [vmem:[%s217 + $0x90] sm:$0xff]
        %v300 = vld [vmem:[%s217 + $0x98] sm:$0xff]
        %v301 = vld [vmem:[%s217 + $0xa0] sm:$0xff]
        %v302 = vld [vmem:[%s217 + $0xa8] sm:$0xff]
        %v303 = vld [vmem:[%s217 + $0xb0] sm:$0xff]
        %v304 = vld [vmem:[%s217 + $0xb8] sm:$0xff]
        %v305 = vld [vmem:[%s217 + $0xc0] sm:$0xf]
        %v306 = vld [vmem:[%s217 + $0xc4] sm:$0xff]
        %v307 = vld [vmem:[%s217 + $0xcc] sm:$0xff]
        %v308 = vld [vmem:[%s217 + $0xd4] sm:$0xff]
        %v309 = vld [vmem:[%s217 + $0xdc] sm:$0xff]
        %v310 = vld [vmem:[%s217 + $0xe4] sm:$0xff]
        %v311 = vld [vmem:[%s217 + $0xec] sm:$0xff]
        %v312 = vld [vmem:[%s217 + $0xf4] sm:$0xff]
        %v313 = vld [vmem:[%s217 + $0xfc] sm:$0xff]
        %v314 = vld [vmem:[%s217 + $0x104] sm:$0xff]
        %v315 = vld [vmem:[%s217 + $0x10c] sm:$0xff]
        %v316 = vld [vmem:[%s217 + $0x114] sm:$0xff]
        %v317 = vld [vmem:[%s217 + $0x11c] sm:$0xff]
        %v318 = vld [vmem:[%s217 + $0x124] sm:$0xff]
        %v319 = vld [vmem:[%s217 + $0x12c] sm:$0xff]
        %v320 = vld [vmem:[%s217 + $0x134] sm:$0xff]
        %v321 = vld [vmem:[%s217 + $0x13c] sm:$0xff]
        %v322 = vld [vmem:[%s217 + $0x144] sm:$0xff]
        %v323 = vld [vmem:[%s217 + $0x14c] sm:$0xff]
        %v324 = vld [vmem:[%s217 + $0x154] sm:$0xff]
        %v325 = vld [vmem:[%s217 + $0x15c] sm:$0xff]
        %v326 = vld [vmem:[%s217 + $0x164] sm:$0xff]
        %v327 = vld [vmem:[%s217 + $0x16c] sm:$0xff]
        %v328 = vld [vmem:[%s217 + $0x174] sm:$0xff]
        %v329 = vld [vmem:[%s217 + $0x17c] sm:$0xff]
        %v330 = vld [vmem:[%s217 + $0x184] sm:$0xf]
        %v331 = vld [vmem:[%s217 + $0x188] sm:$0xff]
        %v332 = vld [vmem:[%s217 + $0x190] sm:$0xff]
        %v333 = vld [vmem:[%s217 + $0x198] sm:$0xff]
        %v334 = vld [vmem:[%s217 + $0x1a0] sm:$0xff]
        %v335 = vld [vmem:[%s217 + $0x1a8] sm:$0xff]
        %v336 = vld [vmem:[%s217 + $0x1b0] sm:$0xff]
        %v337 = vld [vmem:[%s217 + $0x1b8] sm:$0xff]
        %v338 = vld [vmem:[%s217 + $0x1c0] sm:$0xff]
        %v339 = vld [vmem:[%s217 + $0x1c8] sm:$0xff]
        %v340 = vld [vmem:[%s217 + $0x1d0] sm:$0xff]
        %v341 = vld [vmem:[%s217 + $0x1d8] sm:$0xff]
        %v342 = vld [vmem:[%s217 + $0x1e0] sm:$0xff]
        %v343 = vld [vmem:[%s217 + $0x1e8] sm:$0xff]
        %v344 = vld [vmem:[%s217 + $0x1f0] sm:$0xff]
        %v345 = vld [vmem:[%s217 + $0x1f8] sm:$0xff]
        %v346 = vld [vmem:[%s217 + $0x200] sm:$0xff]
        %v347 = vld [vmem:[%s217 + $0x208] sm:$0xff]
        %v348 = vld [vmem:[%s217 + $0x210] sm:$0xff]
        %v349 = vld [vmem:[%s217 + $0x218] sm:$0xff]
        %v350 = vld [vmem:[%s217 + $0x220] sm:$0xff]
        %v351 = vld [vmem:[%s217 + $0x228] sm:$0xff]
        %v352 = vld [vmem:[%s217 + $0x230] sm:$0xff]
        %v353 = vld [vmem:[%s217 + $0x238] sm:$0xff]
        %v354 = vld [vmem:[%s217 + $0x240] sm:$0xff]
        %v355 = vld [vmem:[%s217 + $0x248] sm:$0xf]
        %v356 = vld [vmem:[%s217 + $0x24c] sm:$0xff]
        %v357 = vld [vmem:[%s217 + $0x254] sm:$0xff]
        %v358 = vld [vmem:[%s217 + $0x25c] sm:$0xff]
        %v359 = vld [vmem:[%s217 + $0x264] sm:$0xff]
        %v360 = vld [vmem:[%s217 + $0x26c] sm:$0xff]
        %v361 = vld [vmem:[%s217 + $0x274] sm:$0xff]
        %v362 = vld [vmem:[%s217 + $0x27c] sm:$0xff]
        %v363 = vld [vmem:[%s217 + $0x284] sm:$0xff]
        %v364 = vld [vmem:[%s217 + $0x28c] sm:$0xff]
        %v365 = vld [vmem:[%s217 + $0x294] sm:$0xff]
        %v366 = vld [vmem:[%s217 + $0x29c] sm:$0xff]
        %v367 = vld [vmem:[%s217 + $0x2a4] sm:$0xff]
        %v368 = vld [vmem:[%s217 + $0x2ac] sm:$0xff]
        %v369 = vld [vmem:[%s217 + $0x2b4] sm:$0xff]
        %v370 = vld [vmem:[%s217 + $0x2bc] sm:$0xff]
        %v371 = vld [vmem:[%s217 + $0x2c4] sm:$0xff]
        %v372 = vld [vmem:[%s217 + $0x2cc] sm:$0xff]
        %v373 = vld [vmem:[%s217 + $0x2d4] sm:$0xff]
        %v374 = vld [vmem:[%s217 + $0x2dc] sm:$0xff]
        %v375 = vld [vmem:[%s217 + $0x2e4] sm:$0xff]
        %v376 = vld [vmem:[%s217 + $0x2ec] sm:$0xff]
        %v377 = vld [vmem:[%s217 + $0x2f4] sm:$0xff]
        %v378 = vld [vmem:[%s217 + $0x2fc] sm:$0xff]
        %v379 = vld [vmem:[%s217 + $0x304] sm:$0xff]
        %v380 = vld [vmem:[%s217 + $0x30c] sm:$0xf]
        %v381 = vld [vmem:[%s217 + $0x310] sm:$0xff]
        %v382 = vld [vmem:[%s217 + $0x318] sm:$0xff]
        %v383 = vld [vmem:[%s217 + $0x320] sm:$0xff]
        %v384 = vld [vmem:[%s217 + $0x328] sm:$0xff]
        %v385 = vld [vmem:[%s217 + $0x330] sm:$0xff]
        %v386 = vld [vmem:[%s217 + $0x338] sm:$0xff]
        %v387 = vld [vmem:[%s217 + $0x340] sm:$0xff]
        %v388 = vld [vmem:[%s217 + $0x348] sm:$0xff]
        %v389 = vld [vmem:[%s217 + $0x350] sm:$0xff]
        %v390 = vld [vmem:[%s217 + $0x358] sm:$0xff]
        %v391 = vld [vmem:[%s217 + $0x360] sm:$0xff]
        %v392 = vld [vmem:[%s217 + $0x368] sm:$0xff]
        %v393 = vld [vmem:[%s217 + $0x370] sm:$0xff]
        %v394 = vld [vmem:[%s217 + $0x378] sm:$0xff]
        %v395 = vld [vmem:[%s217 + $0x380] sm:$0xff]
        %v396 = vld [vmem:[%s217 + $0x388] sm:$0xff]
        %v397 = vld [vmem:[%s217 + $0x390] sm:$0xff]
        %v398 = vld [vmem:[%s217 + $0x398] sm:$0xff]
        %v399 = vld [vmem:[%s217 + $0x3a0] sm:$0xff]
        %v400 = vld [vmem:[%s217 + $0x3a8] sm:$0xff]
        %v401 = vld [vmem:[%s217 + $0x3b0] sm:$0xff]
        %v402 = vld [vmem:[%s217 + $0x3b8] sm:$0xff]
        %v403 = vld [vmem:[%s217 + $0x3c0] sm:$0xff]
        %v404 = vld [vmem:[%s217 + $0x3c8] sm:$0xff]
        %v405 = vld [vmem:[%s217 + $0x3d0] sm:$0xf]
        %v406 = vld [vmem:[%s217 + $0x3d4] sm:$0xff]
        %v407 = vld [vmem:[%s217 + $0x3dc] sm:$0xff]
        %v408 = vld [vmem:[%s217 + $0x3e4] sm:$0xff]
        %v409 = vld [vmem:[%s217 + $0x3ec] sm:$0xff]
        %v410 = vld [vmem:[%s217 + $0x3f4] sm:$0xff]
        %v411 = vld [vmem:[%s217 + $0x3fc] sm:$0xff]
        %v412 = vld [vmem:[%s217 + $0x404] sm:$0xff]
        %v413 = vld [vmem:[%s217 + $0x40c] sm:$0xff]
        %v414 = vld [vmem:[%s217 + $0x414] sm:$0xff]
        %v415 = vld [vmem:[%s217 + $0x41c] sm:$0xff]
        %v416 = vld [vmem:[%s217 + $0x424] sm:$0xff]
        %v417 = vld [vmem:[%s217 + $0x42c] sm:$0xff]
        %v418 = vld [vmem:[%s217 + $0x434] sm:$0xff]
        %v419 = vld [vmem:[%s217 + $0x43c] sm:$0xff]
        %v420 = vld [vmem:[%s217 + $0x444] sm:$0xff]
        %v421 = vld [vmem:[%s217 + $0x44c] sm:$0xff]
        %v422 = vld [vmem:[%s217 + $0x454] sm:$0xff]
        %v423 = vld [vmem:[%s217 + $0x45c] sm:$0xff]
        %v424 = vld [vmem:[%s217 + $0x464] sm:$0xff]
        %v425 = vld [vmem:[%s217 + $0x46c] sm:$0xff]
        %v426 = vld [vmem:[%s217 + $0x474] sm:$0xff]
        %v427 = vld [vmem:[%s217 + $0x47c] sm:$0xff]
        %v428 = vld [vmem:[%s217 + $0x484] sm:$0xff]
        %v429 = vld [vmem:[%s217 + $0x48c] sm:$0xff]
        %v430 = vld [vmem:[%s217 + $0x494] sm:$0xf]
        %v431 = vld [vmem:[%s217 + $0x498] sm:$0xff]
        %v432 = vld [vmem:[%s217 + $0x4a0] sm:$0xff]
        %v433 = vld [vmem:[%s217 + $0x4a8] sm:$0xff]
        %v434 = vld [vmem:[%s217 + $0x4b0] sm:$0xff]
        %v435 = vld [vmem:[%s217 + $0x4b8] sm:$0xff]
        %v436 = vld [vmem:[%s217 + $0x4c0] sm:$0xff]
        %v437 = vld [vmem:[%s217 + $0x4c8] sm:$0xff]
        %v438 = vld [vmem:[%s217 + $0x4d0] sm:$0xff]
        %v439 = vld [vmem:[%s217 + $0x4d8] sm:$0xff]
        %v440 = vld [vmem:[%s217 + $0x4e0] sm:$0xff]
        %v441 = vld [vmem:[%s217 + $0x4e8] sm:$0xff]
        %v442 = vld [vmem:[%s217 + $0x4f0] sm:$0xff]
        %v443 = vld [vmem:[%s217 + $0x4f8] sm:$0xff]
        %v444 = vld [vmem:[%s217 + $0x500] sm:$0xff]
        %v445 = vld [vmem:[%s217 + $0x508] sm:$0xff]
        %v446 = vld [vmem:[%s217 + $0x510] sm:$0xff]
        %v447 = vld [vmem:[%s217 + $0x518] sm:$0xff]
        %v448 = vld [vmem:[%s217 + $0x520] sm:$0xff]
        %v449 = vld [vmem:[%s217 + $0x528] sm:$0xff]
        %v450 = vld [vmem:[%s217 + $0x530] sm:$0xff]
        %v451 = vld [vmem:[%s217 + $0x538] sm:$0xff]
        %v452 = vld [vmem:[%s217 + $0x540] sm:$0xff]
        %v453 = vld [vmem:[%s217 + $0x548] sm:$0xff]
        %v454 = vld [vmem:[%s217 + $0x550] sm:$0xff]
        %v455 = vld [vmem:[%s217 + $0x558] sm:$0xf]
        %v456 = vld [vmem:[%s217 + $0x55c] sm:$0xff]
        %v457 = vld [vmem:[%s217 + $0x564] sm:$0xff]
        %v458 = vld [vmem:[%s217 + $0x56c] sm:$0xff]
        %v459 = vld [vmem:[%s217 + $0x574] sm:$0xff]
        %v460 = vld [vmem:[%s217 + $0x57c] sm:$0xff]
        %v461 = vld [vmem:[%s217 + $0x584] sm:$0xff]
        %v462 = vld [vmem:[%s217 + $0x58c] sm:$0xff]
        %v463 = vld [vmem:[%s217 + $0x594] sm:$0xff]
        %v464 = vld [vmem:[%s217 + $0x59c] sm:$0xff]
        %v465 = vld [vmem:[%s217 + $0x5a4] sm:$0xff]
        %v466 = vld [vmem:[%s217 + $0x5ac] sm:$0xff]
        %v467 = vld [vmem:[%s217 + $0x5b4] sm:$0xff]
        %v468 = vld [vmem:[%s217 + $0x5bc] sm:$0xff]
        %v469 = vld [vmem:[%s217 + $0x5c4] sm:$0xff]
        %v470 = vld [vmem:[%s217 + $0x5cc] sm:$0xff]
        %v471 = vld [vmem:[%s217 + $0x5d4] sm:$0xff]
        %v472 = vld [vmem:[%s217 + $0x5dc] sm:$0xff]
        %v473 = vld [vmem:[%s217 + $0x5e4] sm:$0xff]
        %v474 = vld [vmem:[%s217 + $0x5ec] sm:$0xff]
        %v475 = vld [vmem:[%s217 + $0x5f4] sm:$0xff]
        %v476 = vld [vmem:[%s217 + $0x5fc] sm:$0xff]
        %v477 = vld [vmem:[%s217 + $0x604] sm:$0xff]
        %v478 = vld [vmem:[%s217 + $0x60c] sm:$0xff]
        %v479 = vld [vmem:[%s217 + $0x614] sm:$0xff]
        %v480 = vld [vmem:[%s217 + $0x61c] sm:$0xf]
        %v481 = vld [vmem:[%s217 + $0x620] sm:$0xff]
        %v482 = vld [vmem:[%s217 + $0x628] sm:$0xff]
        %v483 = vld [vmem:[%s217 + $0x630] sm:$0xff]
        %v484 = vld [vmem:[%s217 + $0x638] sm:$0xff]
        %v485 = vld [vmem:[%s217 + $0x640] sm:$0xff]
        %v486 = vld [vmem:[%s217 + $0x648] sm:$0xff]
        %v487 = vld [vmem:[%s217 + $0x650] sm:$0xff]
        %v488 = vld [vmem:[%s217 + $0x658] sm:$0xff]
        %v489 = vld [vmem:[%s217 + $0x660] sm:$0xff]
        %v490 = vld [vmem:[%s217 + $0x668] sm:$0xff]
        %v491 = vld [vmem:[%s217 + $0x670] sm:$0xff]
        %v492 = vld [vmem:[%s217 + $0x678] sm:$0xff]
        %v493 = vld [vmem:[%s217 + $0x680] sm:$0xff]
        %v494 = vld [vmem:[%s217 + $0x688] sm:$0xff]
        %v495 = vld [vmem:[%s217 + $0x690] sm:$0xff]
        %v496 = vld [vmem:[%s217 + $0x698] sm:$0xff]
        %v497 = vld [vmem:[%s217 + $0x6a0] sm:$0xff]
        %v498 = vld [vmem:[%s217 + $0x6a8] sm:$0xff]
        %v499 = vld [vmem:[%s217 + $0x6b0] sm:$0xff]
        %v500 = vld [vmem:[%s217 + $0x6b8] sm:$0xff]
        %v501 = vld [vmem:[%s217 + $0x6c0] sm:$0xff]
        %v502 = vld [vmem:[%s217 + $0x6c8] sm:$0xff]
        %v503 = vld [vmem:[%s217 + $0x6d0] sm:$0xff]
        %v504 = vld [vmem:[%s217 + $0x6d8] sm:$0xff]
        %v505 = vld [vmem:[%s217 + $0x6e0] sm:$0xf]
        %v506 = vld [vmem:[%s217 + $0x6e4] sm:$0xff]
        %v507 = vld [vmem:[%s217 + $0x6ec] sm:$0xff]
        %v508 = vld [vmem:[%s217 + $0x6f4] sm:$0xff]
        %v509 = vld [vmem:[%s217 + $0x6fc] sm:$0xff]
        %v510 = vld [vmem:[%s217 + $0x704] sm:$0xff]
        %v511 = vld [vmem:[%s217 + $0x70c] sm:$0xff]
        %v512 = vld [vmem:[%s217 + $0x714] sm:$0xff]
        %v513 = vld [vmem:[%s217 + $0x71c] sm:$0xff]
        %v514 = vld [vmem:[%s217 + $0x724] sm:$0xff]
        %v515 = vld [vmem:[%s217 + $0x72c] sm:$0xff]
        %v516 = vld [vmem:[%s217 + $0x734] sm:$0xff]
        %v517 = vld [vmem:[%s217 + $0x73c] sm:$0xff]
        %v518 = vld [vmem:[%s217 + $0x744] sm:$0xff]
        %v519 = vld [vmem:[%s217 + $0x74c] sm:$0xff]
        %v520 = vld [vmem:[%s217 + $0x754] sm:$0xff]
        %v521 = vld [vmem:[%s217 + $0x75c] sm:$0xff]
        %v522 = vld [vmem:[%s217 + $0x764] sm:$0xff]
        %v523 = vld [vmem:[%s217 + $0x76c] sm:$0xff]
        %v524 = vld [vmem:[%s217 + $0x774] sm:$0xff]
        %v525 = vld [vmem:[%s217 + $0x77c] sm:$0xff]
        %v526 = vld [vmem:[%s217 + $0x784] sm:$0xff]
        %v527 = vld [vmem:[%s217 + $0x78c] sm:$0xff]
        %v528 = vld [vmem:[%s217 + $0x794] sm:$0xff]
        %v529 = vld [vmem:[%s217 + $0x79c] sm:$0xff]
        %v530 = vld [vmem:[%s217 + $0x7a4] sm:$0xf]
        %v531 = vld [vmem:[%s217 + $0x7a8] sm:$0xff]
        %v532 = vld [vmem:[%s217 + $0x7b0] sm:$0xff]
        %v533 = vld [vmem:[%s217 + $0x7b8] sm:$0xff]
        %v534 = vld [vmem:[%s217 + $0x7c0] sm:$0xff]
        %v535 = vld [vmem:[%s217 + $0x7c8] sm:$0xff]
        %v536 = vld [vmem:[%s217 + $0x7d0] sm:$0xff]
        %v537 = vld [vmem:[%s217 + $0x7d8] sm:$0xff]
        %v538 = vld [vmem:[%s217 + $0x7e0] sm:$0xff]
        %v539 = vld [vmem:[%s217 + $0x7e8] sm:$0xff]
        %v540 = vld [vmem:[%s217 + $0x7f0] sm:$0xff]
        %v541 = vld [vmem:[%s217 + $0x7f8] sm:$0xff]
        %v542 = vld [vmem:[%s217 + $0x800] sm:$0xff]
        %v543 = vld [vmem:[%s217 + $0x808] sm:$0xff]
        %v544 = vld [vmem:[%s217 + $0x810] sm:$0xff]
        %v545 = vld [vmem:[%s217 + $0x818] sm:$0xff]
        %v546 = vld [vmem:[%s217 + $0x820] sm:$0xff]
        %v547 = vld [vmem:[%s217 + $0x828] sm:$0xff]
        %v548 = vld [vmem:[%s217 + $0x830] sm:$0xff]
        %v549 = vld [vmem:[%s217 + $0x838] sm:$0xff]
        %v550 = vld [vmem:[%s217 + $0x840] sm:$0xff]
        %v551 = vld [vmem:[%s217 + $0x848] sm:$0xff]
        %v552 = vld [vmem:[%s217 + $0x850] sm:$0xff]
        %v553 = vld [vmem:[%s217 + $0x858] sm:$0xff]
        %v554 = vld [vmem:[%s217 + $0x860] sm:$0xff]
        %v555 = vld [vmem:[%s217 + $0x868] sm:$0xf]
        %v556 = vld [vmem:[%s217 + $0x86c] sm:$0xff]
        %v557 = vld [vmem:[%s217 + $0x874] sm:$0xff]
        %v558 = vld [vmem:[%s217 + $0x87c] sm:$0xff]
        %v559 = vld [vmem:[%s217 + $0x884] sm:$0xff]
        %v560 = vld [vmem:[%s217 + $0x88c] sm:$0xff]
        %v561 = vld [vmem:[%s217 + $0x894] sm:$0xff]
        %v562 = vld [vmem:[%s217 + $0x89c] sm:$0xff]
        %v563 = vld [vmem:[%s217 + $0x8a4] sm:$0xff]
        %v564 = vld [vmem:[%s217 + $0x8ac] sm:$0xff]
        %v565 = vld [vmem:[%s217 + $0x8b4] sm:$0xff]
        %v566 = vld [vmem:[%s217 + $0x8bc] sm:$0xff]
        %v567 = vld [vmem:[%s217 + $0x8c4] sm:$0xff]
        %v568 = vld [vmem:[%s217 + $0x8cc] sm:$0xff]
        %v569 = vld [vmem:[%s217 + $0x8d4] sm:$0xff]
        %v570 = vld [vmem:[%s217 + $0x8dc] sm:$0xff]
        %v571 = vld [vmem:[%s217 + $0x8e4] sm:$0xff]
        %v572 = vld [vmem:[%s217 + $0x8ec] sm:$0xff]
        %v573 = vld [vmem:[%s217 + $0x8f4] sm:$0xff]
        %v574 = vld [vmem:[%s217 + $0x8fc] sm:$0xff]
        %v575 = vld [vmem:[%s217 + $0x904] sm:$0xff]
        %v576 = vld [vmem:[%s217 + $0x90c] sm:$0xff]
        %v577 = vld [vmem:[%s217 + $0x914] sm:$0xff]
        %v578 = vld [vmem:[%s217 + $0x91c] sm:$0xff]
        %v579 = vld [vmem:[%s217 + $0x924] sm:$0xff]
        %v580 = vld [vmem:[%s217 + $0x92c] sm:$0xf]
        %v581 = vld [vmem:[%s217 + $0x930] sm:$0xff]
        %v582 = vld [vmem:[%s217 + $0x938] sm:$0xff]
        %v583 = vld [vmem:[%s217 + $0x940] sm:$0xff]
        %v584 = vld [vmem:[%s217 + $0x948] sm:$0xff]
        %v585 = vld [vmem:[%s217 + $0x950] sm:$0xff]
        %v586 = vld [vmem:[%s217 + $0x958] sm:$0xff]
        %v587 = vld [vmem:[%s217 + $0x960] sm:$0xff]
        %v588 = vld [vmem:[%s217 + $0x968] sm:$0xff]
        %v589 = vld [vmem:[%s217 + $0x970] sm:$0xff]
        %v590 = vld [vmem:[%s217 + $0x978] sm:$0xff]
        %v591 = vld [vmem:[%s217 + $0x980] sm:$0xff]
        %v592 = vld [vmem:[%s217 + $0x988] sm:$0xff]
        %v593 = vld [vmem:[%s217 + $0x990] sm:$0xff]
        %v594 = vld [vmem:[%s217 + $0x998] sm:$0xff]
        %v595 = vld [vmem:[%s217 + $0x9a0] sm:$0xff]
        %v596 = vld [vmem:[%s217 + $0x9a8] sm:$0xff]
        %v597 = vld [vmem:[%s217 + $0x9b0] sm:$0xff]
        %v598 = vld [vmem:[%s217 + $0x9b8] sm:$0xff]
        %v599 = vld [vmem:[%s217 + $0x9c0] sm:$0xff]
        %v600 = vld [vmem:[%s217 + $0x9c8] sm:$0xff]
        %v601 = vld [vmem:[%s217 + $0x9d0] sm:$0xff]
        %v602 = vld [vmem:[%s217 + $0x9d8] sm:$0xff]
        %v603 = vld [vmem:[%s217 + $0x9e0] sm:$0xff]
        %v604 = vld [vmem:[%s217 + $0x9e8] sm:$0xff]
        %v605 = vld [vmem:[%s217 + $0x9f0] sm:$0xf]
        %v606 = vld [vmem:[%s217 + $0x9f4] sm:$0xff]
        %v607 = vld [vmem:[%s217 + $0x9fc] sm:$0xff]
        %v608 = vld [vmem:[%s217 + $0xa04] sm:$0xff]
        %v609 = vld [vmem:[%s217 + $0xa0c] sm:$0xff]
        %v610 = vld [vmem:[%s217 + $0xa14] sm:$0xff]
        %v611 = vld [vmem:[%s217 + $0xa1c] sm:$0xff]
        %v612 = vld [vmem:[%s217 + $0xa24] sm:$0xff]
        %v613 = vld [vmem:[%s217 + $0xa2c] sm:$0xff]
        %v614 = vld [vmem:[%s217 + $0xa34] sm:$0xff]
        %v615 = vld [vmem:[%s217 + $0xa3c] sm:$0xff]
        %v616 = vld [vmem:[%s217 + $0xa44] sm:$0xff]
        %v617 = vld [vmem:[%s217 + $0xa4c] sm:$0xff]
        %v618 = vld [vmem:[%s217 + $0xa54] sm:$0xff]
        %v619 = vld [vmem:[%s217 + $0xa5c] sm:$0xff]
        %v620 = vld [vmem:[%s217 + $0xa64] sm:$0xff]
        %v621 = vld [vmem:[%s217 + $0xa6c] sm:$0xff]
        %v622 = vld [vmem:[%s217 + $0xa74] sm:$0xff]
        %v623 = vld [vmem:[%s217 + $0xa7c] sm:$0xff]
        %v624 = vld [vmem:[%s217 + $0xa84] sm:$0xff]
        %v625 = vld [vmem:[%s217 + $0xa8c] sm:$0xff]
        %v626 = vld [vmem:[%s217 + $0xa94] sm:$0xff]
        %v627 = vld [vmem:[%s217 + $0xa9c] sm:$0xff]
        %v628 = vld [vmem:[%s217 + $0xaa4] sm:$0xff]
        %v629 = vld [vmem:[%s217 + $0xaac] sm:$0xff]
        %v630 = vld [vmem:[%s217 + $0xab4] sm:$0xf]
        %v631 = vld [vmem:[%s217 + $0xab8] sm:$0xff]
        %v632 = vld [vmem:[%s217 + $0xac0] sm:$0xff]
        %v633 = vld [vmem:[%s217 + $0xac8] sm:$0xff]
        %v634 = vld [vmem:[%s217 + $0xad0] sm:$0xff]
        %v635 = vld [vmem:[%s217 + $0xad8] sm:$0xff]
        %v636 = vld [vmem:[%s217 + $0xae0] sm:$0xff]
        %v637 = vld [vmem:[%s217 + $0xae8] sm:$0xff]
        %v638 = vld [vmem:[%s217 + $0xaf0] sm:$0xff]
        %v639 = vld [vmem:[%s217 + $0xaf8] sm:$0xff]
        %v640 = vld [vmem:[%s217 + $0xb00] sm:$0xff]
        %v641 = vld [vmem:[%s217 + $0xb08] sm:$0xff]
        %v642 = vld [vmem:[%s217 + $0xb10] sm:$0xff]
        %v643 = vld [vmem:[%s217 + $0xb18] sm:$0xff]
        %v644 = vld [vmem:[%s217 + $0xb20] sm:$0xff]
        %v645 = vld [vmem:[%s217 + $0xb28] sm:$0xff]
        %v646 = vld [vmem:[%s217 + $0xb30] sm:$0xff]
        %v647 = vld [vmem:[%s217 + $0xb38] sm:$0xff]
        %v648 = vld [vmem:[%s217 + $0xb40] sm:$0xff]
        %v649 = vld [vmem:[%s217 + $0xb48] sm:$0xff]
        %v650 = vld [vmem:[%s217 + $0xb50] sm:$0xff]
        %v651 = vld [vmem:[%s217 + $0xb58] sm:$0xff]
        %v652 = vld [vmem:[%s217 + $0xb60] sm:$0xff]
        %v653 = vld [vmem:[%s217 + $0xb68] sm:$0xff]
        %v654 = vld [vmem:[%s217 + $0xb70] sm:$0xff]
        %v655 = vld [vmem:[%s217 + $0xb78] sm:$0xf]
        %v656 = vld [vmem:[%s217 + $0xb7c] sm:$0xff]
        %v657 = vld [vmem:[%s217 + $0xb84] sm:$0xff]
        %v658 = vld [vmem:[%s217 + $0xb8c] sm:$0xff]
        %v659 = vld [vmem:[%s217 + $0xb94] sm:$0xff]
        %v660 = vld [vmem:[%s217 + $0xb9c] sm:$0xff]
        %v661 = vld [vmem:[%s217 + $0xba4] sm:$0xff]
        %v662 = vld [vmem:[%s217 + $0xbac] sm:$0xff]
        %v663 = vld [vmem:[%s217 + $0xbb4] sm:$0xff]
        %v664 = vld [vmem:[%s217 + $0xbbc] sm:$0xff]
        %v665 = vld [vmem:[%s217 + $0xbc4] sm:$0xff]
        %v666 = vld [vmem:[%s217 + $0xbcc] sm:$0xff]
        %v667 = vld [vmem:[%s217 + $0xbd4] sm:$0xff]
        %v668 = vld [vmem:[%s217 + $0xbdc] sm:$0xff]
        %v669 = vld [vmem:[%s217 + $0xbe4] sm:$0xff]
        %v670 = vld [vmem:[%s217 + $0xbec] sm:$0xff]
        %v671 = vld [vmem:[%s217 + $0xbf4] sm:$0xff]
        %v672 = vld [vmem:[%s217 + $0xbfc] sm:$0xff]
        %v673 = vld [vmem:[%s217 + $0xc04] sm:$0xff]
        %v674 = vld [vmem:[%s217 + $0xc0c] sm:$0xff]
        %v675 = vld [vmem:[%s217 + $0xc14] sm:$0xff]
        %v676 = vld [vmem:[%s217 + $0xc1c] sm:$0xff]
        %v677 = vld [vmem:[%s217 + $0xc24] sm:$0xff]
        %v678 = vld [vmem:[%s217 + $0xc2c] sm:$0xff]
        %v679 = vld [vmem:[%s217 + $0xc34] sm:$0xff]
        %v680 = vld [vmem:[%s217 + $0xc3c] sm:$0xf]
        %v681 = vld [vmem:[%s217 + $0xc40] sm:$0xff]
        %v682 = vld [vmem:[%s217 + $0xc48] sm:$0xff]
        %v683 = vld [vmem:[%s217 + $0xc50] sm:$0xff]
        %v684 = vld [vmem:[%s217 + $0xc58] sm:$0xff]
        %v685 = vld [vmem:[%s217 + $0xc60] sm:$0xff]
        %v686 = vld [vmem:[%s217 + $0xc68] sm:$0xff]
        %v687 = vld [vmem:[%s217 + $0xc70] sm:$0xff]
        %v688 = vld [vmem:[%s217 + $0xc78] sm:$0xff]
        %v689 = vld [vmem:[%s217 + $0xc80] sm:$0xff]
        %v690 = vld [vmem:[%s217 + $0xc88] sm:$0xff]
        %v691 = vld [vmem:[%s217 + $0xc90] sm:$0xff]
        %v692 = vld [vmem:[%s217 + $0xc98] sm:$0xff]
        %v693 = vld [vmem:[%s217 + $0xca0] sm:$0xff]
        %v694 = vld [vmem:[%s217 + $0xca8] sm:$0xff]
        %v695 = vld [vmem:[%s217 + $0xcb0] sm:$0xff]
        %v696 = vld [vmem:[%s217 + $0xcb8] sm:$0xff]
        %v697 = vld [vmem:[%s217 + $0xcc0] sm:$0xff]
        %v698 = vld [vmem:[%s217 + $0xcc8] sm:$0xff]
        %v699 = vld [vmem:[%s217 + $0xcd0] sm:$0xff]
        %v700 = vld [vmem:[%s217 + $0xcd8] sm:$0xff]
        %v701 = vld [vmem:[%s217 + $0xce0] sm:$0xff]
        %v702 = vld [vmem:[%s217 + $0xce8] sm:$0xff]
        %v703 = vld [vmem:[%s217 + $0xcf0] sm:$0xff]
        %v704 = vld [vmem:[%s217 + $0xcf8] sm:$0xff]
        %v705 = vld [vmem:[%s217 + $0xd00] sm:$0xf]
        %v706 = vld [vmem:[%s217 + $0xd04] sm:$0xff]
        %v707 = vld [vmem:[%s217 + $0xd0c] sm:$0xff]
        %v708 = vld [vmem:[%s217 + $0xd14] sm:$0xff]
        %v709 = vld [vmem:[%s217 + $0xd1c] sm:$0xff]
        %v710 = vld [vmem:[%s217 + $0xd24] sm:$0xff]
        %v711 = vld [vmem:[%s217 + $0xd2c] sm:$0xff]
        %v712 = vld [vmem:[%s217 + $0xd34] sm:$0xff]
        %v713 = vld [vmem:[%s217 + $0xd3c] sm:$0xff]
        %v714 = vld [vmem:[%s217 + $0xd44] sm:$0xff]
        %v715 = vld [vmem:[%s217 + $0xd4c] sm:$0xff]
        %v716 = vld [vmem:[%s217 + $0xd54] sm:$0xff]
        %v717 = vld [vmem:[%s217 + $0xd5c] sm:$0xff]
        %v718 = vld [vmem:[%s217 + $0xd64] sm:$0xff]
        %v719 = vld [vmem:[%s217 + $0xd6c] sm:$0xff]
        %v720 = vld [vmem:[%s217 + $0xd74] sm:$0xff]
        %v721 = vld [vmem:[%s217 + $0xd7c] sm:$0xff]
        %v722 = vld [vmem:[%s217 + $0xd84] sm:$0xff]
        %v723 = vld [vmem:[%s217 + $0xd8c] sm:$0xff]
        %v724 = vld [vmem:[%s217 + $0xd94] sm:$0xff]
        %v725 = vld [vmem:[%s217 + $0xd9c] sm:$0xff]
        %v726 = vld [vmem:[%s217 + $0xda4] sm:$0xff]
        %v727 = vld [vmem:[%s217 + $0xdac] sm:$0xff]
        %v728 = vld [vmem:[%s217 + $0xdb4] sm:$0xff]
        %v729 = vld [vmem:[%s217 + $0xdbc] sm:$0xff]
        %v730 = vld [vmem:[%s217 + $0xdc4] sm:$0xf]
        %v731 = vld [vmem:[%s217 + $0xdc8] sm:$0xff]
        %v732 = vld [vmem:[%s217 + $0xdd0] sm:$0xff]
        %v733 = vld [vmem:[%s217 + $0xdd8] sm:$0xff]
        %v734 = vld [vmem:[%s217 + $0xde0] sm:$0xff]
        %v735 = vld [vmem:[%s217 + $0xde8] sm:$0xff]
        %v736 = vld [vmem:[%s217 + $0xdf0] sm:$0xff]
        %v737 = vld [vmem:[%s217 + $0xdf8] sm:$0xff]
        %v738 = vld [vmem:[%s217 + $0xe00] sm:$0xff]
        %v739 = vld [vmem:[%s217 + $0xe08] sm:$0xff]
        %v740 = vld [vmem:[%s217 + $0xe10] sm:$0xff]
        %v741 = vld [vmem:[%s217 + $0xe18] sm:$0xff]
        %v742 = vld [vmem:[%s217 + $0xe20] sm:$0xff]
        %v743 = vld [vmem:[%s217 + $0xe28] sm:$0xff]
        %v744 = vld [vmem:[%s217 + $0xe30] sm:$0xff]
        %v745 = vld [vmem:[%s217 + $0xe38] sm:$0xff]
        %v746 = vld [vmem:[%s217 + $0xe40] sm:$0xff]
        %v747 = vld [vmem:[%s217 + $0xe48] sm:$0xff]
        %v748 = vld [vmem:[%s217 + $0xe50] sm:$0xff]
        %v749 = vld [vmem:[%s217 + $0xe58] sm:$0xff]
        %v750 = vld [vmem:[%s217 + $0xe60] sm:$0xff]
        %v751 = vld [vmem:[%s217 + $0xe68] sm:$0xff]
        %v752 = vld [vmem:[%s217 + $0xe70] sm:$0xff]
        %v753 = vld [vmem:[%s217 + $0xe78] sm:$0xff]
        %v754 = vld [vmem:[%s217 + $0xe80] sm:$0xff]
        %v755 = vld [vmem:[%s217 + $0xe88] sm:$0xf]
        %v756 = vld [vmem:[%s217 + $0xe8c] sm:$0xff]
        %v757 = vld [vmem:[%s217 + $0xe94] sm:$0xff]
        %v758 = vld [vmem:[%s217 + $0xe9c] sm:$0xff]
        %v759 = vld [vmem:[%s217 + $0xea4] sm:$0xff]
        %v760 = vld [vmem:[%s217 + $0xeac] sm:$0xff]
        %v761 = vld [vmem:[%s217 + $0xeb4] sm:$0xff]
        %v762 = vld [vmem:[%s217 + $0xebc] sm:$0xff]
        %v763 = vld [vmem:[%s217 + $0xec4] sm:$0xff]
        %v764 = vld [vmem:[%s217 + $0xecc] sm:$0xff]
        %v765 = vld [vmem:[%s217 + $0xed4] sm:$0xff]
        %v766 = vld [vmem:[%s217 + $0xedc] sm:$0xff]
        %v767 = vld [vmem:[%s217 + $0xee4] sm:$0xff]
        %v768 = vld [vmem:[%s217 + $0xeec] sm:$0xff]
        %v769 = vld [vmem:[%s217 + $0xef4] sm:$0xff]
        %v770 = vld [vmem:[%s217 + $0xefc] sm:$0xff]
        %v771 = vld [vmem:[%s217 + $0xf04] sm:$0xff]
        %v772 = vld [vmem:[%s217 + $0xf0c] sm:$0xff]
        %v773 = vld [vmem:[%s217 + $0xf14] sm:$0xff]
        %v774 = vld [vmem:[%s217 + $0xf1c] sm:$0xff]
        %v775 = vld [vmem:[%s217 + $0xf24] sm:$0xff]
        %v776 = vld [vmem:[%s217 + $0xf2c] sm:$0xff]
        %v777 = vld [vmem:[%s217 + $0xf34] sm:$0xff]
        %v778 = vld [vmem:[%s217 + $0xf3c] sm:$0xff]
        %v779 = vld [vmem:[%s217 + $0xf44] sm:$0xff]
        %v780 = vld [vmem:[%s217 + $0xf4c] sm:$0xf]
        %v781 = vld [vmem:[%s217 + $0xf50] sm:$0xff]
        %v782 = vld [vmem:[%s217 + $0xf58] sm:$0xff]
        %v783 = vld [vmem:[%s217 + $0xf60] sm:$0xff]
        %v784 = vld [vmem:[%s217 + $0xf68] sm:$0xff]
        %v785 = vld [vmem:[%s217 + $0xf70] sm:$0xff]
        %v786 = vld [vmem:[%s217 + $0xf78] sm:$0xff]
        %v787 = vld [vmem:[%s217 + $0xf80] sm:$0xff]
        %v788 = vld [vmem:[%s217 + $0xf88] sm:$0xff]
        %v789 = vld [vmem:[%s217 + $0xf90] sm:$0xff]
        %v790 = vld [vmem:[%s217 + $0xf98] sm:$0xff]
        %v791 = vld [vmem:[%s217 + $0xfa0] sm:$0xff]
        %v792 = vld [vmem:[%s217 + $0xfa8] sm:$0xff]
        %v793 = vld [vmem:[%s217 + $0xfb0] sm:$0xff]
        %v794 = vld [vmem:[%s217 + $0xfb8] sm:$0xff]
        %v795 = vld [vmem:[%s217 + $0xfc0] sm:$0xff]
        %v796 = vld [vmem:[%s217 + $0xfc8] sm:$0xff]
        %v797 = vld [vmem:[%s217 + $0xfd0] sm:$0xff]
        %v798 = vld [vmem:[%s217 + $0xfd8] sm:$0xff]
        %v799 = vld [vmem:[%s217 + $0xfe0] sm:$0xff]
        %v800 = vld [vmem:[%s217 + $0xfe8] sm:$0xff]
        %v801 = vld [vmem:[%s217 + $0xff0] sm:$0xff]
        %v802 = vld [vmem:[%s217 + $0xff8] sm:$0xff]
        %v803 = vld [vmem:[%s217 + $0x1000] sm:$0xff]
        %v804 = vld [vmem:[%s217 + $0x1008] sm:$0xff]
        %v805 = vld [vmem:[%s217 + $0x1010] sm:$0xf]
        %v806 = vld [vmem:[%s217 + $0x1014] sm:$0xff]
        %v807 = vld [vmem:[%s217 + $0x101c] sm:$0xff]
        %v808 = vld [vmem:[%s217 + $0x1024] sm:$0xff]
        %v809 = vld [vmem:[%s217 + $0x102c] sm:$0xff]
        %v810 = vld [vmem:[%s217 + $0x1034] sm:$0xff]
        %v811 = vld [vmem:[%s217 + $0x103c] sm:$0xff]
        %v812 = vld [vmem:[%s217 + $0x1044] sm:$0xff]
        %v813 = vld [vmem:[%s217 + $0x104c] sm:$0xff]
        %v814 = vld [vmem:[%s217 + $0x1054] sm:$0xff]
        %v815 = vld [vmem:[%s217 + $0x105c] sm:$0xff]
        %v816 = vld [vmem:[%s217 + $0x1064] sm:$0xff]
        %v817 = vld [vmem:[%s217 + $0x106c] sm:$0xff]
        %v818 = vld [vmem:[%s217 + $0x1074] sm:$0xff]
        %v819 = vld [vmem:[%s217 + $0x107c] sm:$0xff]
        %v820 = vld [vmem:[%s217 + $0x1084] sm:$0xff]
        %v821 = vld [vmem:[%s217 + $0x108c] sm:$0xff]
        %v822 = vld [vmem:[%s217 + $0x1094] sm:$0xff]
        %v823 = vld [vmem:[%s217 + $0x109c] sm:$0xff]
        %v824 = vld [vmem:[%s217 + $0x10a4] sm:$0xff]
        %v825 = vld [vmem:[%s217 + $0x10ac] sm:$0xff]
        %v826 = vld [vmem:[%s217 + $0x10b4] sm:$0xff]
        %v827 = vld [vmem:[%s217 + $0x10bc] sm:$0xff]
        %v828 = vld [vmem:[%s217 + $0x10c4] sm:$0xff]
        %v829 = vld [vmem:[%s217 + $0x10cc] sm:$0xff]
        %v830 = vld [vmem:[%s217 + $0x10d4] sm:$0xf]
        %v831 = vld [vmem:[%s217 + $0x10d8] sm:$0xff]
        %v832 = vld [vmem:[%s217 + $0x10e0] sm:$0xff]
        %v833 = vld [vmem:[%s217 + $0x10e8] sm:$0xff]
        %v834 = vld [vmem:[%s217 + $0x10f0] sm:$0xff]
        %v835 = vld [vmem:[%s217 + $0x10f8] sm:$0xff]
        %v836 = vld [vmem:[%s217 + $0x1100] sm:$0xff]
        %v837 = vld [vmem:[%s217 + $0x1108] sm:$0xff]
        %v838 = vld [vmem:[%s217 + $0x1110] sm:$0xff]
        %v839 = vld [vmem:[%s217 + $0x1118] sm:$0xff]
        %v840 = vld [vmem:[%s217 + $0x1120] sm:$0xff]
        %v841 = vld [vmem:[%s217 + $0x1128] sm:$0xff]
        %v842 = vld [vmem:[%s217 + $0x1130] sm:$0xff]
        %v843 = vld [vmem:[%s217 + $0x1138] sm:$0xff]
        %v844 = vld [vmem:[%s217 + $0x1140] sm:$0xff]
        %v845 = vld [vmem:[%s217 + $0x1148] sm:$0xff]
        %v846 = vld [vmem:[%s217 + $0x1150] sm:$0xff]
        %v847 = vld [vmem:[%s217 + $0x1158] sm:$0xff]
        %v848 = vld [vmem:[%s217 + $0x1160] sm:$0xff]
        %v849 = vld [vmem:[%s217 + $0x1168] sm:$0xff]
        %v850 = vld [vmem:[%s217 + $0x1170] sm:$0xff]
        %v851 = vld [vmem:[%s217 + $0x1178] sm:$0xff]
        %v852 = vld [vmem:[%s217 + $0x1180] sm:$0xff]
        %v853 = vld [vmem:[%s217 + $0x1188] sm:$0xff]
        %v854 = vld [vmem:[%s217 + $0x1190] sm:$0xff]
        %v855 = vld [vmem:[%s217 + $0x1198] sm:$0xf]
        %v856 = vld [vmem:[%s217 + $0x119c] sm:$0xff]
        %v857 = vld [vmem:[%s217 + $0x11a4] sm:$0xff]
        %v858 = vld [vmem:[%s217 + $0x11ac] sm:$0xff]
        %v859 = vld [vmem:[%s217 + $0x11b4] sm:$0xff]
        %v860 = vld [vmem:[%s217 + $0x11bc] sm:$0xff]
        %v861 = vld [vmem:[%s217 + $0x11c4] sm:$0xff]
        %v862 = vld [vmem:[%s217 + $0x11cc] sm:$0xff]
        %v863 = vld [vmem:[%s217 + $0x11d4] sm:$0xff]
        %v864 = vld [vmem:[%s217 + $0x11dc] sm:$0xff]
        %v865 = vld [vmem:[%s217 + $0x11e4] sm:$0xff]
        %v866 = vld [vmem:[%s217 + $0x11ec] sm:$0xff]
        %v867 = vld [vmem:[%s217 + $0x11f4] sm:$0xff]
        %v868 = vld [vmem:[%s217 + $0x11fc] sm:$0xff]
        %v869 = vld [vmem:[%s217 + $0x1204] sm:$0xff]
        %v870 = vld [vmem:[%s217 + $0x120c] sm:$0xff]
        %v871 = vld [vmem:[%s217 + $0x1214] sm:$0xff]
        %v872 = vld [vmem:[%s217 + $0x121c] sm:$0xff]
        %v873 = vld [vmem:[%s217 + $0x1224] sm:$0xff]
        %v874 = vld [vmem:[%s217 + $0x122c] sm:$0xff]
        %v875 = vld [vmem:[%s217 + $0x1234] sm:$0xff]
        %v876 = vld [vmem:[%s217 + $0x123c] sm:$0xff]
        %v877 = vld [vmem:[%s217 + $0x1244] sm:$0xff]
        %v878 = vld [vmem:[%s217 + $0x124c] sm:$0xff]
        %v879 = vld [vmem:[%s217 + $0x1254] sm:$0xff]
        %v880 = vld [vmem:[%s217 + $0x125c] sm:$0xf]
        %v881 = vld [vmem:[%s217 + $0x1260] sm:$0xff]
        %v882 = vld [vmem:[%s217 + $0x1268] sm:$0xff]
        %v883 = vld [vmem:[%s217 + $0x1270] sm:$0xff]
        %v884 = vld [vmem:[%s217 + $0x1278] sm:$0xff]
        %v885 = vld [vmem:[%s217 + $0x1280] sm:$0xff]
        %v886 = vld [vmem:[%s217 + $0x1288] sm:$0xff]
        %v887 = vld [vmem:[%s217 + $0x1290] sm:$0xff]
        %v888 = vld [vmem:[%s217 + $0x1298] sm:$0xff]
        %v889 = vld [vmem:[%s217 + $0x12a0] sm:$0xff]
        %v890 = vld [vmem:[%s217 + $0x12a8] sm:$0xff]
        %v891 = vld [vmem:[%s217 + $0x12b0] sm:$0xff]
        %v892 = vld [vmem:[%s217 + $0x12b8] sm:$0xff]
        %v893 = vld [vmem:[%s217 + $0x12c0] sm:$0xff]
        %v894 = vld [vmem:[%s217 + $0x12c8] sm:$0xff]
        %v895 = vld [vmem:[%s217 + $0x12d0] sm:$0xff]
        %v896 = vld [vmem:[%s217 + $0x12d8] sm:$0xff]
        %v897 = vld [vmem:[%s217 + $0x12e0] sm:$0xff]
        %v898 = vld [vmem:[%s217 + $0x12e8] sm:$0xff]
        %v899 = vld [vmem:[%s217 + $0x12f0] sm:$0xff]
        %v900 = vld [vmem:[%s217 + $0x12f8] sm:$0xff]
        %v901 = vld [vmem:[%s217 + $0x1300] sm:$0xff]
        %v902 = vld [vmem:[%s217 + $0x1308] sm:$0xff]
        %v903 = vld [vmem:[%s217 + $0x1310] sm:$0xff]
        %v904 = vld [vmem:[%s217 + $0x1318] sm:$0xff]
        %v905 = vld [vmem:[%s217 + $0x1320] sm:$0xf]
        %v906 = vld [vmem:[%s217 + $0x1324] sm:$0xff]
        %v907 = vld [vmem:[%s217 + $0x132c] sm:$0xff]
        %v908 = vld [vmem:[%s217 + $0x1334] sm:$0xff]
        %v909 = vld [vmem:[%s217 + $0x133c] sm:$0xff]
        %v910 = vld [vmem:[%s217 + $0x1344] sm:$0xff]
        %v911 = vld [vmem:[%s217 + $0x134c] sm:$0xff]
        %v912 = vld [vmem:[%s217 + $0x1354] sm:$0xff]
        %v913 = vld [vmem:[%s217 + $0x135c] sm:$0xff]
        %v914 = vld [vmem:[%s217 + $0x1364] sm:$0xff]
        %v915 = vld [vmem:[%s217 + $0x136c] sm:$0xff]
        %v916 = vld [vmem:[%s217 + $0x1374] sm:$0xff]
        %v917 = vld [vmem:[%s217 + $0x137c] sm:$0xff]
        %v918 = vld [vmem:[%s217 + $0x1384] sm:$0xff]
        %v919 = vld [vmem:[%s217 + $0x138c] sm:$0xff]
        %v920 = vld [vmem:[%s217 + $0x1394] sm:$0xff]
        %v921 = vld [vmem:[%s217 + $0x139c] sm:$0xff]
        %v922 = vld [vmem:[%s217 + $0x13a4] sm:$0xff]
        %v923 = vld [vmem:[%s217 + $0x13ac] sm:$0xff]
        %v924 = vld [vmem:[%s217 + $0x13b4] sm:$0xff]
        %v925 = vld [vmem:[%s217 + $0x13bc] sm:$0xff]
        %v926 = vld [vmem:[%s217 + $0x13c4] sm:$0xff]
        %v927 = vld [vmem:[%s217 + $0x13cc] sm:$0xff]
        %v928 = vld [vmem:[%s217 + $0x13d4] sm:$0xff]
        %v929 = vld [vmem:[%s217 + $0x13dc] sm:$0xff]
        %v930 = vld [vmem:[%s217 + $0x13e4] sm:$0xf]
        %v931 = vld [vmem:[%s217 + $0x13e8] sm:$0xff]
        %v932 = vld [vmem:[%s217 + $0x13f0] sm:$0xff]
        %v933 = vld [vmem:[%s217 + $0x13f8] sm:$0xff]
        %v934 = vld [vmem:[%s217 + $0x1400] sm:$0xff]
        %v935 = vld [vmem:[%s217 + $0x1408] sm:$0xff]
        %v936 = vld [vmem:[%s217 + $0x1410] sm:$0xff]
        %v937 = vld [vmem:[%s217 + $0x1418] sm:$0xff]
        %v938 = vld [vmem:[%s217 + $0x1420] sm:$0xff]
        %v939 = vld [vmem:[%s217 + $0x1428] sm:$0xff]
        %v940 = vld [vmem:[%s217 + $0x1430] sm:$0xff]
        %v941 = vld [vmem:[%s217 + $0x1438] sm:$0xff]
        %v942 = vld [vmem:[%s217 + $0x1440] sm:$0xff]
        %v943 = vld [vmem:[%s217 + $0x1448] sm:$0xff]
        %v944 = vld [vmem:[%s217 + $0x1450] sm:$0xff]
        %v945 = vld [vmem:[%s217 + $0x1458] sm:$0xff]
        %v946 = vld [vmem:[%s217 + $0x1460] sm:$0xff]
        %v947 = vld [vmem:[%s217 + $0x1468] sm:$0xff]
        %v948 = vld [vmem:[%s217 + $0x1470] sm:$0xff]
        %v949 = vld [vmem:[%s217 + $0x1478] sm:$0xff]
        %v950 = vld [vmem:[%s217 + $0x1480] sm:$0xff]
        %v951 = vld [vmem:[%s217 + $0x1488] sm:$0xff]
        %v952 = vld [vmem:[%s217 + $0x1490] sm:$0xff]
        %v953 = vld [vmem:[%s217 + $0x1498] sm:$0xff]
        %v954 = vld [vmem:[%s217 + $0x14a0] sm:$0xff]
        %v955 = vld [vmem:[%s217 + $0x14a8] sm:$0xf]
        %v956 = vld [vmem:[%s217 + $0x14ac] sm:$0xff]
        %v957 = vld [vmem:[%s217 + $0x14b4] sm:$0xff]
        %v958 = vld [vmem:[%s217 + $0x14bc] sm:$0xff]
        %v959 = vld [vmem:[%s217 + $0x14c4] sm:$0xff]
        %v960 = vld [vmem:[%s217 + $0x14cc] sm:$0xff]
        %v961 = vld [vmem:[%s217 + $0x14d4] sm:$0xff]
        %v962 = vld [vmem:[%s217 + $0x14dc] sm:$0xff]
        %v963 = vld [vmem:[%s217 + $0x14e4] sm:$0xff]
        %v964 = vld [vmem:[%s217 + $0x14ec] sm:$0xff]
        %v965 = vld [vmem:[%s217 + $0x14f4] sm:$0xff]
        %v966 = vld [vmem:[%s217 + $0x14fc] sm:$0xff]
        %v967 = vld [vmem:[%s217 + $0x1504] sm:$0xff]
        %v968 = vld [vmem:[%s217 + $0x150c] sm:$0xff]
        %v969 = vld [vmem:[%s217 + $0x1514] sm:$0xff]
        %v970 = vld [vmem:[%s217 + $0x151c] sm:$0xff]
        %v971 = vld [vmem:[%s217 + $0x1524] sm:$0xff]
        %v972 = vld [vmem:[%s217 + $0x152c] sm:$0xff]
        %v973 = vld [vmem:[%s217 + $0x1534] sm:$0xff]
        %v974 = vld [vmem:[%s217 + $0x153c] sm:$0xff]
        %v975 = vld [vmem:[%s217 + $0x1544] sm:$0xff]
        %v976 = vld [vmem:[%s217 + $0x154c] sm:$0xff]
        %v977 = vld [vmem:[%s217 + $0x1554] sm:$0xff]
        %v978 = vld [vmem:[%s217 + $0x155c] sm:$0xff]
        %v979 = vld [vmem:[%s217 + $0x1564] sm:$0xff]
        %v980 = vld [vmem:[%s217 + $0x156c] sm:$0xf]
        %v981 = vld [vmem:[%s217 + $0x1570] sm:$0xff]
        %v982 = vld [vmem:[%s217 + $0x1578] sm:$0xff]
        %v983 = vld [vmem:[%s217 + $0x1580] sm:$0xff]
        %v984 = vld [vmem:[%s217 + $0x1588] sm:$0xff]
        %v985 = vld [vmem:[%s217 + $0x1590] sm:$0xff]
        %v986 = vld [vmem:[%s217 + $0x1598] sm:$0xff]
        %v987 = vld [vmem:[%s217 + $0x15a0] sm:$0xff]
        %v988 = vld [vmem:[%s217 + $0x15a8] sm:$0xff]
        %v989 = vld [vmem:[%s217 + $0x15b0] sm:$0xff]
        %v990 = vld [vmem:[%s217 + $0x15b8] sm:$0xff]
        %v991 = vld [vmem:[%s217 + $0x15c0] sm:$0xff]
        %v992 = vld [vmem:[%s217 + $0x15c8] sm:$0xff]
        %v993 = vld [vmem:[%s217 + $0x15d0] sm:$0xff]
        %v994 = vld [vmem:[%s217 + $0x15d8] sm:$0xff]
        %v995 = vld [vmem:[%s217 + $0x15e0] sm:$0xff]
        %v996 = vld [vmem:[%s217 + $0x15e8] sm:$0xff]
        %v997 = vld [vmem:[%s217 + $0x15f0] sm:$0xff]
        %v998 = vld [vmem:[%s217 + $0x15f8] sm:$0xff]
        %v999 = vld [vmem:[%s217 + $0x1600] sm:$0xff]
        %v1000 = vld [vmem:[%s217 + $0x1608] sm:$0xff]
        %v1001 = vld [vmem:[%s217 + $0x1610] sm:$0xff]
        %v1002 = vld [vmem:[%s217 + $0x1618] sm:$0xff]
        %v1003 = vld [vmem:[%s217 + $0x1620] sm:$0xff]
        %v1004 = vld [vmem:[%s217 + $0x1628] sm:$0xff]
        %v1005 = vld [vmem:[%s217 + $0x1630] sm:$0xf]
        %v1006 = vld [vmem:[%s217 + $0x1634] sm:$0xff]
        %v1007 = vld [vmem:[%s217 + $0x163c] sm:$0xff]
        %v1008 = vld [vmem:[%s217 + $0x1644] sm:$0xff]
        %v1009 = vld [vmem:[%s217 + $0x164c] sm:$0xff]
        %v1010 = vld [vmem:[%s217 + $0x1654] sm:$0xff]
        %v1011 = vld [vmem:[%s217 + $0x165c] sm:$0xff]
        %v1012 = vld [vmem:[%s217 + $0x1664] sm:$0xff]
        %v1013 = vld [vmem:[%s217 + $0x166c] sm:$0xff]
        %v1014 = vld [vmem:[%s217 + $0x1674] sm:$0xff]
        %v1015 = vld [vmem:[%s217 + $0x167c] sm:$0xff]
        %v1016 = vld [vmem:[%s217 + $0x1684] sm:$0xff]
        %v1017 = vld [vmem:[%s217 + $0x168c] sm:$0xff]
        %v1018 = vld [vmem:[%s217 + $0x1694] sm:$0xff]
        %v1019 = vld [vmem:[%s217 + $0x169c] sm:$0xff]
        %v1020 = vld [vmem:[%s217 + $0x16a4] sm:$0xff]
        %v1021 = vld [vmem:[%s217 + $0x16ac] sm:$0xff]
        %v1022 = vld [vmem:[%s217 + $0x16b4] sm:$0xff]
        %v1023 = vld [vmem:[%s217 + $0x16bc] sm:$0xff]
        %v1024 = vld [vmem:[%s217 + $0x16c4] sm:$0xff]
        %v1025 = vld [vmem:[%s217 + $0x16cc] sm:$0xff]
        %v1026 = vld [vmem:[%s217 + $0x16d4] sm:$0xff]
        %v1027 = vld [vmem:[%s217 + $0x16dc] sm:$0xff]
        %v1028 = vld [vmem:[%s217 + $0x16e4] sm:$0xff]
        %v1029 = vld [vmem:[%s217 + $0x16ec] sm:$0xff]
        %v1030 = vld [vmem:[%s217 + $0x16f4] sm:$0xf]
        %v1031 = vld [vmem:[%s217 + $0x16f8] sm:$0xff]
        %v1032 = vld [vmem:[%s217 + $0x1700] sm:$0xff]
        %v1033 = vld [vmem:[%s217 + $0x1708] sm:$0xff]
        %v1034 = vld [vmem:[%s217 + $0x1710] sm:$0xff]
        %v1035 = vld [vmem:[%s217 + $0x1718] sm:$0xff]
        %v1036 = vld [vmem:[%s217 + $0x1720] sm:$0xff]
        %v1037 = vld [vmem:[%s217 + $0x1728] sm:$0xff]
        %v1038 = vld [vmem:[%s217 + $0x1730] sm:$0xff]
        %v1039 = vld [vmem:[%s217 + $0x1738] sm:$0xff]
        %v1040 = vld [vmem:[%s217 + $0x1740] sm:$0xff]
        %v1041 = vld [vmem:[%s217 + $0x1748] sm:$0xff]
        %v1042 = vld [vmem:[%s217 + $0x1750] sm:$0xff]
        %v1043 = vld [vmem:[%s217 + $0x1758] sm:$0xff]
        %v1044 = vld [vmem:[%s217 + $0x1760] sm:$0xff]
        %v1045 = vld [vmem:[%s217 + $0x1768] sm:$0xff]
        %v1046 = vld [vmem:[%s217 + $0x1770] sm:$0xff]
        %v1047 = vld [vmem:[%s217 + $0x1778] sm:$0xff]
        %v1048 = vld [vmem:[%s217 + $0x1780] sm:$0xff]
        %v1049 = vld [vmem:[%s217 + $0x1788] sm:$0xff]
        %v1050 = vld [vmem:[%s217 + $0x1790] sm:$0xff]
        %v1051 = vld [vmem:[%s217 + $0x1798] sm:$0xff]
        %v1052 = vld [vmem:[%s217 + $0x17a0] sm:$0xff]
        %v1053 = vld [vmem:[%s217 + $0x17a8] sm:$0xff]
        %v1054 = vld [vmem:[%s217 + $0x17b0] sm:$0xff]
        %v1055 = vld [vmem:[%s217 + $0x17b8] sm:$0xf]
        %v1056 = vld [vmem:[%s217 + $0x17bc] sm:$0xff]
        %v1057 = vld [vmem:[%s217 + $0x17c4] sm:$0xff]
        %v1058 = vld [vmem:[%s217 + $0x17cc] sm:$0xff]
        %v1059 = vld [vmem:[%s217 + $0x17d4] sm:$0xff]
        %v1060 = vld [vmem:[%s217 + $0x17dc] sm:$0xff]
        %v1061 = vld [vmem:[%s217 + $0x17e4] sm:$0xff]
        %v1062 = vld [vmem:[%s217 + $0x17ec] sm:$0xff]
        %v1063 = vld [vmem:[%s217 + $0x17f4] sm:$0xff]
        %v1064 = vld [vmem:[%s217 + $0x17fc] sm:$0xff]
        %v1065 = vld [vmem:[%s217 + $0x1804] sm:$0xff]
        %v1066 = vld [vmem:[%s217 + $0x180c] sm:$0xff]
        %v1067 = vld [vmem:[%s217 + $0x1814] sm:$0xff]
        %v1068 = vld [vmem:[%s217 + $0x181c] sm:$0xff]
        %v1069 = vld [vmem:[%s217 + $0x1824] sm:$0xff]
        %v1070 = vld [vmem:[%s217 + $0x182c] sm:$0xff]
        %v1071 = vld [vmem:[%s217 + $0x1834] sm:$0xff]
        %v1072 = vld [vmem:[%s217 + $0x183c] sm:$0xff]
        %v1073 = vld [vmem:[%s217 + $0x1844] sm:$0xff]
        %v1074 = vld [vmem:[%s217 + $0x184c] sm:$0xff]
        %v1075 = vld [vmem:[%s217 + $0x1854] sm:$0xff]
        %v1076 = vld [vmem:[%s217 + $0x185c] sm:$0xff]
        %v1077 = vld [vmem:[%s217 + $0x1864] sm:$0xff]
        %v1078 = vld [vmem:[%s217 + $0x186c] sm:$0xff]
        %v1079 = vld [vmem:[%s217 + $0x1874] sm:$0xff]
        %v1080 = vld [vmem:[%s217 + $0x187c] sm:$0xf]
        %v1081 = vld [vmem:[%s217 + $0x1880] sm:$0xff]
        %v1082 = vld [vmem:[%s217 + $0x1888] sm:$0xff]
        %v1083 = vld [vmem:[%s217 + $0x1890] sm:$0xff]
        %v1084 = vld [vmem:[%s217 + $0x1898] sm:$0xff]
        %v1085 = vld [vmem:[%s217 + $0x18a0] sm:$0xff]
        %v1086 = vld [vmem:[%s217 + $0x18a8] sm:$0xff]
        %v1087 = vld [vmem:[%s217 + $0x18b0] sm:$0xff]
        %v1088 = vld [vmem:[%s217 + $0x18b8] sm:$0xff]
        %v1089 = vld [vmem:[%s217 + $0x18c0] sm:$0xff]
        %v1090 = vld [vmem:[%s217 + $0x18c8] sm:$0xff]
        %v1091 = vld [vmem:[%s217 + $0x18d0] sm:$0xff]
        %v1092 = vld [vmem:[%s217 + $0x18d8] sm:$0xff]
        %v1093 = vld [vmem:[%s217 + $0x18e0] sm:$0xff]
        %v1094 = vld [vmem:[%s217 + $0x18e8] sm:$0xff]
        %v1095 = vld [vmem:[%s217 + $0x18f0] sm:$0xff]
        %v1096 = vld [vmem:[%s217 + $0x18f8] sm:$0xff]
        %v1097 = vld [vmem:[%s217 + $0x1900] sm:$0xff]
        %v1098 = vld [vmem:[%s217 + $0x1908] sm:$0xff]
        %v1099 = vld [vmem:[%s217 + $0x1910] sm:$0xff]
        %v1100 = vld [vmem:[%s217 + $0x1918] sm:$0xff]
        %v1101 = vld [vmem:[%s217 + $0x1920] sm:$0xff]
        %v1102 = vld [vmem:[%s217 + $0x1928] sm:$0xff]
        %v1103 = vld [vmem:[%s217 + $0x1930] sm:$0xff]
        %v1104 = vld [vmem:[%s217 + $0x1938] sm:$0xff]
        %v1105 = vld [vmem:[%s217 + $0x1940] sm:$0xf]
        %v1106 = vld [vmem:[%s217 + $0x1944] sm:$0xff]
        %v1107 = vld [vmem:[%s217 + $0x194c] sm:$0xff]
        %v1108 = vld [vmem:[%s217 + $0x1954] sm:$0xff]
        %v1109 = vld [vmem:[%s217 + $0x195c] sm:$0xff]
        %v1110 = vld [vmem:[%s217 + $0x1964] sm:$0xff]
        %v1111 = vld [vmem:[%s217 + $0x196c] sm:$0xff]
        %v1112 = vld [vmem:[%s217 + $0x1974] sm:$0xff]
        %v1113 = vld [vmem:[%s217 + $0x197c] sm:$0xff]
        %v1114 = vld [vmem:[%s217 + $0x1984] sm:$0xff]
        %v1115 = vld [vmem:[%s217 + $0x198c] sm:$0xff]
        %v1116 = vld [vmem:[%s217 + $0x1994] sm:$0xff]
        %v1117 = vld [vmem:[%s217 + $0x199c] sm:$0xff]
        %v1118 = vld [vmem:[%s217 + $0x19a4] sm:$0xff]
        %v1119 = vld [vmem:[%s217 + $0x19ac] sm:$0xff]
        %v1120 = vld [vmem:[%s217 + $0x19b4] sm:$0xff]
        %v1121 = vld [vmem:[%s217 + $0x19bc] sm:$0xff]
        %v1122 = vld [vmem:[%s217 + $0x19c4] sm:$0xff]
        %v1123 = vld [vmem:[%s217 + $0x19cc] sm:$0xff]
        %v1124 = vld [vmem:[%s217 + $0x19d4] sm:$0xff]
        %v1125 = vld [vmem:[%s217 + $0x19dc] sm:$0xff]
        %v1126 = vld [vmem:[%s217 + $0x19e4] sm:$0xff]
        %v1127 = vld [vmem:[%s217 + $0x19ec] sm:$0xff]
        %v1128 = vld [vmem:[%s217 + $0x19f4] sm:$0xff]
        %v1129 = vld [vmem:[%s217 + $0x19fc] sm:$0xff]
        %v1130 = vld [vmem:[%s217 + $0x1a04] sm:$0xf]
        %v1131 = vld [vmem:[%s217 + $0x1a08] sm:$0xff]
        %v1132 = vld [vmem:[%s217 + $0x1a10] sm:$0xff]
        %v1133 = vld [vmem:[%s217 + $0x1a18] sm:$0xff]
        %v1134 = vld [vmem:[%s217 + $0x1a20] sm:$0xff]
        %v1135 = vld [vmem:[%s217 + $0x1a28] sm:$0xff]
        %v1136 = vld [vmem:[%s217 + $0x1a30] sm:$0xff]
        %v1137 = vld [vmem:[%s217 + $0x1a38] sm:$0xff]
        %v1138 = vld [vmem:[%s217 + $0x1a40] sm:$0xff]
        %v1139 = vld [vmem:[%s217 + $0x1a48] sm:$0xff]
        %v1140 = vld [vmem:[%s217 + $0x1a50] sm:$0xff]
        %v1141 = vld [vmem:[%s217 + $0x1a58] sm:$0xff]
        %v1142 = vld [vmem:[%s217 + $0x1a60] sm:$0xff]
        %v1143 = vld [vmem:[%s217 + $0x1a68] sm:$0xff]
        %v1144 = vld [vmem:[%s217 + $0x1a70] sm:$0xff]
        %v1145 = vld [vmem:[%s217 + $0x1a78] sm:$0xff]
        %v1146 = vld [vmem:[%s217 + $0x1a80] sm:$0xff]
        %v1147 = vld [vmem:[%s217 + $0x1a88] sm:$0xff]
        %v1148 = vld [vmem:[%s217 + $0x1a90] sm:$0xff]
        %v1149 = vld [vmem:[%s217 + $0x1a98] sm:$0xff]
        %v1150 = vld [vmem:[%s217 + $0x1aa0] sm:$0xff]
        %v1151 = vld [vmem:[%s217 + $0x1aa8] sm:$0xff]
        %v1152 = vld [vmem:[%s217 + $0x1ab0] sm:$0xff]
        %v1153 = vld [vmem:[%s217 + $0x1ab8] sm:$0xff]
        %v1154 = vld [vmem:[%s217 + $0x1ac0] sm:$0xff]
        %v1155 = vld [vmem:[%s217 + $0x1ac8] sm:$0xf]
        %v1156 = vld [vmem:[%s217 + $0x1acc] sm:$0xff]
        %v1157 = vld [vmem:[%s217 + $0x1ad4] sm:$0xff]
        %v1158 = vld [vmem:[%s217 + $0x1adc] sm:$0xff]
        %v1159 = vld [vmem:[%s217 + $0x1ae4] sm:$0xff]
        %v1160 = vld [vmem:[%s217 + $0x1aec] sm:$0xff]
        %v1161 = vld [vmem:[%s217 + $0x1af4] sm:$0xff]
        %v1162 = vld [vmem:[%s217 + $0x1afc] sm:$0xff]
        %v1163 = vld [vmem:[%s217 + $0x1b04] sm:$0xff]
        %v1164 = vld [vmem:[%s217 + $0x1b0c] sm:$0xff]
        %v1165 = vld [vmem:[%s217 + $0x1b14] sm:$0xff]
        %v1166 = vld [vmem:[%s217 + $0x1b1c] sm:$0xff]
        %v1167 = vld [vmem:[%s217 + $0x1b24] sm:$0xff]
        %v1168 = vld [vmem:[%s217 + $0x1b2c] sm:$0xff]
        %v1169 = vld [vmem:[%s217 + $0x1b34] sm:$0xff]
        %v1170 = vld [vmem:[%s217 + $0x1b3c] sm:$0xff]
        %v1171 = vld [vmem:[%s217 + $0x1b44] sm:$0xff]
        %v1172 = vld [vmem:[%s217 + $0x1b4c] sm:$0xff]
        %v1173 = vld [vmem:[%s217 + $0x1b54] sm:$0xff]
        %v1174 = vld [vmem:[%s217 + $0x1b5c] sm:$0xff]
        %v1175 = vld [vmem:[%s217 + $0x1b64] sm:$0xff]
        %v1176 = vld [vmem:[%s217 + $0x1b6c] sm:$0xff]
        %v1177 = vld [vmem:[%s217 + $0x1b74] sm:$0xff]
        %v1178 = vld [vmem:[%s217 + $0x1b7c] sm:$0xff]
        %v1179 = vld [vmem:[%s217 + $0x1b84] sm:$0xff]
        %v1180 = vld [vmem:[%s217 + $0x1b8c] sm:$0xf]
        %v1181 = vld [vmem:[%s217 + $0x1b90] sm:$0xff]
        %v1182 = vld [vmem:[%s217 + $0x1b98] sm:$0xff]
        %v1183 = vld [vmem:[%s217 + $0x1ba0] sm:$0xff]
        %v1184 = vld [vmem:[%s217 + $0x1ba8] sm:$0xff]
        %v1185 = vld [vmem:[%s217 + $0x1bb0] sm:$0xff]
        %v1186 = vld [vmem:[%s217 + $0x1bb8] sm:$0xff]
        %v1187 = vld [vmem:[%s217 + $0x1bc0] sm:$0xff]
        %v1188 = vld [vmem:[%s217 + $0x1bc8] sm:$0xff]
        %v1189 = vld [vmem:[%s217 + $0x1bd0] sm:$0xff]
        %v1190 = vld [vmem:[%s217 + $0x1bd8] sm:$0xff]
        %v1191 = vld [vmem:[%s217 + $0x1be0] sm:$0xff]
        %v1192 = vld [vmem:[%s217 + $0x1be8] sm:$0xff]
        %v1193 = vld [vmem:[%s217 + $0x1bf0] sm:$0xff]
        %v1194 = vld [vmem:[%s217 + $0x1bf8] sm:$0xff]
        %v1195 = vld [vmem:[%s217 + $0x1c00] sm:$0xff]
        %v1196 = vld [vmem:[%s217 + $0x1c08] sm:$0xff]
        %v1197 = vld [vmem:[%s217 + $0x1c10] sm:$0xff]
        %v1198 = vld [vmem:[%s217 + $0x1c18] sm:$0xff]
        %v1199 = vld [vmem:[%s217 + $0x1c20] sm:$0xff]
        %v1200 = vld [vmem:[%s217 + $0x1c28] sm:$0xff]
        %v1201 = vld [vmem:[%s217 + $0x1c30] sm:$0xff]
        %v1202 = vld [vmem:[%s217 + $0x1c38] sm:$0xff]
        %v1203 = vld [vmem:[%s217 + $0x1c40] sm:$0xff]
        %v1204 = vld [vmem:[%s217 + $0x1c48] sm:$0xff]
        %v1205 = vld [vmem:[%s217 + $0x1c50] sm:$0xf]
        %v1206 = vld [vmem:[%s217 + $0x1c54] sm:$0xff]
        %v1207 = vld [vmem:[%s217 + $0x1c5c] sm:$0xff]
        %v1208 = vld [vmem:[%s217 + $0x1c64] sm:$0xff]
        %v1209 = vld [vmem:[%s217 + $0x1c6c] sm:$0xff]
        %v1210 = vld [vmem:[%s217 + $0x1c74] sm:$0xff]
        %v1211 = vld [vmem:[%s217 + $0x1c7c] sm:$0xff]
        %v1212 = vld [vmem:[%s217 + $0x1c84] sm:$0xff]
        %v1213 = vld [vmem:[%s217 + $0x1c8c] sm:$0xff]
        %v1214 = vld [vmem:[%s217 + $0x1c94] sm:$0xff]
        %v1215 = vld [vmem:[%s217 + $0x1c9c] sm:$0xff]
        %v1216 = vld [vmem:[%s217 + $0x1ca4] sm:$0xff]
        %v1217 = vld [vmem:[%s217 + $0x1cac] sm:$0xff]
        %v1218 = vld [vmem:[%s217 + $0x1cb4] sm:$0xff]
        %v1219 = vld [vmem:[%s217 + $0x1cbc] sm:$0xff]
        %v1220 = vld [vmem:[%s217 + $0x1cc4] sm:$0xff]
        %v1221 = vld [vmem:[%s217 + $0x1ccc] sm:$0xff]
        %v1222 = vld [vmem:[%s217 + $0x1cd4] sm:$0xff]
        %v1223 = vld [vmem:[%s217 + $0x1cdc] sm:$0xff]
        %v1224 = vld [vmem:[%s217 + $0x1ce4] sm:$0xff]
        %v1225 = vld [vmem:[%s217 + $0x1cec] sm:$0xff]
        %v1226 = vld [vmem:[%s217 + $0x1cf4] sm:$0xff]
        %v1227 = vld [vmem:[%s217 + $0x1cfc] sm:$0xff]
        %v1228 = vld [vmem:[%s217 + $0x1d04] sm:$0xff]
        %v1229 = vld [vmem:[%s217 + $0x1d0c] sm:$0xff]
        %v1230 = vld [vmem:[%s217 + $0x1d14] sm:$0xf]
        %v1231 = vld [vmem:[%s217 + $0x1d18] sm:$0xff]
        %v1232 = vld [vmem:[%s217 + $0x1d20] sm:$0xff]
        %v1233 = vld [vmem:[%s217 + $0x1d28] sm:$0xff]
        %v1234 = vld [vmem:[%s217 + $0x1d30] sm:$0xff]
        %v1235 = vld [vmem:[%s217 + $0x1d38] sm:$0xff]
        %v1236 = vld [vmem:[%s217 + $0x1d40] sm:$0xff]
        %v1237 = vld [vmem:[%s217 + $0x1d48] sm:$0xff]
        %v1238 = vld [vmem:[%s217 + $0x1d50] sm:$0xff]
        %v1239 = vld [vmem:[%s217 + $0x1d58] sm:$0xff]
        %v1240 = vld [vmem:[%s217 + $0x1d60] sm:$0xff]
        %v1241 = vld [vmem:[%s217 + $0x1d68] sm:$0xff]
        %v1242 = vld [vmem:[%s217 + $0x1d70] sm:$0xff]
        %v1243 = vld [vmem:[%s217 + $0x1d78] sm:$0xff]
        %v1244 = vld [vmem:[%s217 + $0x1d80] sm:$0xff]
        %v1245 = vld [vmem:[%s217 + $0x1d88] sm:$0xff]
        %v1246 = vld [vmem:[%s217 + $0x1d90] sm:$0xff]
        %v1247 = vld [vmem:[%s217 + $0x1d98] sm:$0xff]
        %v1248 = vld [vmem:[%s217 + $0x1da0] sm:$0xff]
        %v1249 = vld [vmem:[%s217 + $0x1da8] sm:$0xff]
        %v1250 = vld [vmem:[%s217 + $0x1db0] sm:$0xff]
        %v1251 = vld [vmem:[%s217 + $0x1db8] sm:$0xff]
        %v1252 = vld [vmem:[%s217 + $0x1dc0] sm:$0xff]
        %v1253 = vld [vmem:[%s217 + $0x1dc8] sm:$0xff]
        %v1254 = vld [vmem:[%s217 + $0x1dd0] sm:$0xff]
        %v1255 = vld [vmem:[%s217 + $0x1dd8] sm:$0xf]
        %v1256 = vld [vmem:[%s217 + $0x1ddc] sm:$0xff]
        %v1257 = vld [vmem:[%s217 + $0x1de4] sm:$0xff]
        %v1258 = vld [vmem:[%s217 + $0x1dec] sm:$0xff]
        %v1259 = vld [vmem:[%s217 + $0x1df4] sm:$0xff]
        %v1260 = vld [vmem:[%s217 + $0x1dfc] sm:$0xff]
        %v1261 = vld [vmem:[%s217 + $0x1e04] sm:$0xff]
        %v1262 = vld [vmem:[%s217 + $0x1e0c] sm:$0xff]
        %v1263 = vld [vmem:[%s217 + $0x1e14] sm:$0xff]
        %v1264 = vld [vmem:[%s217 + $0x1e1c] sm:$0xff]
        %v1265 = vld [vmem:[%s217 + $0x1e24] sm:$0xff]
        %v1266 = vld [vmem:[%s217 + $0x1e2c] sm:$0xff]
        %v1267 = vld [vmem:[%s217 + $0x1e34] sm:$0xff]
        %v1268 = vld [vmem:[%s217 + $0x1e3c] sm:$0xff]
        %v1269 = vld [vmem:[%s217 + $0x1e44] sm:$0xff]
        %v1270 = vld [vmem:[%s217 + $0x1e4c] sm:$0xff]
        %v1271 = vld [vmem:[%s217 + $0x1e54] sm:$0xff]
        %v1272 = vld [vmem:[%s217 + $0x1e5c] sm:$0xff]
        %v1273 = vld [vmem:[%s217 + $0x1e64] sm:$0xff]
        %v1274 = vld [vmem:[%s217 + $0x1e6c] sm:$0xff]
        %v1275 = vld [vmem:[%s217 + $0x1e74] sm:$0xff]
        %v1276 = vld [vmem:[%s217 + $0x1e7c] sm:$0xff]
        %v1277 = vld [vmem:[%s217 + $0x1e84] sm:$0xff]
        %v1278 = vld [vmem:[%s217 + $0x1e8c] sm:$0xff]
        %v1279 = vld [vmem:[%s217 + $0x1e94] sm:$0xff]
        %v1280 = vld [vmem:[%s217 + $0x1e9c] sm:$0xf]
        %v1281 = vld [vmem:[%s217 + $0x1ea0] sm:$0xff]
        %v1282 = vld [vmem:[%s217 + $0x1ea8] sm:$0xff]
        %v1283 = vld [vmem:[%s217 + $0x1eb0] sm:$0xff]
        %v1284 = vld [vmem:[%s217 + $0x1eb8] sm:$0xff]
        %v1285 = vld [vmem:[%s217 + $0x1ec0] sm:$0xff]
        %v1286 = vld [vmem:[%s217 + $0x1ec8] sm:$0xff]
        %v1287 = vld [vmem:[%s217 + $0x1ed0] sm:$0xff]
        %v1288 = vld [vmem:[%s217 + $0x1ed8] sm:$0xff]
        %v1289 = vld [vmem:[%s217 + $0x1ee0] sm:$0xff]
        %v1290 = vld [vmem:[%s217 + $0x1ee8] sm:$0xff]
        %v1291 = vld [vmem:[%s217 + $0x1ef0] sm:$0xff]
        %v1292 = vld [vmem:[%s217 + $0x1ef8] sm:$0xff]
        %v1293 = vld [vmem:[%s217 + $0x1f00] sm:$0xff]
        %v1294 = vld [vmem:[%s217 + $0x1f08] sm:$0xff]
        %v1295 = vld [vmem:[%s217 + $0x1f10] sm:$0xff]
        %v1296 = vld [vmem:[%s217 + $0x1f18] sm:$0xff]
        %v1297 = vld [vmem:[%s217 + $0x1f20] sm:$0xff]
        %v1298 = vld [vmem:[%s217 + $0x1f28] sm:$0xff]
        %v1299 = vld [vmem:[%s217 + $0x1f30] sm:$0xff]
        %v1300 = vld [vmem:[%s217 + $0x1f38] sm:$0xff]
        %v1301 = vld [vmem:[%s217 + $0x1f40] sm:$0xff]
        %v1302 = vld [vmem:[%s217 + $0x1f48] sm:$0xff]
        %v1303 = vld [vmem:[%s217 + $0x1f50] sm:$0xff]
        %v1304 = vld [vmem:[%s217 + $0x1f58] sm:$0xff]
        %v1305 = vld [vmem:[%s217 + $0x1f60] sm:$0xf]
        %v1306 = vld [vmem:[%s217 + $0x1f64] sm:$0xff]
        %v1307 = vld [vmem:[%s217 + $0x1f6c] sm:$0xff]
        %v1308 = vld [vmem:[%s217 + $0x1f74] sm:$0xff]
        %v1309 = vld [vmem:[%s217 + $0x1f7c] sm:$0xff]
        %v1310 = vld [vmem:[%s217 + $0x1f84] sm:$0xff]
        %v1311 = vld [vmem:[%s217 + $0x1f8c] sm:$0xff]
        %v1312 = vld [vmem:[%s217 + $0x1f94] sm:$0xff]
        %v1313 = vld [vmem:[%s217 + $0x1f9c] sm:$0xff]
        %v1314 = vld [vmem:[%s217 + $0x1fa4] sm:$0xff]
        %v1315 = vld [vmem:[%s217 + $0x1fac] sm:$0xff]
        %v1316 = vld [vmem:[%s217 + $0x1fb4] sm:$0xff]
        %v1317 = vld [vmem:[%s217 + $0x1fbc] sm:$0xff]
        %v1318 = vld [vmem:[%s217 + $0x1fc4] sm:$0xff]
        %v1319 = vld [vmem:[%s217 + $0x1fcc] sm:$0xff]
        %v1320 = vld [vmem:[%s217 + $0x1fd4] sm:$0xff]
        %v1321 = vld [vmem:[%s217 + $0x1fdc] sm:$0xff]
        %v1322 = vld [vmem:[%s217 + $0x1fe4] sm:$0xff]
        %v1323 = vld [vmem:[%s217 + $0x1fec] sm:$0xff]
        %v1324 = vld [vmem:[%s217 + $0x1ff4] sm:$0xff]
        %v1325 = vld [vmem:[%s217 + $0x1ffc] sm:$0xff]
        %v1326 = vld [vmem:[%s217 + $0x2004] sm:$0xff]
        %v1327 = vld [vmem:[%s217 + $0x200c] sm:$0xff]
        %v1328 = vld [vmem:[%s217 + $0x2014] sm:$0xff]
        %v1329 = vld [vmem:[%s217 + $0x201c] sm:$0xff]
        %v1330 = vld [vmem:[%s217 + $0x2024] sm:$0xf]
        %v1331 = vld [vmem:[%s217 + $0x2028] sm:$0xff]
        %v1332 = vld [vmem:[%s217 + $0x2030] sm:$0xff]
        %v1333 = vld [vmem:[%s217 + $0x2038] sm:$0xff]
        %v1334 = vld [vmem:[%s217 + $0x2040] sm:$0xff]
        %v1335 = vld [vmem:[%s217 + $0x2048] sm:$0xff]
        %v1336 = vld [vmem:[%s217 + $0x2050] sm:$0xff]
        %v1337 = vld [vmem:[%s217 + $0x2058] sm:$0xff]
        %v1338 = vld [vmem:[%s217 + $0x2060] sm:$0xff]
        %v1339 = vld [vmem:[%s217 + $0x2068] sm:$0xff]
        %v1340 = vld [vmem:[%s217 + $0x2070] sm:$0xff]
        %v1341 = vld [vmem:[%s217 + $0x2078] sm:$0xff]
        %v1342 = vld [vmem:[%s217 + $0x2080] sm:$0xff]
        %v1343 = vld [vmem:[%s217 + $0x2088] sm:$0xff]
        %v1344 = vld [vmem:[%s217 + $0x2090] sm:$0xff]
        %v1345 = vld [vmem:[%s217 + $0x2098] sm:$0xff]
        %v1346 = vld [vmem:[%s217 + $0x20a0] sm:$0xff]
        %v1347 = vld [vmem:[%s217 + $0x20a8] sm:$0xff]
        %v1348 = vld [vmem:[%s217 + $0x20b0] sm:$0xff]
        %v1349 = vld [vmem:[%s217 + $0x20b8] sm:$0xff]
        %v1350 = vld [vmem:[%s217 + $0x20c0] sm:$0xff]
        %v1351 = vld [vmem:[%s217 + $0x20c8] sm:$0xff]
        %v1352 = vld [vmem:[%s217 + $0x20d0] sm:$0xff]
        %v1353 = vld [vmem:[%s217 + $0x20d8] sm:$0xff]
        %v1354 = vld [vmem:[%s217 + $0x20e0] sm:$0xff]
        %v1355 = vld [vmem:[%s217 + $0x20e8] sm:$0xf]
        %v1356 = vld [vmem:[%s217 + $0x20ec] sm:$0xff]
        %v1357 = vld [vmem:[%s217 + $0x20f4] sm:$0xff]
        %v1358 = vld [vmem:[%s217 + $0x20fc] sm:$0xff]
        %v1359 = vld [vmem:[%s217 + $0x2104] sm:$0xff]
        %v1360 = vld [vmem:[%s217 + $0x210c] sm:$0xff]
        %v1361 = vld [vmem:[%s217 + $0x2114] sm:$0xff]
        %v1362 = vld [vmem:[%s217 + $0x211c] sm:$0xff]
        %v1363 = vld [vmem:[%s217 + $0x2124] sm:$0xff]
        %v1364 = vld [vmem:[%s217 + $0x212c] sm:$0xff]
        %v1365 = vld [vmem:[%s217 + $0x2134] sm:$0xff]
        %v1366 = vld [vmem:[%s217 + $0x213c] sm:$0xff]
        %v1367 = vld [vmem:[%s217 + $0x2144] sm:$0xff]
        %v1368 = vld [vmem:[%s217 + $0x214c] sm:$0xff]
        %v1369 = vld [vmem:[%s217 + $0x2154] sm:$0xff]
        %v1370 = vld [vmem:[%s217 + $0x215c] sm:$0xff]
        %v1371 = vld [vmem:[%s217 + $0x2164] sm:$0xff]
        %v1372 = vld [vmem:[%s217 + $0x216c] sm:$0xff]
        %v1373 = vld [vmem:[%s217 + $0x2174] sm:$0xff]
        %v1374 = vld [vmem:[%s217 + $0x217c] sm:$0xff]
        %v1375 = vld [vmem:[%s217 + $0x2184] sm:$0xff]
        %v1376 = vld [vmem:[%s217 + $0x218c] sm:$0xff]
        %v1377 = vld [vmem:[%s217 + $0x2194] sm:$0xff]
        %v1378 = vld [vmem:[%s217 + $0x219c] sm:$0xff]
        %v1379 = vld [vmem:[%s217 + $0x21a4] sm:$0xff]
        %v1380 = vld [vmem:[%s217 + $0x21ac] sm:$0xf]
        %v1381 = vld [vmem:[%s217 + $0x21b0] sm:$0xff]
        %v1382 = vld [vmem:[%s217 + $0x21b8] sm:$0xff]
        %v1383 = vld [vmem:[%s217 + $0x21c0] sm:$0xff]
        %v1384 = vld [vmem:[%s217 + $0x21c8] sm:$0xff]
        %v1385 = vld [vmem:[%s217 + $0x21d0] sm:$0xff]
        %v1386 = vld [vmem:[%s217 + $0x21d8] sm:$0xff]
        %v1387 = vld [vmem:[%s217 + $0x21e0] sm:$0xff]
        %v1388 = vld [vmem:[%s217 + $0x21e8] sm:$0xff]
        %v1389 = vld [vmem:[%s217 + $0x21f0] sm:$0xff]
        %v1390 = vld [vmem:[%s217 + $0x21f8] sm:$0xff]
        %v1391 = vld [vmem:[%s217 + $0x2200] sm:$0xff]
        %v1392 = vld [vmem:[%s217 + $0x2208] sm:$0xff]
        %v1393 = vld [vmem:[%s217 + $0x2210] sm:$0xff]
        %v1394 = vld [vmem:[%s217 + $0x2218] sm:$0xff]
        %v1395 = vld [vmem:[%s217 + $0x2220] sm:$0xff]
        %v1396 = vld [vmem:[%s217 + $0x2228] sm:$0xff]
        %v1397 = vld [vmem:[%s217 + $0x2230] sm:$0xff]
        %v1398 = vld [vmem:[%s217 + $0x2238] sm:$0xff]
        %v1399 = vld [vmem:[%s217 + $0x2240] sm:$0xff]
        %v1400 = vld [vmem:[%s217 + $0x2248] sm:$0xff]
        %v1401 = vld [vmem:[%s217 + $0x2250] sm:$0xff]
        %v1402 = vld [vmem:[%s217 + $0x2258] sm:$0xff]
        %v1403 = vld [vmem:[%s217 + $0x2260] sm:$0xff]
        %v1404 = vld [vmem:[%s217 + $0x2268] sm:$0xff]
        %v1405 = vld [vmem:[%s217 + $0x2270] sm:$0xf]
        %v1406 = vld [vmem:[%s217 + $0x2274] sm:$0xff]
        %v1407 = vld [vmem:[%s217 + $0x227c] sm:$0xff]
        %v1408 = vld [vmem:[%s217 + $0x2284] sm:$0xff]
        %v1409 = vld [vmem:[%s217 + $0x228c] sm:$0xff]
        %v1410 = vld [vmem:[%s217 + $0x2294] sm:$0xff]
        %v1411 = vld [vmem:[%s217 + $0x229c] sm:$0xff]
        %v1412 = vld [vmem:[%s217 + $0x22a4] sm:$0xff]
        %v1413 = vld [vmem:[%s217 + $0x22ac] sm:$0xff]
        %v1414 = vld [vmem:[%s217 + $0x22b4] sm:$0xff]
        %v1415 = vld [vmem:[%s217 + $0x22bc] sm:$0xff]
        %v1416 = vld [vmem:[%s217 + $0x22c4] sm:$0xff]
        %v1417 = vld [vmem:[%s217 + $0x22cc] sm:$0xff]
        %v1418 = vld [vmem:[%s217 + $0x22d4] sm:$0xff]
        %v1419 = vld [vmem:[%s217 + $0x22dc] sm:$0xff]
        %v1420 = vld [vmem:[%s217 + $0x22e4] sm:$0xff]
        %v1421 = vld [vmem:[%s217 + $0x22ec] sm:$0xff]
        %v1422 = vld [vmem:[%s217 + $0x22f4] sm:$0xff]
        %v1423 = vld [vmem:[%s217 + $0x22fc] sm:$0xff]
        %v1424 = vld [vmem:[%s217 + $0x2304] sm:$0xff]
        %v1425 = vld [vmem:[%s217 + $0x230c] sm:$0xff]
        %v1426 = vld [vmem:[%s217 + $0x2314] sm:$0xff]
        %v1427 = vld [vmem:[%s217 + $0x231c] sm:$0xff]
        %v1428 = vld [vmem:[%s217 + $0x2324] sm:$0xff]
        %v1429 = vld [vmem:[%s217 + $0x232c] sm:$0xff]
        %v1430 = vld [vmem:[%s217 + $0x2334] sm:$0xf]
        %v1431 = vld [vmem:[%s217 + $0x2338] sm:$0xff]
        %v1432 = vld [vmem:[%s217 + $0x2340] sm:$0xff]
        %v1433 = vld [vmem:[%s217 + $0x2348] sm:$0xff]
        %v1434 = vld [vmem:[%s217 + $0x2350] sm:$0xff]
        %v1435 = vld [vmem:[%s217 + $0x2358] sm:$0xff]
        %v1436 = vld [vmem:[%s217 + $0x2360] sm:$0xff]
        %v1437 = vld [vmem:[%s217 + $0x2368] sm:$0xff]
        %v1438 = vld [vmem:[%s217 + $0x2370] sm:$0xff]
        %v1439 = vld [vmem:[%s217 + $0x2378] sm:$0xff]
        %v1440 = vld [vmem:[%s217 + $0x2380] sm:$0xff]
        %v1441 = vld [vmem:[%s217 + $0x2388] sm:$0xff]
        %v1442 = vld [vmem:[%s217 + $0x2390] sm:$0xff]
        %v1443 = vld [vmem:[%s217 + $0x2398] sm:$0xff]
        %v1444 = vld [vmem:[%s217 + $0x23a0] sm:$0xff]
        %v1445 = vld [vmem:[%s217 + $0x23a8] sm:$0xff]
        %v1446 = vld [vmem:[%s217 + $0x23b0] sm:$0xff]
        %v1447 = vld [vmem:[%s217 + $0x23b8] sm:$0xff]
        %v1448 = vld [vmem:[%s217 + $0x23c0] sm:$0xff]
        %v1449 = vld [vmem:[%s217 + $0x23c8] sm:$0xff]
        %v1450 = vld [vmem:[%s217 + $0x23d0] sm:$0xff]
        %v1451 = vld [vmem:[%s217 + $0x23d8] sm:$0xff]
        %v1452 = vld [vmem:[%s217 + $0x23e0] sm:$0xff]
        %v1453 = vld [vmem:[%s217 + $0x23e8] sm:$0xff]
        %v1454 = vld [vmem:[%s217 + $0x23f0] sm:$0xff]
        %v1455 = vld [vmem:[%s217 + $0x23f8] sm:$0xf]
        %v1456 = vld [vmem:[%s217 + $0x23fc] sm:$0xff]
        %v1457 = vld [vmem:[%s217 + $0x2404] sm:$0xff]
        %v1458 = vld [vmem:[%s217 + $0x240c] sm:$0xff]
        %v1459 = vld [vmem:[%s217 + $0x2414] sm:$0xff]
        %v1460 = vld [vmem:[%s217 + $0x241c] sm:$0xff]
        %v1461 = vld [vmem:[%s217 + $0x2424] sm:$0xff]
        %v1462 = vld [vmem:[%s217 + $0x242c] sm:$0xff]
        %v1463 = vld [vmem:[%s217 + $0x2434] sm:$0xff]
        %v1464 = vld [vmem:[%s217 + $0x243c] sm:$0xff]
        %v1465 = vld [vmem:[%s217 + $0x2444] sm:$0xff]
        %v1466 = vld [vmem:[%s217 + $0x244c] sm:$0xff]
        %v1467 = vld [vmem:[%s217 + $0x2454] sm:$0xff]
        %v1468 = vld [vmem:[%s217 + $0x245c] sm:$0xff]
        %v1469 = vld [vmem:[%s217 + $0x2464] sm:$0xff]
        %v1470 = vld [vmem:[%s217 + $0x246c] sm:$0xff]
        %v1471 = vld [vmem:[%s217 + $0x2474] sm:$0xff]
        %v1472 = vld [vmem:[%s217 + $0x247c] sm:$0xff]
        %v1473 = vld [vmem:[%s217 + $0x2484] sm:$0xff]
        %v1474 = vld [vmem:[%s217 + $0x248c] sm:$0xff]
        %v1475 = vld [vmem:[%s217 + $0x2494] sm:$0xff]
        %v1476 = vld [vmem:[%s217 + $0x249c] sm:$0xff]
        %v1477 = vld [vmem:[%s217 + $0x24a4] sm:$0xff]
        %v1478 = vld [vmem:[%s217 + $0x24ac] sm:$0xff]
        %v1479 = vld [vmem:[%s217 + $0x24b4] sm:$0xff]
        %v1480 = vld [vmem:[%s217 + $0x24bc] sm:$0xf]
        %v1481 = vld [vmem:[%s217 + $0x24c0] sm:$0xff]
        %v1482 = vld [vmem:[%s217 + $0x24c8] sm:$0xff]
        %v1483 = vld [vmem:[%s217 + $0x24d0] sm:$0xff]
        %v1484 = vld [vmem:[%s217 + $0x24d8] sm:$0xff]
        %v1485 = vld [vmem:[%s217 + $0x24e0] sm:$0xff]
        %v1486 = vld [vmem:[%s217 + $0x24e8] sm:$0xff]
        %v1487 = vld [vmem:[%s217 + $0x24f0] sm:$0xff]
        %v1488 = vld [vmem:[%s217 + $0x24f8] sm:$0xff]
        %v1489 = vld [vmem:[%s217 + $0x2500] sm:$0xff]
        %v1490 = vld [vmem:[%s217 + $0x2508] sm:$0xff]
        %v1491 = vld [vmem:[%s217 + $0x2510] sm:$0xff]
        %v1492 = vld [vmem:[%s217 + $0x2518] sm:$0xff]
        %v1493 = vld [vmem:[%s217 + $0x2520] sm:$0xff]
        %v1494 = vld [vmem:[%s217 + $0x2528] sm:$0xff]
        %v1495 = vld [vmem:[%s217 + $0x2530] sm:$0xff]
        %v1496 = vld [vmem:[%s217 + $0x2538] sm:$0xff]
        %v1497 = vld [vmem:[%s217 + $0x2540] sm:$0xff]
        %v1498 = vld [vmem:[%s217 + $0x2548] sm:$0xff]
        %v1499 = vld [vmem:[%s217 + $0x2550] sm:$0xff]
        %v1500 = vld [vmem:[%s217 + $0x2558] sm:$0xff]
        %v1501 = vld [vmem:[%s217 + $0x2560] sm:$0xff]
        %v1502 = vld [vmem:[%s217 + $0x2568] sm:$0xff]
        %v1503 = vld [vmem:[%s217 + $0x2570] sm:$0xff]
        %v1504 = vld [vmem:[%s217 + $0x2578] sm:$0xff]
        %v1505 = vld [vmem:[%s217 + $0x2580] sm:$0xf]
        %v1506 = vld [vmem:[%s217 + $0x2584] sm:$0xff]
        %v1507 = vld [vmem:[%s217 + $0x258c] sm:$0xff]
        %v1508 = vld [vmem:[%s217 + $0x2594] sm:$0xff]
        %v1509 = vld [vmem:[%s217 + $0x259c] sm:$0xff]
        %v1510 = vld [vmem:[%s217 + $0x25a4] sm:$0xff]
        %v1511 = vld [vmem:[%s217 + $0x25ac] sm:$0xff]
        %v1512 = vld [vmem:[%s217 + $0x25b4] sm:$0xff]
        %v1513 = vld [vmem:[%s217 + $0x25bc] sm:$0xff]
        %v1514 = vld [vmem:[%s217 + $0x25c4] sm:$0xff]
        %v1515 = vld [vmem:[%s217 + $0x25cc] sm:$0xff]
        %v1516 = vld [vmem:[%s217 + $0x25d4] sm:$0xff]
        %v1517 = vld [vmem:[%s217 + $0x25dc] sm:$0xff]
        %v1518 = vld [vmem:[%s217 + $0x25e4] sm:$0xff]
        %v1519 = vld [vmem:[%s217 + $0x25ec] sm:$0xff]
        %v1520 = vld [vmem:[%s217 + $0x25f4] sm:$0xff]
        %v1521 = vld [vmem:[%s217 + $0x25fc] sm:$0xff]
        %v1522 = vld [vmem:[%s217 + $0x2604] sm:$0xff]
        %v1523 = vld [vmem:[%s217 + $0x260c] sm:$0xff]
        %v1524 = vld [vmem:[%s217 + $0x2614] sm:$0xff]
        %v1525 = vld [vmem:[%s217 + $0x261c] sm:$0xff]
        %v1526 = vld [vmem:[%s217 + $0x2624] sm:$0xff]
        %v1527 = vld [vmem:[%s217 + $0x262c] sm:$0xff]
        %v1528 = vld [vmem:[%s217 + $0x2634] sm:$0xff]
        %v1529 = vld [vmem:[%s217 + $0x263c] sm:$0xff]
        %v1530 = vld [vmem:[%s217 + $0x2644] sm:$0xf]
        %v1531 = vld [vmem:[%s217 + $0x2648] sm:$0xff]
        %v1532 = vld [vmem:[%s217 + $0x2650] sm:$0xff]
        %v1533 = vld [vmem:[%s217 + $0x2658] sm:$0xff]
        %v1534 = vld [vmem:[%s217 + $0x2660] sm:$0xff]
        %v1535 = vld [vmem:[%s217 + $0x2668] sm:$0xff]
        %v1536 = vld [vmem:[%s217 + $0x2670] sm:$0xff]
        %v1537 = vld [vmem:[%s217 + $0x2678] sm:$0xff]
        %v1538 = vld [vmem:[%s217 + $0x2680] sm:$0xff]
        %v1539 = vld [vmem:[%s217 + $0x2688] sm:$0xff]
        %v1540 = vld [vmem:[%s217 + $0x2690] sm:$0xff]
        %v1541 = vld [vmem:[%s217 + $0x2698] sm:$0xff]
        %v1542 = vld [vmem:[%s217 + $0x26a0] sm:$0xff]
        %v1543 = vld [vmem:[%s217 + $0x26a8] sm:$0xff]
        %v1544 = vld [vmem:[%s217 + $0x26b0] sm:$0xff]
        %v1545 = vld [vmem:[%s217 + $0x26b8] sm:$0xff]
        %v1546 = vld [vmem:[%s217 + $0x26c0] sm:$0xff]
        %v1547 = vld [vmem:[%s217 + $0x26c8] sm:$0xff]
        %v1548 = vld [vmem:[%s217 + $0x26d0] sm:$0xff]
        %v1549 = vld [vmem:[%s217 + $0x26d8] sm:$0xff]
        %v1550 = vld [vmem:[%s217 + $0x26e0] sm:$0xff]
        %v1551 = vld [vmem:[%s217 + $0x26e8] sm:$0xff]
        %v1552 = vld [vmem:[%s217 + $0x26f0] sm:$0xff]
        %v1553 = vld [vmem:[%s217 + $0x26f8] sm:$0xff]
        %v1554 = vld [vmem:[%s217 + $0x2700] sm:$0xff]
        %v1555 = vld [vmem:[%s217 + $0x2708] sm:$0xf]
        %v1556 = vld [vmem:[%s217 + $0x270c] sm:$0xff]
        %v1557 = vld [vmem:[%s217 + $0x2714] sm:$0xff]
        %v1558 = vld [vmem:[%s217 + $0x271c] sm:$0xff]
        %v1559 = vld [vmem:[%s217 + $0x2724] sm:$0xff]
        %v1560 = vld [vmem:[%s217 + $0x272c] sm:$0xff]
        %v1561 = vld [vmem:[%s217 + $0x2734] sm:$0xff]
        %v1562 = vld [vmem:[%s217 + $0x273c] sm:$0xff]
        %v1563 = vld [vmem:[%s217 + $0x2744] sm:$0xff]
        %v1564 = vld [vmem:[%s217 + $0x274c] sm:$0xff]
        %v1565 = vld [vmem:[%s217 + $0x2754] sm:$0xff]
        %v1566 = vld [vmem:[%s217 + $0x275c] sm:$0xff]
        %v1567 = vld [vmem:[%s217 + $0x2764] sm:$0xff]
        %v1568 = vld [vmem:[%s217 + $0x276c] sm:$0xff]
        %v1569 = vld [vmem:[%s217 + $0x2774] sm:$0xff]
        %v1570 = vld [vmem:[%s217 + $0x277c] sm:$0xff]
        %v1571 = vld [vmem:[%s217 + $0x2784] sm:$0xff]
        %v1572 = vld [vmem:[%s217 + $0x278c] sm:$0xff]
        %v1573 = vld [vmem:[%s217 + $0x2794] sm:$0xff]
        %v1574 = vld [vmem:[%s217 + $0x279c] sm:$0xff]
        %v1575 = vld [vmem:[%s217 + $0x27a4] sm:$0xff]
        %v1576 = vld [vmem:[%s217 + $0x27ac] sm:$0xff]
        %v1577 = vld [vmem:[%s217 + $0x27b4] sm:$0xff]
        %v1578 = vld [vmem:[%s217 + $0x27bc] sm:$0xff]
        %v1579 = vld [vmem:[%s217 + $0x27c4] sm:$0xff]
        %v1580 = vld [vmem:[%s217 + $0x27cc] sm:$0xf]
        %v1581 = vld [vmem:[%s217 + $0x27d0] sm:$0xff]
        %v1582 = vld [vmem:[%s217 + $0x27d8] sm:$0xff]
        %v1583 = vld [vmem:[%s217 + $0x27e0] sm:$0xff]
        %v1584 = vld [vmem:[%s217 + $0x27e8] sm:$0xff]
        %v1585 = vld [vmem:[%s217 + $0x27f0] sm:$0xff]
        %v1586 = vld [vmem:[%s217 + $0x27f8] sm:$0xff]
        %v1587 = vld [vmem:[%s217 + $0x2800] sm:$0xff]
        %v1588 = vld [vmem:[%s217 + $0x2808] sm:$0xff]
        %v1589 = vld [vmem:[%s217 + $0x2810] sm:$0xff]
        %v1590 = vld [vmem:[%s217 + $0x2818] sm:$0xff]
        %v1591 = vld [vmem:[%s217 + $0x2820] sm:$0xff]
        %v1592 = vld [vmem:[%s217 + $0x2828] sm:$0xff]
        %v1593 = vld [vmem:[%s217 + $0x2830] sm:$0xff]
        %v1594 = vld [vmem:[%s217 + $0x2838] sm:$0xff]
        %v1595 = vld [vmem:[%s217 + $0x2840] sm:$0xff]
        %v1596 = vld [vmem:[%s217 + $0x2848] sm:$0xff]
        %v1597 = vld [vmem:[%s217 + $0x2850] sm:$0xff]
        %v1598 = vld [vmem:[%s217 + $0x2858] sm:$0xff]
        %v1599 = vld [vmem:[%s217 + $0x2860] sm:$0xff]
        %v1600 = vld [vmem:[%s217 + $0x2868] sm:$0xff]
        %v1601 = vld [vmem:[%s217 + $0x2870] sm:$0xff]
        %v1602 = vld [vmem:[%s217 + $0x2878] sm:$0xff]
        %v1603 = vld [vmem:[%s217 + $0x2880] sm:$0xff]
        %v1604 = vld [vmem:[%s217 + $0x2888] sm:$0xff]
        %v1605 = vld [vmem:[%s217 + $0x2890] sm:$0xf]
        %v1606 = vld [vmem:[%s217 + $0x2894] sm:$0xff]
        %v1607 = vld [vmem:[%s217 + $0x289c] sm:$0xff]
        %v1608 = vld [vmem:[%s217 + $0x28a4] sm:$0xff]
        %v1609 = vld [vmem:[%s217 + $0x28ac] sm:$0xff]
        %v1610 = vld [vmem:[%s217 + $0x28b4] sm:$0xff]
        %v1611 = vld [vmem:[%s217 + $0x28bc] sm:$0xff]
        %v1612 = vld [vmem:[%s217 + $0x28c4] sm:$0xff]
        %v1613 = vld [vmem:[%s217 + $0x28cc] sm:$0xff]
        %v1614 = vld [vmem:[%s217 + $0x28d4] sm:$0xff]
        %v1615 = vld [vmem:[%s217 + $0x28dc] sm:$0xff]
        %v1616 = vld [vmem:[%s217 + $0x28e4] sm:$0xff]
        %v1617 = vld [vmem:[%s217 + $0x28ec] sm:$0xff]
        %v1618 = vld [vmem:[%s217 + $0x28f4] sm:$0xff]
        %v1619 = vld [vmem:[%s217 + $0x28fc] sm:$0xff]
        %v1620 = vld [vmem:[%s217 + $0x2904] sm:$0xff]
        %v1621 = vld [vmem:[%s217 + $0x290c] sm:$0xff]
        %v1622 = vld [vmem:[%s217 + $0x2914] sm:$0xff]
        %v1623 = vld [vmem:[%s217 + $0x291c] sm:$0xff]
        %v1624 = vld [vmem:[%s217 + $0x2924] sm:$0xff]
        %v1625 = vld [vmem:[%s217 + $0x292c] sm:$0xff]
        %v1626 = vld [vmem:[%s217 + $0x2934] sm:$0xff]
        %v1627 = vld [vmem:[%s217 + $0x293c] sm:$0xff]
        %v1628 = vld [vmem:[%s217 + $0x2944] sm:$0xff]
        %v1629 = vld [vmem:[%s217 + $0x294c] sm:$0xff]
        %v1630 = vld [vmem:[%s217 + $0x2954] sm:$0xf]
        %v1631 = vld [vmem:[%s217 + $0x2958] sm:$0xff]
        %v1632 = vld [vmem:[%s217 + $0x2960] sm:$0xff]
        %v1633 = vld [vmem:[%s217 + $0x2968] sm:$0xff]
        %v1634 = vld [vmem:[%s217 + $0x2970] sm:$0xff]
        %v1635 = vld [vmem:[%s217 + $0x2978] sm:$0xff]
        %v1636 = vld [vmem:[%s217 + $0x2980] sm:$0xff]
        %v1637 = vld [vmem:[%s217 + $0x2988] sm:$0xff]
        %v1638 = vld [vmem:[%s217 + $0x2990] sm:$0xff]
        %v1639 = vld [vmem:[%s217 + $0x2998] sm:$0xff]
        %v1640 = vld [vmem:[%s217 + $0x29a0] sm:$0xff]
        %v1641 = vld [vmem:[%s217 + $0x29a8] sm:$0xff]
        %v1642 = vld [vmem:[%s217 + $0x29b0] sm:$0xff]
        %v1643 = vld [vmem:[%s217 + $0x29b8] sm:$0xff]
        %v1644 = vld [vmem:[%s217 + $0x29c0] sm:$0xff]
        %v1645 = vld [vmem:[%s217 + $0x29c8] sm:$0xff]
        %v1646 = vld [vmem:[%s217 + $0x29d0] sm:$0xff]
        %v1647 = vld [vmem:[%s217 + $0x29d8] sm:$0xff]
        %v1648 = vld [vmem:[%s217 + $0x29e0] sm:$0xff]
        %v1649 = vld [vmem:[%s217 + $0x29e8] sm:$0xff]
        %v1650 = vld [vmem:[%s217 + $0x29f0] sm:$0xff]
        %v1651 = vld [vmem:[%s217 + $0x29f8] sm:$0xff]
        %v1652 = vld [vmem:[%s217 + $0x2a00] sm:$0xff]
        %v1653 = vld [vmem:[%s217 + $0x2a08] sm:$0xff]
        %v1654 = vld [vmem:[%s217 + $0x2a10] sm:$0xff]
        %v1655 = vld [vmem:[%s217 + $0x2a18] sm:$0xf]
        %v1656 = vld [vmem:[%s217 + $0x2a1c] sm:$0xff]
        %v1657 = vld [vmem:[%s217 + $0x2a24] sm:$0xff]
        %v1658 = vld [vmem:[%s217 + $0x2a2c] sm:$0xff]
        %v1659 = vld [vmem:[%s217 + $0x2a34] sm:$0xff]
        %v1660 = vld [vmem:[%s217 + $0x2a3c] sm:$0xff]
        %v1661 = vld [vmem:[%s217 + $0x2a44] sm:$0xff]
        %v1662 = vld [vmem:[%s217 + $0x2a4c] sm:$0xff]
        %v1663 = vld [vmem:[%s217 + $0x2a54] sm:$0xff]
        %v1664 = vld [vmem:[%s217 + $0x2a5c] sm:$0xff]
        %v1665 = vld [vmem:[%s217 + $0x2a64] sm:$0xff]
        %v1666 = vld [vmem:[%s217 + $0x2a6c] sm:$0xff]
        %v1667 = vld [vmem:[%s217 + $0x2a74] sm:$0xff]
        %v1668 = vld [vmem:[%s217 + $0x2a7c] sm:$0xff]
        %v1669 = vld [vmem:[%s217 + $0x2a84] sm:$0xff]
        %v1670 = vld [vmem:[%s217 + $0x2a8c] sm:$0xff]
        %v1671 = vld [vmem:[%s217 + $0x2a94] sm:$0xff]
        %v1672 = vld [vmem:[%s217 + $0x2a9c] sm:$0xff]
        %v1673 = vld [vmem:[%s217 + $0x2aa4] sm:$0xff]
        %v1674 = vld [vmem:[%s217 + $0x2aac] sm:$0xff]
        %v1675 = vld [vmem:[%s217 + $0x2ab4] sm:$0xff]
        %v1676 = vld [vmem:[%s217 + $0x2abc] sm:$0xff]
        %v1677 = vld [vmem:[%s217 + $0x2ac4] sm:$0xff]
        %v1678 = vld [vmem:[%s217 + $0x2acc] sm:$0xff]
        %v1679 = vld [vmem:[%s217 + $0x2ad4] sm:$0xff]
        %v1680 = vld [vmem:[%s217 + $0x2adc] sm:$0xf]
        %v1681 = vld [vmem:[%s217 + $0x2ae0] sm:$0xff]
        %v1682 = vld [vmem:[%s217 + $0x2ae8] sm:$0xff]
        %v1683 = vld [vmem:[%s217 + $0x2af0] sm:$0xff]
        %v1684 = vld [vmem:[%s217 + $0x2af8] sm:$0xff]
        %v1685 = vld [vmem:[%s217 + $0x2b00] sm:$0xff]
        %v1686 = vld [vmem:[%s217 + $0x2b08] sm:$0xff]
        %v1687 = vld [vmem:[%s217 + $0x2b10] sm:$0xff]
        %v1688 = vld [vmem:[%s217 + $0x2b18] sm:$0xff]
        %v1689 = vld [vmem:[%s217 + $0x2b20] sm:$0xff]
        %v1690 = vld [vmem:[%s217 + $0x2b28] sm:$0xff]
        %v1691 = vld [vmem:[%s217 + $0x2b30] sm:$0xff]
        %v1692 = vld [vmem:[%s217 + $0x2b38] sm:$0xff]
        %v1693 = vld [vmem:[%s217 + $0x2b40] sm:$0xff]
        %v1694 = vld [vmem:[%s217 + $0x2b48] sm:$0xff]
        %v1695 = vld [vmem:[%s217 + $0x2b50] sm:$0xff]
        %v1696 = vld [vmem:[%s217 + $0x2b58] sm:$0xff]
        %v1697 = vld [vmem:[%s217 + $0x2b60] sm:$0xff]
        %v1698 = vld [vmem:[%s217 + $0x2b68] sm:$0xff]
        %v1699 = vld [vmem:[%s217 + $0x2b70] sm:$0xff]
        %v1700 = vld [vmem:[%s217 + $0x2b78] sm:$0xff]
        %v1701 = vld [vmem:[%s217 + $0x2b80] sm:$0xff]
        %v1702 = vld [vmem:[%s217 + $0x2b88] sm:$0xff]
        %v1703 = vld [vmem:[%s217 + $0x2b90] sm:$0xff]
        %v1704 = vld [vmem:[%s217 + $0x2b98] sm:$0xff]
        %v1705 = vld [vmem:[%s217 + $0x2ba0] sm:$0xf]
        %v1706 = vld [vmem:[%s217 + $0x2ba4] sm:$0xff]
        %v1707 = vld [vmem:[%s217 + $0x2bac] sm:$0xff]
        %v1708 = vld [vmem:[%s217 + $0x2bb4] sm:$0xff]
        %v1709 = vld [vmem:[%s217 + $0x2bbc] sm:$0xff]
        %v1710 = vld [vmem:[%s217 + $0x2bc4] sm:$0xff]
        %v1711 = vld [vmem:[%s217 + $0x2bcc] sm:$0xff]
        %v1712 = vld [vmem:[%s217 + $0x2bd4] sm:$0xff]
        %v1713 = vld [vmem:[%s217 + $0x2bdc] sm:$0xff]
        %v1714 = vld [vmem:[%s217 + $0x2be4] sm:$0xff]
        %v1715 = vld [vmem:[%s217 + $0x2bec] sm:$0xff]
        %v1716 = vld [vmem:[%s217 + $0x2bf4] sm:$0xff]
        %v1717 = vld [vmem:[%s217 + $0x2bfc] sm:$0xff]
        %v1718 = vld [vmem:[%s217 + $0x2c04] sm:$0xff]
        %v1719 = vld [vmem:[%s217 + $0x2c0c] sm:$0xff]
        %v1720 = vld [vmem:[%s217 + $0x2c14] sm:$0xff]
        %v1721 = vld [vmem:[%s217 + $0x2c1c] sm:$0xff]
        %v1722 = vld [vmem:[%s217 + $0x2c24] sm:$0xff]
        %v1723 = vld [vmem:[%s217 + $0x2c2c] sm:$0xff]
        %v1724 = vld [vmem:[%s217 + $0x2c34] sm:$0xff]
        %v1725 = vld [vmem:[%s217 + $0x2c3c] sm:$0xff]
        %v1726 = vld [vmem:[%s217 + $0x2c44] sm:$0xff]
        %v1727 = vld [vmem:[%s217 + $0x2c4c] sm:$0xff]
        %v1728 = vld [vmem:[%s217 + $0x2c54] sm:$0xff]
        %v1729 = vld [vmem:[%s217 + $0x2c5c] sm:$0xff]
        %v1730 = vld [vmem:[%s217 + $0x2c64] sm:$0xf]
        %v1731 = vld [vmem:[%s217 + $0x2c68] sm:$0xff]
        %v1732 = vld [vmem:[%s217 + $0x2c70] sm:$0xff]
        %v1733 = vld [vmem:[%s217 + $0x2c78] sm:$0xff]
        %v1734 = vld [vmem:[%s217 + $0x2c80] sm:$0xff]
        %v1735 = vld [vmem:[%s217 + $0x2c88] sm:$0xff]
        %v1736 = vld [vmem:[%s217 + $0x2c90] sm:$0xff]
        %v1737 = vld [vmem:[%s217 + $0x2c98] sm:$0xff]
        %v1738 = vld [vmem:[%s217 + $0x2ca0] sm:$0xff]
        %v1739 = vld [vmem:[%s217 + $0x2ca8] sm:$0xff]
        %v1740 = vld [vmem:[%s217 + $0x2cb0] sm:$0xff]
        %v1741 = vld [vmem:[%s217 + $0x2cb8] sm:$0xff]
        %v1742 = vld [vmem:[%s217 + $0x2cc0] sm:$0xff]
        %v1743 = vld [vmem:[%s217 + $0x2cc8] sm:$0xff]
        %v1744 = vld [vmem:[%s217 + $0x2cd0] sm:$0xff]
        %v1745 = vld [vmem:[%s217 + $0x2cd8] sm:$0xff]
        %v1746 = vld [vmem:[%s217 + $0x2ce0] sm:$0xff]
        %v1747 = vld [vmem:[%s217 + $0x2ce8] sm:$0xff]
        %v1748 = vld [vmem:[%s217 + $0x2cf0] sm:$0xff]
        %v1749 = vld [vmem:[%s217 + $0x2cf8] sm:$0xff]
        %v1750 = vld [vmem:[%s217 + $0x2d00] sm:$0xff]
        %v1751 = vld [vmem:[%s217 + $0x2d08] sm:$0xff]
        %v1752 = vld [vmem:[%s217 + $0x2d10] sm:$0xff]
        %v1753 = vld [vmem:[%s217 + $0x2d18] sm:$0xff]
        %v1754 = vld [vmem:[%s217 + $0x2d20] sm:$0xff]
        %v1755 = vld [vmem:[%s217 + $0x2d28] sm:$0xf]
        %v1756 = vld [vmem:[%s217 + $0x2d2c] sm:$0xff]
        %v1757 = vld [vmem:[%s217 + $0x2d34] sm:$0xff]
        %v1758 = vld [vmem:[%s217 + $0x2d3c] sm:$0xff]
        %v1759 = vld [vmem:[%s217 + $0x2d44] sm:$0xff]
        %v1760 = vld [vmem:[%s217 + $0x2d4c] sm:$0xff]
        %v1761 = vld [vmem:[%s217 + $0x2d54] sm:$0xff]
        %v1762 = vld [vmem:[%s217 + $0x2d5c] sm:$0xff]
        %v1763 = vld [vmem:[%s217 + $0x2d64] sm:$0xff]
        %v1764 = vld [vmem:[%s217 + $0x2d6c] sm:$0xff]
        %v1765 = vld [vmem:[%s217 + $0x2d74] sm:$0xff]
        %v1766 = vld [vmem:[%s217 + $0x2d7c] sm:$0xff]
        %v1767 = vld [vmem:[%s217 + $0x2d84] sm:$0xff]
        %v1768 = vld [vmem:[%s217 + $0x2d8c] sm:$0xff]
        %v1769 = vld [vmem:[%s217 + $0x2d94] sm:$0xff]
        %v1770 = vld [vmem:[%s217 + $0x2d9c] sm:$0xff]
        %v1771 = vld [vmem:[%s217 + $0x2da4] sm:$0xff]
        %v1772 = vld [vmem:[%s217 + $0x2dac] sm:$0xff]
        %v1773 = vld [vmem:[%s217 + $0x2db4] sm:$0xff]
        %v1774 = vld [vmem:[%s217 + $0x2dbc] sm:$0xff]
        %v1775 = vld [vmem:[%s217 + $0x2dc4] sm:$0xff]
        %v1776 = vld [vmem:[%s217 + $0x2dcc] sm:$0xff]
        %v1777 = vld [vmem:[%s217 + $0x2dd4] sm:$0xff]
        %v1778 = vld [vmem:[%s217 + $0x2ddc] sm:$0xff]
        %v1779 = vld [vmem:[%s217 + $0x2de4] sm:$0xff]
        %v1780 = vld [vmem:[%s217 + $0x2dec] sm:$0xf]
        %v1781 = vld [vmem:[%s217 + $0x2df0] sm:$0xff]
        %v1782 = vld [vmem:[%s217 + $0x2df8] sm:$0xff]
        %v1783 = vld [vmem:[%s217 + $0x2e00] sm:$0xff]
        %v1784 = vld [vmem:[%s217 + $0x2e08] sm:$0xff]
        %v1785 = vld [vmem:[%s217 + $0x2e10] sm:$0xff]
        %v1786 = vld [vmem:[%s217 + $0x2e18] sm:$0xff]
        %v1787 = vld [vmem:[%s217 + $0x2e20] sm:$0xff]
        %v1788 = vld [vmem:[%s217 + $0x2e28] sm:$0xff]
        %v1789 = vld [vmem:[%s217 + $0x2e30] sm:$0xff]
        %v1790 = vld [vmem:[%s217 + $0x2e38] sm:$0xff]
        %v1791 = vld [vmem:[%s217 + $0x2e40] sm:$0xff]
        %v1792 = vld [vmem:[%s217 + $0x2e48] sm:$0xff]
        %v1793 = vld [vmem:[%s217 + $0x2e50] sm:$0xff]
        %v1794 = vld [vmem:[%s217 + $0x2e58] sm:$0xff]
        %v1795 = vld [vmem:[%s217 + $0x2e60] sm:$0xff]
        %v1796 = vld [vmem:[%s217 + $0x2e68] sm:$0xff]
        %v1797 = vld [vmem:[%s217 + $0x2e70] sm:$0xff]
        %v1798 = vld [vmem:[%s217 + $0x2e78] sm:$0xff]
        %v1799 = vld [vmem:[%s217 + $0x2e80] sm:$0xff]
        %v1800 = vld [vmem:[%s217 + $0x2e88] sm:$0xff]
        %v1801 = vld [vmem:[%s217 + $0x2e90] sm:$0xff]
        %v1802 = vld [vmem:[%s217 + $0x2e98] sm:$0xff]
        %v1803 = vld [vmem:[%s217 + $0x2ea0] sm:$0xff]
        %v1804 = vld [vmem:[%s217 + $0x2ea8] sm:$0xff]
        %v1805 = vld [vmem:[%s217 + $0x2eb0] sm:$0xf]
        %v1806 = vld [vmem:[%s217 + $0x2eb4] sm:$0xff]
        %v1807 = vld [vmem:[%s217 + $0x2ebc] sm:$0xff]
        %v1808 = vld [vmem:[%s217 + $0x2ec4] sm:$0xff]
        %v1809 = vld [vmem:[%s217 + $0x2ecc] sm:$0xff]
        %v1810 = vld [vmem:[%s217 + $0x2ed4] sm:$0xff]
        %v1811 = vld [vmem:[%s217 + $0x2edc] sm:$0xff]
        %v1812 = vld [vmem:[%s217 + $0x2ee4] sm:$0xff]
        %v1813 = vld [vmem:[%s217 + $0x2eec] sm:$0xff]
        %v1814 = vld [vmem:[%s217 + $0x2ef4] sm:$0xff]
        %v1815 = vld [vmem:[%s217 + $0x2efc] sm:$0xff]
        %v1816 = vld [vmem:[%s217 + $0x2f04] sm:$0xff]
        %v1817 = vld [vmem:[%s217 + $0x2f0c] sm:$0xff]
        %v1818 = vld [vmem:[%s217 + $0x2f14] sm:$0xff]
        %v1819 = vld [vmem:[%s217 + $0x2f1c] sm:$0xff]
        %v1820 = vld [vmem:[%s217 + $0x2f24] sm:$0xff]
        %v1821 = vld [vmem:[%s217 + $0x2f2c] sm:$0xff]
        %v1822 = vld [vmem:[%s217 + $0x2f34] sm:$0xff]
        %v1823 = vld [vmem:[%s217 + $0x2f3c] sm:$0xff]
        %v1824 = vld [vmem:[%s217 + $0x2f44] sm:$0xff]
        %v1825 = vld [vmem:[%s217 + $0x2f4c] sm:$0xff]
        %v1826 = vld [vmem:[%s217 + $0x2f54] sm:$0xff]
        %v1827 = vld [vmem:[%s217 + $0x2f5c] sm:$0xff]
        %v1828 = vld [vmem:[%s217 + $0x2f64] sm:$0xff]
        %v1829 = vld [vmem:[%s217 + $0x2f6c] sm:$0xff]
        %v1830 = vld [vmem:[%s217 + $0x2f74] sm:$0xf]
        %v1831 = vld [vmem:[%s217 + $0x2f78] sm:$0xff]
        %v1832 = vld [vmem:[%s217 + $0x2f80] sm:$0xff]
        %v1833 = vld [vmem:[%s217 + $0x2f88] sm:$0xff]
        %v1834 = vld [vmem:[%s217 + $0x2f90] sm:$0xff]
        %v1835 = vld [vmem:[%s217 + $0x2f98] sm:$0xff]
        %v1836 = vld [vmem:[%s217 + $0x2fa0] sm:$0xff]
        %v1837 = vld [vmem:[%s217 + $0x2fa8] sm:$0xff]
        %v1838 = vld [vmem:[%s217 + $0x2fb0] sm:$0xff]
        %v1839 = vld [vmem:[%s217 + $0x2fb8] sm:$0xff]
        %v1840 = vld [vmem:[%s217 + $0x2fc0] sm:$0xff]
        %v1841 = vld [vmem:[%s217 + $0x2fc8] sm:$0xff]
        %v1842 = vld [vmem:[%s217 + $0x2fd0] sm:$0xff]
        %v1843 = vld [vmem:[%s217 + $0x2fd8] sm:$0xff]
        %v1844 = vld [vmem:[%s217 + $0x2fe0] sm:$0xff]
        %v1845 = vld [vmem:[%s217 + $0x2fe8] sm:$0xff]
        %v1846 = vld [vmem:[%s217 + $0x2ff0] sm:$0xff]
        %v1847 = vld [vmem:[%s217 + $0x2ff8] sm:$0xff]
        %v1848 = vld [vmem:[%s217 + $0x3000] sm:$0xff]
        %v1849 = vld [vmem:[%s217 + $0x3008] sm:$0xff]
        %v1850 = vld [vmem:[%s217 + $0x3010] sm:$0xff]
        %v1851 = vld [vmem:[%s217 + $0x3018] sm:$0xff]
        %v1852 = vld [vmem:[%s217 + $0x3020] sm:$0xff]
        %v1853 = vld [vmem:[%s217 + $0x3028] sm:$0xff]
        %v1854 = vld [vmem:[%s217 + $0x3030] sm:$0xff]
        %v1855 = vld [vmem:[%s217 + $0x3038] sm:$0xf]
        %v1856 = vld [vmem:[%s217 + $0x303c] sm:$0xff]
        %v1857 = vld [vmem:[%s217 + $0x3044] sm:$0xff]
        %v1858 = vld [vmem:[%s217 + $0x304c] sm:$0xff]
        %v1859 = vld [vmem:[%s217 + $0x3054] sm:$0xff]
        %v1860 = vld [vmem:[%s217 + $0x305c] sm:$0xff]
        %v1861 = vld [vmem:[%s217 + $0x3064] sm:$0xff]
        %v1862 = vld [vmem:[%s217 + $0x306c] sm:$0xff]
        %v1863 = vld [vmem:[%s217 + $0x3074] sm:$0xff]
        %v1864 = vld [vmem:[%s217 + $0x307c] sm:$0xff]
        %v1865 = vld [vmem:[%s217 + $0x3084] sm:$0xff]
        %v1866 = vld [vmem:[%s217 + $0x308c] sm:$0xff]
        %v1867 = vld [vmem:[%s217 + $0x3094] sm:$0xff]
        %v1868 = vld [vmem:[%s217 + $0x309c] sm:$0xff]
        %v1869 = vld [vmem:[%s217 + $0x30a4] sm:$0xff]
        %v1870 = vld [vmem:[%s217 + $0x30ac] sm:$0xff]
        %v1871 = vld [vmem:[%s217 + $0x30b4] sm:$0xff]
        %v1872 = vld [vmem:[%s217 + $0x30bc] sm:$0xff]
        %v1873 = vld [vmem:[%s217 + $0x30c4] sm:$0xff]
        %v1874 = vld [vmem:[%s217 + $0x30cc] sm:$0xff]
        %v1875 = vld [vmem:[%s217 + $0x30d4] sm:$0xff]
        %v1876 = vld [vmem:[%s217 + $0x30dc] sm:$0xff]
        %v1877 = vld [vmem:[%s217 + $0x30e4] sm:$0xff]
        %v1878 = vld [vmem:[%s217 + $0x30ec] sm:$0xff]
        %v1879 = vld [vmem:[%s217 + $0x30f4] sm:$0xff]
        %v1880 = vld [vmem:[%s217 + $0x30fc] sm:$0xf]
        %v1888 = vcombine.high %v274, %v274
        %v1890 = vunpack.c.l.s4 1966171168
        %v1891 = vunpack.c.0.s8 %v1890
        %v1892 = vlaneseq
        %v1893 = vshrl.u32 %v1892, 7
        %v1894 = vsub.s32 %v1891, %v1893
        %v1895 = vrot.slane %v274, %v1894
        %v1897 = vunpack.c.l.s4 1966171168
        %v1898 = vunpack.c.0.s8 %v1897
        %v1899 = vlaneseq
        %v1900 = vshrl.u32 %v1899, 7
        %v1901 = vsub.s32 %v1898, %v1900
        %v1902 = vrot.slane %v1888, %v1901
        %v1903 = vcombine.high %v1895, %v1895
        %v1904 = vcombine.high %v1902, %v1902
        %v1906 = vunpack.c.l.s4 1966171168
        %v1907 = vunpack.c.0.s8 %v1906
        %v1908 = vlaneseq
        %v1909 = vshrl.u32 %v1908, 7
        %v1910 = vsub.s32 %v1907, %v1909
        %v1911 = vrot.slane %v1895, %v1910
        %v1913 = vunpack.c.l.s4 1966171168
        %v1914 = vunpack.c.0.s8 %v1913
        %v1915 = vlaneseq
        %v1916 = vshrl.u32 %v1915, 7
        %v1917 = vsub.s32 %v1914, %v1916
        %v1918 = vrot.slane %v1902, %v1917
        %v1920 = vunpack.c.l.s4 1966171168
        %v1921 = vunpack.c.0.s8 %v1920
        %v1922 = vlaneseq
        %v1923 = vshrl.u32 %v1922, 7
        %v1924 = vsub.s32 %v1921, %v1923
        %v1925 = vrot.slane %v1903, %v1924
        %v1927 = vunpack.c.l.s4 1966171168
        %v1928 = vunpack.c.0.s8 %v1927
        %v1929 = vlaneseq
        %v1930 = vshrl.u32 %v1929, 7
        %v1931 = vsub.s32 %v1928, %v1930
        %v1932 = vrot.slane %v1904, %v1931
        %v1933 = vcombine.high %v1911, %v1911
        %v1934 = vcombine.high %v1918, %v1918
        %v1935 = vcombine.high %v1925, %v1925
        %v1936 = vcombine.high %v1932, %v1932
        %v1937 = vcombine.high %v275, %v275
        %v1939 = vunpack.c.l.s4 1966171168
        %v1940 = vunpack.c.0.s8 %v1939
        %v1941 = vlaneseq
        %v1942 = vshrl.u32 %v1941, 7
        %v1943 = vsub.s32 %v1940, %v1942
        %v1944 = vrot.slane %v275, %v1943
        %v1946 = vunpack.c.l.s4 1966171168
        %v1947 = vunpack.c.0.s8 %v1946
        %v1948 = vlaneseq
        %v1949 = vshrl.u32 %v1948, 7
        %v1950 = vsub.s32 %v1947, %v1949
        %v1951 = vrot.slane %v1937, %v1950
        %v1952 = vcombine.high %v1944, %v1944
        %v1953 = vcombine.high %v1951, %v1951
        %v1955 = vunpack.c.l.s4 1966171168
        %v1956 = vunpack.c.0.s8 %v1955
        %v1957 = vlaneseq
        %v1958 = vshrl.u32 %v1957, 7
        %v1959 = vsub.s32 %v1956, %v1958
        %v1960 = vrot.slane %v1944, %v1959
        %v1962 = vunpack.c.l.s4 1966171168
        %v1963 = vunpack.c.0.s8 %v1962
        %v1964 = vlaneseq
        %v1965 = vshrl.u32 %v1964, 7
        %v1966 = vsub.s32 %v1963, %v1965
        %v1967 = vrot.slane %v1951, %v1966
        %v1969 = vunpack.c.l.s4 1966171168
        %v1970 = vunpack.c.0.s8 %v1969
        %v1971 = vlaneseq
        %v1972 = vshrl.u32 %v1971, 7
        %v1973 = vsub.s32 %v1970, %v1972
        %v1974 = vrot.slane %v1952, %v1973
        %v1976 = vunpack.c.l.s4 1966171168
        %v1977 = vunpack.c.0.s8 %v1976
        %v1978 = vlaneseq
        %v1979 = vshrl.u32 %v1978, 7
        %v1980 = vsub.s32 %v1977, %v1979
        %v1981 = vrot.slane %v1953, %v1980
        %v1982 = vcombine.high %v1960, %v1960
        %v1983 = vcombine.high %v1967, %v1967
        %v1984 = vcombine.high %v1974, %v1974
        %v1985 = vcombine.high %v1981, %v1981
        %v1986 = vcombine.high %v276, %v276
        %v1988 = vunpack.c.l.s4 1966171168
        %v1989 = vunpack.c.0.s8 %v1988
        %v1990 = vlaneseq
        %v1991 = vshrl.u32 %v1990, 7
        %v1992 = vsub.s32 %v1989, %v1991
        %v1993 = vrot.slane %v276, %v1992
        %v1995 = vunpack.c.l.s4 1966171168
        %v1996 = vunpack.c.0.s8 %v1995
        %v1997 = vlaneseq
        %v1998 = vshrl.u32 %v1997, 7
        %v1999 = vsub.s32 %v1996, %v1998
        %v2000 = vrot.slane %v1986, %v1999
        %v2001 = vcombine.high %v1993, %v1993
        %v2002 = vcombine.high %v2000, %v2000
        %v2004 = vunpack.c.l.s4 1966171168
        %v2005 = vunpack.c.0.s8 %v2004
        %v2006 = vlaneseq
        %v2007 = vshrl.u32 %v2006, 7
        %v2008 = vsub.s32 %v2005, %v2007
        %v2009 = vrot.slane %v1993, %v2008
        %v2011 = vunpack.c.l.s4 1966171168
        %v2012 = vunpack.c.0.s8 %v2011
        %v2013 = vlaneseq
        %v2014 = vshrl.u32 %v2013, 7
        %v2015 = vsub.s32 %v2012, %v2014
        %v2016 = vrot.slane %v2000, %v2015
        %v2018 = vunpack.c.l.s4 1966171168
        %v2019 = vunpack.c.0.s8 %v2018
        %v2020 = vlaneseq
        %v2021 = vshrl.u32 %v2020, 7
        %v2022 = vsub.s32 %v2019, %v2021
        %v2023 = vrot.slane %v2001, %v2022
        %v2025 = vunpack.c.l.s4 1966171168
        %v2026 = vunpack.c.0.s8 %v2025
        %v2027 = vlaneseq
        %v2028 = vshrl.u32 %v2027, 7
        %v2029 = vsub.s32 %v2026, %v2028
        %v2030 = vrot.slane %v2002, %v2029
        %v2031 = vcombine.high %v2009, %v2009
        %v2032 = vcombine.high %v2016, %v2016
        %v2033 = vcombine.high %v2023, %v2023
        %v2034 = vcombine.high %v2030, %v2030
        %v2035 = vcombine.high %v277, %v277
        %v2037 = vunpack.c.l.s4 1966171168
        %v2038 = vunpack.c.0.s8 %v2037
        %v2039 = vlaneseq
        %v2040 = vshrl.u32 %v2039, 7
        %v2041 = vsub.s32 %v2038, %v2040
        %v2042 = vrot.slane %v277, %v2041
        %v2044 = vunpack.c.l.s4 1966171168
        %v2045 = vunpack.c.0.s8 %v2044
        %v2046 = vlaneseq
        %v2047 = vshrl.u32 %v2046, 7
        %v2048 = vsub.s32 %v2045, %v2047
        %v2049 = vrot.slane %v2035, %v2048
        %v2050 = vcombine.high %v2042, %v2042
        %v2051 = vcombine.high %v2049, %v2049
        %v2053 = vunpack.c.l.s4 1966171168
        %v2054 = vunpack.c.0.s8 %v2053
        %v2055 = vlaneseq
        %v2056 = vshrl.u32 %v2055, 7
        %v2057 = vsub.s32 %v2054, %v2056
        %v2058 = vrot.slane %v2042, %v2057
        %v2060 = vunpack.c.l.s4 1966171168
        %v2061 = vunpack.c.0.s8 %v2060
        %v2062 = vlaneseq
        %v2063 = vshrl.u32 %v2062, 7
        %v2064 = vsub.s32 %v2061, %v2063
        %v2065 = vrot.slane %v2049, %v2064
        %v2067 = vunpack.c.l.s4 1966171168
        %v2068 = vunpack.c.0.s8 %v2067
        %v2069 = vlaneseq
        %v2070 = vshrl.u32 %v2069, 7
        %v2071 = vsub.s32 %v2068, %v2070
        %v2072 = vrot.slane %v2050, %v2071
        %v2074 = vunpack.c.l.s4 1966171168
        %v2075 = vunpack.c.0.s8 %v2074
        %v2076 = vlaneseq
        %v2077 = vshrl.u32 %v2076, 7
        %v2078 = vsub.s32 %v2075, %v2077
        %v2079 = vrot.slane %v2051, %v2078
        %v2080 = vcombine.high %v2058, %v2058
        %v2081 = vcombine.high %v2065, %v2065
        %v2082 = vcombine.high %v2072, %v2072
        %v2083 = vcombine.high %v2079, %v2079
        %v2084 = vcombine.high %v278, %v278
        %v2086 = vunpack.c.l.s4 1966171168
        %v2087 = vunpack.c.0.s8 %v2086
        %v2088 = vlaneseq
        %v2089 = vshrl.u32 %v2088, 7
        %v2090 = vsub.s32 %v2087, %v2089
        %v2091 = vrot.slane %v278, %v2090
        %v2093 = vunpack.c.l.s4 1966171168
        %v2094 = vunpack.c.0.s8 %v2093
        %v2095 = vlaneseq
        %v2096 = vshrl.u32 %v2095, 7
        %v2097 = vsub.s32 %v2094, %v2096
        %v2098 = vrot.slane %v2084, %v2097
        %v2099 = vcombine.high %v2091, %v2091
        %v2100 = vcombine.high %v2098, %v2098
        %v2102 = vunpack.c.l.s4 1966171168
        %v2103 = vunpack.c.0.s8 %v2102
        %v2104 = vlaneseq
        %v2105 = vshrl.u32 %v2104, 7
        %v2106 = vsub.s32 %v2103, %v2105
        %v2107 = vrot.slane %v2091, %v2106
        %v2109 = vunpack.c.l.s4 1966171168
        %v2110 = vunpack.c.0.s8 %v2109
        %v2111 = vlaneseq
        %v2112 = vshrl.u32 %v2111, 7
        %v2113 = vsub.s32 %v2110, %v2112
        %v2114 = vrot.slane %v2098, %v2113
        %v2116 = vunpack.c.l.s4 1966171168
        %v2117 = vunpack.c.0.s8 %v2116
        %v2118 = vlaneseq
        %v2119 = vshrl.u32 %v2118, 7
        %v2120 = vsub.s32 %v2117, %v2119
        %v2121 = vrot.slane %v2099, %v2120
        %v2123 = vunpack.c.l.s4 1966171168
        %v2124 = vunpack.c.0.s8 %v2123
        %v2125 = vlaneseq
        %v2126 = vshrl.u32 %v2125, 7
        %v2127 = vsub.s32 %v2124, %v2126
        %v2128 = vrot.slane %v2100, %v2127
        %v2129 = vcombine.high %v2107, %v2107
        %v2130 = vcombine.high %v2114, %v2114
        %v2131 = vcombine.high %v2121, %v2121
        %v2132 = vcombine.high %v2128, %v2128
        %v2133 = vcombine.high %v279, %v279
        %v2135 = vunpack.c.l.s4 1966171168
        %v2136 = vunpack.c.0.s8 %v2135
        %v2137 = vlaneseq
        %v2138 = vshrl.u32 %v2137, 7
        %v2139 = vsub.s32 %v2136, %v2138
        %v2140 = vrot.slane %v279, %v2139
        %v2142 = vunpack.c.l.s4 1966171168
        %v2143 = vunpack.c.0.s8 %v2142
        %v2144 = vlaneseq
        %v2145 = vshrl.u32 %v2144, 7
        %v2146 = vsub.s32 %v2143, %v2145
        %v2147 = vrot.slane %v2133, %v2146
        %v2148 = vcombine.high %v2140, %v2140
        %v2149 = vcombine.high %v2147, %v2147
        %v2151 = vunpack.c.l.s4 1966171168
        %v2152 = vunpack.c.0.s8 %v2151
        %v2153 = vlaneseq
        %v2154 = vshrl.u32 %v2153, 7
        %v2155 = vsub.s32 %v2152, %v2154
        %v2156 = vrot.slane %v2140, %v2155
        %v2158 = vunpack.c.l.s4 1966171168
        %v2159 = vunpack.c.0.s8 %v2158
        %v2160 = vlaneseq
        %v2161 = vshrl.u32 %v2160, 7
        %v2162 = vsub.s32 %v2159, %v2161
        %v2163 = vrot.slane %v2147, %v2162
        %v2165 = vunpack.c.l.s4 1966171168
        %v2166 = vunpack.c.0.s8 %v2165
        %v2167 = vlaneseq
        %v2168 = vshrl.u32 %v2167, 7
        %v2169 = vsub.s32 %v2166, %v2168
        %v2170 = vrot.slane %v2148, %v2169
        %v2172 = vunpack.c.l.s4 1966171168
        %v2173 = vunpack.c.0.s8 %v2172
        %v2174 = vlaneseq
        %v2175 = vshrl.u32 %v2174, 7
        %v2176 = vsub.s32 %v2173, %v2175
        %v2177 = vrot.slane %v2149, %v2176
        %v2178 = vcombine.high %v2156, %v2156
        %v2179 = vcombine.high %v2163, %v2163
        %v2180 = vcombine.high %v2170, %v2170
        %v2181 = vcombine.high %v2177, %v2177
        %v2183 = vunpack.c.l.s4 1966171168
        %v2184 = vunpack.c.0.s8 %v2183
        %v2185 = vlaneseq
        %v2186 = vshrl.u32 %v2185, 7
        %v2187 = vsub.s32 %v2184, %v2186
        %v2188 = vrot.slane %v280, %v2187
        %v2190 = vunpack.c.l.s4 1966171168
        %v2191 = vunpack.c.0.s8 %v2190
        %v2192 = vlaneseq
        %v2193 = vshrl.u32 %v2192, 7
        %v2194 = vsub.s32 %v2191, %v2193
        %v2195 = vrot.slane %v2188, %v2194
        %v3845 = vunpack.c.l.b16 %v281
        %v3846 = vunpack.c.h.b16 %v281
        %v3847 = vunpack.c.l.b16 %v282
        %v3848 = vunpack.c.h.b16 %v282
        %v3849 = vunpack.c.l.b16 %v283
        %v3850 = vunpack.c.h.b16 %v283
        %v3851 = vunpack.c.l.b16 %v284
        %v3852 = vunpack.c.h.b16 %v284
        %v3853 = vunpack.c.l.b16 %v285
        %v3854 = vunpack.c.h.b16 %v285
        %v3855 = vunpack.c.l.b16 %v286
        %v3856 = vunpack.c.h.b16 %v286
        %v3857 = vunpack.c.l.b16 %v287
        %v3858 = vunpack.c.h.b16 %v287
        %v3859 = vunpack.c.l.b16 %v288
        %v3860 = vunpack.c.h.b16 %v288
        %v3861 = vunpack.c.l.b16 %v289
        %v3862 = vunpack.c.h.b16 %v289
        %v3863 = vunpack.c.l.b16 %v290
        %v3864 = vunpack.c.h.b16 %v290
        %v3865 = vunpack.c.l.b16 %v291
        %v3866 = vunpack.c.h.b16 %v291
        %v3867 = vunpack.c.l.b16 %v292
        %v3868 = vunpack.c.h.b16 %v292
        %v3869 = vunpack.c.l.b16 %v293
        %v3870 = vunpack.c.h.b16 %v293
        %v3871 = vunpack.c.l.b16 %v294
        %v3872 = vunpack.c.h.b16 %v294
        %v3873 = vunpack.c.l.b16 %v295
        %v3874 = vunpack.c.h.b16 %v295
        %v3875 = vunpack.c.l.b16 %v296
        %v3876 = vunpack.c.h.b16 %v296
        %v3877 = vunpack.c.l.b16 %v297
        %v3878 = vunpack.c.h.b16 %v297
        %v3879 = vunpack.c.l.b16 %v298
        %v3880 = vunpack.c.h.b16 %v298
        %v3881 = vunpack.c.l.b16 %v299
        %v3882 = vunpack.c.h.b16 %v299
        %v3883 = vunpack.c.l.b16 %v300
        %v3884 = vunpack.c.h.b16 %v300
        %v3885 = vunpack.c.l.b16 %v301
        %v3886 = vunpack.c.h.b16 %v301
        %v3887 = vunpack.c.l.b16 %v302
        %v3888 = vunpack.c.h.b16 %v302
        %v3889 = vunpack.c.l.b16 %v303
        %v3890 = vunpack.c.h.b16 %v303
        %v3891 = vunpack.c.l.b16 %v304
        %v3892 = vunpack.c.h.b16 %v304
        %v3893 = vunpack.c.l.b16 %v305
        %v3894 = vunpack.c.l.b16 %v306
        %v3895 = vunpack.c.h.b16 %v306
        %v3896 = vunpack.c.l.b16 %v307
        %v3897 = vunpack.c.h.b16 %v307
        %v3898 = vunpack.c.l.b16 %v308
        %v3899 = vunpack.c.h.b16 %v308
        %v3900 = vunpack.c.l.b16 %v309
        %v3901 = vunpack.c.h.b16 %v309
        %v3902 = vunpack.c.l.b16 %v310
        %v3903 = vunpack.c.h.b16 %v310
        %v3904 = vunpack.c.l.b16 %v311
        %v3905 = vunpack.c.h.b16 %v311
        %v3906 = vunpack.c.l.b16 %v312
        %v3907 = vunpack.c.h.b16 %v312
        %v3908 = vunpack.c.l.b16 %v313
        %v3909 = vunpack.c.h.b16 %v313
        %v3910 = vunpack.c.l.b16 %v314
        %v3911 = vunpack.c.h.b16 %v314
        %v3912 = vunpack.c.l.b16 %v315
        %v3913 = vunpack.c.h.b16 %v315
        %v3914 = vunpack.c.l.b16 %v316
        %v3915 = vunpack.c.h.b16 %v316
        %v3916 = vunpack.c.l.b16 %v317
        %v3917 = vunpack.c.h.b16 %v317
        %v3918 = vunpack.c.l.b16 %v318
        %v3919 = vunpack.c.h.b16 %v318
        %v3920 = vunpack.c.l.b16 %v319
        %v3921 = vunpack.c.h.b16 %v319
        %v3922 = vunpack.c.l.b16 %v320
        %v3923 = vunpack.c.h.b16 %v320
        %v3924 = vunpack.c.l.b16 %v321
        %v3925 = vunpack.c.h.b16 %v321
        %v3926 = vunpack.c.l.b16 %v322
        %v3927 = vunpack.c.h.b16 %v322
        %v3928 = vunpack.c.l.b16 %v323
        %v3929 = vunpack.c.h.b16 %v323
        %v3930 = vunpack.c.l.b16 %v324
        %v3931 = vunpack.c.h.b16 %v324
        %v3932 = vunpack.c.l.b16 %v325
        %v3933 = vunpack.c.h.b16 %v325
        %v3934 = vunpack.c.l.b16 %v326
        %v3935 = vunpack.c.h.b16 %v326
        %v3936 = vunpack.c.l.b16 %v327
        %v3937 = vunpack.c.h.b16 %v327
        %v3938 = vunpack.c.l.b16 %v328
        %v3939 = vunpack.c.h.b16 %v328
        %v3940 = vunpack.c.l.b16 %v329
        %v3941 = vunpack.c.h.b16 %v329
        %v3942 = vunpack.c.l.b16 %v330
        %v3943 = vunpack.c.l.b16 %v331
        %v3944 = vunpack.c.h.b16 %v331
        %v3945 = vunpack.c.l.b16 %v332
        %v3946 = vunpack.c.h.b16 %v332
        %v3947 = vunpack.c.l.b16 %v333
        %v3948 = vunpack.c.h.b16 %v333
        %v3949 = vunpack.c.l.b16 %v334
        %v3950 = vunpack.c.h.b16 %v334
        %v3951 = vunpack.c.l.b16 %v335
        %v3952 = vunpack.c.h.b16 %v335
        %v3953 = vunpack.c.l.b16 %v336
        %v3954 = vunpack.c.h.b16 %v336
        %v3955 = vunpack.c.l.b16 %v337
        %v3956 = vunpack.c.h.b16 %v337
        %v3957 = vunpack.c.l.b16 %v338
        %v3958 = vunpack.c.h.b16 %v338
        %v3959 = vunpack.c.l.b16 %v339
        %v3960 = vunpack.c.h.b16 %v339
        %v3961 = vunpack.c.l.b16 %v340
        %v3962 = vunpack.c.h.b16 %v340
        %v3963 = vunpack.c.l.b16 %v341
        %v3964 = vunpack.c.h.b16 %v341
        %v3965 = vunpack.c.l.b16 %v342
        %v3966 = vunpack.c.h.b16 %v342
        %v3967 = vunpack.c.l.b16 %v343
        %v3968 = vunpack.c.h.b16 %v343
        %v3969 = vunpack.c.l.b16 %v344
        %v3970 = vunpack.c.h.b16 %v344
        %v3971 = vunpack.c.l.b16 %v345
        %v3972 = vunpack.c.h.b16 %v345
        %v3973 = vunpack.c.l.b16 %v346
        %v3974 = vunpack.c.h.b16 %v346
        %v3975 = vunpack.c.l.b16 %v347
        %v3976 = vunpack.c.h.b16 %v347
        %v3977 = vunpack.c.l.b16 %v348
        %v3978 = vunpack.c.h.b16 %v348
        %v3979 = vunpack.c.l.b16 %v349
        %v3980 = vunpack.c.h.b16 %v349
        %v3981 = vunpack.c.l.b16 %v350
        %v3982 = vunpack.c.h.b16 %v350
        %v3983 = vunpack.c.l.b16 %v351
        %v3984 = vunpack.c.h.b16 %v351
        %v3985 = vunpack.c.l.b16 %v352
        %v3986 = vunpack.c.h.b16 %v352
        %v3987 = vunpack.c.l.b16 %v353
        %v3988 = vunpack.c.h.b16 %v353
        %v3989 = vunpack.c.l.b16 %v354
        %v3990 = vunpack.c.h.b16 %v354
        %v3991 = vunpack.c.l.b16 %v355
        %v3992 = vunpack.c.l.b16 %v356
        %v3993 = vunpack.c.h.b16 %v356
        %v3994 = vunpack.c.l.b16 %v357
        %v3995 = vunpack.c.h.b16 %v357
        %v3996 = vunpack.c.l.b16 %v358
        %v3997 = vunpack.c.h.b16 %v358
        %v3998 = vunpack.c.l.b16 %v359
        %v3999 = vunpack.c.h.b16 %v359
        %v4000 = vunpack.c.l.b16 %v360
        %v4001 = vunpack.c.h.b16 %v360
        %v4002 = vunpack.c.l.b16 %v361
        %v4003 = vunpack.c.h.b16 %v361
        %v4004 = vunpack.c.l.b16 %v362
        %v4005 = vunpack.c.h.b16 %v362
        %v4006 = vunpack.c.l.b16 %v363
        %v4007 = vunpack.c.h.b16 %v363
        %v4008 = vunpack.c.l.b16 %v364
        %v4009 = vunpack.c.h.b16 %v364
        %v4010 = vunpack.c.l.b16 %v365
        %v4011 = vunpack.c.h.b16 %v365
        %v4012 = vunpack.c.l.b16 %v366
        %v4013 = vunpack.c.h.b16 %v366
        %v4014 = vunpack.c.l.b16 %v367
        %v4015 = vunpack.c.h.b16 %v367
        %v4016 = vunpack.c.l.b16 %v368
        %v4017 = vunpack.c.h.b16 %v368
        %v4018 = vunpack.c.l.b16 %v369
        %v4019 = vunpack.c.h.b16 %v369
        %v4020 = vunpack.c.l.b16 %v370
        %v4021 = vunpack.c.h.b16 %v370
        %v4022 = vunpack.c.l.b16 %v371
        %v4023 = vunpack.c.h.b16 %v371
        %v4024 = vunpack.c.l.b16 %v372
        %v4025 = vunpack.c.h.b16 %v372
        %v4026 = vunpack.c.l.b16 %v373
        %v4027 = vunpack.c.h.b16 %v373
        %v4028 = vunpack.c.l.b16 %v374
        %v4029 = vunpack.c.h.b16 %v374
        %v4030 = vunpack.c.l.b16 %v375
        %v4031 = vunpack.c.h.b16 %v375
        %v4032 = vunpack.c.l.b16 %v376
        %v4033 = vunpack.c.h.b16 %v376
        %v4034 = vunpack.c.l.b16 %v377
        %v4035 = vunpack.c.h.b16 %v377
        %v4036 = vunpack.c.l.b16 %v378
        %v4037 = vunpack.c.h.b16 %v378
        %v4038 = vunpack.c.l.b16 %v379
        %v4039 = vunpack.c.h.b16 %v379
        %v4040 = vunpack.c.l.b16 %v380
        %v4041 = vunpack.c.l.b16 %v381
        %v4042 = vunpack.c.h.b16 %v381
        %v4043 = vunpack.c.l.b16 %v382
        %v4044 = vunpack.c.h.b16 %v382
        %v4045 = vunpack.c.l.b16 %v383
        %v4046 = vunpack.c.h.b16 %v383
        %v4047 = vunpack.c.l.b16 %v384
        %v4048 = vunpack.c.h.b16 %v384
        %v4049 = vunpack.c.l.b16 %v385
        %v4050 = vunpack.c.h.b16 %v385
        %v4051 = vunpack.c.l.b16 %v386
        %v4052 = vunpack.c.h.b16 %v386
        %v4053 = vunpack.c.l.b16 %v387
        %v4054 = vunpack.c.h.b16 %v387
        %v4055 = vunpack.c.l.b16 %v388
        %v4056 = vunpack.c.h.b16 %v388
        %v4057 = vunpack.c.l.b16 %v389
        %v4058 = vunpack.c.h.b16 %v389
        %v4059 = vunpack.c.l.b16 %v390
        %v4060 = vunpack.c.h.b16 %v390
        %v4061 = vunpack.c.l.b16 %v391
        %v4062 = vunpack.c.h.b16 %v391
        %v4063 = vunpack.c.l.b16 %v392
        %v4064 = vunpack.c.h.b16 %v392
        %v4065 = vunpack.c.l.b16 %v393
        %v4066 = vunpack.c.h.b16 %v393
        %v4067 = vunpack.c.l.b16 %v394
        %v4068 = vunpack.c.h.b16 %v394
        %v4069 = vunpack.c.l.b16 %v395
        %v4070 = vunpack.c.h.b16 %v395
        %v4071 = vunpack.c.l.b16 %v396
        %v4072 = vunpack.c.h.b16 %v396
        %v4073 = vunpack.c.l.b16 %v397
        %v4074 = vunpack.c.h.b16 %v397
        %v4075 = vunpack.c.l.b16 %v398
        %v4076 = vunpack.c.h.b16 %v398
        %v4077 = vunpack.c.l.b16 %v399
        %v4078 = vunpack.c.h.b16 %v399
        %v4079 = vunpack.c.l.b16 %v400
        %v4080 = vunpack.c.h.b16 %v400
        %v4081 = vunpack.c.l.b16 %v401
        %v4082 = vunpack.c.h.b16 %v401
        %v4083 = vunpack.c.l.b16 %v402
        %v4084 = vunpack.c.h.b16 %v402
        %v4085 = vunpack.c.l.b16 %v403
        %v4086 = vunpack.c.h.b16 %v403
        %v4087 = vunpack.c.l.b16 %v404
        %v4088 = vunpack.c.h.b16 %v404
        %v4089 = vunpack.c.l.b16 %v405
        %v4090 = vunpack.c.l.b16 %v406
        %v4091 = vunpack.c.h.b16 %v406
        %v4092 = vunpack.c.l.b16 %v407
        %v4093 = vunpack.c.h.b16 %v407
        %v4094 = vunpack.c.l.b16 %v408
        %v4095 = vunpack.c.h.b16 %v408
        %v4096 = vunpack.c.l.b16 %v409
        %v4097 = vunpack.c.h.b16 %v409
        %v4098 = vunpack.c.l.b16 %v410
        %v4099 = vunpack.c.h.b16 %v410
        %v4100 = vunpack.c.l.b16 %v411
        %v4101 = vunpack.c.h.b16 %v411
        %v4102 = vunpack.c.l.b16 %v412
        %v4103 = vunpack.c.h.b16 %v412
        %v4104 = vunpack.c.l.b16 %v413
        %v4105 = vunpack.c.h.b16 %v413
        %v4106 = vunpack.c.l.b16 %v414
        %v4107 = vunpack.c.h.b16 %v414
        %v4108 = vunpack.c.l.b16 %v415
        %v4109 = vunpack.c.h.b16 %v415
        %v4110 = vunpack.c.l.b16 %v416
        %v4111 = vunpack.c.h.b16 %v416
        %v4112 = vunpack.c.l.b16 %v417
        %v4113 = vunpack.c.h.b16 %v417
        %v4114 = vunpack.c.l.b16 %v418
        %v4115 = vunpack.c.h.b16 %v418
        %v4116 = vunpack.c.l.b16 %v419
        %v4117 = vunpack.c.h.b16 %v419
        %v4118 = vunpack.c.l.b16 %v420
        %v4119 = vunpack.c.h.b16 %v420
        %v4120 = vunpack.c.l.b16 %v421
        %v4121 = vunpack.c.h.b16 %v421
        %v4122 = vunpack.c.l.b16 %v422
        %v4123 = vunpack.c.h.b16 %v422
        %v4124 = vunpack.c.l.b16 %v423
        %v4125 = vunpack.c.h.b16 %v423
        %v4126 = vunpack.c.l.b16 %v424
        %v4127 = vunpack.c.h.b16 %v424
        %v4128 = vunpack.c.l.b16 %v425
        %v4129 = vunpack.c.h.b16 %v425
        %v4130 = vunpack.c.l.b16 %v426
        %v4131 = vunpack.c.h.b16 %v426
        %v4132 = vunpack.c.l.b16 %v427
        %v4133 = vunpack.c.h.b16 %v427
        %v4134 = vunpack.c.l.b16 %v428
        %v4135 = vunpack.c.h.b16 %v428
        %v4136 = vunpack.c.l.b16 %v429
        %v4137 = vunpack.c.h.b16 %v429
        %v4138 = vunpack.c.l.b16 %v430
        %v4139 = vunpack.c.l.b16 %v431
        %v4140 = vunpack.c.h.b16 %v431
        %v4141 = vunpack.c.l.b16 %v432
        %v4142 = vunpack.c.h.b16 %v432
        %v4143 = vunpack.c.l.b16 %v433
        %v4144 = vunpack.c.h.b16 %v433
        %v4145 = vunpack.c.l.b16 %v434
        %v4146 = vunpack.c.h.b16 %v434
        %v4147 = vunpack.c.l.b16 %v435
        %v4148 = vunpack.c.h.b16 %v435
        %v4149 = vunpack.c.l.b16 %v436
        %v4150 = vunpack.c.h.b16 %v436
        %v4151 = vunpack.c.l.b16 %v437
        %v4152 = vunpack.c.h.b16 %v437
        %v4153 = vunpack.c.l.b16 %v438
        %v4154 = vunpack.c.h.b16 %v438
        %v4155 = vunpack.c.l.b16 %v439
        %v4156 = vunpack.c.h.b16 %v439
        %v4157 = vunpack.c.l.b16 %v440
        %v4158 = vunpack.c.h.b16 %v440
        %v4159 = vunpack.c.l.b16 %v441
        %v4160 = vunpack.c.h.b16 %v441
        %v4161 = vunpack.c.l.b16 %v442
        %v4162 = vunpack.c.h.b16 %v442
        %v4163 = vunpack.c.l.b16 %v443
        %v4164 = vunpack.c.h.b16 %v443
        %v4165 = vunpack.c.l.b16 %v444
        %v4166 = vunpack.c.h.b16 %v444
        %v4167 = vunpack.c.l.b16 %v445
        %v4168 = vunpack.c.h.b16 %v445
        %v4169 = vunpack.c.l.b16 %v446
        %v4170 = vunpack.c.h.b16 %v446
        %v4171 = vunpack.c.l.b16 %v447
        %v4172 = vunpack.c.h.b16 %v447
        %v4173 = vunpack.c.l.b16 %v448
        %v4174 = vunpack.c.h.b16 %v448
        %v4175 = vunpack.c.l.b16 %v449
        %v4176 = vunpack.c.h.b16 %v449
        %v4177 = vunpack.c.l.b16 %v450
        %v4178 = vunpack.c.h.b16 %v450
        %v4179 = vunpack.c.l.b16 %v451
        %v4180 = vunpack.c.h.b16 %v451
        %v4181 = vunpack.c.l.b16 %v452
        %v4182 = vunpack.c.h.b16 %v452
        %v4183 = vunpack.c.l.b16 %v453
        %v4184 = vunpack.c.h.b16 %v453
        %v4185 = vunpack.c.l.b16 %v454
        %v4186 = vunpack.c.h.b16 %v454
        %v4187 = vunpack.c.l.b16 %v455
        %v4188 = vunpack.c.l.b16 %v456
        %v4189 = vunpack.c.h.b16 %v456
        %v4190 = vunpack.c.l.b16 %v457
        %v4191 = vunpack.c.h.b16 %v457
        %v4192 = vunpack.c.l.b16 %v458
        %v4193 = vunpack.c.h.b16 %v458
        %v4194 = vunpack.c.l.b16 %v459
        %v4195 = vunpack.c.h.b16 %v459
        %v4196 = vunpack.c.l.b16 %v460
        %v4197 = vunpack.c.h.b16 %v460
        %v4198 = vunpack.c.l.b16 %v461
        %v4199 = vunpack.c.h.b16 %v461
        %v4200 = vunpack.c.l.b16 %v462
        %v4201 = vunpack.c.h.b16 %v462
        %v4202 = vunpack.c.l.b16 %v463
        %v4203 = vunpack.c.h.b16 %v463
        %v4204 = vunpack.c.l.b16 %v464
        %v4205 = vunpack.c.h.b16 %v464
        %v4206 = vunpack.c.l.b16 %v465
        %v4207 = vunpack.c.h.b16 %v465
        %v4208 = vunpack.c.l.b16 %v466
        %v4209 = vunpack.c.h.b16 %v466
        %v4210 = vunpack.c.l.b16 %v467
        %v4211 = vunpack.c.h.b16 %v467
        %v4212 = vunpack.c.l.b16 %v468
        %v4213 = vunpack.c.h.b16 %v468
        %v4214 = vunpack.c.l.b16 %v469
        %v4215 = vunpack.c.h.b16 %v469
        %v4216 = vunpack.c.l.b16 %v470
        %v4217 = vunpack.c.h.b16 %v470
        %v4218 = vunpack.c.l.b16 %v471
        %v4219 = vunpack.c.h.b16 %v471
        %v4220 = vunpack.c.l.b16 %v472
        %v4221 = vunpack.c.h.b16 %v472
        %v4222 = vunpack.c.l.b16 %v473
        %v4223 = vunpack.c.h.b16 %v473
        %v4224 = vunpack.c.l.b16 %v474
        %v4225 = vunpack.c.h.b16 %v474
        %v4226 = vunpack.c.l.b16 %v475
        %v4227 = vunpack.c.h.b16 %v475
        %v4228 = vunpack.c.l.b16 %v476
        %v4229 = vunpack.c.h.b16 %v476
        %v4230 = vunpack.c.l.b16 %v477
        %v4231 = vunpack.c.h.b16 %v477
        %v4232 = vunpack.c.l.b16 %v478
        %v4233 = vunpack.c.h.b16 %v478
        %v4234 = vunpack.c.l.b16 %v479
        %v4235 = vunpack.c.h.b16 %v479
        %v4236 = vunpack.c.l.b16 %v480
        %v4237 = vunpack.c.l.b16 %v481
        %v4238 = vunpack.c.h.b16 %v481
        %v4239 = vunpack.c.l.b16 %v482
        %v4240 = vunpack.c.h.b16 %v482
        %v4241 = vunpack.c.l.b16 %v483
        %v4242 = vunpack.c.h.b16 %v483
        %v4243 = vunpack.c.l.b16 %v484
        %v4244 = vunpack.c.h.b16 %v484
        %v4245 = vunpack.c.l.b16 %v485
        %v4246 = vunpack.c.h.b16 %v485
        %v4247 = vunpack.c.l.b16 %v486
        %v4248 = vunpack.c.h.b16 %v486
        %v4249 = vunpack.c.l.b16 %v487
        %v4250 = vunpack.c.h.b16 %v487
        %v4251 = vunpack.c.l.b16 %v488
        %v4252 = vunpack.c.h.b16 %v488
        %v4253 = vunpack.c.l.b16 %v489
        %v4254 = vunpack.c.h.b16 %v489
        %v4255 = vunpack.c.l.b16 %v490
        %v4256 = vunpack.c.h.b16 %v490
        %v4257 = vunpack.c.l.b16 %v491
        %v4258 = vunpack.c.h.b16 %v491
        %v4259 = vunpack.c.l.b16 %v492
        %v4260 = vunpack.c.h.b16 %v492
        %v4261 = vunpack.c.l.b16 %v493
        %v4262 = vunpack.c.h.b16 %v493
        %v4263 = vunpack.c.l.b16 %v494
        %v4264 = vunpack.c.h.b16 %v494
        %v4265 = vunpack.c.l.b16 %v495
        %v4266 = vunpack.c.h.b16 %v495
        %v4267 = vunpack.c.l.b16 %v496
        %v4268 = vunpack.c.h.b16 %v496
        %v4269 = vunpack.c.l.b16 %v497
        %v4270 = vunpack.c.h.b16 %v497
        %v4271 = vunpack.c.l.b16 %v498
        %v4272 = vunpack.c.h.b16 %v498
        %v4273 = vunpack.c.l.b16 %v499
        %v4274 = vunpack.c.h.b16 %v499
        %v4275 = vunpack.c.l.b16 %v500
        %v4276 = vunpack.c.h.b16 %v500
        %v4277 = vunpack.c.l.b16 %v501
        %v4278 = vunpack.c.h.b16 %v501
        %v4279 = vunpack.c.l.b16 %v502
        %v4280 = vunpack.c.h.b16 %v502
        %v4281 = vunpack.c.l.b16 %v503
        %v4282 = vunpack.c.h.b16 %v503
        %v4283 = vunpack.c.l.b16 %v504
        %v4284 = vunpack.c.h.b16 %v504
        %v4285 = vunpack.c.l.b16 %v505
        %v4286 = vunpack.c.l.b16 %v506
        %v4287 = vunpack.c.h.b16 %v506
        %v4288 = vunpack.c.l.b16 %v507
        %v4289 = vunpack.c.h.b16 %v507
        %v4290 = vunpack.c.l.b16 %v508
        %v4291 = vunpack.c.h.b16 %v508
        %v4292 = vunpack.c.l.b16 %v509
        %v4293 = vunpack.c.h.b16 %v509
        %v4294 = vunpack.c.l.b16 %v510
        %v4295 = vunpack.c.h.b16 %v510
        %v4296 = vunpack.c.l.b16 %v511
        %v4297 = vunpack.c.h.b16 %v511
        %v4298 = vunpack.c.l.b16 %v512
        %v4299 = vunpack.c.h.b16 %v512
        %v4300 = vunpack.c.l.b16 %v513
        %v4301 = vunpack.c.h.b16 %v513
        %v4302 = vunpack.c.l.b16 %v514
        %v4303 = vunpack.c.h.b16 %v514
        %v4304 = vunpack.c.l.b16 %v515
        %v4305 = vunpack.c.h.b16 %v515
        %v4306 = vunpack.c.l.b16 %v516
        %v4307 = vunpack.c.h.b16 %v516
        %v4308 = vunpack.c.l.b16 %v517
        %v4309 = vunpack.c.h.b16 %v517
        %v4310 = vunpack.c.l.b16 %v518
        %v4311 = vunpack.c.h.b16 %v518
        %v4312 = vunpack.c.l.b16 %v519
        %v4313 = vunpack.c.h.b16 %v519
        %v4314 = vunpack.c.l.b16 %v520
        %v4315 = vunpack.c.h.b16 %v520
        %v4316 = vunpack.c.l.b16 %v521
        %v4317 = vunpack.c.h.b16 %v521
        %v4318 = vunpack.c.l.b16 %v522
        %v4319 = vunpack.c.h.b16 %v522
        %v4320 = vunpack.c.l.b16 %v523
        %v4321 = vunpack.c.h.b16 %v523
        %v4322 = vunpack.c.l.b16 %v524
        %v4323 = vunpack.c.h.b16 %v524
        %v4324 = vunpack.c.l.b16 %v525
        %v4325 = vunpack.c.h.b16 %v525
        %v4326 = vunpack.c.l.b16 %v526
        %v4327 = vunpack.c.h.b16 %v526
        %v4328 = vunpack.c.l.b16 %v527
        %v4329 = vunpack.c.h.b16 %v527
        %v4330 = vunpack.c.l.b16 %v528
        %v4331 = vunpack.c.h.b16 %v528
        %v4332 = vunpack.c.l.b16 %v529
        %v4333 = vunpack.c.h.b16 %v529
        %v4334 = vunpack.c.l.b16 %v530
        %v4335 = vunpack.c.l.b16 %v531
        %v4336 = vunpack.c.h.b16 %v531
        %v4337 = vunpack.c.l.b16 %v532
        %v4338 = vunpack.c.h.b16 %v532
        %v4339 = vunpack.c.l.b16 %v533
        %v4340 = vunpack.c.h.b16 %v533
        %v4341 = vunpack.c.l.b16 %v534
        %v4342 = vunpack.c.h.b16 %v534
        %v4343 = vunpack.c.l.b16 %v535
        %v4344 = vunpack.c.h.b16 %v535
        %v4345 = vunpack.c.l.b16 %v536
        %v4346 = vunpack.c.h.b16 %v536
        %v4347 = vunpack.c.l.b16 %v537
        %v4348 = vunpack.c.h.b16 %v537
        %v4349 = vunpack.c.l.b16 %v538
        %v4350 = vunpack.c.h.b16 %v538
        %v4351 = vunpack.c.l.b16 %v539
        %v4352 = vunpack.c.h.b16 %v539
        %v4353 = vunpack.c.l.b16 %v540
        %v4354 = vunpack.c.h.b16 %v540
        %v4355 = vunpack.c.l.b16 %v541
        %v4356 = vunpack.c.h.b16 %v541
        %v4357 = vunpack.c.l.b16 %v542
        %v4358 = vunpack.c.h.b16 %v542
        %v4359 = vunpack.c.l.b16 %v543
        %v4360 = vunpack.c.h.b16 %v543
        %v4361 = vunpack.c.l.b16 %v544
        %v4362 = vunpack.c.h.b16 %v544
        %v4363 = vunpack.c.l.b16 %v545
        %v4364 = vunpack.c.h.b16 %v545
        %v4365 = vunpack.c.l.b16 %v546
        %v4366 = vunpack.c.h.b16 %v546
        %v4367 = vunpack.c.l.b16 %v547
        %v4368 = vunpack.c.h.b16 %v547
        %v4369 = vunpack.c.l.b16 %v548
        %v4370 = vunpack.c.h.b16 %v548
        %v4371 = vunpack.c.l.b16 %v549
        %v4372 = vunpack.c.h.b16 %v549
        %v4373 = vunpack.c.l.b16 %v550
        %v4374 = vunpack.c.h.b16 %v550
        %v4375 = vunpack.c.l.b16 %v551
        %v4376 = vunpack.c.h.b16 %v551
        %v4377 = vunpack.c.l.b16 %v552
        %v4378 = vunpack.c.h.b16 %v552
        %v4379 = vunpack.c.l.b16 %v553
        %v4380 = vunpack.c.h.b16 %v553
        %v4381 = vunpack.c.l.b16 %v554
        %v4382 = vunpack.c.h.b16 %v554
        %v4383 = vunpack.c.l.b16 %v555
        %v4384 = vunpack.c.l.b16 %v556
        %v4385 = vunpack.c.h.b16 %v556
        %v4386 = vunpack.c.l.b16 %v557
        %v4387 = vunpack.c.h.b16 %v557
        %v4388 = vunpack.c.l.b16 %v558
        %v4389 = vunpack.c.h.b16 %v558
        %v4390 = vunpack.c.l.b16 %v559
        %v4391 = vunpack.c.h.b16 %v559
        %v4392 = vunpack.c.l.b16 %v560
        %v4393 = vunpack.c.h.b16 %v560
        %v4394 = vunpack.c.l.b16 %v561
        %v4395 = vunpack.c.h.b16 %v561
        %v4396 = vunpack.c.l.b16 %v562
        %v4397 = vunpack.c.h.b16 %v562
        %v4398 = vunpack.c.l.b16 %v563
        %v4399 = vunpack.c.h.b16 %v563
        %v4400 = vunpack.c.l.b16 %v564
        %v4401 = vunpack.c.h.b16 %v564
        %v4402 = vunpack.c.l.b16 %v565
        %v4403 = vunpack.c.h.b16 %v565
        %v4404 = vunpack.c.l.b16 %v566
        %v4405 = vunpack.c.h.b16 %v566
        %v4406 = vunpack.c.l.b16 %v567
        %v4407 = vunpack.c.h.b16 %v567
        %v4408 = vunpack.c.l.b16 %v568
        %v4409 = vunpack.c.h.b16 %v568
        %v4410 = vunpack.c.l.b16 %v569
        %v4411 = vunpack.c.h.b16 %v569
        %v4412 = vunpack.c.l.b16 %v570
        %v4413 = vunpack.c.h.b16 %v570
        %v4414 = vunpack.c.l.b16 %v571
        %v4415 = vunpack.c.h.b16 %v571
        %v4416 = vunpack.c.l.b16 %v572
        %v4417 = vunpack.c.h.b16 %v572
        %v4418 = vunpack.c.l.b16 %v573
        %v4419 = vunpack.c.h.b16 %v573
        %v4420 = vunpack.c.l.b16 %v574
        %v4421 = vunpack.c.h.b16 %v574
        %v4422 = vunpack.c.l.b16 %v575
        %v4423 = vunpack.c.h.b16 %v575
        %v4424 = vunpack.c.l.b16 %v576
        %v4425 = vunpack.c.h.b16 %v576
        %v4426 = vunpack.c.l.b16 %v577
        %v4427 = vunpack.c.h.b16 %v577
        %v4428 = vunpack.c.l.b16 %v578
        %v4429 = vunpack.c.h.b16 %v578
        %v4430 = vunpack.c.l.b16 %v579
        %v4431 = vunpack.c.h.b16 %v579
        %v4432 = vunpack.c.l.b16 %v580
        %v4433 = vunpack.c.l.b16 %v581
        %v4434 = vunpack.c.h.b16 %v581
        %v4435 = vunpack.c.l.b16 %v582
        %v4436 = vunpack.c.h.b16 %v582
        %v4437 = vunpack.c.l.b16 %v583
        %v4438 = vunpack.c.h.b16 %v583
        %v4439 = vunpack.c.l.b16 %v584
        %v4440 = vunpack.c.h.b16 %v584
        %v4441 = vunpack.c.l.b16 %v585
        %v4442 = vunpack.c.h.b16 %v585
        %v4443 = vunpack.c.l.b16 %v586
        %v4444 = vunpack.c.h.b16 %v586
        %v4445 = vunpack.c.l.b16 %v587
        %v4446 = vunpack.c.h.b16 %v587
        %v4447 = vunpack.c.l.b16 %v588
        %v4448 = vunpack.c.h.b16 %v588
        %v4449 = vunpack.c.l.b16 %v589
        %v4450 = vunpack.c.h.b16 %v589
        %v4451 = vunpack.c.l.b16 %v590
        %v4452 = vunpack.c.h.b16 %v590
        %v4453 = vunpack.c.l.b16 %v591
        %v4454 = vunpack.c.h.b16 %v591
        %v4455 = vunpack.c.l.b16 %v592
        %v4456 = vunpack.c.h.b16 %v592
        %v4457 = vunpack.c.l.b16 %v593
        %v4458 = vunpack.c.h.b16 %v593
        %v4459 = vunpack.c.l.b16 %v594
        %v4460 = vunpack.c.h.b16 %v594
        %v4461 = vunpack.c.l.b16 %v595
        %v4462 = vunpack.c.h.b16 %v595
        %v4463 = vunpack.c.l.b16 %v596
        %v4464 = vunpack.c.h.b16 %v596
        %v4465 = vunpack.c.l.b16 %v597
        %v4466 = vunpack.c.h.b16 %v597
        %v4467 = vunpack.c.l.b16 %v598
        %v4468 = vunpack.c.h.b16 %v598
        %v4469 = vunpack.c.l.b16 %v599
        %v4470 = vunpack.c.h.b16 %v599
        %v4471 = vunpack.c.l.b16 %v600
        %v4472 = vunpack.c.h.b16 %v600
        %v4473 = vunpack.c.l.b16 %v601
        %v4474 = vunpack.c.h.b16 %v601
        %v4475 = vunpack.c.l.b16 %v602
        %v4476 = vunpack.c.h.b16 %v602
        %v4477 = vunpack.c.l.b16 %v603
        %v4478 = vunpack.c.h.b16 %v603
        %v4479 = vunpack.c.l.b16 %v604
        %v4480 = vunpack.c.h.b16 %v604
        %v4481 = vunpack.c.l.b16 %v605
        %v4482 = vunpack.c.l.b16 %v606
        %v4483 = vunpack.c.h.b16 %v606
        %v4484 = vunpack.c.l.b16 %v607
        %v4485 = vunpack.c.h.b16 %v607
        %v4486 = vunpack.c.l.b16 %v608
        %v4487 = vunpack.c.h.b16 %v608
        %v4488 = vunpack.c.l.b16 %v609
        %v4489 = vunpack.c.h.b16 %v609
        %v4490 = vunpack.c.l.b16 %v610
        %v4491 = vunpack.c.h.b16 %v610
        %v4492 = vunpack.c.l.b16 %v611
        %v4493 = vunpack.c.h.b16 %v611
        %v4494 = vunpack.c.l.b16 %v612
        %v4495 = vunpack.c.h.b16 %v612
        %v4496 = vunpack.c.l.b16 %v613
        %v4497 = vunpack.c.h.b16 %v613
        %v4498 = vunpack.c.l.b16 %v614
        %v4499 = vunpack.c.h.b16 %v614
        %v4500 = vunpack.c.l.b16 %v615
        %v4501 = vunpack.c.h.b16 %v615
        %v4502 = vunpack.c.l.b16 %v616
        %v4503 = vunpack.c.h.b16 %v616
        %v4504 = vunpack.c.l.b16 %v617
        %v4505 = vunpack.c.h.b16 %v617
        %v4506 = vunpack.c.l.b16 %v618
        %v4507 = vunpack.c.h.b16 %v618
        %v4508 = vunpack.c.l.b16 %v619
        %v4509 = vunpack.c.h.b16 %v619
        %v4510 = vunpack.c.l.b16 %v620
        %v4511 = vunpack.c.h.b16 %v620
        %v4512 = vunpack.c.l.b16 %v621
        %v4513 = vunpack.c.h.b16 %v621
        %v4514 = vunpack.c.l.b16 %v622
        %v4515 = vunpack.c.h.b16 %v622
        %v4516 = vunpack.c.l.b16 %v623
        %v4517 = vunpack.c.h.b16 %v623
        %v4518 = vunpack.c.l.b16 %v624
        %v4519 = vunpack.c.h.b16 %v624
        %v4520 = vunpack.c.l.b16 %v625
        %v4521 = vunpack.c.h.b16 %v625
        %v4522 = vunpack.c.l.b16 %v626
        %v4523 = vunpack.c.h.b16 %v626
        %v4524 = vunpack.c.l.b16 %v627
        %v4525 = vunpack.c.h.b16 %v627
        %v4526 = vunpack.c.l.b16 %v628
        %v4527 = vunpack.c.h.b16 %v628
        %v4528 = vunpack.c.l.b16 %v629
        %v4529 = vunpack.c.h.b16 %v629
        %v4530 = vunpack.c.l.b16 %v630
        %v4531 = vunpack.c.l.b16 %v631
        %v4532 = vunpack.c.h.b16 %v631
        %v4533 = vunpack.c.l.b16 %v632
        %v4534 = vunpack.c.h.b16 %v632
        %v4535 = vunpack.c.l.b16 %v633
        %v4536 = vunpack.c.h.b16 %v633
        %v4537 = vunpack.c.l.b16 %v634
        %v4538 = vunpack.c.h.b16 %v634
        %v4539 = vunpack.c.l.b16 %v635
        %v4540 = vunpack.c.h.b16 %v635
        %v4541 = vunpack.c.l.b16 %v636
        %v4542 = vunpack.c.h.b16 %v636
        %v4543 = vunpack.c.l.b16 %v637
        %v4544 = vunpack.c.h.b16 %v637
        %v4545 = vunpack.c.l.b16 %v638
        %v4546 = vunpack.c.h.b16 %v638
        %v4547 = vunpack.c.l.b16 %v639
        %v4548 = vunpack.c.h.b16 %v639
        %v4549 = vunpack.c.l.b16 %v640
        %v4550 = vunpack.c.h.b16 %v640
        %v4551 = vunpack.c.l.b16 %v641
        %v4552 = vunpack.c.h.b16 %v641
        %v4553 = vunpack.c.l.b16 %v642
        %v4554 = vunpack.c.h.b16 %v642
        %v4555 = vunpack.c.l.b16 %v643
        %v4556 = vunpack.c.h.b16 %v643
        %v4557 = vunpack.c.l.b16 %v644
        %v4558 = vunpack.c.h.b16 %v644
        %v4559 = vunpack.c.l.b16 %v645
        %v4560 = vunpack.c.h.b16 %v645
        %v4561 = vunpack.c.l.b16 %v646
        %v4562 = vunpack.c.h.b16 %v646
        %v4563 = vunpack.c.l.b16 %v647
        %v4564 = vunpack.c.h.b16 %v647
        %v4565 = vunpack.c.l.b16 %v648
        %v4566 = vunpack.c.h.b16 %v648
        %v4567 = vunpack.c.l.b16 %v649
        %v4568 = vunpack.c.h.b16 %v649
        %v4569 = vunpack.c.l.b16 %v650
        %v4570 = vunpack.c.h.b16 %v650
        %v4571 = vunpack.c.l.b16 %v651
        %v4572 = vunpack.c.h.b16 %v651
        %v4573 = vunpack.c.l.b16 %v652
        %v4574 = vunpack.c.h.b16 %v652
        %v4575 = vunpack.c.l.b16 %v653
        %v4576 = vunpack.c.h.b16 %v653
        %v4577 = vunpack.c.l.b16 %v654
        %v4578 = vunpack.c.h.b16 %v654
        %v4579 = vunpack.c.l.b16 %v655
        %v4580 = vunpack.c.l.b16 %v656
        %v4581 = vunpack.c.h.b16 %v656
        %v4582 = vunpack.c.l.b16 %v657
        %v4583 = vunpack.c.h.b16 %v657
        %v4584 = vunpack.c.l.b16 %v658
        %v4585 = vunpack.c.h.b16 %v658
        %v4586 = vunpack.c.l.b16 %v659
        %v4587 = vunpack.c.h.b16 %v659
        %v4588 = vunpack.c.l.b16 %v660
        %v4589 = vunpack.c.h.b16 %v660
        %v4590 = vunpack.c.l.b16 %v661
        %v4591 = vunpack.c.h.b16 %v661
        %v4592 = vunpack.c.l.b16 %v662
        %v4593 = vunpack.c.h.b16 %v662
        %v4594 = vunpack.c.l.b16 %v663
        %v4595 = vunpack.c.h.b16 %v663
        %v4596 = vunpack.c.l.b16 %v664
        %v4597 = vunpack.c.h.b16 %v664
        %v4598 = vunpack.c.l.b16 %v665
        %v4599 = vunpack.c.h.b16 %v665
        %v4600 = vunpack.c.l.b16 %v666
        %v4601 = vunpack.c.h.b16 %v666
        %v4602 = vunpack.c.l.b16 %v667
        %v4603 = vunpack.c.h.b16 %v667
        %v4604 = vunpack.c.l.b16 %v668
        %v4605 = vunpack.c.h.b16 %v668
        %v4606 = vunpack.c.l.b16 %v669
        %v4607 = vunpack.c.h.b16 %v669
        %v4608 = vunpack.c.l.b16 %v670
        %v4609 = vunpack.c.h.b16 %v670
        %v4610 = vunpack.c.l.b16 %v671
        %v4611 = vunpack.c.h.b16 %v671
        %v4612 = vunpack.c.l.b16 %v672
        %v4613 = vunpack.c.h.b16 %v672
        %v4614 = vunpack.c.l.b16 %v673
        %v4615 = vunpack.c.h.b16 %v673
        %v4616 = vunpack.c.l.b16 %v674
        %v4617 = vunpack.c.h.b16 %v674
        %v4618 = vunpack.c.l.b16 %v675
        %v4619 = vunpack.c.h.b16 %v675
        %v4620 = vunpack.c.l.b16 %v676
        %v4621 = vunpack.c.h.b16 %v676
        %v4622 = vunpack.c.l.b16 %v677
        %v4623 = vunpack.c.h.b16 %v677
        %v4624 = vunpack.c.l.b16 %v678
        %v4625 = vunpack.c.h.b16 %v678
        %v4626 = vunpack.c.l.b16 %v679
        %v4627 = vunpack.c.h.b16 %v679
        %v4628 = vunpack.c.l.b16 %v680
        %v4629 = vunpack.c.l.b16 %v681
        %v4630 = vunpack.c.h.b16 %v681
        %v4631 = vunpack.c.l.b16 %v682
        %v4632 = vunpack.c.h.b16 %v682
        %v4633 = vunpack.c.l.b16 %v683
        %v4634 = vunpack.c.h.b16 %v683
        %v4635 = vunpack.c.l.b16 %v684
        %v4636 = vunpack.c.h.b16 %v684
        %v4637 = vunpack.c.l.b16 %v685
        %v4638 = vunpack.c.h.b16 %v685
        %v4639 = vunpack.c.l.b16 %v686
        %v4640 = vunpack.c.h.b16 %v686
        %v4641 = vunpack.c.l.b16 %v687
        %v4642 = vunpack.c.h.b16 %v687
        %v4643 = vunpack.c.l.b16 %v688
        %v4644 = vunpack.c.h.b16 %v688
        %v4645 = vunpack.c.l.b16 %v689
        %v4646 = vunpack.c.h.b16 %v689
        %v4647 = vunpack.c.l.b16 %v690
        %v4648 = vunpack.c.h.b16 %v690
        %v4649 = vunpack.c.l.b16 %v691
        %v4650 = vunpack.c.h.b16 %v691
        %v4651 = vunpack.c.l.b16 %v692
        %v4652 = vunpack.c.h.b16 %v692
        %v4653 = vunpack.c.l.b16 %v693
        %v4654 = vunpack.c.h.b16 %v693
        %v4655 = vunpack.c.l.b16 %v694
        %v4656 = vunpack.c.h.b16 %v694
        %v4657 = vunpack.c.l.b16 %v695
        %v4658 = vunpack.c.h.b16 %v695
        %v4659 = vunpack.c.l.b16 %v696
        %v4660 = vunpack.c.h.b16 %v696
        %v4661 = vunpack.c.l.b16 %v697
        %v4662 = vunpack.c.h.b16 %v697
        %v4663 = vunpack.c.l.b16 %v698
        %v4664 = vunpack.c.h.b16 %v698
        %v4665 = vunpack.c.l.b16 %v699
        %v4666 = vunpack.c.h.b16 %v699
        %v4667 = vunpack.c.l.b16 %v700
        %v4668 = vunpack.c.h.b16 %v700
        %v4669 = vunpack.c.l.b16 %v701
        %v4670 = vunpack.c.h.b16 %v701
        %v4671 = vunpack.c.l.b16 %v702
        %v4672 = vunpack.c.h.b16 %v702
        %v4673 = vunpack.c.l.b16 %v703
        %v4674 = vunpack.c.h.b16 %v703
        %v4675 = vunpack.c.l.b16 %v704
        %v4676 = vunpack.c.h.b16 %v704
        %v4677 = vunpack.c.l.b16 %v705
        %v4678 = vunpack.c.l.b16 %v706
        %v4679 = vunpack.c.h.b16 %v706
        %v4680 = vunpack.c.l.b16 %v707
        %v4681 = vunpack.c.h.b16 %v707
        %v4682 = vunpack.c.l.b16 %v708
        %v4683 = vunpack.c.h.b16 %v708
        %v4684 = vunpack.c.l.b16 %v709
        %v4685 = vunpack.c.h.b16 %v709
        %v4686 = vunpack.c.l.b16 %v710
        %v4687 = vunpack.c.h.b16 %v710
        %v4688 = vunpack.c.l.b16 %v711
        %v4689 = vunpack.c.h.b16 %v711
        %v4690 = vunpack.c.l.b16 %v712
        %v4691 = vunpack.c.h.b16 %v712
        %v4692 = vunpack.c.l.b16 %v713
        %v4693 = vunpack.c.h.b16 %v713
        %v4694 = vunpack.c.l.b16 %v714
        %v4695 = vunpack.c.h.b16 %v714
        %v4696 = vunpack.c.l.b16 %v715
        %v4697 = vunpack.c.h.b16 %v715
        %v4698 = vunpack.c.l.b16 %v716
        %v4699 = vunpack.c.h.b16 %v716
        %v4700 = vunpack.c.l.b16 %v717
        %v4701 = vunpack.c.h.b16 %v717
        %v4702 = vunpack.c.l.b16 %v718
        %v4703 = vunpack.c.h.b16 %v718
        %v4704 = vunpack.c.l.b16 %v719
        %v4705 = vunpack.c.h.b16 %v719
        %v4706 = vunpack.c.l.b16 %v720
        %v4707 = vunpack.c.h.b16 %v720
        %v4708 = vunpack.c.l.b16 %v721
        %v4709 = vunpack.c.h.b16 %v721
        %v4710 = vunpack.c.l.b16 %v722
        %v4711 = vunpack.c.h.b16 %v722
        %v4712 = vunpack.c.l.b16 %v723
        %v4713 = vunpack.c.h.b16 %v723
        %v4714 = vunpack.c.l.b16 %v724
        %v4715 = vunpack.c.h.b16 %v724
        %v4716 = vunpack.c.l.b16 %v725
        %v4717 = vunpack.c.h.b16 %v725
        %v4718 = vunpack.c.l.b16 %v726
        %v4719 = vunpack.c.h.b16 %v726
        %v4720 = vunpack.c.l.b16 %v727
        %v4721 = vunpack.c.h.b16 %v727
        %v4722 = vunpack.c.l.b16 %v728
        %v4723 = vunpack.c.h.b16 %v728
        %v4724 = vunpack.c.l.b16 %v729
        %v4725 = vunpack.c.h.b16 %v729
        %v4726 = vunpack.c.l.b16 %v730
        %v4727 = vunpack.c.l.b16 %v731
        %v4728 = vunpack.c.h.b16 %v731
        %v4729 = vunpack.c.l.b16 %v732
        %v4730 = vunpack.c.h.b16 %v732
        %v4731 = vunpack.c.l.b16 %v733
        %v4732 = vunpack.c.h.b16 %v733
        %v4733 = vunpack.c.l.b16 %v734
        %v4734 = vunpack.c.h.b16 %v734
        %v4735 = vunpack.c.l.b16 %v735
        %v4736 = vunpack.c.h.b16 %v735
        %v4737 = vunpack.c.l.b16 %v736
        %v4738 = vunpack.c.h.b16 %v736
        %v4739 = vunpack.c.l.b16 %v737
        %v4740 = vunpack.c.h.b16 %v737
        %v4741 = vunpack.c.l.b16 %v738
        %v4742 = vunpack.c.h.b16 %v738
        %v4743 = vunpack.c.l.b16 %v739
        %v4744 = vunpack.c.h.b16 %v739
        %v4745 = vunpack.c.l.b16 %v740
        %v4746 = vunpack.c.h.b16 %v740
        %v4747 = vunpack.c.l.b16 %v741
        %v4748 = vunpack.c.h.b16 %v741
        %v4749 = vunpack.c.l.b16 %v742
        %v4750 = vunpack.c.h.b16 %v742
        %v4751 = vunpack.c.l.b16 %v743
        %v4752 = vunpack.c.h.b16 %v743
        %v4753 = vunpack.c.l.b16 %v744
        %v4754 = vunpack.c.h.b16 %v744
        %v4755 = vunpack.c.l.b16 %v745
        %v4756 = vunpack.c.h.b16 %v745
        %v4757 = vunpack.c.l.b16 %v746
        %v4758 = vunpack.c.h.b16 %v746
        %v4759 = vunpack.c.l.b16 %v747
        %v4760 = vunpack.c.h.b16 %v747
        %v4761 = vunpack.c.l.b16 %v748
        %v4762 = vunpack.c.h.b16 %v748
        %v4763 = vunpack.c.l.b16 %v749
        %v4764 = vunpack.c.h.b16 %v749
        %v4765 = vunpack.c.l.b16 %v750
        %v4766 = vunpack.c.h.b16 %v750
        %v4767 = vunpack.c.l.b16 %v751
        %v4768 = vunpack.c.h.b16 %v751
        %v4769 = vunpack.c.l.b16 %v752
        %v4770 = vunpack.c.h.b16 %v752
        %v4771 = vunpack.c.l.b16 %v753
        %v4772 = vunpack.c.h.b16 %v753
        %v4773 = vunpack.c.l.b16 %v754
        %v4774 = vunpack.c.h.b16 %v754
        %v4775 = vunpack.c.l.b16 %v755
        %v4776 = vunpack.c.l.b16 %v756
        %v4777 = vunpack.c.h.b16 %v756
        %v4778 = vunpack.c.l.b16 %v757
        %v4779 = vunpack.c.h.b16 %v757
        %v4780 = vunpack.c.l.b16 %v758
        %v4781 = vunpack.c.h.b16 %v758
        %v4782 = vunpack.c.l.b16 %v759
        %v4783 = vunpack.c.h.b16 %v759
        %v4784 = vunpack.c.l.b16 %v760
        %v4785 = vunpack.c.h.b16 %v760
        %v4786 = vunpack.c.l.b16 %v761
        %v4787 = vunpack.c.h.b16 %v761
        %v4788 = vunpack.c.l.b16 %v762
        %v4789 = vunpack.c.h.b16 %v762
        %v4790 = vunpack.c.l.b16 %v763
        %v4791 = vunpack.c.h.b16 %v763
        %v4792 = vunpack.c.l.b16 %v764
        %v4793 = vunpack.c.h.b16 %v764
        %v4794 = vunpack.c.l.b16 %v765
        %v4795 = vunpack.c.h.b16 %v765
        %v4796 = vunpack.c.l.b16 %v766
        %v4797 = vunpack.c.h.b16 %v766
        %v4798 = vunpack.c.l.b16 %v767
        %v4799 = vunpack.c.h.b16 %v767
        %v4800 = vunpack.c.l.b16 %v768
        %v4801 = vunpack.c.h.b16 %v768
        %v4802 = vunpack.c.l.b16 %v769
        %v4803 = vunpack.c.h.b16 %v769
        %v4804 = vunpack.c.l.b16 %v770
        %v4805 = vunpack.c.h.b16 %v770
        %v4806 = vunpack.c.l.b16 %v771
        %v4807 = vunpack.c.h.b16 %v771
        %v4808 = vunpack.c.l.b16 %v772
        %v4809 = vunpack.c.h.b16 %v772
        %v4810 = vunpack.c.l.b16 %v773
        %v4811 = vunpack.c.h.b16 %v773
        %v4812 = vunpack.c.l.b16 %v774
        %v4813 = vunpack.c.h.b16 %v774
        %v4814 = vunpack.c.l.b16 %v775
        %v4815 = vunpack.c.h.b16 %v775
        %v4816 = vunpack.c.l.b16 %v776
        %v4817 = vunpack.c.h.b16 %v776
        %v4818 = vunpack.c.l.b16 %v777
        %v4819 = vunpack.c.h.b16 %v777
        %v4820 = vunpack.c.l.b16 %v778
        %v4821 = vunpack.c.h.b16 %v778
        %v4822 = vunpack.c.l.b16 %v779
        %v4823 = vunpack.c.h.b16 %v779
        %v4824 = vunpack.c.l.b16 %v780
        %v4825 = vunpack.c.l.b16 %v781
        %v4826 = vunpack.c.h.b16 %v781
        %v4827 = vunpack.c.l.b16 %v782
        %v4828 = vunpack.c.h.b16 %v782
        %v4829 = vunpack.c.l.b16 %v783
        %v4830 = vunpack.c.h.b16 %v783
        %v4831 = vunpack.c.l.b16 %v784
        %v4832 = vunpack.c.h.b16 %v784
        %v4833 = vunpack.c.l.b16 %v785
        %v4834 = vunpack.c.h.b16 %v785
        %v4835 = vunpack.c.l.b16 %v786
        %v4836 = vunpack.c.h.b16 %v786
        %v4837 = vunpack.c.l.b16 %v787
        %v4838 = vunpack.c.h.b16 %v787
        %v4839 = vunpack.c.l.b16 %v788
        %v4840 = vunpack.c.h.b16 %v788
        %v4841 = vunpack.c.l.b16 %v789
        %v4842 = vunpack.c.h.b16 %v789
        %v4843 = vunpack.c.l.b16 %v790
        %v4844 = vunpack.c.h.b16 %v790
        %v4845 = vunpack.c.l.b16 %v791
        %v4846 = vunpack.c.h.b16 %v791
        %v4847 = vunpack.c.l.b16 %v792
        %v4848 = vunpack.c.h.b16 %v792
        %v4849 = vunpack.c.l.b16 %v793
        %v4850 = vunpack.c.h.b16 %v793
        %v4851 = vunpack.c.l.b16 %v794
        %v4852 = vunpack.c.h.b16 %v794
        %v4853 = vunpack.c.l.b16 %v795
        %v4854 = vunpack.c.h.b16 %v795
        %v4855 = vunpack.c.l.b16 %v796
        %v4856 = vunpack.c.h.b16 %v796
        %v4857 = vunpack.c.l.b16 %v797
        %v4858 = vunpack.c.h.b16 %v797
        %v4859 = vunpack.c.l.b16 %v798
        %v4860 = vunpack.c.h.b16 %v798
        %v4861 = vunpack.c.l.b16 %v799
        %v4862 = vunpack.c.h.b16 %v799
        %v4863 = vunpack.c.l.b16 %v800
        %v4864 = vunpack.c.h.b16 %v800
        %v4865 = vunpack.c.l.b16 %v801
        %v4866 = vunpack.c.h.b16 %v801
        %v4867 = vunpack.c.l.b16 %v802
        %v4868 = vunpack.c.h.b16 %v802
        %v4869 = vunpack.c.l.b16 %v803
        %v4870 = vunpack.c.h.b16 %v803
        %v4871 = vunpack.c.l.b16 %v804
        %v4872 = vunpack.c.h.b16 %v804
        %v4873 = vunpack.c.l.b16 %v805
        %v4874 = vunpack.c.l.b16 %v806
        %v4875 = vunpack.c.h.b16 %v806
        %v4876 = vunpack.c.l.b16 %v807
        %v4877 = vunpack.c.h.b16 %v807
        %v4878 = vunpack.c.l.b16 %v808
        %v4879 = vunpack.c.h.b16 %v808
        %v4880 = vunpack.c.l.b16 %v809
        %v4881 = vunpack.c.h.b16 %v809
        %v4882 = vunpack.c.l.b16 %v810
        %v4883 = vunpack.c.h.b16 %v810
        %v4884 = vunpack.c.l.b16 %v811
        %v4885 = vunpack.c.h.b16 %v811
        %v4886 = vunpack.c.l.b16 %v812
        %v4887 = vunpack.c.h.b16 %v812
        %v4888 = vunpack.c.l.b16 %v813
        %v4889 = vunpack.c.h.b16 %v813
        %v4890 = vunpack.c.l.b16 %v814
        %v4891 = vunpack.c.h.b16 %v814
        %v4892 = vunpack.c.l.b16 %v815
        %v4893 = vunpack.c.h.b16 %v815
        %v4894 = vunpack.c.l.b16 %v816
        %v4895 = vunpack.c.h.b16 %v816
        %v4896 = vunpack.c.l.b16 %v817
        %v4897 = vunpack.c.h.b16 %v817
        %v4898 = vunpack.c.l.b16 %v818
        %v4899 = vunpack.c.h.b16 %v818
        %v4900 = vunpack.c.l.b16 %v819
        %v4901 = vunpack.c.h.b16 %v819
        %v4902 = vunpack.c.l.b16 %v820
        %v4903 = vunpack.c.h.b16 %v820
        %v4904 = vunpack.c.l.b16 %v821
        %v4905 = vunpack.c.h.b16 %v821
        %v4906 = vunpack.c.l.b16 %v822
        %v4907 = vunpack.c.h.b16 %v822
        %v4908 = vunpack.c.l.b16 %v823
        %v4909 = vunpack.c.h.b16 %v823
        %v4910 = vunpack.c.l.b16 %v824
        %v4911 = vunpack.c.h.b16 %v824
        %v4912 = vunpack.c.l.b16 %v825
        %v4913 = vunpack.c.h.b16 %v825
        %v4914 = vunpack.c.l.b16 %v826
        %v4915 = vunpack.c.h.b16 %v826
        %v4916 = vunpack.c.l.b16 %v827
        %v4917 = vunpack.c.h.b16 %v827
        %v4918 = vunpack.c.l.b16 %v828
        %v4919 = vunpack.c.h.b16 %v828
        %v4920 = vunpack.c.l.b16 %v829
        %v4921 = vunpack.c.h.b16 %v829
        %v4922 = vunpack.c.l.b16 %v830
        %v4923 = vunpack.c.l.b16 %v831
        %v4924 = vunpack.c.h.b16 %v831
        %v4925 = vunpack.c.l.b16 %v832
        %v4926 = vunpack.c.h.b16 %v832
        %v4927 = vunpack.c.l.b16 %v833
        %v4928 = vunpack.c.h.b16 %v833
        %v4929 = vunpack.c.l.b16 %v834
        %v4930 = vunpack.c.h.b16 %v834
        %v4931 = vunpack.c.l.b16 %v835
        %v4932 = vunpack.c.h.b16 %v835
        %v4933 = vunpack.c.l.b16 %v836
        %v4934 = vunpack.c.h.b16 %v836
        %v4935 = vunpack.c.l.b16 %v837
        %v4936 = vunpack.c.h.b16 %v837
        %v4937 = vunpack.c.l.b16 %v838
        %v4938 = vunpack.c.h.b16 %v838
        %v4939 = vunpack.c.l.b16 %v839
        %v4940 = vunpack.c.h.b16 %v839
        %v4941 = vunpack.c.l.b16 %v840
        %v4942 = vunpack.c.h.b16 %v840
        %v4943 = vunpack.c.l.b16 %v841
        %v4944 = vunpack.c.h.b16 %v841
        %v4945 = vunpack.c.l.b16 %v842
        %v4946 = vunpack.c.h.b16 %v842
        %v4947 = vunpack.c.l.b16 %v843
        %v4948 = vunpack.c.h.b16 %v843
        %v4949 = vunpack.c.l.b16 %v844
        %v4950 = vunpack.c.h.b16 %v844
        %v4951 = vunpack.c.l.b16 %v845
        %v4952 = vunpack.c.h.b16 %v845
        %v4953 = vunpack.c.l.b16 %v846
        %v4954 = vunpack.c.h.b16 %v846
        %v4955 = vunpack.c.l.b16 %v847
        %v4956 = vunpack.c.h.b16 %v847
        %v4957 = vunpack.c.l.b16 %v848
        %v4958 = vunpack.c.h.b16 %v848
        %v4959 = vunpack.c.l.b16 %v849
        %v4960 = vunpack.c.h.b16 %v849
        %v4961 = vunpack.c.l.b16 %v850
        %v4962 = vunpack.c.h.b16 %v850
        %v4963 = vunpack.c.l.b16 %v851
        %v4964 = vunpack.c.h.b16 %v851
        %v4965 = vunpack.c.l.b16 %v852
        %v4966 = vunpack.c.h.b16 %v852
        %v4967 = vunpack.c.l.b16 %v853
        %v4968 = vunpack.c.h.b16 %v853
        %v4969 = vunpack.c.l.b16 %v854
        %v4970 = vunpack.c.h.b16 %v854
        %v4971 = vunpack.c.l.b16 %v855
        %v4972 = vunpack.c.l.b16 %v856
        %v4973 = vunpack.c.h.b16 %v856
        %v4974 = vunpack.c.l.b16 %v857
        %v4975 = vunpack.c.h.b16 %v857
        %v4976 = vunpack.c.l.b16 %v858
        %v4977 = vunpack.c.h.b16 %v858
        %v4978 = vunpack.c.l.b16 %v859
        %v4979 = vunpack.c.h.b16 %v859
        %v4980 = vunpack.c.l.b16 %v860
        %v4981 = vunpack.c.h.b16 %v860
        %v4982 = vunpack.c.l.b16 %v861
        %v4983 = vunpack.c.h.b16 %v861
        %v4984 = vunpack.c.l.b16 %v862
        %v4985 = vunpack.c.h.b16 %v862
        %v4986 = vunpack.c.l.b16 %v863
        %v4987 = vunpack.c.h.b16 %v863
        %v4988 = vunpack.c.l.b16 %v864
        %v4989 = vunpack.c.h.b16 %v864
        %v4990 = vunpack.c.l.b16 %v865
        %v4991 = vunpack.c.h.b16 %v865
        %v4992 = vunpack.c.l.b16 %v866
        %v4993 = vunpack.c.h.b16 %v866
        %v4994 = vunpack.c.l.b16 %v867
        %v4995 = vunpack.c.h.b16 %v867
        %v4996 = vunpack.c.l.b16 %v868
        %v4997 = vunpack.c.h.b16 %v868
        %v4998 = vunpack.c.l.b16 %v869
        %v4999 = vunpack.c.h.b16 %v869
        %v5000 = vunpack.c.l.b16 %v870
        %v5001 = vunpack.c.h.b16 %v870
        %v5002 = vunpack.c.l.b16 %v871
        %v5003 = vunpack.c.h.b16 %v871
        %v5004 = vunpack.c.l.b16 %v872
        %v5005 = vunpack.c.h.b16 %v872
        %v5006 = vunpack.c.l.b16 %v873
        %v5007 = vunpack.c.h.b16 %v873
        %v5008 = vunpack.c.l.b16 %v874
        %v5009 = vunpack.c.h.b16 %v874
        %v5010 = vunpack.c.l.b16 %v875
        %v5011 = vunpack.c.h.b16 %v875
        %v5012 = vunpack.c.l.b16 %v876
        %v5013 = vunpack.c.h.b16 %v876
        %v5014 = vunpack.c.l.b16 %v877
        %v5015 = vunpack.c.h.b16 %v877
        %v5016 = vunpack.c.l.b16 %v878
        %v5017 = vunpack.c.h.b16 %v878
        %v5018 = vunpack.c.l.b16 %v879
        %v5019 = vunpack.c.h.b16 %v879
        %v5020 = vunpack.c.l.b16 %v880
        %v5021 = vunpack.c.l.b16 %v881
        %v5022 = vunpack.c.h.b16 %v881
        %v5023 = vunpack.c.l.b16 %v882
        %v5024 = vunpack.c.h.b16 %v882
        %v5025 = vunpack.c.l.b16 %v883
        %v5026 = vunpack.c.h.b16 %v883
        %v5027 = vunpack.c.l.b16 %v884
        %v5028 = vunpack.c.h.b16 %v884
        %v5029 = vunpack.c.l.b16 %v885
        %v5030 = vunpack.c.h.b16 %v885
        %v5031 = vunpack.c.l.b16 %v886
        %v5032 = vunpack.c.h.b16 %v886
        %v5033 = vunpack.c.l.b16 %v887
        %v5034 = vunpack.c.h.b16 %v887
        %v5035 = vunpack.c.l.b16 %v888
        %v5036 = vunpack.c.h.b16 %v888
        %v5037 = vunpack.c.l.b16 %v889
        %v5038 = vunpack.c.h.b16 %v889
        %v5039 = vunpack.c.l.b16 %v890
        %v5040 = vunpack.c.h.b16 %v890
        %v5041 = vunpack.c.l.b16 %v891
        %v5042 = vunpack.c.h.b16 %v891
        %v5043 = vunpack.c.l.b16 %v892
        %v5044 = vunpack.c.h.b16 %v892
        %v5045 = vunpack.c.l.b16 %v893
        %v5046 = vunpack.c.h.b16 %v893
        %v5047 = vunpack.c.l.b16 %v894
        %v5048 = vunpack.c.h.b16 %v894
        %v5049 = vunpack.c.l.b16 %v895
        %v5050 = vunpack.c.h.b16 %v895
        %v5051 = vunpack.c.l.b16 %v896
        %v5052 = vunpack.c.h.b16 %v896
        %v5053 = vunpack.c.l.b16 %v897
        %v5054 = vunpack.c.h.b16 %v897
        %v5055 = vunpack.c.l.b16 %v898
        %v5056 = vunpack.c.h.b16 %v898
        %v5057 = vunpack.c.l.b16 %v899
        %v5058 = vunpack.c.h.b16 %v899
        %v5059 = vunpack.c.l.b16 %v900
        %v5060 = vunpack.c.h.b16 %v900
        %v5061 = vunpack.c.l.b16 %v901
        %v5062 = vunpack.c.h.b16 %v901
        %v5063 = vunpack.c.l.b16 %v902
        %v5064 = vunpack.c.h.b16 %v902
        %v5065 = vunpack.c.l.b16 %v903
        %v5066 = vunpack.c.h.b16 %v903
        %v5067 = vunpack.c.l.b16 %v904
        %v5068 = vunpack.c.h.b16 %v904
        %v5069 = vunpack.c.l.b16 %v905
        %v5070 = vunpack.c.l.b16 %v906
        %v5071 = vunpack.c.h.b16 %v906
        %v5072 = vunpack.c.l.b16 %v907
        %v5073 = vunpack.c.h.b16 %v907
        %v5074 = vunpack.c.l.b16 %v908
        %v5075 = vunpack.c.h.b16 %v908
        %v5076 = vunpack.c.l.b16 %v909
        %v5077 = vunpack.c.h.b16 %v909
        %v5078 = vunpack.c.l.b16 %v910
        %v5079 = vunpack.c.h.b16 %v910
        %v5080 = vunpack.c.l.b16 %v911
        %v5081 = vunpack.c.h.b16 %v911
        %v5082 = vunpack.c.l.b16 %v912
        %v5083 = vunpack.c.h.b16 %v912
        %v5084 = vunpack.c.l.b16 %v913
        %v5085 = vunpack.c.h.b16 %v913
        %v5086 = vunpack.c.l.b16 %v914
        %v5087 = vunpack.c.h.b16 %v914
        %v5088 = vunpack.c.l.b16 %v915
        %v5089 = vunpack.c.h.b16 %v915
        %v5090 = vunpack.c.l.b16 %v916
        %v5091 = vunpack.c.h.b16 %v916
        %v5092 = vunpack.c.l.b16 %v917
        %v5093 = vunpack.c.h.b16 %v917
        %v5094 = vunpack.c.l.b16 %v918
        %v5095 = vunpack.c.h.b16 %v918
        %v5096 = vunpack.c.l.b16 %v919
        %v5097 = vunpack.c.h.b16 %v919
        %v5098 = vunpack.c.l.b16 %v920
        %v5099 = vunpack.c.h.b16 %v920
        %v5100 = vunpack.c.l.b16 %v921
        %v5101 = vunpack.c.h.b16 %v921
        %v5102 = vunpack.c.l.b16 %v922
        %v5103 = vunpack.c.h.b16 %v922
        %v5104 = vunpack.c.l.b16 %v923
        %v5105 = vunpack.c.h.b16 %v923
        %v5106 = vunpack.c.l.b16 %v924
        %v5107 = vunpack.c.h.b16 %v924
        %v5108 = vunpack.c.l.b16 %v925
        %v5109 = vunpack.c.h.b16 %v925
        %v5110 = vunpack.c.l.b16 %v926
        %v5111 = vunpack.c.h.b16 %v926
        %v5112 = vunpack.c.l.b16 %v927
        %v5113 = vunpack.c.h.b16 %v927
        %v5114 = vunpack.c.l.b16 %v928
        %v5115 = vunpack.c.h.b16 %v928
        %v5116 = vunpack.c.l.b16 %v929
        %v5117 = vunpack.c.h.b16 %v929
        %v5118 = vunpack.c.l.b16 %v930
        %v5119 = vunpack.c.l.b16 %v931
        %v5120 = vunpack.c.h.b16 %v931
        %v5121 = vunpack.c.l.b16 %v932
        %v5122 = vunpack.c.h.b16 %v932
        %v5123 = vunpack.c.l.b16 %v933
        %v5124 = vunpack.c.h.b16 %v933
        %v5125 = vunpack.c.l.b16 %v934
        %v5126 = vunpack.c.h.b16 %v934
        %v5127 = vunpack.c.l.b16 %v935
        %v5128 = vunpack.c.h.b16 %v935
        %v5129 = vunpack.c.l.b16 %v936
        %v5130 = vunpack.c.h.b16 %v936
        %v5131 = vunpack.c.l.b16 %v937
        %v5132 = vunpack.c.h.b16 %v937
        %v5133 = vunpack.c.l.b16 %v938
        %v5134 = vunpack.c.h.b16 %v938
        %v5135 = vunpack.c.l.b16 %v939
        %v5136 = vunpack.c.h.b16 %v939
        %v5137 = vunpack.c.l.b16 %v940
        %v5138 = vunpack.c.h.b16 %v940
        %v5139 = vunpack.c.l.b16 %v941
        %v5140 = vunpack.c.h.b16 %v941
        %v5141 = vunpack.c.l.b16 %v942
        %v5142 = vunpack.c.h.b16 %v942
        %v5143 = vunpack.c.l.b16 %v943
        %v5144 = vunpack.c.h.b16 %v943
        %v5145 = vunpack.c.l.b16 %v944
        %v5146 = vunpack.c.h.b16 %v944
        %v5147 = vunpack.c.l.b16 %v945
        %v5148 = vunpack.c.h.b16 %v945
        %v5149 = vunpack.c.l.b16 %v946
        %v5150 = vunpack.c.h.b16 %v946
        %v5151 = vunpack.c.l.b16 %v947
        %v5152 = vunpack.c.h.b16 %v947
        %v5153 = vunpack.c.l.b16 %v948
        %v5154 = vunpack.c.h.b16 %v948
        %v5155 = vunpack.c.l.b16 %v949
        %v5156 = vunpack.c.h.b16 %v949
        %v5157 = vunpack.c.l.b16 %v950
        %v5158 = vunpack.c.h.b16 %v950
        %v5159 = vunpack.c.l.b16 %v951
        %v5160 = vunpack.c.h.b16 %v951
        %v5161 = vunpack.c.l.b16 %v952
        %v5162 = vunpack.c.h.b16 %v952
        %v5163 = vunpack.c.l.b16 %v953
        %v5164 = vunpack.c.h.b16 %v953
        %v5165 = vunpack.c.l.b16 %v954
        %v5166 = vunpack.c.h.b16 %v954
        %v5167 = vunpack.c.l.b16 %v955
        %v5168 = vunpack.c.l.b16 %v956
        %v5169 = vunpack.c.h.b16 %v956
        %v5170 = vunpack.c.l.b16 %v957
        %v5171 = vunpack.c.h.b16 %v957
        %v5172 = vunpack.c.l.b16 %v958
        %v5173 = vunpack.c.h.b16 %v958
        %v5174 = vunpack.c.l.b16 %v959
        %v5175 = vunpack.c.h.b16 %v959
        %v5176 = vunpack.c.l.b16 %v960
        %v5177 = vunpack.c.h.b16 %v960
        %v5178 = vunpack.c.l.b16 %v961
        %v5179 = vunpack.c.h.b16 %v961
        %v5180 = vunpack.c.l.b16 %v962
        %v5181 = vunpack.c.h.b16 %v962
        %v5182 = vunpack.c.l.b16 %v963
        %v5183 = vunpack.c.h.b16 %v963
        %v5184 = vunpack.c.l.b16 %v964
        %v5185 = vunpack.c.h.b16 %v964
        %v5186 = vunpack.c.l.b16 %v965
        %v5187 = vunpack.c.h.b16 %v965
        %v5188 = vunpack.c.l.b16 %v966
        %v5189 = vunpack.c.h.b16 %v966
        %v5190 = vunpack.c.l.b16 %v967
        %v5191 = vunpack.c.h.b16 %v967
        %v5192 = vunpack.c.l.b16 %v968
        %v5193 = vunpack.c.h.b16 %v968
        %v5194 = vunpack.c.l.b16 %v969
        %v5195 = vunpack.c.h.b16 %v969
        %v5196 = vunpack.c.l.b16 %v970
        %v5197 = vunpack.c.h.b16 %v970
        %v5198 = vunpack.c.l.b16 %v971
        %v5199 = vunpack.c.h.b16 %v971
        %v5200 = vunpack.c.l.b16 %v972
        %v5201 = vunpack.c.h.b16 %v972
        %v5202 = vunpack.c.l.b16 %v973
        %v5203 = vunpack.c.h.b16 %v973
        %v5204 = vunpack.c.l.b16 %v974
        %v5205 = vunpack.c.h.b16 %v974
        %v5206 = vunpack.c.l.b16 %v975
        %v5207 = vunpack.c.h.b16 %v975
        %v5208 = vunpack.c.l.b16 %v976
        %v5209 = vunpack.c.h.b16 %v976
        %v5210 = vunpack.c.l.b16 %v977
        %v5211 = vunpack.c.h.b16 %v977
        %v5212 = vunpack.c.l.b16 %v978
        %v5213 = vunpack.c.h.b16 %v978
        %v5214 = vunpack.c.l.b16 %v979
        %v5215 = vunpack.c.h.b16 %v979
        %v5216 = vunpack.c.l.b16 %v980
        %v5217 = vunpack.c.l.b16 %v981
        %v5218 = vunpack.c.h.b16 %v981
        %v5219 = vunpack.c.l.b16 %v982
        %v5220 = vunpack.c.h.b16 %v982
        %v5221 = vunpack.c.l.b16 %v983
        %v5222 = vunpack.c.h.b16 %v983
        %v5223 = vunpack.c.l.b16 %v984
        %v5224 = vunpack.c.h.b16 %v984
        %v5225 = vunpack.c.l.b16 %v985
        %v5226 = vunpack.c.h.b16 %v985
        %v5227 = vunpack.c.l.b16 %v986
        %v5228 = vunpack.c.h.b16 %v986
        %v5229 = vunpack.c.l.b16 %v987
        %v5230 = vunpack.c.h.b16 %v987
        %v5231 = vunpack.c.l.b16 %v988
        %v5232 = vunpack.c.h.b16 %v988
        %v5233 = vunpack.c.l.b16 %v989
        %v5234 = vunpack.c.h.b16 %v989
        %v5235 = vunpack.c.l.b16 %v990
        %v5236 = vunpack.c.h.b16 %v990
        %v5237 = vunpack.c.l.b16 %v991
        %v5238 = vunpack.c.h.b16 %v991
        %v5239 = vunpack.c.l.b16 %v992
        %v5240 = vunpack.c.h.b16 %v992
        %v5241 = vunpack.c.l.b16 %v993
        %v5242 = vunpack.c.h.b16 %v993
        %v5243 = vunpack.c.l.b16 %v994
        %v5244 = vunpack.c.h.b16 %v994
        %v5245 = vunpack.c.l.b16 %v995
        %v5246 = vunpack.c.h.b16 %v995
        %v5247 = vunpack.c.l.b16 %v996
        %v5248 = vunpack.c.h.b16 %v996
        %v5249 = vunpack.c.l.b16 %v997
        %v5250 = vunpack.c.h.b16 %v997
        %v5251 = vunpack.c.l.b16 %v998
        %v5252 = vunpack.c.h.b16 %v998
        %v5253 = vunpack.c.l.b16 %v999
        %v5254 = vunpack.c.h.b16 %v999
        %v5255 = vunpack.c.l.b16 %v1000
        %v5256 = vunpack.c.h.b16 %v1000
        %v5257 = vunpack.c.l.b16 %v1001
        %v5258 = vunpack.c.h.b16 %v1001
        %v5259 = vunpack.c.l.b16 %v1002
        %v5260 = vunpack.c.h.b16 %v1002
        %v5261 = vunpack.c.l.b16 %v1003
        %v5262 = vunpack.c.h.b16 %v1003
        %v5263 = vunpack.c.l.b16 %v1004
        %v5264 = vunpack.c.h.b16 %v1004
        %v5265 = vunpack.c.l.b16 %v1005
        %v5266 = vunpack.c.l.b16 %v1006
        %v5267 = vunpack.c.h.b16 %v1006
        %v5268 = vunpack.c.l.b16 %v1007
        %v5269 = vunpack.c.h.b16 %v1007
        %v5270 = vunpack.c.l.b16 %v1008
        %v5271 = vunpack.c.h.b16 %v1008
        %v5272 = vunpack.c.l.b16 %v1009
        %v5273 = vunpack.c.h.b16 %v1009
        %v5274 = vunpack.c.l.b16 %v1010
        %v5275 = vunpack.c.h.b16 %v1010
        %v5276 = vunpack.c.l.b16 %v1011
        %v5277 = vunpack.c.h.b16 %v1011
        %v5278 = vunpack.c.l.b16 %v1012
        %v5279 = vunpack.c.h.b16 %v1012
        %v5280 = vunpack.c.l.b16 %v1013
        %v5281 = vunpack.c.h.b16 %v1013
        %v5282 = vunpack.c.l.b16 %v1014
        %v5283 = vunpack.c.h.b16 %v1014
        %v5284 = vunpack.c.l.b16 %v1015
        %v5285 = vunpack.c.h.b16 %v1015
        %v5286 = vunpack.c.l.b16 %v1016
        %v5287 = vunpack.c.h.b16 %v1016
        %v5288 = vunpack.c.l.b16 %v1017
        %v5289 = vunpack.c.h.b16 %v1017
        %v5290 = vunpack.c.l.b16 %v1018
        %v5291 = vunpack.c.h.b16 %v1018
        %v5292 = vunpack.c.l.b16 %v1019
        %v5293 = vunpack.c.h.b16 %v1019
        %v5294 = vunpack.c.l.b16 %v1020
        %v5295 = vunpack.c.h.b16 %v1020
        %v5296 = vunpack.c.l.b16 %v1021
        %v5297 = vunpack.c.h.b16 %v1021
        %v5298 = vunpack.c.l.b16 %v1022
        %v5299 = vunpack.c.h.b16 %v1022
        %v5300 = vunpack.c.l.b16 %v1023
        %v5301 = vunpack.c.h.b16 %v1023
        %v5302 = vunpack.c.l.b16 %v1024
        %v5303 = vunpack.c.h.b16 %v1024
        %v5304 = vunpack.c.l.b16 %v1025
        %v5305 = vunpack.c.h.b16 %v1025
        %v5306 = vunpack.c.l.b16 %v1026
        %v5307 = vunpack.c.h.b16 %v1026
        %v5308 = vunpack.c.l.b16 %v1027
        %v5309 = vunpack.c.h.b16 %v1027
        %v5310 = vunpack.c.l.b16 %v1028
        %v5311 = vunpack.c.h.b16 %v1028
        %v5312 = vunpack.c.l.b16 %v1029
        %v5313 = vunpack.c.h.b16 %v1029
        %v5314 = vunpack.c.l.b16 %v1030
        %v5315 = vunpack.c.l.b16 %v1031
        %v5316 = vunpack.c.h.b16 %v1031
        %v5317 = vunpack.c.l.b16 %v1032
        %v5318 = vunpack.c.h.b16 %v1032
        %v5319 = vunpack.c.l.b16 %v1033
        %v5320 = vunpack.c.h.b16 %v1033
        %v5321 = vunpack.c.l.b16 %v1034
        %v5322 = vunpack.c.h.b16 %v1034
        %v5323 = vunpack.c.l.b16 %v1035
        %v5324 = vunpack.c.h.b16 %v1035
        %v5325 = vunpack.c.l.b16 %v1036
        %v5326 = vunpack.c.h.b16 %v1036
        %v5327 = vunpack.c.l.b16 %v1037
        %v5328 = vunpack.c.h.b16 %v1037
        %v5329 = vunpack.c.l.b16 %v1038
        %v5330 = vunpack.c.h.b16 %v1038
        %v5331 = vunpack.c.l.b16 %v1039
        %v5332 = vunpack.c.h.b16 %v1039
        %v5333 = vunpack.c.l.b16 %v1040
        %v5334 = vunpack.c.h.b16 %v1040
        %v5335 = vunpack.c.l.b16 %v1041
        %v5336 = vunpack.c.h.b16 %v1041
        %v5337 = vunpack.c.l.b16 %v1042
        %v5338 = vunpack.c.h.b16 %v1042
        %v5339 = vunpack.c.l.b16 %v1043
        %v5340 = vunpack.c.h.b16 %v1043
        %v5341 = vunpack.c.l.b16 %v1044
        %v5342 = vunpack.c.h.b16 %v1044
        %v5343 = vunpack.c.l.b16 %v1045
        %v5344 = vunpack.c.h.b16 %v1045
        %v5345 = vunpack.c.l.b16 %v1046
        %v5346 = vunpack.c.h.b16 %v1046
        %v5347 = vunpack.c.l.b16 %v1047
        %v5348 = vunpack.c.h.b16 %v1047
        %v5349 = vunpack.c.l.b16 %v1048
        %v5350 = vunpack.c.h.b16 %v1048
        %v5351 = vunpack.c.l.b16 %v1049
        %v5352 = vunpack.c.h.b16 %v1049
        %v5353 = vunpack.c.l.b16 %v1050
        %v5354 = vunpack.c.h.b16 %v1050
        %v5355 = vunpack.c.l.b16 %v1051
        %v5356 = vunpack.c.h.b16 %v1051
        %v5357 = vunpack.c.l.b16 %v1052
        %v5358 = vunpack.c.h.b16 %v1052
        %v5359 = vunpack.c.l.b16 %v1053
        %v5360 = vunpack.c.h.b16 %v1053
        %v5361 = vunpack.c.l.b16 %v1054
        %v5362 = vunpack.c.h.b16 %v1054
        %v5363 = vunpack.c.l.b16 %v1055
        %v5364 = vunpack.c.l.b16 %v1056
        %v5365 = vunpack.c.h.b16 %v1056
        %v5366 = vunpack.c.l.b16 %v1057
        %v5367 = vunpack.c.h.b16 %v1057
        %v5368 = vunpack.c.l.b16 %v1058
        %v5369 = vunpack.c.h.b16 %v1058
        %v5370 = vunpack.c.l.b16 %v1059
        %v5371 = vunpack.c.h.b16 %v1059
        %v5372 = vunpack.c.l.b16 %v1060
        %v5373 = vunpack.c.h.b16 %v1060
        %v5374 = vunpack.c.l.b16 %v1061
        %v5375 = vunpack.c.h.b16 %v1061
        %v5376 = vunpack.c.l.b16 %v1062
        %v5377 = vunpack.c.h.b16 %v1062
        %v5378 = vunpack.c.l.b16 %v1063
        %v5379 = vunpack.c.h.b16 %v1063
        %v5380 = vunpack.c.l.b16 %v1064
        %v5381 = vunpack.c.h.b16 %v1064
        %v5382 = vunpack.c.l.b16 %v1065
        %v5383 = vunpack.c.h.b16 %v1065
        %v5384 = vunpack.c.l.b16 %v1066
        %v5385 = vunpack.c.h.b16 %v1066
        %v5386 = vunpack.c.l.b16 %v1067
        %v5387 = vunpack.c.h.b16 %v1067
        %v5388 = vunpack.c.l.b16 %v1068
        %v5389 = vunpack.c.h.b16 %v1068
        %v5390 = vunpack.c.l.b16 %v1069
        %v5391 = vunpack.c.h.b16 %v1069
        %v5392 = vunpack.c.l.b16 %v1070
        %v5393 = vunpack.c.h.b16 %v1070
        %v5394 = vunpack.c.l.b16 %v1071
        %v5395 = vunpack.c.h.b16 %v1071
        %v5396 = vunpack.c.l.b16 %v1072
        %v5397 = vunpack.c.h.b16 %v1072
        %v5398 = vunpack.c.l.b16 %v1073
        %v5399 = vunpack.c.h.b16 %v1073
        %v5400 = vunpack.c.l.b16 %v1074
        %v5401 = vunpack.c.h.b16 %v1074
        %v5402 = vunpack.c.l.b16 %v1075
        %v5403 = vunpack.c.h.b16 %v1075
        %v5404 = vunpack.c.l.b16 %v1076
        %v5405 = vunpack.c.h.b16 %v1076
        %v5406 = vunpack.c.l.b16 %v1077
        %v5407 = vunpack.c.h.b16 %v1077
        %v5408 = vunpack.c.l.b16 %v1078
        %v5409 = vunpack.c.h.b16 %v1078
        %v5410 = vunpack.c.l.b16 %v1079
        %v5411 = vunpack.c.h.b16 %v1079
        %v5412 = vunpack.c.l.b16 %v1080
        %v5413 = vunpack.c.l.b16 %v1081
        %v5414 = vunpack.c.h.b16 %v1081
        %v5415 = vunpack.c.l.b16 %v1082
        %v5416 = vunpack.c.h.b16 %v1082
        %v5417 = vunpack.c.l.b16 %v1083
        %v5418 = vunpack.c.h.b16 %v1083
        %v5419 = vunpack.c.l.b16 %v1084
        %v5420 = vunpack.c.h.b16 %v1084
        %v5421 = vunpack.c.l.b16 %v1085
        %v5422 = vunpack.c.h.b16 %v1085
        %v5423 = vunpack.c.l.b16 %v1086
        %v5424 = vunpack.c.h.b16 %v1086
        %v5425 = vunpack.c.l.b16 %v1087
        %v5426 = vunpack.c.h.b16 %v1087
        %v5427 = vunpack.c.l.b16 %v1088
        %v5428 = vunpack.c.h.b16 %v1088
        %v5429 = vunpack.c.l.b16 %v1089
        %v5430 = vunpack.c.h.b16 %v1089
        %v5431 = vunpack.c.l.b16 %v1090
        %v5432 = vunpack.c.h.b16 %v1090
        %v5433 = vunpack.c.l.b16 %v1091
        %v5434 = vunpack.c.h.b16 %v1091
        %v5435 = vunpack.c.l.b16 %v1092
        %v5436 = vunpack.c.h.b16 %v1092
        %v5437 = vunpack.c.l.b16 %v1093
        %v5438 = vunpack.c.h.b16 %v1093
        %v5439 = vunpack.c.l.b16 %v1094
        %v5440 = vunpack.c.h.b16 %v1094
        %v5441 = vunpack.c.l.b16 %v1095
        %v5442 = vunpack.c.h.b16 %v1095
        %v5443 = vunpack.c.l.b16 %v1096
        %v5444 = vunpack.c.h.b16 %v1096
        %v5445 = vunpack.c.l.b16 %v1097
        %v5446 = vunpack.c.h.b16 %v1097
        %v5447 = vunpack.c.l.b16 %v1098
        %v5448 = vunpack.c.h.b16 %v1098
        %v5449 = vunpack.c.l.b16 %v1099
        %v5450 = vunpack.c.h.b16 %v1099
        %v5451 = vunpack.c.l.b16 %v1100
        %v5452 = vunpack.c.h.b16 %v1100
        %v5453 = vunpack.c.l.b16 %v1101
        %v5454 = vunpack.c.h.b16 %v1101
        %v5455 = vunpack.c.l.b16 %v1102
        %v5456 = vunpack.c.h.b16 %v1102
        %v5457 = vunpack.c.l.b16 %v1103
        %v5458 = vunpack.c.h.b16 %v1103
        %v5459 = vunpack.c.l.b16 %v1104
        %v5460 = vunpack.c.h.b16 %v1104
        %v5461 = vunpack.c.l.b16 %v1105
        %v5462 = vunpack.c.l.b16 %v1106
        %v5463 = vunpack.c.h.b16 %v1106
        %v5464 = vunpack.c.l.b16 %v1107
        %v5465 = vunpack.c.h.b16 %v1107
        %v5466 = vunpack.c.l.b16 %v1108
        %v5467 = vunpack.c.h.b16 %v1108
        %v5468 = vunpack.c.l.b16 %v1109
        %v5469 = vunpack.c.h.b16 %v1109
        %v5470 = vunpack.c.l.b16 %v1110
        %v5471 = vunpack.c.h.b16 %v1110
        %v5472 = vunpack.c.l.b16 %v1111
        %v5473 = vunpack.c.h.b16 %v1111
        %v5474 = vunpack.c.l.b16 %v1112
        %v5475 = vunpack.c.h.b16 %v1112
        %v5476 = vunpack.c.l.b16 %v1113
        %v5477 = vunpack.c.h.b16 %v1113
        %v5478 = vunpack.c.l.b16 %v1114
        %v5479 = vunpack.c.h.b16 %v1114
        %v5480 = vunpack.c.l.b16 %v1115
        %v5481 = vunpack.c.h.b16 %v1115
        %v5482 = vunpack.c.l.b16 %v1116
        %v5483 = vunpack.c.h.b16 %v1116
        %v5484 = vunpack.c.l.b16 %v1117
        %v5485 = vunpack.c.h.b16 %v1117
        %v5486 = vunpack.c.l.b16 %v1118
        %v5487 = vunpack.c.h.b16 %v1118
        %v5488 = vunpack.c.l.b16 %v1119
        %v5489 = vunpack.c.h.b16 %v1119
        %v5490 = vunpack.c.l.b16 %v1120
        %v5491 = vunpack.c.h.b16 %v1120
        %v5492 = vunpack.c.l.b16 %v1121
        %v5493 = vunpack.c.h.b16 %v1121
        %v5494 = vunpack.c.l.b16 %v1122
        %v5495 = vunpack.c.h.b16 %v1122
        %v5496 = vunpack.c.l.b16 %v1123
        %v5497 = vunpack.c.h.b16 %v1123
        %v5498 = vunpack.c.l.b16 %v1124
        %v5499 = vunpack.c.h.b16 %v1124
        %v5500 = vunpack.c.l.b16 %v1125
        %v5501 = vunpack.c.h.b16 %v1125
        %v5502 = vunpack.c.l.b16 %v1126
        %v5503 = vunpack.c.h.b16 %v1126
        %v5504 = vunpack.c.l.b16 %v1127
        %v5505 = vunpack.c.h.b16 %v1127
        %v5506 = vunpack.c.l.b16 %v1128
        %v5507 = vunpack.c.h.b16 %v1128
        %v5508 = vunpack.c.l.b16 %v1129
        %v5509 = vunpack.c.h.b16 %v1129
        %v5510 = vunpack.c.l.b16 %v1130
        %v5511 = vunpack.c.l.b16 %v1131
        %v5512 = vunpack.c.h.b16 %v1131
        %v5513 = vunpack.c.l.b16 %v1132
        %v5514 = vunpack.c.h.b16 %v1132
        %v5515 = vunpack.c.l.b16 %v1133
        %v5516 = vunpack.c.h.b16 %v1133
        %v5517 = vunpack.c.l.b16 %v1134
        %v5518 = vunpack.c.h.b16 %v1134
        %v5519 = vunpack.c.l.b16 %v1135
        %v5520 = vunpack.c.h.b16 %v1135
        %v5521 = vunpack.c.l.b16 %v1136
        %v5522 = vunpack.c.h.b16 %v1136
        %v5523 = vunpack.c.l.b16 %v1137
        %v5524 = vunpack.c.h.b16 %v1137
        %v5525 = vunpack.c.l.b16 %v1138
        %v5526 = vunpack.c.h.b16 %v1138
        %v5527 = vunpack.c.l.b16 %v1139
        %v5528 = vunpack.c.h.b16 %v1139
        %v5529 = vunpack.c.l.b16 %v1140
        %v5530 = vunpack.c.h.b16 %v1140
        %v5531 = vunpack.c.l.b16 %v1141
        %v5532 = vunpack.c.h.b16 %v1141
        %v5533 = vunpack.c.l.b16 %v1142
        %v5534 = vunpack.c.h.b16 %v1142
        %v5535 = vunpack.c.l.b16 %v1143
        %v5536 = vunpack.c.h.b16 %v1143
        %v5537 = vunpack.c.l.b16 %v1144
        %v5538 = vunpack.c.h.b16 %v1144
        %v5539 = vunpack.c.l.b16 %v1145
        %v5540 = vunpack.c.h.b16 %v1145
        %v5541 = vunpack.c.l.b16 %v1146
        %v5542 = vunpack.c.h.b16 %v1146
        %v5543 = vunpack.c.l.b16 %v1147
        %v5544 = vunpack.c.h.b16 %v1147
        %v5545 = vunpack.c.l.b16 %v1148
        %v5546 = vunpack.c.h.b16 %v1148
        %v5547 = vunpack.c.l.b16 %v1149
        %v5548 = vunpack.c.h.b16 %v1149
        %v5549 = vunpack.c.l.b16 %v1150
        %v5550 = vunpack.c.h.b16 %v1150
        %v5551 = vunpack.c.l.b16 %v1151
        %v5552 = vunpack.c.h.b16 %v1151
        %v5553 = vunpack.c.l.b16 %v1152
        %v5554 = vunpack.c.h.b16 %v1152
        %v5555 = vunpack.c.l.b16 %v1153
        %v5556 = vunpack.c.h.b16 %v1153
        %v5557 = vunpack.c.l.b16 %v1154
        %v5558 = vunpack.c.h.b16 %v1154
        %v5559 = vunpack.c.l.b16 %v1155
        %v5560 = vunpack.c.l.b16 %v1156
        %v5561 = vunpack.c.h.b16 %v1156
        %v5562 = vunpack.c.l.b16 %v1157
        %v5563 = vunpack.c.h.b16 %v1157
        %v5564 = vunpack.c.l.b16 %v1158
        %v5565 = vunpack.c.h.b16 %v1158
        %v5566 = vunpack.c.l.b16 %v1159
        %v5567 = vunpack.c.h.b16 %v1159
        %v5568 = vunpack.c.l.b16 %v1160
        %v5569 = vunpack.c.h.b16 %v1160
        %v5570 = vunpack.c.l.b16 %v1161
        %v5571 = vunpack.c.h.b16 %v1161
        %v5572 = vunpack.c.l.b16 %v1162
        %v5573 = vunpack.c.h.b16 %v1162
        %v5574 = vunpack.c.l.b16 %v1163
        %v5575 = vunpack.c.h.b16 %v1163
        %v5576 = vunpack.c.l.b16 %v1164
        %v5577 = vunpack.c.h.b16 %v1164
        %v5578 = vunpack.c.l.b16 %v1165
        %v5579 = vunpack.c.h.b16 %v1165
        %v5580 = vunpack.c.l.b16 %v1166
        %v5581 = vunpack.c.h.b16 %v1166
        %v5582 = vunpack.c.l.b16 %v1167
        %v5583 = vunpack.c.h.b16 %v1167
        %v5584 = vunpack.c.l.b16 %v1168
        %v5585 = vunpack.c.h.b16 %v1168
        %v5586 = vunpack.c.l.b16 %v1169
        %v5587 = vunpack.c.h.b16 %v1169
        %v5588 = vunpack.c.l.b16 %v1170
        %v5589 = vunpack.c.h.b16 %v1170
        %v5590 = vunpack.c.l.b16 %v1171
        %v5591 = vunpack.c.h.b16 %v1171
        %v5592 = vunpack.c.l.b16 %v1172
        %v5593 = vunpack.c.h.b16 %v1172
        %v5594 = vunpack.c.l.b16 %v1173
        %v5595 = vunpack.c.h.b16 %v1173
        %v5596 = vunpack.c.l.b16 %v1174
        %v5597 = vunpack.c.h.b16 %v1174
        %v5598 = vunpack.c.l.b16 %v1175
        %v5599 = vunpack.c.h.b16 %v1175
        %v5600 = vunpack.c.l.b16 %v1176
        %v5601 = vunpack.c.h.b16 %v1176
        %v5602 = vunpack.c.l.b16 %v1177
        %v5603 = vunpack.c.h.b16 %v1177
        %v5604 = vunpack.c.l.b16 %v1178
        %v5605 = vunpack.c.h.b16 %v1178
        %v5606 = vunpack.c.l.b16 %v1179
        %v5607 = vunpack.c.h.b16 %v1179
        %v5608 = vunpack.c.l.b16 %v1180
        %v5609 = vunpack.c.l.b16 %v1181
        %v5610 = vunpack.c.h.b16 %v1181
        %v5611 = vunpack.c.l.b16 %v1182
        %v5612 = vunpack.c.h.b16 %v1182
        %v5613 = vunpack.c.l.b16 %v1183
        %v5614 = vunpack.c.h.b16 %v1183
        %v5615 = vunpack.c.l.b16 %v1184
        %v5616 = vunpack.c.h.b16 %v1184
        %v5617 = vunpack.c.l.b16 %v1185
        %v5618 = vunpack.c.h.b16 %v1185
        %v5619 = vunpack.c.l.b16 %v1186
        %v5620 = vunpack.c.h.b16 %v1186
        %v5621 = vunpack.c.l.b16 %v1187
        %v5622 = vunpack.c.h.b16 %v1187
        %v5623 = vunpack.c.l.b16 %v1188
        %v5624 = vunpack.c.h.b16 %v1188
        %v5625 = vunpack.c.l.b16 %v1189
        %v5626 = vunpack.c.h.b16 %v1189
        %v5627 = vunpack.c.l.b16 %v1190
        %v5628 = vunpack.c.h.b16 %v1190
        %v5629 = vunpack.c.l.b16 %v1191
        %v5630 = vunpack.c.h.b16 %v1191
        %v5631 = vunpack.c.l.b16 %v1192
        %v5632 = vunpack.c.h.b16 %v1192
        %v5633 = vunpack.c.l.b16 %v1193
        %v5634 = vunpack.c.h.b16 %v1193
        %v5635 = vunpack.c.l.b16 %v1194
        %v5636 = vunpack.c.h.b16 %v1194
        %v5637 = vunpack.c.l.b16 %v1195
        %v5638 = vunpack.c.h.b16 %v1195
        %v5639 = vunpack.c.l.b16 %v1196
        %v5640 = vunpack.c.h.b16 %v1196
        %v5641 = vunpack.c.l.b16 %v1197
        %v5642 = vunpack.c.h.b16 %v1197
        %v5643 = vunpack.c.l.b16 %v1198
        %v5644 = vunpack.c.h.b16 %v1198
        %v5645 = vunpack.c.l.b16 %v1199
        %v5646 = vunpack.c.h.b16 %v1199
        %v5647 = vunpack.c.l.b16 %v1200
        %v5648 = vunpack.c.h.b16 %v1200
        %v5649 = vunpack.c.l.b16 %v1201
        %v5650 = vunpack.c.h.b16 %v1201
        %v5651 = vunpack.c.l.b16 %v1202
        %v5652 = vunpack.c.h.b16 %v1202
        %v5653 = vunpack.c.l.b16 %v1203
        %v5654 = vunpack.c.h.b16 %v1203
        %v5655 = vunpack.c.l.b16 %v1204
        %v5656 = vunpack.c.h.b16 %v1204
        %v5657 = vunpack.c.l.b16 %v1205
        %v5658 = vunpack.c.l.b16 %v1206
        %v5659 = vunpack.c.h.b16 %v1206
        %v5660 = vunpack.c.l.b16 %v1207
        %v5661 = vunpack.c.h.b16 %v1207
        %v5662 = vunpack.c.l.b16 %v1208
        %v5663 = vunpack.c.h.b16 %v1208
        %v5664 = vunpack.c.l.b16 %v1209
        %v5665 = vunpack.c.h.b16 %v1209
        %v5666 = vunpack.c.l.b16 %v1210
        %v5667 = vunpack.c.h.b16 %v1210
        %v5668 = vunpack.c.l.b16 %v1211
        %v5669 = vunpack.c.h.b16 %v1211
        %v5670 = vunpack.c.l.b16 %v1212
        %v5671 = vunpack.c.h.b16 %v1212
        %v5672 = vunpack.c.l.b16 %v1213
        %v5673 = vunpack.c.h.b16 %v1213
        %v5674 = vunpack.c.l.b16 %v1214
        %v5675 = vunpack.c.h.b16 %v1214
        %v5676 = vunpack.c.l.b16 %v1215
        %v5677 = vunpack.c.h.b16 %v1215
        %v5678 = vunpack.c.l.b16 %v1216
        %v5679 = vunpack.c.h.b16 %v1216
        %v5680 = vunpack.c.l.b16 %v1217
        %v5681 = vunpack.c.h.b16 %v1217
        %v5682 = vunpack.c.l.b16 %v1218
        %v5683 = vunpack.c.h.b16 %v1218
        %v5684 = vunpack.c.l.b16 %v1219
        %v5685 = vunpack.c.h.b16 %v1219
        %v5686 = vunpack.c.l.b16 %v1220
        %v5687 = vunpack.c.h.b16 %v1220
        %v5688 = vunpack.c.l.b16 %v1221
        %v5689 = vunpack.c.h.b16 %v1221
        %v5690 = vunpack.c.l.b16 %v1222
        %v5691 = vunpack.c.h.b16 %v1222
        %v5692 = vunpack.c.l.b16 %v1223
        %v5693 = vunpack.c.h.b16 %v1223
        %v5694 = vunpack.c.l.b16 %v1224
        %v5695 = vunpack.c.h.b16 %v1224
        %v5696 = vunpack.c.l.b16 %v1225
        %v5697 = vunpack.c.h.b16 %v1225
        %v5698 = vunpack.c.l.b16 %v1226
        %v5699 = vunpack.c.h.b16 %v1226
        %v5700 = vunpack.c.l.b16 %v1227
        %v5701 = vunpack.c.h.b16 %v1227
        %v5702 = vunpack.c.l.b16 %v1228
        %v5703 = vunpack.c.h.b16 %v1228
        %v5704 = vunpack.c.l.b16 %v1229
        %v5705 = vunpack.c.h.b16 %v1229
        %v5706 = vunpack.c.l.b16 %v1230
        %v5707 = vunpack.c.l.b16 %v1231
        %v5708 = vunpack.c.h.b16 %v1231
        %v5709 = vunpack.c.l.b16 %v1232
        %v5710 = vunpack.c.h.b16 %v1232
        %v5711 = vunpack.c.l.b16 %v1233
        %v5712 = vunpack.c.h.b16 %v1233
        %v5713 = vunpack.c.l.b16 %v1234
        %v5714 = vunpack.c.h.b16 %v1234
        %v5715 = vunpack.c.l.b16 %v1235
        %v5716 = vunpack.c.h.b16 %v1235
        %v5717 = vunpack.c.l.b16 %v1236
        %v5718 = vunpack.c.h.b16 %v1236
        %v5719 = vunpack.c.l.b16 %v1237
        %v5720 = vunpack.c.h.b16 %v1237
        %v5721 = vunpack.c.l.b16 %v1238
        %v5722 = vunpack.c.h.b16 %v1238
        %v5723 = vunpack.c.l.b16 %v1239
        %v5724 = vunpack.c.h.b16 %v1239
        %v5725 = vunpack.c.l.b16 %v1240
        %v5726 = vunpack.c.h.b16 %v1240
        %v5727 = vunpack.c.l.b16 %v1241
        %v5728 = vunpack.c.h.b16 %v1241
        %v5729 = vunpack.c.l.b16 %v1242
        %v5730 = vunpack.c.h.b16 %v1242
        %v5731 = vunpack.c.l.b16 %v1243
        %v5732 = vunpack.c.h.b16 %v1243
        %v5733 = vunpack.c.l.b16 %v1244
        %v5734 = vunpack.c.h.b16 %v1244
        %v5735 = vunpack.c.l.b16 %v1245
        %v5736 = vunpack.c.h.b16 %v1245
        %v5737 = vunpack.c.l.b16 %v1246
        %v5738 = vunpack.c.h.b16 %v1246
        %v5739 = vunpack.c.l.b16 %v1247
        %v5740 = vunpack.c.h.b16 %v1247
        %v5741 = vunpack.c.l.b16 %v1248
        %v5742 = vunpack.c.h.b16 %v1248
        %v5743 = vunpack.c.l.b16 %v1249
        %v5744 = vunpack.c.h.b16 %v1249
        %v5745 = vunpack.c.l.b16 %v1250
        %v5746 = vunpack.c.h.b16 %v1250
        %v5747 = vunpack.c.l.b16 %v1251
        %v5748 = vunpack.c.h.b16 %v1251
        %v5749 = vunpack.c.l.b16 %v1252
        %v5750 = vunpack.c.h.b16 %v1252
        %v5751 = vunpack.c.l.b16 %v1253
        %v5752 = vunpack.c.h.b16 %v1253
        %v5753 = vunpack.c.l.b16 %v1254
        %v5754 = vunpack.c.h.b16 %v1254
        %v5755 = vunpack.c.l.b16 %v1255
        %v5756 = vunpack.c.l.b16 %v1256
        %v5757 = vunpack.c.h.b16 %v1256
        %v5758 = vunpack.c.l.b16 %v1257
        %v5759 = vunpack.c.h.b16 %v1257
        %v5760 = vunpack.c.l.b16 %v1258
        %v5761 = vunpack.c.h.b16 %v1258
        %v5762 = vunpack.c.l.b16 %v1259
        %v5763 = vunpack.c.h.b16 %v1259
        %v5764 = vunpack.c.l.b16 %v1260
        %v5765 = vunpack.c.h.b16 %v1260
        %v5766 = vunpack.c.l.b16 %v1261
        %v5767 = vunpack.c.h.b16 %v1261
        %v5768 = vunpack.c.l.b16 %v1262
        %v5769 = vunpack.c.h.b16 %v1262
        %v5770 = vunpack.c.l.b16 %v1263
        %v5771 = vunpack.c.h.b16 %v1263
        %v5772 = vunpack.c.l.b16 %v1264
        %v5773 = vunpack.c.h.b16 %v1264
        %v5774 = vunpack.c.l.b16 %v1265
        %v5775 = vunpack.c.h.b16 %v1265
        %v5776 = vunpack.c.l.b16 %v1266
        %v5777 = vunpack.c.h.b16 %v1266
        %v5778 = vunpack.c.l.b16 %v1267
        %v5779 = vunpack.c.h.b16 %v1267
        %v5780 = vunpack.c.l.b16 %v1268
        %v5781 = vunpack.c.h.b16 %v1268
        %v5782 = vunpack.c.l.b16 %v1269
        %v5783 = vunpack.c.h.b16 %v1269
        %v5784 = vunpack.c.l.b16 %v1270
        %v5785 = vunpack.c.h.b16 %v1270
        %v5786 = vunpack.c.l.b16 %v1271
        %v5787 = vunpack.c.h.b16 %v1271
        %v5788 = vunpack.c.l.b16 %v1272
        %v5789 = vunpack.c.h.b16 %v1272
        %v5790 = vunpack.c.l.b16 %v1273
        %v5791 = vunpack.c.h.b16 %v1273
        %v5792 = vunpack.c.l.b16 %v1274
        %v5793 = vunpack.c.h.b16 %v1274
        %v5794 = vunpack.c.l.b16 %v1275
        %v5795 = vunpack.c.h.b16 %v1275
        %v5796 = vunpack.c.l.b16 %v1276
        %v5797 = vunpack.c.h.b16 %v1276
        %v5798 = vunpack.c.l.b16 %v1277
        %v5799 = vunpack.c.h.b16 %v1277
        %v5800 = vunpack.c.l.b16 %v1278
        %v5801 = vunpack.c.h.b16 %v1278
        %v5802 = vunpack.c.l.b16 %v1279
        %v5803 = vunpack.c.h.b16 %v1279
        %v5804 = vunpack.c.l.b16 %v1280
        %v5805 = vunpack.c.l.b16 %v1281
        %v5806 = vunpack.c.h.b16 %v1281
        %v5807 = vunpack.c.l.b16 %v1282
        %v5808 = vunpack.c.h.b16 %v1282
        %v5809 = vunpack.c.l.b16 %v1283
        %v5810 = vunpack.c.h.b16 %v1283
        %v5811 = vunpack.c.l.b16 %v1284
        %v5812 = vunpack.c.h.b16 %v1284
        %v5813 = vunpack.c.l.b16 %v1285
        %v5814 = vunpack.c.h.b16 %v1285
        %v5815 = vunpack.c.l.b16 %v1286
        %v5816 = vunpack.c.h.b16 %v1286
        %v5817 = vunpack.c.l.b16 %v1287
        %v5818 = vunpack.c.h.b16 %v1287
        %v5819 = vunpack.c.l.b16 %v1288
        %v5820 = vunpack.c.h.b16 %v1288
        %v5821 = vunpack.c.l.b16 %v1289
        %v5822 = vunpack.c.h.b16 %v1289
        %v5823 = vunpack.c.l.b16 %v1290
        %v5824 = vunpack.c.h.b16 %v1290
        %v5825 = vunpack.c.l.b16 %v1291
        %v5826 = vunpack.c.h.b16 %v1291
        %v5827 = vunpack.c.l.b16 %v1292
        %v5828 = vunpack.c.h.b16 %v1292
        %v5829 = vunpack.c.l.b16 %v1293
        %v5830 = vunpack.c.h.b16 %v1293
        %v5831 = vunpack.c.l.b16 %v1294
        %v5832 = vunpack.c.h.b16 %v1294
        %v5833 = vunpack.c.l.b16 %v1295
        %v5834 = vunpack.c.h.b16 %v1295
        %v5835 = vunpack.c.l.b16 %v1296
        %v5836 = vunpack.c.h.b16 %v1296
        %v5837 = vunpack.c.l.b16 %v1297
        %v5838 = vunpack.c.h.b16 %v1297
        %v5839 = vunpack.c.l.b16 %v1298
        %v5840 = vunpack.c.h.b16 %v1298
        %v5841 = vunpack.c.l.b16 %v1299
        %v5842 = vunpack.c.h.b16 %v1299
        %v5843 = vunpack.c.l.b16 %v1300
        %v5844 = vunpack.c.h.b16 %v1300
        %v5845 = vunpack.c.l.b16 %v1301
        %v5846 = vunpack.c.h.b16 %v1301
        %v5847 = vunpack.c.l.b16 %v1302
        %v5848 = vunpack.c.h.b16 %v1302
        %v5849 = vunpack.c.l.b16 %v1303
        %v5850 = vunpack.c.h.b16 %v1303
        %v5851 = vunpack.c.l.b16 %v1304
        %v5852 = vunpack.c.h.b16 %v1304
        %v5853 = vunpack.c.l.b16 %v1305
        %v5854 = vunpack.c.l.b16 %v1306
        %v5855 = vunpack.c.h.b16 %v1306
        %v5856 = vunpack.c.l.b16 %v1307
        %v5857 = vunpack.c.h.b16 %v1307
        %v5858 = vunpack.c.l.b16 %v1308
        %v5859 = vunpack.c.h.b16 %v1308
        %v5860 = vunpack.c.l.b16 %v1309
        %v5861 = vunpack.c.h.b16 %v1309
        %v5862 = vunpack.c.l.b16 %v1310
        %v5863 = vunpack.c.h.b16 %v1310
        %v5864 = vunpack.c.l.b16 %v1311
        %v5865 = vunpack.c.h.b16 %v1311
        %v5866 = vunpack.c.l.b16 %v1312
        %v5867 = vunpack.c.h.b16 %v1312
        %v5868 = vunpack.c.l.b16 %v1313
        %v5869 = vunpack.c.h.b16 %v1313
        %v5870 = vunpack.c.l.b16 %v1314
        %v5871 = vunpack.c.h.b16 %v1314
        %v5872 = vunpack.c.l.b16 %v1315
        %v5873 = vunpack.c.h.b16 %v1315
        %v5874 = vunpack.c.l.b16 %v1316
        %v5875 = vunpack.c.h.b16 %v1316
        %v5876 = vunpack.c.l.b16 %v1317
        %v5877 = vunpack.c.h.b16 %v1317
        %v5878 = vunpack.c.l.b16 %v1318
        %v5879 = vunpack.c.h.b16 %v1318
        %v5880 = vunpack.c.l.b16 %v1319
        %v5881 = vunpack.c.h.b16 %v1319
        %v5882 = vunpack.c.l.b16 %v1320
        %v5883 = vunpack.c.h.b16 %v1320
        %v5884 = vunpack.c.l.b16 %v1321
        %v5885 = vunpack.c.h.b16 %v1321
        %v5886 = vunpack.c.l.b16 %v1322
        %v5887 = vunpack.c.h.b16 %v1322
        %v5888 = vunpack.c.l.b16 %v1323
        %v5889 = vunpack.c.h.b16 %v1323
        %v5890 = vunpack.c.l.b16 %v1324
        %v5891 = vunpack.c.h.b16 %v1324
        %v5892 = vunpack.c.l.b16 %v1325
        %v5893 = vunpack.c.h.b16 %v1325
        %v5894 = vunpack.c.l.b16 %v1326
        %v5895 = vunpack.c.h.b16 %v1326
        %v5896 = vunpack.c.l.b16 %v1327
        %v5897 = vunpack.c.h.b16 %v1327
        %v5898 = vunpack.c.l.b16 %v1328
        %v5899 = vunpack.c.h.b16 %v1328
        %v5900 = vunpack.c.l.b16 %v1329
        %v5901 = vunpack.c.h.b16 %v1329
        %v5902 = vunpack.c.l.b16 %v1330
        %v5903 = vunpack.c.l.b16 %v1331
        %v5904 = vunpack.c.h.b16 %v1331
        %v5905 = vunpack.c.l.b16 %v1332
        %v5906 = vunpack.c.h.b16 %v1332
        %v5907 = vunpack.c.l.b16 %v1333
        %v5908 = vunpack.c.h.b16 %v1333
        %v5909 = vunpack.c.l.b16 %v1334
        %v5910 = vunpack.c.h.b16 %v1334
        %v5911 = vunpack.c.l.b16 %v1335
        %v5912 = vunpack.c.h.b16 %v1335
        %v5913 = vunpack.c.l.b16 %v1336
        %v5914 = vunpack.c.h.b16 %v1336
        %v5915 = vunpack.c.l.b16 %v1337
        %v5916 = vunpack.c.h.b16 %v1337
        %v5917 = vunpack.c.l.b16 %v1338
        %v5918 = vunpack.c.h.b16 %v1338
        %v5919 = vunpack.c.l.b16 %v1339
        %v5920 = vunpack.c.h.b16 %v1339
        %v5921 = vunpack.c.l.b16 %v1340
        %v5922 = vunpack.c.h.b16 %v1340
        %v5923 = vunpack.c.l.b16 %v1341
        %v5924 = vunpack.c.h.b16 %v1341
        %v5925 = vunpack.c.l.b16 %v1342
        %v5926 = vunpack.c.h.b16 %v1342
        %v5927 = vunpack.c.l.b16 %v1343
        %v5928 = vunpack.c.h.b16 %v1343
        %v5929 = vunpack.c.l.b16 %v1344
        %v5930 = vunpack.c.h.b16 %v1344
        %v5931 = vunpack.c.l.b16 %v1345
        %v5932 = vunpack.c.h.b16 %v1345
        %v5933 = vunpack.c.l.b16 %v1346
        %v5934 = vunpack.c.h.b16 %v1346
        %v5935 = vunpack.c.l.b16 %v1347
        %v5936 = vunpack.c.h.b16 %v1347
        %v5937 = vunpack.c.l.b16 %v1348
        %v5938 = vunpack.c.h.b16 %v1348
        %v5939 = vunpack.c.l.b16 %v1349
        %v5940 = vunpack.c.h.b16 %v1349
        %v5941 = vunpack.c.l.b16 %v1350
        %v5942 = vunpack.c.h.b16 %v1350
        %v5943 = vunpack.c.l.b16 %v1351
        %v5944 = vunpack.c.h.b16 %v1351
        %v5945 = vunpack.c.l.b16 %v1352
        %v5946 = vunpack.c.h.b16 %v1352
        %v5947 = vunpack.c.l.b16 %v1353
        %v5948 = vunpack.c.h.b16 %v1353
        %v5949 = vunpack.c.l.b16 %v1354
        %v5950 = vunpack.c.h.b16 %v1354
        %v5951 = vunpack.c.l.b16 %v1355
        %v5952 = vunpack.c.l.b16 %v1356
        %v5953 = vunpack.c.h.b16 %v1356
        %v5954 = vunpack.c.l.b16 %v1357
        %v5955 = vunpack.c.h.b16 %v1357
        %v5956 = vunpack.c.l.b16 %v1358
        %v5957 = vunpack.c.h.b16 %v1358
        %v5958 = vunpack.c.l.b16 %v1359
        %v5959 = vunpack.c.h.b16 %v1359
        %v5960 = vunpack.c.l.b16 %v1360
        %v5961 = vunpack.c.h.b16 %v1360
        %v5962 = vunpack.c.l.b16 %v1361
        %v5963 = vunpack.c.h.b16 %v1361
        %v5964 = vunpack.c.l.b16 %v1362
        %v5965 = vunpack.c.h.b16 %v1362
        %v5966 = vunpack.c.l.b16 %v1363
        %v5967 = vunpack.c.h.b16 %v1363
        %v5968 = vunpack.c.l.b16 %v1364
        %v5969 = vunpack.c.h.b16 %v1364
        %v5970 = vunpack.c.l.b16 %v1365
        %v5971 = vunpack.c.h.b16 %v1365
        %v5972 = vunpack.c.l.b16 %v1366
        %v5973 = vunpack.c.h.b16 %v1366
        %v5974 = vunpack.c.l.b16 %v1367
        %v5975 = vunpack.c.h.b16 %v1367
        %v5976 = vunpack.c.l.b16 %v1368
        %v5977 = vunpack.c.h.b16 %v1368
        %v5978 = vunpack.c.l.b16 %v1369
        %v5979 = vunpack.c.h.b16 %v1369
        %v5980 = vunpack.c.l.b16 %v1370
        %v5981 = vunpack.c.h.b16 %v1370
        %v5982 = vunpack.c.l.b16 %v1371
        %v5983 = vunpack.c.h.b16 %v1371
        %v5984 = vunpack.c.l.b16 %v1372
        %v5985 = vunpack.c.h.b16 %v1372
        %v5986 = vunpack.c.l.b16 %v1373
        %v5987 = vunpack.c.h.b16 %v1373
        %v5988 = vunpack.c.l.b16 %v1374
        %v5989 = vunpack.c.h.b16 %v1374
        %v5990 = vunpack.c.l.b16 %v1375
        %v5991 = vunpack.c.h.b16 %v1375
        %v5992 = vunpack.c.l.b16 %v1376
        %v5993 = vunpack.c.h.b16 %v1376
        %v5994 = vunpack.c.l.b16 %v1377
        %v5995 = vunpack.c.h.b16 %v1377
        %v5996 = vunpack.c.l.b16 %v1378
        %v5997 = vunpack.c.h.b16 %v1378
        %v5998 = vunpack.c.l.b16 %v1379
        %v5999 = vunpack.c.h.b16 %v1379
        %v6000 = vunpack.c.l.b16 %v1380
        %v6001 = vunpack.c.l.b16 %v1381
        %v6002 = vunpack.c.h.b16 %v1381
        %v6003 = vunpack.c.l.b16 %v1382
        %v6004 = vunpack.c.h.b16 %v1382
        %v6005 = vunpack.c.l.b16 %v1383
        %v6006 = vunpack.c.h.b16 %v1383
        %v6007 = vunpack.c.l.b16 %v1384
        %v6008 = vunpack.c.h.b16 %v1384
        %v6009 = vunpack.c.l.b16 %v1385
        %v6010 = vunpack.c.h.b16 %v1385
        %v6011 = vunpack.c.l.b16 %v1386
        %v6012 = vunpack.c.h.b16 %v1386
        %v6013 = vunpack.c.l.b16 %v1387
        %v6014 = vunpack.c.h.b16 %v1387
        %v6015 = vunpack.c.l.b16 %v1388
        %v6016 = vunpack.c.h.b16 %v1388
        %v6017 = vunpack.c.l.b16 %v1389
        %v6018 = vunpack.c.h.b16 %v1389
        %v6019 = vunpack.c.l.b16 %v1390
        %v6020 = vunpack.c.h.b16 %v1390
        %v6021 = vunpack.c.l.b16 %v1391
        %v6022 = vunpack.c.h.b16 %v1391
        %v6023 = vunpack.c.l.b16 %v1392
        %v6024 = vunpack.c.h.b16 %v1392
        %v6025 = vunpack.c.l.b16 %v1393
        %v6026 = vunpack.c.h.b16 %v1393
        %v6027 = vunpack.c.l.b16 %v1394
        %v6028 = vunpack.c.h.b16 %v1394
        %v6029 = vunpack.c.l.b16 %v1395
        %v6030 = vunpack.c.h.b16 %v1395
        %v6031 = vunpack.c.l.b16 %v1396
        %v6032 = vunpack.c.h.b16 %v1396
        %v6033 = vunpack.c.l.b16 %v1397
        %v6034 = vunpack.c.h.b16 %v1397
        %v6035 = vunpack.c.l.b16 %v1398
        %v6036 = vunpack.c.h.b16 %v1398
        %v6037 = vunpack.c.l.b16 %v1399
        %v6038 = vunpack.c.h.b16 %v1399
        %v6039 = vunpack.c.l.b16 %v1400
        %v6040 = vunpack.c.h.b16 %v1400
        %v6041 = vunpack.c.l.b16 %v1401
        %v6042 = vunpack.c.h.b16 %v1401
        %v6043 = vunpack.c.l.b16 %v1402
        %v6044 = vunpack.c.h.b16 %v1402
        %v6045 = vunpack.c.l.b16 %v1403
        %v6046 = vunpack.c.h.b16 %v1403
        %v6047 = vunpack.c.l.b16 %v1404
        %v6048 = vunpack.c.h.b16 %v1404
        %v6049 = vunpack.c.l.b16 %v1405
        %v6050 = vunpack.c.l.b16 %v1406
        %v6051 = vunpack.c.h.b16 %v1406
        %v6052 = vunpack.c.l.b16 %v1407
        %v6053 = vunpack.c.h.b16 %v1407
        %v6054 = vunpack.c.l.b16 %v1408
        %v6055 = vunpack.c.h.b16 %v1408
        %v6056 = vunpack.c.l.b16 %v1409
        %v6057 = vunpack.c.h.b16 %v1409
        %v6058 = vunpack.c.l.b16 %v1410
        %v6059 = vunpack.c.h.b16 %v1410
        %v6060 = vunpack.c.l.b16 %v1411
        %v6061 = vunpack.c.h.b16 %v1411
        %v6062 = vunpack.c.l.b16 %v1412
        %v6063 = vunpack.c.h.b16 %v1412
        %v6064 = vunpack.c.l.b16 %v1413
        %v6065 = vunpack.c.h.b16 %v1413
        %v6066 = vunpack.c.l.b16 %v1414
        %v6067 = vunpack.c.h.b16 %v1414
        %v6068 = vunpack.c.l.b16 %v1415
        %v6069 = vunpack.c.h.b16 %v1415
        %v6070 = vunpack.c.l.b16 %v1416
        %v6071 = vunpack.c.h.b16 %v1416
        %v6072 = vunpack.c.l.b16 %v1417
        %v6073 = vunpack.c.h.b16 %v1417
        %v6074 = vunpack.c.l.b16 %v1418
        %v6075 = vunpack.c.h.b16 %v1418
        %v6076 = vunpack.c.l.b16 %v1419
        %v6077 = vunpack.c.h.b16 %v1419
        %v6078 = vunpack.c.l.b16 %v1420
        %v6079 = vunpack.c.h.b16 %v1420
        %v6080 = vunpack.c.l.b16 %v1421
        %v6081 = vunpack.c.h.b16 %v1421
        %v6082 = vunpack.c.l.b16 %v1422
        %v6083 = vunpack.c.h.b16 %v1422
        %v6084 = vunpack.c.l.b16 %v1423
        %v6085 = vunpack.c.h.b16 %v1423
        %v6086 = vunpack.c.l.b16 %v1424
        %v6087 = vunpack.c.h.b16 %v1424
        %v6088 = vunpack.c.l.b16 %v1425
        %v6089 = vunpack.c.h.b16 %v1425
        %v6090 = vunpack.c.l.b16 %v1426
        %v6091 = vunpack.c.h.b16 %v1426
        %v6092 = vunpack.c.l.b16 %v1427
        %v6093 = vunpack.c.h.b16 %v1427
        %v6094 = vunpack.c.l.b16 %v1428
        %v6095 = vunpack.c.h.b16 %v1428
        %v6096 = vunpack.c.l.b16 %v1429
        %v6097 = vunpack.c.h.b16 %v1429
        %v6098 = vunpack.c.l.b16 %v1430
        %v6099 = vunpack.c.l.b16 %v1431
        %v6100 = vunpack.c.h.b16 %v1431
        %v6101 = vunpack.c.l.b16 %v1432
        %v6102 = vunpack.c.h.b16 %v1432
        %v6103 = vunpack.c.l.b16 %v1433
        %v6104 = vunpack.c.h.b16 %v1433
        %v6105 = vunpack.c.l.b16 %v1434
        %v6106 = vunpack.c.h.b16 %v1434
        %v6107 = vunpack.c.l.b16 %v1435
        %v6108 = vunpack.c.h.b16 %v1435
        %v6109 = vunpack.c.l.b16 %v1436
        %v6110 = vunpack.c.h.b16 %v1436
        %v6111 = vunpack.c.l.b16 %v1437
        %v6112 = vunpack.c.h.b16 %v1437
        %v6113 = vunpack.c.l.b16 %v1438
        %v6114 = vunpack.c.h.b16 %v1438
        %v6115 = vunpack.c.l.b16 %v1439
        %v6116 = vunpack.c.h.b16 %v1439
        %v6117 = vunpack.c.l.b16 %v1440
        %v6118 = vunpack.c.h.b16 %v1440
        %v6119 = vunpack.c.l.b16 %v1441
        %v6120 = vunpack.c.h.b16 %v1441
        %v6121 = vunpack.c.l.b16 %v1442
        %v6122 = vunpack.c.h.b16 %v1442
        %v6123 = vunpack.c.l.b16 %v1443
        %v6124 = vunpack.c.h.b16 %v1443
        %v6125 = vunpack.c.l.b16 %v1444
        %v6126 = vunpack.c.h.b16 %v1444
        %v6127 = vunpack.c.l.b16 %v1445
        %v6128 = vunpack.c.h.b16 %v1445
        %v6129 = vunpack.c.l.b16 %v1446
        %v6130 = vunpack.c.h.b16 %v1446
        %v6131 = vunpack.c.l.b16 %v1447
        %v6132 = vunpack.c.h.b16 %v1447
        %v6133 = vunpack.c.l.b16 %v1448
        %v6134 = vunpack.c.h.b16 %v1448
        %v6135 = vunpack.c.l.b16 %v1449
        %v6136 = vunpack.c.h.b16 %v1449
        %v6137 = vunpack.c.l.b16 %v1450
        %v6138 = vunpack.c.h.b16 %v1450
        %v6139 = vunpack.c.l.b16 %v1451
        %v6140 = vunpack.c.h.b16 %v1451
        %v6141 = vunpack.c.l.b16 %v1452
        %v6142 = vunpack.c.h.b16 %v1452
        %v6143 = vunpack.c.l.b16 %v1453
        %v6144 = vunpack.c.h.b16 %v1453
        %v6145 = vunpack.c.l.b16 %v1454
        %v6146 = vunpack.c.h.b16 %v1454
        %v6147 = vunpack.c.l.b16 %v1455
        %v6148 = vunpack.c.l.b16 %v1456
        %v6149 = vunpack.c.h.b16 %v1456
        %v6150 = vunpack.c.l.b16 %v1457
        %v6151 = vunpack.c.h.b16 %v1457
        %v6152 = vunpack.c.l.b16 %v1458
        %v6153 = vunpack.c.h.b16 %v1458
        %v6154 = vunpack.c.l.b16 %v1459
        %v6155 = vunpack.c.h.b16 %v1459
        %v6156 = vunpack.c.l.b16 %v1460
        %v6157 = vunpack.c.h.b16 %v1460
        %v6158 = vunpack.c.l.b16 %v1461
        %v6159 = vunpack.c.h.b16 %v1461
        %v6160 = vunpack.c.l.b16 %v1462
        %v6161 = vunpack.c.h.b16 %v1462
        %v6162 = vunpack.c.l.b16 %v1463
        %v6163 = vunpack.c.h.b16 %v1463
        %v6164 = vunpack.c.l.b16 %v1464
        %v6165 = vunpack.c.h.b16 %v1464
        %v6166 = vunpack.c.l.b16 %v1465
        %v6167 = vunpack.c.h.b16 %v1465
        %v6168 = vunpack.c.l.b16 %v1466
        %v6169 = vunpack.c.h.b16 %v1466
        %v6170 = vunpack.c.l.b16 %v1467
        %v6171 = vunpack.c.h.b16 %v1467
        %v6172 = vunpack.c.l.b16 %v1468
        %v6173 = vunpack.c.h.b16 %v1468
        %v6174 = vunpack.c.l.b16 %v1469
        %v6175 = vunpack.c.h.b16 %v1469
        %v6176 = vunpack.c.l.b16 %v1470
        %v6177 = vunpack.c.h.b16 %v1470
        %v6178 = vunpack.c.l.b16 %v1471
        %v6179 = vunpack.c.h.b16 %v1471
        %v6180 = vunpack.c.l.b16 %v1472
        %v6181 = vunpack.c.h.b16 %v1472
        %v6182 = vunpack.c.l.b16 %v1473
        %v6183 = vunpack.c.h.b16 %v1473
        %v6184 = vunpack.c.l.b16 %v1474
        %v6185 = vunpack.c.h.b16 %v1474
        %v6186 = vunpack.c.l.b16 %v1475
        %v6187 = vunpack.c.h.b16 %v1475
        %v6188 = vunpack.c.l.b16 %v1476
        %v6189 = vunpack.c.h.b16 %v1476
        %v6190 = vunpack.c.l.b16 %v1477
        %v6191 = vunpack.c.h.b16 %v1477
        %v6192 = vunpack.c.l.b16 %v1478
        %v6193 = vunpack.c.h.b16 %v1478
        %v6194 = vunpack.c.l.b16 %v1479
        %v6195 = vunpack.c.h.b16 %v1479
        %v6196 = vunpack.c.l.b16 %v1480
        %v6197 = vunpack.c.l.b16 %v1481
        %v6198 = vunpack.c.h.b16 %v1481
        %v6199 = vunpack.c.l.b16 %v1482
        %v6200 = vunpack.c.h.b16 %v1482
        %v6201 = vunpack.c.l.b16 %v1483
        %v6202 = vunpack.c.h.b16 %v1483
        %v6203 = vunpack.c.l.b16 %v1484
        %v6204 = vunpack.c.h.b16 %v1484
        %v6205 = vunpack.c.l.b16 %v1485
        %v6206 = vunpack.c.h.b16 %v1485
        %v6207 = vunpack.c.l.b16 %v1486
        %v6208 = vunpack.c.h.b16 %v1486
        %v6209 = vunpack.c.l.b16 %v1487
        %v6210 = vunpack.c.h.b16 %v1487
        %v6211 = vunpack.c.l.b16 %v1488
        %v6212 = vunpack.c.h.b16 %v1488
        %v6213 = vunpack.c.l.b16 %v1489
        %v6214 = vunpack.c.h.b16 %v1489
        %v6215 = vunpack.c.l.b16 %v1490
        %v6216 = vunpack.c.h.b16 %v1490
        %v6217 = vunpack.c.l.b16 %v1491
        %v6218 = vunpack.c.h.b16 %v1491
        %v6219 = vunpack.c.l.b16 %v1492
        %v6220 = vunpack.c.h.b16 %v1492
        %v6221 = vunpack.c.l.b16 %v1493
        %v6222 = vunpack.c.h.b16 %v1493
        %v6223 = vunpack.c.l.b16 %v1494
        %v6224 = vunpack.c.h.b16 %v1494
        %v6225 = vunpack.c.l.b16 %v1495
        %v6226 = vunpack.c.h.b16 %v1495
        %v6227 = vunpack.c.l.b16 %v1496
        %v6228 = vunpack.c.h.b16 %v1496
        %v6229 = vunpack.c.l.b16 %v1497
        %v6230 = vunpack.c.h.b16 %v1497
        %v6231 = vunpack.c.l.b16 %v1498
        %v6232 = vunpack.c.h.b16 %v1498
        %v6233 = vunpack.c.l.b16 %v1499
        %v6234 = vunpack.c.h.b16 %v1499
        %v6235 = vunpack.c.l.b16 %v1500
        %v6236 = vunpack.c.h.b16 %v1500
        %v6237 = vunpack.c.l.b16 %v1501
        %v6238 = vunpack.c.h.b16 %v1501
        %v6239 = vunpack.c.l.b16 %v1502
        %v6240 = vunpack.c.h.b16 %v1502
        %v6241 = vunpack.c.l.b16 %v1503
        %v6242 = vunpack.c.h.b16 %v1503
        %v6243 = vunpack.c.l.b16 %v1504
        %v6244 = vunpack.c.h.b16 %v1504
        %v6245 = vunpack.c.l.b16 %v1505
        %v6246 = vunpack.c.l.b16 %v1506
        %v6247 = vunpack.c.h.b16 %v1506
        %v6248 = vunpack.c.l.b16 %v1507
        %v6249 = vunpack.c.h.b16 %v1507
        %v6250 = vunpack.c.l.b16 %v1508
        %v6251 = vunpack.c.h.b16 %v1508
        %v6252 = vunpack.c.l.b16 %v1509
        %v6253 = vunpack.c.h.b16 %v1509
        %v6254 = vunpack.c.l.b16 %v1510
        %v6255 = vunpack.c.h.b16 %v1510
        %v6256 = vunpack.c.l.b16 %v1511
        %v6257 = vunpack.c.h.b16 %v1511
        %v6258 = vunpack.c.l.b16 %v1512
        %v6259 = vunpack.c.h.b16 %v1512
        %v6260 = vunpack.c.l.b16 %v1513
        %v6261 = vunpack.c.h.b16 %v1513
        %v6262 = vunpack.c.l.b16 %v1514
        %v6263 = vunpack.c.h.b16 %v1514
        %v6264 = vunpack.c.l.b16 %v1515
        %v6265 = vunpack.c.h.b16 %v1515
        %v6266 = vunpack.c.l.b16 %v1516
        %v6267 = vunpack.c.h.b16 %v1516
        %v6268 = vunpack.c.l.b16 %v1517
        %v6269 = vunpack.c.h.b16 %v1517
        %v6270 = vunpack.c.l.b16 %v1518
        %v6271 = vunpack.c.h.b16 %v1518
        %v6272 = vunpack.c.l.b16 %v1519
        %v6273 = vunpack.c.h.b16 %v1519
        %v6274 = vunpack.c.l.b16 %v1520
        %v6275 = vunpack.c.h.b16 %v1520
        %v6276 = vunpack.c.l.b16 %v1521
        %v6277 = vunpack.c.h.b16 %v1521
        %v6278 = vunpack.c.l.b16 %v1522
        %v6279 = vunpack.c.h.b16 %v1522
        %v6280 = vunpack.c.l.b16 %v1523
        %v6281 = vunpack.c.h.b16 %v1523
        %v6282 = vunpack.c.l.b16 %v1524
        %v6283 = vunpack.c.h.b16 %v1524
        %v6284 = vunpack.c.l.b16 %v1525
        %v6285 = vunpack.c.h.b16 %v1525
        %v6286 = vunpack.c.l.b16 %v1526
        %v6287 = vunpack.c.h.b16 %v1526
        %v6288 = vunpack.c.l.b16 %v1527
        %v6289 = vunpack.c.h.b16 %v1527
        %v6290 = vunpack.c.l.b16 %v1528
        %v6291 = vunpack.c.h.b16 %v1528
        %v6292 = vunpack.c.l.b16 %v1529
        %v6293 = vunpack.c.h.b16 %v1529
        %v6294 = vunpack.c.l.b16 %v1530
        %v6295 = vunpack.c.l.b16 %v1531
        %v6296 = vunpack.c.h.b16 %v1531
        %v6297 = vunpack.c.l.b16 %v1532
        %v6298 = vunpack.c.h.b16 %v1532
        %v6299 = vunpack.c.l.b16 %v1533
        %v6300 = vunpack.c.h.b16 %v1533
        %v6301 = vunpack.c.l.b16 %v1534
        %v6302 = vunpack.c.h.b16 %v1534
        %v6303 = vunpack.c.l.b16 %v1535
        %v6304 = vunpack.c.h.b16 %v1535
        %v6305 = vunpack.c.l.b16 %v1536
        %v6306 = vunpack.c.h.b16 %v1536
        %v6307 = vunpack.c.l.b16 %v1537
        %v6308 = vunpack.c.h.b16 %v1537
        %v6309 = vunpack.c.l.b16 %v1538
        %v6310 = vunpack.c.h.b16 %v1538
        %v6311 = vunpack.c.l.b16 %v1539
        %v6312 = vunpack.c.h.b16 %v1539
        %v6313 = vunpack.c.l.b16 %v1540
        %v6314 = vunpack.c.h.b16 %v1540
        %v6315 = vunpack.c.l.b16 %v1541
        %v6316 = vunpack.c.h.b16 %v1541
        %v6317 = vunpack.c.l.b16 %v1542
        %v6318 = vunpack.c.h.b16 %v1542
        %v6319 = vunpack.c.l.b16 %v1543
        %v6320 = vunpack.c.h.b16 %v1543
        %v6321 = vunpack.c.l.b16 %v1544
        %v6322 = vunpack.c.h.b16 %v1544
        %v6323 = vunpack.c.l.b16 %v1545
        %v6324 = vunpack.c.h.b16 %v1545
        %v6325 = vunpack.c.l.b16 %v1546
        %v6326 = vunpack.c.h.b16 %v1546
        %v6327 = vunpack.c.l.b16 %v1547
        %v6328 = vunpack.c.h.b16 %v1547
        %v6329 = vunpack.c.l.b16 %v1548
        %v6330 = vunpack.c.h.b16 %v1548
        %v6331 = vunpack.c.l.b16 %v1549
        %v6332 = vunpack.c.h.b16 %v1549
        %v6333 = vunpack.c.l.b16 %v1550
        %v6334 = vunpack.c.h.b16 %v1550
        %v6335 = vunpack.c.l.b16 %v1551
        %v6336 = vunpack.c.h.b16 %v1551
        %v6337 = vunpack.c.l.b16 %v1552
        %v6338 = vunpack.c.h.b16 %v1552
        %v6339 = vunpack.c.l.b16 %v1553
        %v6340 = vunpack.c.h.b16 %v1553
        %v6341 = vunpack.c.l.b16 %v1554
        %v6342 = vunpack.c.h.b16 %v1554
        %v6343 = vunpack.c.l.b16 %v1555
        %v6344 = vunpack.c.l.b16 %v1556
        %v6345 = vunpack.c.h.b16 %v1556
        %v6346 = vunpack.c.l.b16 %v1557
        %v6347 = vunpack.c.h.b16 %v1557
        %v6348 = vunpack.c.l.b16 %v1558
        %v6349 = vunpack.c.h.b16 %v1558
        %v6350 = vunpack.c.l.b16 %v1559
        %v6351 = vunpack.c.h.b16 %v1559
        %v6352 = vunpack.c.l.b16 %v1560
        %v6353 = vunpack.c.h.b16 %v1560
        %v6354 = vunpack.c.l.b16 %v1561
        %v6355 = vunpack.c.h.b16 %v1561
        %v6356 = vunpack.c.l.b16 %v1562
        %v6357 = vunpack.c.h.b16 %v1562
        %v6358 = vunpack.c.l.b16 %v1563
        %v6359 = vunpack.c.h.b16 %v1563
        %v6360 = vunpack.c.l.b16 %v1564
        %v6361 = vunpack.c.h.b16 %v1564
        %v6362 = vunpack.c.l.b16 %v1565
        %v6363 = vunpack.c.h.b16 %v1565
        %v6364 = vunpack.c.l.b16 %v1566
        %v6365 = vunpack.c.h.b16 %v1566
        %v6366 = vunpack.c.l.b16 %v1567
        %v6367 = vunpack.c.h.b16 %v1567
        %v6368 = vunpack.c.l.b16 %v1568
        %v6369 = vunpack.c.h.b16 %v1568
        %v6370 = vunpack.c.l.b16 %v1569
        %v6371 = vunpack.c.h.b16 %v1569
        %v6372 = vunpack.c.l.b16 %v1570
        %v6373 = vunpack.c.h.b16 %v1570
        %v6374 = vunpack.c.l.b16 %v1571
        %v6375 = vunpack.c.h.b16 %v1571
        %v6376 = vunpack.c.l.b16 %v1572
        %v6377 = vunpack.c.h.b16 %v1572
        %v6378 = vunpack.c.l.b16 %v1573
        %v6379 = vunpack.c.h.b16 %v1573
        %v6380 = vunpack.c.l.b16 %v1574
        %v6381 = vunpack.c.h.b16 %v1574
        %v6382 = vunpack.c.l.b16 %v1575
        %v6383 = vunpack.c.h.b16 %v1575
        %v6384 = vunpack.c.l.b16 %v1576
        %v6385 = vunpack.c.h.b16 %v1576
        %v6386 = vunpack.c.l.b16 %v1577
        %v6387 = vunpack.c.h.b16 %v1577
        %v6388 = vunpack.c.l.b16 %v1578
        %v6389 = vunpack.c.h.b16 %v1578
        %v6390 = vunpack.c.l.b16 %v1579
        %v6391 = vunpack.c.h.b16 %v1579
        %v6392 = vunpack.c.l.b16 %v1580
        %v6393 = vunpack.c.l.b16 %v1581
        %v6394 = vunpack.c.h.b16 %v1581
        %v6395 = vunpack.c.l.b16 %v1582
        %v6396 = vunpack.c.h.b16 %v1582
        %v6397 = vunpack.c.l.b16 %v1583
        %v6398 = vunpack.c.h.b16 %v1583
        %v6399 = vunpack.c.l.b16 %v1584
        %v6400 = vunpack.c.h.b16 %v1584
        %v6401 = vunpack.c.l.b16 %v1585
        %v6402 = vunpack.c.h.b16 %v1585
        %v6403 = vunpack.c.l.b16 %v1586
        %v6404 = vunpack.c.h.b16 %v1586
        %v6405 = vunpack.c.l.b16 %v1587
        %v6406 = vunpack.c.h.b16 %v1587
        %v6407 = vunpack.c.l.b16 %v1588
        %v6408 = vunpack.c.h.b16 %v1588
        %v6409 = vunpack.c.l.b16 %v1589
        %v6410 = vunpack.c.h.b16 %v1589
        %v6411 = vunpack.c.l.b16 %v1590
        %v6412 = vunpack.c.h.b16 %v1590
        %v6413 = vunpack.c.l.b16 %v1591
        %v6414 = vunpack.c.h.b16 %v1591
        %v6415 = vunpack.c.l.b16 %v1592
        %v6416 = vunpack.c.h.b16 %v1592
        %v6417 = vunpack.c.l.b16 %v1593
        %v6418 = vunpack.c.h.b16 %v1593
        %v6419 = vunpack.c.l.b16 %v1594
        %v6420 = vunpack.c.h.b16 %v1594
        %v6421 = vunpack.c.l.b16 %v1595
        %v6422 = vunpack.c.h.b16 %v1595
        %v6423 = vunpack.c.l.b16 %v1596
        %v6424 = vunpack.c.h.b16 %v1596
        %v6425 = vunpack.c.l.b16 %v1597
        %v6426 = vunpack.c.h.b16 %v1597
        %v6427 = vunpack.c.l.b16 %v1598
        %v6428 = vunpack.c.h.b16 %v1598
        %v6429 = vunpack.c.l.b16 %v1599
        %v6430 = vunpack.c.h.b16 %v1599
        %v6431 = vunpack.c.l.b16 %v1600
        %v6432 = vunpack.c.h.b16 %v1600
        %v6433 = vunpack.c.l.b16 %v1601
        %v6434 = vunpack.c.h.b16 %v1601
        %v6435 = vunpack.c.l.b16 %v1602
        %v6436 = vunpack.c.h.b16 %v1602
        %v6437 = vunpack.c.l.b16 %v1603
        %v6438 = vunpack.c.h.b16 %v1603
        %v6439 = vunpack.c.l.b16 %v1604
        %v6440 = vunpack.c.h.b16 %v1604
        %v6441 = vunpack.c.l.b16 %v1605
        %v6442 = vunpack.c.l.b16 %v1606
        %v6443 = vunpack.c.h.b16 %v1606
        %v6444 = vunpack.c.l.b16 %v1607
        %v6445 = vunpack.c.h.b16 %v1607
        %v6446 = vunpack.c.l.b16 %v1608
        %v6447 = vunpack.c.h.b16 %v1608
        %v6448 = vunpack.c.l.b16 %v1609
        %v6449 = vunpack.c.h.b16 %v1609
        %v6450 = vunpack.c.l.b16 %v1610
        %v6451 = vunpack.c.h.b16 %v1610
        %v6452 = vunpack.c.l.b16 %v1611
        %v6453 = vunpack.c.h.b16 %v1611
        %v6454 = vunpack.c.l.b16 %v1612
        %v6455 = vunpack.c.h.b16 %v1612
        %v6456 = vunpack.c.l.b16 %v1613
        %v6457 = vunpack.c.h.b16 %v1613
        %v6458 = vunpack.c.l.b16 %v1614
        %v6459 = vunpack.c.h.b16 %v1614
        %v6460 = vunpack.c.l.b16 %v1615
        %v6461 = vunpack.c.h.b16 %v1615
        %v6462 = vunpack.c.l.b16 %v1616
        %v6463 = vunpack.c.h.b16 %v1616
        %v6464 = vunpack.c.l.b16 %v1617
        %v6465 = vunpack.c.h.b16 %v1617
        %v6466 = vunpack.c.l.b16 %v1618
        %v6467 = vunpack.c.h.b16 %v1618
        %v6468 = vunpack.c.l.b16 %v1619
        %v6469 = vunpack.c.h.b16 %v1619
        %v6470 = vunpack.c.l.b16 %v1620
        %v6471 = vunpack.c.h.b16 %v1620
        %v6472 = vunpack.c.l.b16 %v1621
        %v6473 = vunpack.c.h.b16 %v1621
        %v6474 = vunpack.c.l.b16 %v1622
        %v6475 = vunpack.c.h.b16 %v1622
        %v6476 = vunpack.c.l.b16 %v1623
        %v6477 = vunpack.c.h.b16 %v1623
        %v6478 = vunpack.c.l.b16 %v1624
        %v6479 = vunpack.c.h.b16 %v1624
        %v6480 = vunpack.c.l.b16 %v1625
        %v6481 = vunpack.c.h.b16 %v1625
        %v6482 = vunpack.c.l.b16 %v1626
        %v6483 = vunpack.c.h.b16 %v1626
        %v6484 = vunpack.c.l.b16 %v1627
        %v6485 = vunpack.c.h.b16 %v1627
        %v6486 = vunpack.c.l.b16 %v1628
        %v6487 = vunpack.c.h.b16 %v1628
        %v6488 = vunpack.c.l.b16 %v1629
        %v6489 = vunpack.c.h.b16 %v1629
        %v6490 = vunpack.c.l.b16 %v1630
        %v6491 = vunpack.c.l.b16 %v1631
        %v6492 = vunpack.c.h.b16 %v1631
        %v6493 = vunpack.c.l.b16 %v1632
        %v6494 = vunpack.c.h.b16 %v1632
        %v6495 = vunpack.c.l.b16 %v1633
        %v6496 = vunpack.c.h.b16 %v1633
        %v6497 = vunpack.c.l.b16 %v1634
        %v6498 = vunpack.c.h.b16 %v1634
        %v6499 = vunpack.c.l.b16 %v1635
        %v6500 = vunpack.c.h.b16 %v1635
        %v6501 = vunpack.c.l.b16 %v1636
        %v6502 = vunpack.c.h.b16 %v1636
        %v6503 = vunpack.c.l.b16 %v1637
        %v6504 = vunpack.c.h.b16 %v1637
        %v6505 = vunpack.c.l.b16 %v1638
        %v6506 = vunpack.c.h.b16 %v1638
        %v6507 = vunpack.c.l.b16 %v1639
        %v6508 = vunpack.c.h.b16 %v1639
        %v6509 = vunpack.c.l.b16 %v1640
        %v6510 = vunpack.c.h.b16 %v1640
        %v6511 = vunpack.c.l.b16 %v1641
        %v6512 = vunpack.c.h.b16 %v1641
        %v6513 = vunpack.c.l.b16 %v1642
        %v6514 = vunpack.c.h.b16 %v1642
        %v6515 = vunpack.c.l.b16 %v1643
        %v6516 = vunpack.c.h.b16 %v1643
        %v6517 = vunpack.c.l.b16 %v1644
        %v6518 = vunpack.c.h.b16 %v1644
        %v6519 = vunpack.c.l.b16 %v1645
        %v6520 = vunpack.c.h.b16 %v1645
        %v6521 = vunpack.c.l.b16 %v1646
        %v6522 = vunpack.c.h.b16 %v1646
        %v6523 = vunpack.c.l.b16 %v1647
        %v6524 = vunpack.c.h.b16 %v1647
        %v6525 = vunpack.c.l.b16 %v1648
        %v6526 = vunpack.c.h.b16 %v1648
        %v6527 = vunpack.c.l.b16 %v1649
        %v6528 = vunpack.c.h.b16 %v1649
        %v6529 = vunpack.c.l.b16 %v1650
        %v6530 = vunpack.c.h.b16 %v1650
        %v6531 = vunpack.c.l.b16 %v1651
        %v6532 = vunpack.c.h.b16 %v1651
        %v6533 = vunpack.c.l.b16 %v1652
        %v6534 = vunpack.c.h.b16 %v1652
        %v6535 = vunpack.c.l.b16 %v1653
        %v6536 = vunpack.c.h.b16 %v1653
        %v6537 = vunpack.c.l.b16 %v1654
        %v6538 = vunpack.c.h.b16 %v1654
        %v6539 = vunpack.c.l.b16 %v1655
        %v6540 = vunpack.c.l.b16 %v1656
        %v6541 = vunpack.c.h.b16 %v1656
        %v6542 = vunpack.c.l.b16 %v1657
        %v6543 = vunpack.c.h.b16 %v1657
        %v6544 = vunpack.c.l.b16 %v1658
        %v6545 = vunpack.c.h.b16 %v1658
        %v6546 = vunpack.c.l.b16 %v1659
        %v6547 = vunpack.c.h.b16 %v1659
        %v6548 = vunpack.c.l.b16 %v1660
        %v6549 = vunpack.c.h.b16 %v1660
        %v6550 = vunpack.c.l.b16 %v1661
        %v6551 = vunpack.c.h.b16 %v1661
        %v6552 = vunpack.c.l.b16 %v1662
        %v6553 = vunpack.c.h.b16 %v1662
        %v6554 = vunpack.c.l.b16 %v1663
        %v6555 = vunpack.c.h.b16 %v1663
        %v6556 = vunpack.c.l.b16 %v1664
        %v6557 = vunpack.c.h.b16 %v1664
        %v6558 = vunpack.c.l.b16 %v1665
        %v6559 = vunpack.c.h.b16 %v1665
        %v6560 = vunpack.c.l.b16 %v1666
        %v6561 = vunpack.c.h.b16 %v1666
        %v6562 = vunpack.c.l.b16 %v1667
        %v6563 = vunpack.c.h.b16 %v1667
        %v6564 = vunpack.c.l.b16 %v1668
        %v6565 = vunpack.c.h.b16 %v1668
        %v6566 = vunpack.c.l.b16 %v1669
        %v6567 = vunpack.c.h.b16 %v1669
        %v6568 = vunpack.c.l.b16 %v1670
        %v6569 = vunpack.c.h.b16 %v1670
        %v6570 = vunpack.c.l.b16 %v1671
        %v6571 = vunpack.c.h.b16 %v1671
        %v6572 = vunpack.c.l.b16 %v1672
        %v6573 = vunpack.c.h.b16 %v1672
        %v6574 = vunpack.c.l.b16 %v1673
        %v6575 = vunpack.c.h.b16 %v1673
        %v6576 = vunpack.c.l.b16 %v1674
        %v6577 = vunpack.c.h.b16 %v1674
        %v6578 = vunpack.c.l.b16 %v1675
        %v6579 = vunpack.c.h.b16 %v1675
        %v6580 = vunpack.c.l.b16 %v1676
        %v6581 = vunpack.c.h.b16 %v1676
        %v6582 = vunpack.c.l.b16 %v1677
        %v6583 = vunpack.c.h.b16 %v1677
        %v6584 = vunpack.c.l.b16 %v1678
        %v6585 = vunpack.c.h.b16 %v1678
        %v6586 = vunpack.c.l.b16 %v1679
        %v6587 = vunpack.c.h.b16 %v1679
        %v6588 = vunpack.c.l.b16 %v1680
        %v6589 = vunpack.c.l.b16 %v1681
        %v6590 = vunpack.c.h.b16 %v1681
        %v6591 = vunpack.c.l.b16 %v1682
        %v6592 = vunpack.c.h.b16 %v1682
        %v6593 = vunpack.c.l.b16 %v1683
        %v6594 = vunpack.c.h.b16 %v1683
        %v6595 = vunpack.c.l.b16 %v1684
        %v6596 = vunpack.c.h.b16 %v1684
        %v6597 = vunpack.c.l.b16 %v1685
        %v6598 = vunpack.c.h.b16 %v1685
        %v6599 = vunpack.c.l.b16 %v1686
        %v6600 = vunpack.c.h.b16 %v1686
        %v6601 = vunpack.c.l.b16 %v1687
        %v6602 = vunpack.c.h.b16 %v1687
        %v6603 = vunpack.c.l.b16 %v1688
        %v6604 = vunpack.c.h.b16 %v1688
        %v6605 = vunpack.c.l.b16 %v1689
        %v6606 = vunpack.c.h.b16 %v1689
        %v6607 = vunpack.c.l.b16 %v1690
        %v6608 = vunpack.c.h.b16 %v1690
        %v6609 = vunpack.c.l.b16 %v1691
        %v6610 = vunpack.c.h.b16 %v1691
        %v6611 = vunpack.c.l.b16 %v1692
        %v6612 = vunpack.c.h.b16 %v1692
        %v6613 = vunpack.c.l.b16 %v1693
        %v6614 = vunpack.c.h.b16 %v1693
        %v6615 = vunpack.c.l.b16 %v1694
        %v6616 = vunpack.c.h.b16 %v1694
        %v6617 = vunpack.c.l.b16 %v1695
        %v6618 = vunpack.c.h.b16 %v1695
        %v6619 = vunpack.c.l.b16 %v1696
        %v6620 = vunpack.c.h.b16 %v1696
        %v6621 = vunpack.c.l.b16 %v1697
        %v6622 = vunpack.c.h.b16 %v1697
        %v6623 = vunpack.c.l.b16 %v1698
        %v6624 = vunpack.c.h.b16 %v1698
        %v6625 = vunpack.c.l.b16 %v1699
        %v6626 = vunpack.c.h.b16 %v1699
        %v6627 = vunpack.c.l.b16 %v1700
        %v6628 = vunpack.c.h.b16 %v1700
        %v6629 = vunpack.c.l.b16 %v1701
        %v6630 = vunpack.c.h.b16 %v1701
        %v6631 = vunpack.c.l.b16 %v1702
        %v6632 = vunpack.c.h.b16 %v1702
        %v6633 = vunpack.c.l.b16 %v1703
        %v6634 = vunpack.c.h.b16 %v1703
        %v6635 = vunpack.c.l.b16 %v1704
        %v6636 = vunpack.c.h.b16 %v1704
        %v6637 = vunpack.c.l.b16 %v1705
        %v6638 = vunpack.c.l.b16 %v1706
        %v6639 = vunpack.c.h.b16 %v1706
        %v6640 = vunpack.c.l.b16 %v1707
        %v6641 = vunpack.c.h.b16 %v1707
        %v6642 = vunpack.c.l.b16 %v1708
        %v6643 = vunpack.c.h.b16 %v1708
        %v6644 = vunpack.c.l.b16 %v1709
        %v6645 = vunpack.c.h.b16 %v1709
        %v6646 = vunpack.c.l.b16 %v1710
        %v6647 = vunpack.c.h.b16 %v1710
        %v6648 = vunpack.c.l.b16 %v1711
        %v6649 = vunpack.c.h.b16 %v1711
        %v6650 = vunpack.c.l.b16 %v1712
        %v6651 = vunpack.c.h.b16 %v1712
        %v6652 = vunpack.c.l.b16 %v1713
        %v6653 = vunpack.c.h.b16 %v1713
        %v6654 = vunpack.c.l.b16 %v1714
        %v6655 = vunpack.c.h.b16 %v1714
        %v6656 = vunpack.c.l.b16 %v1715
        %v6657 = vunpack.c.h.b16 %v1715
        %v6658 = vunpack.c.l.b16 %v1716
        %v6659 = vunpack.c.h.b16 %v1716
        %v6660 = vunpack.c.l.b16 %v1717
        %v6661 = vunpack.c.h.b16 %v1717
        %v6662 = vunpack.c.l.b16 %v1718
        %v6663 = vunpack.c.h.b16 %v1718
        %v6664 = vunpack.c.l.b16 %v1719
        %v6665 = vunpack.c.h.b16 %v1719
        %v6666 = vunpack.c.l.b16 %v1720
        %v6667 = vunpack.c.h.b16 %v1720
        %v6668 = vunpack.c.l.b16 %v1721
        %v6669 = vunpack.c.h.b16 %v1721
        %v6670 = vunpack.c.l.b16 %v1722
        %v6671 = vunpack.c.h.b16 %v1722
        %v6672 = vunpack.c.l.b16 %v1723
        %v6673 = vunpack.c.h.b16 %v1723
        %v6674 = vunpack.c.l.b16 %v1724
        %v6675 = vunpack.c.h.b16 %v1724
        %v6676 = vunpack.c.l.b16 %v1725
        %v6677 = vunpack.c.h.b16 %v1725
        %v6678 = vunpack.c.l.b16 %v1726
        %v6679 = vunpack.c.h.b16 %v1726
        %v6680 = vunpack.c.l.b16 %v1727
        %v6681 = vunpack.c.h.b16 %v1727
        %v6682 = vunpack.c.l.b16 %v1728
        %v6683 = vunpack.c.h.b16 %v1728
        %v6684 = vunpack.c.l.b16 %v1729
        %v6685 = vunpack.c.h.b16 %v1729
        %v6686 = vunpack.c.l.b16 %v1730
        %v6687 = vunpack.c.l.b16 %v1731
        %v6688 = vunpack.c.h.b16 %v1731
        %v6689 = vunpack.c.l.b16 %v1732
        %v6690 = vunpack.c.h.b16 %v1732
        %v6691 = vunpack.c.l.b16 %v1733
        %v6692 = vunpack.c.h.b16 %v1733
        %v6693 = vunpack.c.l.b16 %v1734
        %v6694 = vunpack.c.h.b16 %v1734
        %v6695 = vunpack.c.l.b16 %v1735
        %v6696 = vunpack.c.h.b16 %v1735
        %v6697 = vunpack.c.l.b16 %v1736
        %v6698 = vunpack.c.h.b16 %v1736
        %v6699 = vunpack.c.l.b16 %v1737
        %v6700 = vunpack.c.h.b16 %v1737
        %v6701 = vunpack.c.l.b16 %v1738
        %v6702 = vunpack.c.h.b16 %v1738
        %v6703 = vunpack.c.l.b16 %v1739
        %v6704 = vunpack.c.h.b16 %v1739
        %v6705 = vunpack.c.l.b16 %v1740
        %v6706 = vunpack.c.h.b16 %v1740
        %v6707 = vunpack.c.l.b16 %v1741
        %v6708 = vunpack.c.h.b16 %v1741
        %v6709 = vunpack.c.l.b16 %v1742
        %v6710 = vunpack.c.h.b16 %v1742
        %v6711 = vunpack.c.l.b16 %v1743
        %v6712 = vunpack.c.h.b16 %v1743
        %v6713 = vunpack.c.l.b16 %v1744
        %v6714 = vunpack.c.h.b16 %v1744
        %v6715 = vunpack.c.l.b16 %v1745
        %v6716 = vunpack.c.h.b16 %v1745
        %v6717 = vunpack.c.l.b16 %v1746
        %v6718 = vunpack.c.h.b16 %v1746
        %v6719 = vunpack.c.l.b16 %v1747
        %v6720 = vunpack.c.h.b16 %v1747
        %v6721 = vunpack.c.l.b16 %v1748
        %v6722 = vunpack.c.h.b16 %v1748
        %v6723 = vunpack.c.l.b16 %v1749
        %v6724 = vunpack.c.h.b16 %v1749
        %v6725 = vunpack.c.l.b16 %v1750
        %v6726 = vunpack.c.h.b16 %v1750
        %v6727 = vunpack.c.l.b16 %v1751
        %v6728 = vunpack.c.h.b16 %v1751
        %v6729 = vunpack.c.l.b16 %v1752
        %v6730 = vunpack.c.h.b16 %v1752
        %v6731 = vunpack.c.l.b16 %v1753
        %v6732 = vunpack.c.h.b16 %v1753
        %v6733 = vunpack.c.l.b16 %v1754
        %v6734 = vunpack.c.h.b16 %v1754
        %v6735 = vunpack.c.l.b16 %v1755
        %v6736 = vunpack.c.l.b16 %v1756
        %v6737 = vunpack.c.h.b16 %v1756
        %v6738 = vunpack.c.l.b16 %v1757
        %v6739 = vunpack.c.h.b16 %v1757
        %v6740 = vunpack.c.l.b16 %v1758
        %v6741 = vunpack.c.h.b16 %v1758
        %v6742 = vunpack.c.l.b16 %v1759
        %v6743 = vunpack.c.h.b16 %v1759
        %v6744 = vunpack.c.l.b16 %v1760
        %v6745 = vunpack.c.h.b16 %v1760
        %v6746 = vunpack.c.l.b16 %v1761
        %v6747 = vunpack.c.h.b16 %v1761
        %v6748 = vunpack.c.l.b16 %v1762
        %v6749 = vunpack.c.h.b16 %v1762
        %v6750 = vunpack.c.l.b16 %v1763
        %v6751 = vunpack.c.h.b16 %v1763
        %v6752 = vunpack.c.l.b16 %v1764
        %v6753 = vunpack.c.h.b16 %v1764
        %v6754 = vunpack.c.l.b16 %v1765
        %v6755 = vunpack.c.h.b16 %v1765
        %v6756 = vunpack.c.l.b16 %v1766
        %v6757 = vunpack.c.h.b16 %v1766
        %v6758 = vunpack.c.l.b16 %v1767
        %v6759 = vunpack.c.h.b16 %v1767
        %v6760 = vunpack.c.l.b16 %v1768
        %v6761 = vunpack.c.h.b16 %v1768
        %v6762 = vunpack.c.l.b16 %v1769
        %v6763 = vunpack.c.h.b16 %v1769
        %v6764 = vunpack.c.l.b16 %v1770
        %v6765 = vunpack.c.h.b16 %v1770
        %v6766 = vunpack.c.l.b16 %v1771
        %v6767 = vunpack.c.h.b16 %v1771
        %v6768 = vunpack.c.l.b16 %v1772
        %v6769 = vunpack.c.h.b16 %v1772
        %v6770 = vunpack.c.l.b16 %v1773
        %v6771 = vunpack.c.h.b16 %v1773
        %v6772 = vunpack.c.l.b16 %v1774
        %v6773 = vunpack.c.h.b16 %v1774
        %v6774 = vunpack.c.l.b16 %v1775
        %v6775 = vunpack.c.h.b16 %v1775
        %v6776 = vunpack.c.l.b16 %v1776
        %v6777 = vunpack.c.h.b16 %v1776
        %v6778 = vunpack.c.l.b16 %v1777
        %v6779 = vunpack.c.h.b16 %v1777
        %v6780 = vunpack.c.l.b16 %v1778
        %v6781 = vunpack.c.h.b16 %v1778
        %v6782 = vunpack.c.l.b16 %v1779
        %v6783 = vunpack.c.h.b16 %v1779
        %v6784 = vunpack.c.l.b16 %v1780
        %v6785 = vunpack.c.l.b16 %v1781
        %v6786 = vunpack.c.h.b16 %v1781
        %v6787 = vunpack.c.l.b16 %v1782
        %v6788 = vunpack.c.h.b16 %v1782
        %v6789 = vunpack.c.l.b16 %v1783
        %v6790 = vunpack.c.h.b16 %v1783
        %v6791 = vunpack.c.l.b16 %v1784
        %v6792 = vunpack.c.h.b16 %v1784
        %v6793 = vunpack.c.l.b16 %v1785
        %v6794 = vunpack.c.h.b16 %v1785
        %v6795 = vunpack.c.l.b16 %v1786
        %v6796 = vunpack.c.h.b16 %v1786
        %v6797 = vunpack.c.l.b16 %v1787
        %v6798 = vunpack.c.h.b16 %v1787
        %v6799 = vunpack.c.l.b16 %v1788
        %v6800 = vunpack.c.h.b16 %v1788
        %v6801 = vunpack.c.l.b16 %v1789
        %v6802 = vunpack.c.h.b16 %v1789
        %v6803 = vunpack.c.l.b16 %v1790
        %v6804 = vunpack.c.h.b16 %v1790
        %v6805 = vunpack.c.l.b16 %v1791
        %v6806 = vunpack.c.h.b16 %v1791
        %v6807 = vunpack.c.l.b16 %v1792
        %v6808 = vunpack.c.h.b16 %v1792
        %v6809 = vunpack.c.l.b16 %v1793
        %v6810 = vunpack.c.h.b16 %v1793
        %v6811 = vunpack.c.l.b16 %v1794
        %v6812 = vunpack.c.h.b16 %v1794
        %v6813 = vunpack.c.l.b16 %v1795
        %v6814 = vunpack.c.h.b16 %v1795
        %v6815 = vunpack.c.l.b16 %v1796
        %v6816 = vunpack.c.h.b16 %v1796
        %v6817 = vunpack.c.l.b16 %v1797
        %v6818 = vunpack.c.h.b16 %v1797
        %v6819 = vunpack.c.l.b16 %v1798
        %v6820 = vunpack.c.h.b16 %v1798
        %v6821 = vunpack.c.l.b16 %v1799
        %v6822 = vunpack.c.h.b16 %v1799
        %v6823 = vunpack.c.l.b16 %v1800
        %v6824 = vunpack.c.h.b16 %v1800
        %v6825 = vunpack.c.l.b16 %v1801
        %v6826 = vunpack.c.h.b16 %v1801
        %v6827 = vunpack.c.l.b16 %v1802
        %v6828 = vunpack.c.h.b16 %v1802
        %v6829 = vunpack.c.l.b16 %v1803
        %v6830 = vunpack.c.h.b16 %v1803
        %v6831 = vunpack.c.l.b16 %v1804
        %v6832 = vunpack.c.h.b16 %v1804
        %v6833 = vunpack.c.l.b16 %v1805
        %v6834 = vunpack.c.l.b16 %v1806
        %v6835 = vunpack.c.h.b16 %v1806
        %v6836 = vunpack.c.l.b16 %v1807
        %v6837 = vunpack.c.h.b16 %v1807
        %v6838 = vunpack.c.l.b16 %v1808
        %v6839 = vunpack.c.h.b16 %v1808
        %v6840 = vunpack.c.l.b16 %v1809
        %v6841 = vunpack.c.h.b16 %v1809
        %v6842 = vunpack.c.l.b16 %v1810
        %v6843 = vunpack.c.h.b16 %v1810
        %v6844 = vunpack.c.l.b16 %v1811
        %v6845 = vunpack.c.h.b16 %v1811
        %v6846 = vunpack.c.l.b16 %v1812
        %v6847 = vunpack.c.h.b16 %v1812
        %v6848 = vunpack.c.l.b16 %v1813
        %v6849 = vunpack.c.h.b16 %v1813
        %v6850 = vunpack.c.l.b16 %v1814
        %v6851 = vunpack.c.h.b16 %v1814
        %v6852 = vunpack.c.l.b16 %v1815
        %v6853 = vunpack.c.h.b16 %v1815
        %v6854 = vunpack.c.l.b16 %v1816
        %v6855 = vunpack.c.h.b16 %v1816
        %v6856 = vunpack.c.l.b16 %v1817
        %v6857 = vunpack.c.h.b16 %v1817
        %v6858 = vunpack.c.l.b16 %v1818
        %v6859 = vunpack.c.h.b16 %v1818
        %v6860 = vunpack.c.l.b16 %v1819
        %v6861 = vunpack.c.h.b16 %v1819
        %v6862 = vunpack.c.l.b16 %v1820
        %v6863 = vunpack.c.h.b16 %v1820
        %v6864 = vunpack.c.l.b16 %v1821
        %v6865 = vunpack.c.h.b16 %v1821
        %v6866 = vunpack.c.l.b16 %v1822
        %v6867 = vunpack.c.h.b16 %v1822
        %v6868 = vunpack.c.l.b16 %v1823
        %v6869 = vunpack.c.h.b16 %v1823
        %v6870 = vunpack.c.l.b16 %v1824
        %v6871 = vunpack.c.h.b16 %v1824
        %v6872 = vunpack.c.l.b16 %v1825
        %v6873 = vunpack.c.h.b16 %v1825
        %v6874 = vunpack.c.l.b16 %v1826
        %v6875 = vunpack.c.h.b16 %v1826
        %v6876 = vunpack.c.l.b16 %v1827
        %v6877 = vunpack.c.h.b16 %v1827
        %v6878 = vunpack.c.l.b16 %v1828
        %v6879 = vunpack.c.h.b16 %v1828
        %v6880 = vunpack.c.l.b16 %v1829
        %v6881 = vunpack.c.h.b16 %v1829
        %v6882 = vunpack.c.l.b16 %v1830
        %v6883 = vunpack.c.l.b16 %v1831
        %v6884 = vunpack.c.h.b16 %v1831
        %v6885 = vunpack.c.l.b16 %v1832
        %v6886 = vunpack.c.h.b16 %v1832
        %v6887 = vunpack.c.l.b16 %v1833
        %v6888 = vunpack.c.h.b16 %v1833
        %v6889 = vunpack.c.l.b16 %v1834
        %v6890 = vunpack.c.h.b16 %v1834
        %v6891 = vunpack.c.l.b16 %v1835
        %v6892 = vunpack.c.h.b16 %v1835
        %v6893 = vunpack.c.l.b16 %v1836
        %v6894 = vunpack.c.h.b16 %v1836
        %v6895 = vunpack.c.l.b16 %v1837
        %v6896 = vunpack.c.h.b16 %v1837
        %v6897 = vunpack.c.l.b16 %v1838
        %v6898 = vunpack.c.h.b16 %v1838
        %v6899 = vunpack.c.l.b16 %v1839
        %v6900 = vunpack.c.h.b16 %v1839
        %v6901 = vunpack.c.l.b16 %v1840
        %v6902 = vunpack.c.h.b16 %v1840
        %v6903 = vunpack.c.l.b16 %v1841
        %v6904 = vunpack.c.h.b16 %v1841
        %v6905 = vunpack.c.l.b16 %v1842
        %v6906 = vunpack.c.h.b16 %v1842
        %v6907 = vunpack.c.l.b16 %v1843
        %v6908 = vunpack.c.h.b16 %v1843
        %v6909 = vunpack.c.l.b16 %v1844
        %v6910 = vunpack.c.h.b16 %v1844
        %v6911 = vunpack.c.l.b16 %v1845
        %v6912 = vunpack.c.h.b16 %v1845
        %v6913 = vunpack.c.l.b16 %v1846
        %v6914 = vunpack.c.h.b16 %v1846
        %v6915 = vunpack.c.l.b16 %v1847
        %v6916 = vunpack.c.h.b16 %v1847
        %v6917 = vunpack.c.l.b16 %v1848
        %v6918 = vunpack.c.h.b16 %v1848
        %v6919 = vunpack.c.l.b16 %v1849
        %v6920 = vunpack.c.h.b16 %v1849
        %v6921 = vunpack.c.l.b16 %v1850
        %v6922 = vunpack.c.h.b16 %v1850
        %v6923 = vunpack.c.l.b16 %v1851
        %v6924 = vunpack.c.h.b16 %v1851
        %v6925 = vunpack.c.l.b16 %v1852
        %v6926 = vunpack.c.h.b16 %v1852
        %v6927 = vunpack.c.l.b16 %v1853
        %v6928 = vunpack.c.h.b16 %v1853
        %v6929 = vunpack.c.l.b16 %v1854
        %v6930 = vunpack.c.h.b16 %v1854
        %v6931 = vunpack.c.l.b16 %v1855
        %v6932 = vunpack.c.l.b16 %v1856
        %v6933 = vunpack.c.h.b16 %v1856
        %v6934 = vunpack.c.l.b16 %v1857
        %v6935 = vunpack.c.h.b16 %v1857
        %v6936 = vunpack.c.l.b16 %v1858
        %v6937 = vunpack.c.h.b16 %v1858
        %v6938 = vunpack.c.l.b16 %v1859
        %v6939 = vunpack.c.h.b16 %v1859
        %v6940 = vunpack.c.l.b16 %v1860
        %v6941 = vunpack.c.h.b16 %v1860
        %v6942 = vunpack.c.l.b16 %v1861
        %v6943 = vunpack.c.h.b16 %v1861
        %v6944 = vunpack.c.l.b16 %v1862
        %v6945 = vunpack.c.h.b16 %v1862
        %v6946 = vunpack.c.l.b16 %v1863
        %v6947 = vunpack.c.h.b16 %v1863
        %v6948 = vunpack.c.l.b16 %v1864
        %v6949 = vunpack.c.h.b16 %v1864
        %v6950 = vunpack.c.l.b16 %v1865
        %v6951 = vunpack.c.h.b16 %v1865
        %v6952 = vunpack.c.l.b16 %v1866
        %v6953 = vunpack.c.h.b16 %v1866
        %v6954 = vunpack.c.l.b16 %v1867
        %v6955 = vunpack.c.h.b16 %v1867
        %v6956 = vunpack.c.l.b16 %v1868
        %v6957 = vunpack.c.h.b16 %v1868
        %v6958 = vunpack.c.l.b16 %v1869
        %v6959 = vunpack.c.h.b16 %v1869
        %v6960 = vunpack.c.l.b16 %v1870
        %v6961 = vunpack.c.h.b16 %v1870
        %v6962 = vunpack.c.l.b16 %v1871
        %v6963 = vunpack.c.h.b16 %v1871
        %v6964 = vunpack.c.l.b16 %v1872
        %v6965 = vunpack.c.h.b16 %v1872
        %v6966 = vunpack.c.l.b16 %v1873
        %v6967 = vunpack.c.h.b16 %v1873
        %v6968 = vunpack.c.l.b16 %v1874
        %v6969 = vunpack.c.h.b16 %v1874
        %v6970 = vunpack.c.l.b16 %v1875
        %v6971 = vunpack.c.h.b16 %v1875
        %v6972 = vunpack.c.l.b16 %v1876
        %v6973 = vunpack.c.h.b16 %v1876
        %v6974 = vunpack.c.l.b16 %v1877
        %v6975 = vunpack.c.h.b16 %v1877
        %v6976 = vunpack.c.l.b16 %v1878
        %v6977 = vunpack.c.h.b16 %v1878
        %v6978 = vunpack.c.l.b16 %v1879
        %v6979 = vunpack.c.h.b16 %v1879
        %v6980 = vunpack.c.l.b16 %v1880
        %v6981 = vpack.c.b16 %v3894, %v3845
        %v6982 = vpack.c.b16 %v3895, %v3846
        %v6983 = vpack.c.b16 %v3896, %v3847
        %v6984 = vpack.c.b16 %v3897, %v3848
        %v6985 = vpack.c.b16 %v3898, %v3849
        %v6986 = vpack.c.b16 %v3899, %v3850
        %v6987 = vpack.c.b16 %v3900, %v3851
        %v6988 = vpack.c.b16 %v3901, %v3852
        %v6989 = vpack.c.b16 %v3902, %v3853
        %v6990 = vpack.c.b16 %v3903, %v3854
        %v6991 = vpack.c.b16 %v3904, %v3855
        %v6992 = vpack.c.b16 %v3905, %v3856
        %v6993 = vpack.c.b16 %v3906, %v3857
        %v6994 = vpack.c.b16 %v3907, %v3858
        %v6995 = vpack.c.b16 %v3908, %v3859
        %v6996 = vpack.c.b16 %v3909, %v3860
        %v6997 = vpack.c.b16 %v3910, %v3861
        %v6998 = vpack.c.b16 %v3911, %v3862
        %v6999 = vpack.c.b16 %v3912, %v3863
        %v7000 = vpack.c.b16 %v3913, %v3864
        %v7001 = vpack.c.b16 %v3914, %v3865
        %v7002 = vpack.c.b16 %v3915, %v3866
        %v7003 = vpack.c.b16 %v3916, %v3867
        %v7004 = vpack.c.b16 %v3917, %v3868
        %v7005 = vpack.c.b16 %v3918, %v3869
        %v7006 = vpack.c.b16 %v3919, %v3870
        %v7007 = vpack.c.b16 %v3920, %v3871
        %v7008 = vpack.c.b16 %v3921, %v3872
        %v7009 = vpack.c.b16 %v3922, %v3873
        %v7010 = vpack.c.b16 %v3923, %v3874
        %v7011 = vpack.c.b16 %v3924, %v3875
        %v7012 = vpack.c.b16 %v3925, %v3876
        %v7013 = vpack.c.b16 %v3926, %v3877
        %v7014 = vpack.c.b16 %v3927, %v3878
        %v7015 = vpack.c.b16 %v3928, %v3879
        %v7016 = vpack.c.b16 %v3929, %v3880
        %v7017 = vpack.c.b16 %v3930, %v3881
        %v7018 = vpack.c.b16 %v3931, %v3882
        %v7019 = vpack.c.b16 %v3932, %v3883
        %v7020 = vpack.c.b16 %v3933, %v3884
        %v7021 = vpack.c.b16 %v3934, %v3885
        %v7022 = vpack.c.b16 %v3935, %v3886
        %v7023 = vpack.c.b16 %v3936, %v3887
        %v7024 = vpack.c.b16 %v3937, %v3888
        %v7025 = vpack.c.b16 %v3938, %v3889
        %v7026 = vpack.c.b16 %v3939, %v3890
        %v7027 = vpack.c.b16 %v3940, %v3891
        %v7028 = vpack.c.b16 %v3941, %v3892
        %v7029 = vpack.c.b16 %v3942, %v3893
        %v7030 = vpack.c.b16 %v3992, %v3943
        %v7031 = vpack.c.b16 %v3993, %v3944
        %v7032 = vpack.c.b16 %v3994, %v3945
        %v7033 = vpack.c.b16 %v3995, %v3946
        %v7034 = vpack.c.b16 %v3996, %v3947
        %v7035 = vpack.c.b16 %v3997, %v3948
        %v7036 = vpack.c.b16 %v3998, %v3949
        %v7037 = vpack.c.b16 %v3999, %v3950
        %v7038 = vpack.c.b16 %v4000, %v3951
        %v7039 = vpack.c.b16 %v4001, %v3952
        %v7040 = vpack.c.b16 %v4002, %v3953
        %v7041 = vpack.c.b16 %v4003, %v3954
        %v7042 = vpack.c.b16 %v4004, %v3955
        %v7043 = vpack.c.b16 %v4005, %v3956
        %v7044 = vpack.c.b16 %v4006, %v3957
        %v7045 = vpack.c.b16 %v4007, %v3958
        %v7046 = vpack.c.b16 %v4008, %v3959
        %v7047 = vpack.c.b16 %v4009, %v3960
        %v7048 = vpack.c.b16 %v4010, %v3961
        %v7049 = vpack.c.b16 %v4011, %v3962
        %v7050 = vpack.c.b16 %v4012, %v3963
        %v7051 = vpack.c.b16 %v4013, %v3964
        %v7052 = vpack.c.b16 %v4014, %v3965
        %v7053 = vpack.c.b16 %v4015, %v3966
        %v7054 = vpack.c.b16 %v4016, %v3967
        %v7055 = vpack.c.b16 %v4017, %v3968
        %v7056 = vpack.c.b16 %v4018, %v3969
        %v7057 = vpack.c.b16 %v4019, %v3970
        %v7058 = vpack.c.b16 %v4020, %v3971
        %v7059 = vpack.c.b16 %v4021, %v3972
        %v7060 = vpack.c.b16 %v4022, %v3973
        %v7061 = vpack.c.b16 %v4023, %v3974
        %v7062 = vpack.c.b16 %v4024, %v3975
        %v7063 = vpack.c.b16 %v4025, %v3976
        %v7064 = vpack.c.b16 %v4026, %v3977
        %v7065 = vpack.c.b16 %v4027, %v3978
        %v7066 = vpack.c.b16 %v4028, %v3979
        %v7067 = vpack.c.b16 %v4029, %v3980
        %v7068 = vpack.c.b16 %v4030, %v3981
        %v7069 = vpack.c.b16 %v4031, %v3982
        %v7070 = vpack.c.b16 %v4032, %v3983
        %v7071 = vpack.c.b16 %v4033, %v3984
        %v7072 = vpack.c.b16 %v4034, %v3985
        %v7073 = vpack.c.b16 %v4035, %v3986
        %v7074 = vpack.c.b16 %v4036, %v3987
        %v7075 = vpack.c.b16 %v4037, %v3988
        %v7076 = vpack.c.b16 %v4038, %v3989
        %v7077 = vpack.c.b16 %v4039, %v3990
        %v7078 = vpack.c.b16 %v4040, %v3991
        %v7079 = vpack.c.b16 %v4090, %v4041
        %v7080 = vpack.c.b16 %v4091, %v4042
        %v7081 = vpack.c.b16 %v4092, %v4043
        %v7082 = vpack.c.b16 %v4093, %v4044
        %v7083 = vpack.c.b16 %v4094, %v4045
        %v7084 = vpack.c.b16 %v4095, %v4046
        %v7085 = vpack.c.b16 %v4096, %v4047
        %v7086 = vpack.c.b16 %v4097, %v4048
        %v7087 = vpack.c.b16 %v4098, %v4049
        %v7088 = vpack.c.b16 %v4099, %v4050
        %v7089 = vpack.c.b16 %v4100, %v4051
        %v7090 = vpack.c.b16 %v4101, %v4052
        %v7091 = vpack.c.b16 %v4102, %v4053
        %v7092 = vpack.c.b16 %v4103, %v4054
        %v7093 = vpack.c.b16 %v4104, %v4055
        %v7094 = vpack.c.b16 %v4105, %v4056
        %v7095 = vpack.c.b16 %v4106, %v4057
        %v7096 = vpack.c.b16 %v4107, %v4058
        %v7097 = vpack.c.b16 %v4108, %v4059
        %v7098 = vpack.c.b16 %v4109, %v4060
        %v7099 = vpack.c.b16 %v4110, %v4061
        %v7100 = vpack.c.b16 %v4111, %v4062
        %v7101 = vpack.c.b16 %v4112, %v4063
        %v7102 = vpack.c.b16 %v4113, %v4064
        %v7103 = vpack.c.b16 %v4114, %v4065
        %v7104 = vpack.c.b16 %v4115, %v4066
        %v7105 = vpack.c.b16 %v4116, %v4067
        %v7106 = vpack.c.b16 %v4117, %v4068
        %v7107 = vpack.c.b16 %v4118, %v4069
        %v7108 = vpack.c.b16 %v4119, %v4070
        %v7109 = vpack.c.b16 %v4120, %v4071
        %v7110 = vpack.c.b16 %v4121, %v4072
        %v7111 = vpack.c.b16 %v4122, %v4073
        %v7112 = vpack.c.b16 %v4123, %v4074
        %v7113 = vpack.c.b16 %v4124, %v4075
        %v7114 = vpack.c.b16 %v4125, %v4076
        %v7115 = vpack.c.b16 %v4126, %v4077
        %v7116 = vpack.c.b16 %v4127, %v4078
        %v7117 = vpack.c.b16 %v4128, %v4079
        %v7118 = vpack.c.b16 %v4129, %v4080
        %v7119 = vpack.c.b16 %v4130, %v4081
        %v7120 = vpack.c.b16 %v4131, %v4082
        %v7121 = vpack.c.b16 %v4132, %v4083
        %v7122 = vpack.c.b16 %v4133, %v4084
        %v7123 = vpack.c.b16 %v4134, %v4085
        %v7124 = vpack.c.b16 %v4135, %v4086
        %v7125 = vpack.c.b16 %v4136, %v4087
        %v7126 = vpack.c.b16 %v4137, %v4088
        %v7127 = vpack.c.b16 %v4138, %v4089
        %v7128 = vpack.c.b16 %v4188, %v4139
        %v7129 = vpack.c.b16 %v4189, %v4140
        %v7130 = vpack.c.b16 %v4190, %v4141
        %v7131 = vpack.c.b16 %v4191, %v4142
        %v7132 = vpack.c.b16 %v4192, %v4143
        %v7133 = vpack.c.b16 %v4193, %v4144
        %v7134 = vpack.c.b16 %v4194, %v4145
        %v7135 = vpack.c.b16 %v4195, %v4146
        %v7136 = vpack.c.b16 %v4196, %v4147
        %v7137 = vpack.c.b16 %v4197, %v4148
        %v7138 = vpack.c.b16 %v4198, %v4149
        %v7139 = vpack.c.b16 %v4199, %v4150
        %v7140 = vpack.c.b16 %v4200, %v4151
        %v7141 = vpack.c.b16 %v4201, %v4152
        %v7142 = vpack.c.b16 %v4202, %v4153
        %v7143 = vpack.c.b16 %v4203, %v4154
        %v7144 = vpack.c.b16 %v4204, %v4155
        %v7145 = vpack.c.b16 %v4205, %v4156
        %v7146 = vpack.c.b16 %v4206, %v4157
        %v7147 = vpack.c.b16 %v4207, %v4158
        %v7148 = vpack.c.b16 %v4208, %v4159
        %v7149 = vpack.c.b16 %v4209, %v4160
        %v7150 = vpack.c.b16 %v4210, %v4161
        %v7151 = vpack.c.b16 %v4211, %v4162
        %v7152 = vpack.c.b16 %v4212, %v4163
        %v7153 = vpack.c.b16 %v4213, %v4164
        %v7154 = vpack.c.b16 %v4214, %v4165
        %v7155 = vpack.c.b16 %v4215, %v4166
        %v7156 = vpack.c.b16 %v4216, %v4167
        %v7157 = vpack.c.b16 %v4217, %v4168
        %v7158 = vpack.c.b16 %v4218, %v4169
        %v7159 = vpack.c.b16 %v4219, %v4170
        %v7160 = vpack.c.b16 %v4220, %v4171
        %v7161 = vpack.c.b16 %v4221, %v4172
        %v7162 = vpack.c.b16 %v4222, %v4173
        %v7163 = vpack.c.b16 %v4223, %v4174
        %v7164 = vpack.c.b16 %v4224, %v4175
        %v7165 = vpack.c.b16 %v4225, %v4176
        %v7166 = vpack.c.b16 %v4226, %v4177
        %v7167 = vpack.c.b16 %v4227, %v4178
        %v7168 = vpack.c.b16 %v4228, %v4179
        %v7169 = vpack.c.b16 %v4229, %v4180
        %v7170 = vpack.c.b16 %v4230, %v4181
        %v7171 = vpack.c.b16 %v4231, %v4182
        %v7172 = vpack.c.b16 %v4232, %v4183
        %v7173 = vpack.c.b16 %v4233, %v4184
        %v7174 = vpack.c.b16 %v4234, %v4185
        %v7175 = vpack.c.b16 %v4235, %v4186
        %v7176 = vpack.c.b16 %v4236, %v4187
        %v7177 = vpack.c.b16 %v4286, %v4237
        %v7178 = vpack.c.b16 %v4287, %v4238
        %v7179 = vpack.c.b16 %v4288, %v4239
        %v7180 = vpack.c.b16 %v4289, %v4240
        %v7181 = vpack.c.b16 %v4290, %v4241
        %v7182 = vpack.c.b16 %v4291, %v4242
        %v7183 = vpack.c.b16 %v4292, %v4243
        %v7184 = vpack.c.b16 %v4293, %v4244
        %v7185 = vpack.c.b16 %v4294, %v4245
        %v7186 = vpack.c.b16 %v4295, %v4246
        %v7187 = vpack.c.b16 %v4296, %v4247
        %v7188 = vpack.c.b16 %v4297, %v4248
        %v7189 = vpack.c.b16 %v4298, %v4249
        %v7190 = vpack.c.b16 %v4299, %v4250
        %v7191 = vpack.c.b16 %v4300, %v4251
        %v7192 = vpack.c.b16 %v4301, %v4252
        %v7193 = vpack.c.b16 %v4302, %v4253
        %v7194 = vpack.c.b16 %v4303, %v4254
        %v7195 = vpack.c.b16 %v4304, %v4255
        %v7196 = vpack.c.b16 %v4305, %v4256
        %v7197 = vpack.c.b16 %v4306, %v4257
        %v7198 = vpack.c.b16 %v4307, %v4258
        %v7199 = vpack.c.b16 %v4308, %v4259
        %v7200 = vpack.c.b16 %v4309, %v4260
        %v7201 = vpack.c.b16 %v4310, %v4261
        %v7202 = vpack.c.b16 %v4311, %v4262
        %v7203 = vpack.c.b16 %v4312, %v4263
        %v7204 = vpack.c.b16 %v4313, %v4264
        %v7205 = vpack.c.b16 %v4314, %v4265
        %v7206 = vpack.c.b16 %v4315, %v4266
        %v7207 = vpack.c.b16 %v4316, %v4267
        %v7208 = vpack.c.b16 %v4317, %v4268
        %v7209 = vpack.c.b16 %v4318, %v4269
        %v7210 = vpack.c.b16 %v4319, %v4270
        %v7211 = vpack.c.b16 %v4320, %v4271
        %v7212 = vpack.c.b16 %v4321, %v4272
        %v7213 = vpack.c.b16 %v4322, %v4273
        %v7214 = vpack.c.b16 %v4323, %v4274
        %v7215 = vpack.c.b16 %v4324, %v4275
        %v7216 = vpack.c.b16 %v4325, %v4276
        %v7217 = vpack.c.b16 %v4326, %v4277
        %v7218 = vpack.c.b16 %v4327, %v4278
        %v7219 = vpack.c.b16 %v4328, %v4279
        %v7220 = vpack.c.b16 %v4329, %v4280
        %v7221 = vpack.c.b16 %v4330, %v4281
        %v7222 = vpack.c.b16 %v4331, %v4282
        %v7223 = vpack.c.b16 %v4332, %v4283
        %v7224 = vpack.c.b16 %v4333, %v4284
        %v7225 = vpack.c.b16 %v4334, %v4285
        %v7226 = vpack.c.b16 %v4384, %v4335
        %v7227 = vpack.c.b16 %v4385, %v4336
        %v7228 = vpack.c.b16 %v4386, %v4337
        %v7229 = vpack.c.b16 %v4387, %v4338
        %v7230 = vpack.c.b16 %v4388, %v4339
        %v7231 = vpack.c.b16 %v4389, %v4340
        %v7232 = vpack.c.b16 %v4390, %v4341
        %v7233 = vpack.c.b16 %v4391, %v4342
        %v7234 = vpack.c.b16 %v4392, %v4343
        %v7235 = vpack.c.b16 %v4393, %v4344
        %v7236 = vpack.c.b16 %v4394, %v4345
        %v7237 = vpack.c.b16 %v4395, %v4346
        %v7238 = vpack.c.b16 %v4396, %v4347
        %v7239 = vpack.c.b16 %v4397, %v4348
        %v7240 = vpack.c.b16 %v4398, %v4349
        %v7241 = vpack.c.b16 %v4399, %v4350
        %v7242 = vpack.c.b16 %v4400, %v4351
        %v7243 = vpack.c.b16 %v4401, %v4352
        %v7244 = vpack.c.b16 %v4402, %v4353
        %v7245 = vpack.c.b16 %v4403, %v4354
        %v7246 = vpack.c.b16 %v4404, %v4355
        %v7247 = vpack.c.b16 %v4405, %v4356
        %v7248 = vpack.c.b16 %v4406, %v4357
        %v7249 = vpack.c.b16 %v4407, %v4358
        %v7250 = vpack.c.b16 %v4408, %v4359
        %v7251 = vpack.c.b16 %v4409, %v4360
        %v7252 = vpack.c.b16 %v4410, %v4361
        %v7253 = vpack.c.b16 %v4411, %v4362
        %v7254 = vpack.c.b16 %v4412, %v4363
        %v7255 = vpack.c.b16 %v4413, %v4364
        %v7256 = vpack.c.b16 %v4414, %v4365
        %v7257 = vpack.c.b16 %v4415, %v4366
        %v7258 = vpack.c.b16 %v4416, %v4367
        %v7259 = vpack.c.b16 %v4417, %v4368
        %v7260 = vpack.c.b16 %v4418, %v4369
        %v7261 = vpack.c.b16 %v4419, %v4370
        %v7262 = vpack.c.b16 %v4420, %v4371
        %v7263 = vpack.c.b16 %v4421, %v4372
        %v7264 = vpack.c.b16 %v4422, %v4373
        %v7265 = vpack.c.b16 %v4423, %v4374
        %v7266 = vpack.c.b16 %v4424, %v4375
        %v7267 = vpack.c.b16 %v4425, %v4376
        %v7268 = vpack.c.b16 %v4426, %v4377
        %v7269 = vpack.c.b16 %v4427, %v4378
        %v7270 = vpack.c.b16 %v4428, %v4379
        %v7271 = vpack.c.b16 %v4429, %v4380
        %v7272 = vpack.c.b16 %v4430, %v4381
        %v7273 = vpack.c.b16 %v4431, %v4382
        %v7274 = vpack.c.b16 %v4432, %v4383
        %v7275 = vpack.c.b16 %v4482, %v4433
        %v7276 = vpack.c.b16 %v4483, %v4434
        %v7277 = vpack.c.b16 %v4484, %v4435
        %v7278 = vpack.c.b16 %v4485, %v4436
        %v7279 = vpack.c.b16 %v4486, %v4437
        %v7280 = vpack.c.b16 %v4487, %v4438
        %v7281 = vpack.c.b16 %v4488, %v4439
        %v7282 = vpack.c.b16 %v4489, %v4440
        %v7283 = vpack.c.b16 %v4490, %v4441
        %v7284 = vpack.c.b16 %v4491, %v4442
        %v7285 = vpack.c.b16 %v4492, %v4443
        %v7286 = vpack.c.b16 %v4493, %v4444
        %v7287 = vpack.c.b16 %v4494, %v4445
        %v7288 = vpack.c.b16 %v4495, %v4446
        %v7289 = vpack.c.b16 %v4496, %v4447
        %v7290 = vpack.c.b16 %v4497, %v4448
        %v7291 = vpack.c.b16 %v4498, %v4449
        %v7292 = vpack.c.b16 %v4499, %v4450
        %v7293 = vpack.c.b16 %v4500, %v4451
        %v7294 = vpack.c.b16 %v4501, %v4452
        %v7295 = vpack.c.b16 %v4502, %v4453
        %v7296 = vpack.c.b16 %v4503, %v4454
        %v7297 = vpack.c.b16 %v4504, %v4455
        %v7298 = vpack.c.b16 %v4505, %v4456
        %v7299 = vpack.c.b16 %v4506, %v4457
        %v7300 = vpack.c.b16 %v4507, %v4458
        %v7301 = vpack.c.b16 %v4508, %v4459
        %v7302 = vpack.c.b16 %v4509, %v4460
        %v7303 = vpack.c.b16 %v4510, %v4461
        %v7304 = vpack.c.b16 %v4511, %v4462
        %v7305 = vpack.c.b16 %v4512, %v4463
        %v7306 = vpack.c.b16 %v4513, %v4464
        %v7307 = vpack.c.b16 %v4514, %v4465
        %v7308 = vpack.c.b16 %v4515, %v4466
        %v7309 = vpack.c.b16 %v4516, %v4467
        %v7310 = vpack.c.b16 %v4517, %v4468
        %v7311 = vpack.c.b16 %v4518, %v4469
        %v7312 = vpack.c.b16 %v4519, %v4470
        %v7313 = vpack.c.b16 %v4520, %v4471
        %v7314 = vpack.c.b16 %v4521, %v4472
        %v7315 = vpack.c.b16 %v4522, %v4473
        %v7316 = vpack.c.b16 %v4523, %v4474
        %v7317 = vpack.c.b16 %v4524, %v4475
        %v7318 = vpack.c.b16 %v4525, %v4476
        %v7319 = vpack.c.b16 %v4526, %v4477
        %v7320 = vpack.c.b16 %v4527, %v4478
        %v7321 = vpack.c.b16 %v4528, %v4479
        %v7322 = vpack.c.b16 %v4529, %v4480
        %v7323 = vpack.c.b16 %v4530, %v4481
        %v7324 = vpack.c.b16 %v4580, %v4531
        %v7325 = vpack.c.b16 %v4581, %v4532
        %v7326 = vpack.c.b16 %v4582, %v4533
        %v7327 = vpack.c.b16 %v4583, %v4534
        %v7328 = vpack.c.b16 %v4584, %v4535
        %v7329 = vpack.c.b16 %v4585, %v4536
        %v7330 = vpack.c.b16 %v4586, %v4537
        %v7331 = vpack.c.b16 %v4587, %v4538
        %v7332 = vpack.c.b16 %v4588, %v4539
        %v7333 = vpack.c.b16 %v4589, %v4540
        %v7334 = vpack.c.b16 %v4590, %v4541
        %v7335 = vpack.c.b16 %v4591, %v4542
        %v7336 = vpack.c.b16 %v4592, %v4543
        %v7337 = vpack.c.b16 %v4593, %v4544
        %v7338 = vpack.c.b16 %v4594, %v4545
        %v7339 = vpack.c.b16 %v4595, %v4546
        %v7340 = vpack.c.b16 %v4596, %v4547
        %v7341 = vpack.c.b16 %v4597, %v4548
        %v7342 = vpack.c.b16 %v4598, %v4549
        %v7343 = vpack.c.b16 %v4599, %v4550
        %v7344 = vpack.c.b16 %v4600, %v4551
        %v7345 = vpack.c.b16 %v4601, %v4552
        %v7346 = vpack.c.b16 %v4602, %v4553
        %v7347 = vpack.c.b16 %v4603, %v4554
        %v7348 = vpack.c.b16 %v4604, %v4555
        %v7349 = vpack.c.b16 %v4605, %v4556
        %v7350 = vpack.c.b16 %v4606, %v4557
        %v7351 = vpack.c.b16 %v4607, %v4558
        %v7352 = vpack.c.b16 %v4608, %v4559
        %v7353 = vpack.c.b16 %v4609, %v4560
        %v7354 = vpack.c.b16 %v4610, %v4561
        %v7355 = vpack.c.b16 %v4611, %v4562
        %v7356 = vpack.c.b16 %v4612, %v4563
        %v7357 = vpack.c.b16 %v4613, %v4564
        %v7358 = vpack.c.b16 %v4614, %v4565
        %v7359 = vpack.c.b16 %v4615, %v4566
        %v7360 = vpack.c.b16 %v4616, %v4567
        %v7361 = vpack.c.b16 %v4617, %v4568
        %v7362 = vpack.c.b16 %v4618, %v4569
        %v7363 = vpack.c.b16 %v4619, %v4570
        %v7364 = vpack.c.b16 %v4620, %v4571
        %v7365 = vpack.c.b16 %v4621, %v4572
        %v7366 = vpack.c.b16 %v4622, %v4573
        %v7367 = vpack.c.b16 %v4623, %v4574
        %v7368 = vpack.c.b16 %v4624, %v4575
        %v7369 = vpack.c.b16 %v4625, %v4576
        %v7370 = vpack.c.b16 %v4626, %v4577
        %v7371 = vpack.c.b16 %v4627, %v4578
        %v7372 = vpack.c.b16 %v4628, %v4579
        %v7373 = vpack.c.b16 %v4678, %v4629
        %v7374 = vpack.c.b16 %v4679, %v4630
        %v7375 = vpack.c.b16 %v4680, %v4631
        %v7376 = vpack.c.b16 %v4681, %v4632
        %v7377 = vpack.c.b16 %v4682, %v4633
        %v7378 = vpack.c.b16 %v4683, %v4634
        %v7379 = vpack.c.b16 %v4684, %v4635
        %v7380 = vpack.c.b16 %v4685, %v4636
        %v7381 = vpack.c.b16 %v4686, %v4637
        %v7382 = vpack.c.b16 %v4687, %v4638
        %v7383 = vpack.c.b16 %v4688, %v4639
        %v7384 = vpack.c.b16 %v4689, %v4640
        %v7385 = vpack.c.b16 %v4690, %v4641
        %v7386 = vpack.c.b16 %v4691, %v4642
        %v7387 = vpack.c.b16 %v4692, %v4643
        %v7388 = vpack.c.b16 %v4693, %v4644
        %v7389 = vpack.c.b16 %v4694, %v4645
        %v7390 = vpack.c.b16 %v4695, %v4646
        %v7391 = vpack.c.b16 %v4696, %v4647
        %v7392 = vpack.c.b16 %v4697, %v4648
        %v7393 = vpack.c.b16 %v4698, %v4649
        %v7394 = vpack.c.b16 %v4699, %v4650
        %v7395 = vpack.c.b16 %v4700, %v4651
        %v7396 = vpack.c.b16 %v4701, %v4652
        %v7397 = vpack.c.b16 %v4702, %v4653
        %v7398 = vpack.c.b16 %v4703, %v4654
        %v7399 = vpack.c.b16 %v4704, %v4655
        %v7400 = vpack.c.b16 %v4705, %v4656
        %v7401 = vpack.c.b16 %v4706, %v4657
        %v7402 = vpack.c.b16 %v4707, %v4658
        %v7403 = vpack.c.b16 %v4708, %v4659
        %v7404 = vpack.c.b16 %v4709, %v4660
        %v7405 = vpack.c.b16 %v4710, %v4661
        %v7406 = vpack.c.b16 %v4711, %v4662
        %v7407 = vpack.c.b16 %v4712, %v4663
        %v7408 = vpack.c.b16 %v4713, %v4664
        %v7409 = vpack.c.b16 %v4714, %v4665
        %v7410 = vpack.c.b16 %v4715, %v4666
        %v7411 = vpack.c.b16 %v4716, %v4667
        %v7412 = vpack.c.b16 %v4717, %v4668
        %v7413 = vpack.c.b16 %v4718, %v4669
        %v7414 = vpack.c.b16 %v4719, %v4670
        %v7415 = vpack.c.b16 %v4720, %v4671
        %v7416 = vpack.c.b16 %v4721, %v4672
        %v7417 = vpack.c.b16 %v4722, %v4673
        %v7418 = vpack.c.b16 %v4723, %v4674
        %v7419 = vpack.c.b16 %v4724, %v4675
        %v7420 = vpack.c.b16 %v4725, %v4676
        %v7421 = vpack.c.b16 %v4726, %v4677
        %v7422 = vpack.c.b16 %v4776, %v4727
        %v7423 = vpack.c.b16 %v4777, %v4728
        %v7424 = vpack.c.b16 %v4778, %v4729
        %v7425 = vpack.c.b16 %v4779, %v4730
        %v7426 = vpack.c.b16 %v4780, %v4731
        %v7427 = vpack.c.b16 %v4781, %v4732
        %v7428 = vpack.c.b16 %v4782, %v4733
        %v7429 = vpack.c.b16 %v4783, %v4734
        %v7430 = vpack.c.b16 %v4784, %v4735
        %v7431 = vpack.c.b16 %v4785, %v4736
        %v7432 = vpack.c.b16 %v4786, %v4737
        %v7433 = vpack.c.b16 %v4787, %v4738
        %v7434 = vpack.c.b16 %v4788, %v4739
        %v7435 = vpack.c.b16 %v4789, %v4740
        %v7436 = vpack.c.b16 %v4790, %v4741
        %v7437 = vpack.c.b16 %v4791, %v4742
        %v7438 = vpack.c.b16 %v4792, %v4743
        %v7439 = vpack.c.b16 %v4793, %v4744
        %v7440 = vpack.c.b16 %v4794, %v4745
        %v7441 = vpack.c.b16 %v4795, %v4746
        %v7442 = vpack.c.b16 %v4796, %v4747
        %v7443 = vpack.c.b16 %v4797, %v4748
        %v7444 = vpack.c.b16 %v4798, %v4749
        %v7445 = vpack.c.b16 %v4799, %v4750
        %v7446 = vpack.c.b16 %v4800, %v4751
        %v7447 = vpack.c.b16 %v4801, %v4752
        %v7448 = vpack.c.b16 %v4802, %v4753
        %v7449 = vpack.c.b16 %v4803, %v4754
        %v7450 = vpack.c.b16 %v4804, %v4755
        %v7451 = vpack.c.b16 %v4805, %v4756
        %v7452 = vpack.c.b16 %v4806, %v4757
        %v7453 = vpack.c.b16 %v4807, %v4758
        %v7454 = vpack.c.b16 %v4808, %v4759
        %v7455 = vpack.c.b16 %v4809, %v4760
        %v7456 = vpack.c.b16 %v4810, %v4761
        %v7457 = vpack.c.b16 %v4811, %v4762
        %v7458 = vpack.c.b16 %v4812, %v4763
        %v7459 = vpack.c.b16 %v4813, %v4764
        %v7460 = vpack.c.b16 %v4814, %v4765
        %v7461 = vpack.c.b16 %v4815, %v4766
        %v7462 = vpack.c.b16 %v4816, %v4767
        %v7463 = vpack.c.b16 %v4817, %v4768
        %v7464 = vpack.c.b16 %v4818, %v4769
        %v7465 = vpack.c.b16 %v4819, %v4770
        %v7466 = vpack.c.b16 %v4820, %v4771
        %v7467 = vpack.c.b16 %v4821, %v4772
        %v7468 = vpack.c.b16 %v4822, %v4773
        %v7469 = vpack.c.b16 %v4823, %v4774
        %v7470 = vpack.c.b16 %v4824, %v4775
        %v7471 = vpack.c.b16 %v4874, %v4825
        %v7472 = vpack.c.b16 %v4875, %v4826
        %v7473 = vpack.c.b16 %v4876, %v4827
        %v7474 = vpack.c.b16 %v4877, %v4828
        %v7475 = vpack.c.b16 %v4878, %v4829
        %v7476 = vpack.c.b16 %v4879, %v4830
        %v7477 = vpack.c.b16 %v4880, %v4831
        %v7478 = vpack.c.b16 %v4881, %v4832
        %v7479 = vpack.c.b16 %v4882, %v4833
        %v7480 = vpack.c.b16 %v4883, %v4834
        %v7481 = vpack.c.b16 %v4884, %v4835
        %v7482 = vpack.c.b16 %v4885, %v4836
        %v7483 = vpack.c.b16 %v4886, %v4837
        %v7484 = vpack.c.b16 %v4887, %v4838
        %v7485 = vpack.c.b16 %v4888, %v4839
        %v7486 = vpack.c.b16 %v4889, %v4840
        %v7487 = vpack.c.b16 %v4890, %v4841
        %v7488 = vpack.c.b16 %v4891, %v4842
        %v7489 = vpack.c.b16 %v4892, %v4843
        %v7490 = vpack.c.b16 %v4893, %v4844
        %v7491 = vpack.c.b16 %v4894, %v4845
        %v7492 = vpack.c.b16 %v4895, %v4846
        %v7493 = vpack.c.b16 %v4896, %v4847
        %v7494 = vpack.c.b16 %v4897, %v4848
        %v7495 = vpack.c.b16 %v4898, %v4849
        %v7496 = vpack.c.b16 %v4899, %v4850
        %v7497 = vpack.c.b16 %v4900, %v4851
        %v7498 = vpack.c.b16 %v4901, %v4852
        %v7499 = vpack.c.b16 %v4902, %v4853
        %v7500 = vpack.c.b16 %v4903, %v4854
        %v7501 = vpack.c.b16 %v4904, %v4855
        %v7502 = vpack.c.b16 %v4905, %v4856
        %v7503 = vpack.c.b16 %v4906, %v4857
        %v7504 = vpack.c.b16 %v4907, %v4858
        %v7505 = vpack.c.b16 %v4908, %v4859
        %v7506 = vpack.c.b16 %v4909, %v4860
        %v7507 = vpack.c.b16 %v4910, %v4861
        %v7508 = vpack.c.b16 %v4911, %v4862
        %v7509 = vpack.c.b16 %v4912, %v4863
        %v7510 = vpack.c.b16 %v4913, %v4864
        %v7511 = vpack.c.b16 %v4914, %v4865
        %v7512 = vpack.c.b16 %v4915, %v4866
        %v7513 = vpack.c.b16 %v4916, %v4867
        %v7514 = vpack.c.b16 %v4917, %v4868
        %v7515 = vpack.c.b16 %v4918, %v4869
        %v7516 = vpack.c.b16 %v4919, %v4870
        %v7517 = vpack.c.b16 %v4920, %v4871
        %v7518 = vpack.c.b16 %v4921, %v4872
        %v7519 = vpack.c.b16 %v4922, %v4873
        %v7520 = vpack.c.b16 %v4972, %v4923
        %v7521 = vpack.c.b16 %v4973, %v4924
        %v7522 = vpack.c.b16 %v4974, %v4925
        %v7523 = vpack.c.b16 %v4975, %v4926
        %v7524 = vpack.c.b16 %v4976, %v4927
        %v7525 = vpack.c.b16 %v4977, %v4928
        %v7526 = vpack.c.b16 %v4978, %v4929
        %v7527 = vpack.c.b16 %v4979, %v4930
        %v7528 = vpack.c.b16 %v4980, %v4931
        %v7529 = vpack.c.b16 %v4981, %v4932
        %v7530 = vpack.c.b16 %v4982, %v4933
        %v7531 = vpack.c.b16 %v4983, %v4934
        %v7532 = vpack.c.b16 %v4984, %v4935
        %v7533 = vpack.c.b16 %v4985, %v4936
        %v7534 = vpack.c.b16 %v4986, %v4937
        %v7535 = vpack.c.b16 %v4987, %v4938
        %v7536 = vpack.c.b16 %v4988, %v4939
        %v7537 = vpack.c.b16 %v4989, %v4940
        %v7538 = vpack.c.b16 %v4990, %v4941
        %v7539 = vpack.c.b16 %v4991, %v4942
        %v7540 = vpack.c.b16 %v4992, %v4943
        %v7541 = vpack.c.b16 %v4993, %v4944
        %v7542 = vpack.c.b16 %v4994, %v4945
        %v7543 = vpack.c.b16 %v4995, %v4946
        %v7544 = vpack.c.b16 %v4996, %v4947
        %v7545 = vpack.c.b16 %v4997, %v4948
        %v7546 = vpack.c.b16 %v4998, %v4949
        %v7547 = vpack.c.b16 %v4999, %v4950
        %v7548 = vpack.c.b16 %v5000, %v4951
        %v7549 = vpack.c.b16 %v5001, %v4952
        %v7550 = vpack.c.b16 %v5002, %v4953
        %v7551 = vpack.c.b16 %v5003, %v4954
        %v7552 = vpack.c.b16 %v5004, %v4955
        %v7553 = vpack.c.b16 %v5005, %v4956
        %v7554 = vpack.c.b16 %v5006, %v4957
        %v7555 = vpack.c.b16 %v5007, %v4958
        %v7556 = vpack.c.b16 %v5008, %v4959
        %v7557 = vpack.c.b16 %v5009, %v4960
        %v7558 = vpack.c.b16 %v5010, %v4961
        %v7559 = vpack.c.b16 %v5011, %v4962
        %v7560 = vpack.c.b16 %v5012, %v4963
        %v7561 = vpack.c.b16 %v5013, %v4964
        %v7562 = vpack.c.b16 %v5014, %v4965
        %v7563 = vpack.c.b16 %v5015, %v4966
        %v7564 = vpack.c.b16 %v5016, %v4967
        %v7565 = vpack.c.b16 %v5017, %v4968
        %v7566 = vpack.c.b16 %v5018, %v4969
        %v7567 = vpack.c.b16 %v5019, %v4970
        %v7568 = vpack.c.b16 %v5020, %v4971
        %v7569 = vpack.c.b16 %v5070, %v5021
        %v7570 = vpack.c.b16 %v5071, %v5022
        %v7571 = vpack.c.b16 %v5072, %v5023
        %v7572 = vpack.c.b16 %v5073, %v5024
        %v7573 = vpack.c.b16 %v5074, %v5025
        %v7574 = vpack.c.b16 %v5075, %v5026
        %v7575 = vpack.c.b16 %v5076, %v5027
        %v7576 = vpack.c.b16 %v5077, %v5028
        %v7577 = vpack.c.b16 %v5078, %v5029
        %v7578 = vpack.c.b16 %v5079, %v5030
        %v7579 = vpack.c.b16 %v5080, %v5031
        %v7580 = vpack.c.b16 %v5081, %v5032
        %v7581 = vpack.c.b16 %v5082, %v5033
        %v7582 = vpack.c.b16 %v5083, %v5034
        %v7583 = vpack.c.b16 %v5084, %v5035
        %v7584 = vpack.c.b16 %v5085, %v5036
        %v7585 = vpack.c.b16 %v5086, %v5037
        %v7586 = vpack.c.b16 %v5087, %v5038
        %v7587 = vpack.c.b16 %v5088, %v5039
        %v7588 = vpack.c.b16 %v5089, %v5040
        %v7589 = vpack.c.b16 %v5090, %v5041
        %v7590 = vpack.c.b16 %v5091, %v5042
        %v7591 = vpack.c.b16 %v5092, %v5043
        %v7592 = vpack.c.b16 %v5093, %v5044
        %v7593 = vpack.c.b16 %v5094, %v5045
        %v7594 = vpack.c.b16 %v5095, %v5046
        %v7595 = vpack.c.b16 %v5096, %v5047
        %v7596 = vpack.c.b16 %v5097, %v5048
        %v7597 = vpack.c.b16 %v5098, %v5049
        %v7598 = vpack.c.b16 %v5099, %v5050
        %v7599 = vpack.c.b16 %v5100, %v5051
        %v7600 = vpack.c.b16 %v5101, %v5052
        %v7601 = vpack.c.b16 %v5102, %v5053
        %v7602 = vpack.c.b16 %v5103, %v5054
        %v7603 = vpack.c.b16 %v5104, %v5055
        %v7604 = vpack.c.b16 %v5105, %v5056
        %v7605 = vpack.c.b16 %v5106, %v5057
        %v7606 = vpack.c.b16 %v5107, %v5058
        %v7607 = vpack.c.b16 %v5108, %v5059
        %v7608 = vpack.c.b16 %v5109, %v5060
        %v7609 = vpack.c.b16 %v5110, %v5061
        %v7610 = vpack.c.b16 %v5111, %v5062
        %v7611 = vpack.c.b16 %v5112, %v5063
        %v7612 = vpack.c.b16 %v5113, %v5064
        %v7613 = vpack.c.b16 %v5114, %v5065
        %v7614 = vpack.c.b16 %v5115, %v5066
        %v7615 = vpack.c.b16 %v5116, %v5067
        %v7616 = vpack.c.b16 %v5117, %v5068
        %v7617 = vpack.c.b16 %v5118, %v5069
        %v7618 = vpack.c.b16 %v5168, %v5119
        %v7619 = vpack.c.b16 %v5169, %v5120
        %v7620 = vpack.c.b16 %v5170, %v5121
        %v7621 = vpack.c.b16 %v5171, %v5122
        %v7622 = vpack.c.b16 %v5172, %v5123
        %v7623 = vpack.c.b16 %v5173, %v5124
        %v7624 = vpack.c.b16 %v5174, %v5125
        %v7625 = vpack.c.b16 %v5175, %v5126
        %v7626 = vpack.c.b16 %v5176, %v5127
        %v7627 = vpack.c.b16 %v5177, %v5128
        %v7628 = vpack.c.b16 %v5178, %v5129
        %v7629 = vpack.c.b16 %v5179, %v5130
        %v7630 = vpack.c.b16 %v5180, %v5131
        %v7631 = vpack.c.b16 %v5181, %v5132
        %v7632 = vpack.c.b16 %v5182, %v5133
        %v7633 = vpack.c.b16 %v5183, %v5134
        %v7634 = vpack.c.b16 %v5184, %v5135
        %v7635 = vpack.c.b16 %v5185, %v5136
        %v7636 = vpack.c.b16 %v5186, %v5137
        %v7637 = vpack.c.b16 %v5187, %v5138
        %v7638 = vpack.c.b16 %v5188, %v5139
        %v7639 = vpack.c.b16 %v5189, %v5140
        %v7640 = vpack.c.b16 %v5190, %v5141
        %v7641 = vpack.c.b16 %v5191, %v5142
        %v7642 = vpack.c.b16 %v5192, %v5143
        %v7643 = vpack.c.b16 %v5193, %v5144
        %v7644 = vpack.c.b16 %v5194, %v5145
        %v7645 = vpack.c.b16 %v5195, %v5146
        %v7646 = vpack.c.b16 %v5196, %v5147
        %v7647 = vpack.c.b16 %v5197, %v5148
        %v7648 = vpack.c.b16 %v5198, %v5149
        %v7649 = vpack.c.b16 %v5199, %v5150
        %v7650 = vpack.c.b16 %v5200, %v5151
        %v7651 = vpack.c.b16 %v5201, %v5152
        %v7652 = vpack.c.b16 %v5202, %v5153
        %v7653 = vpack.c.b16 %v5203, %v5154
        %v7654 = vpack.c.b16 %v5204, %v5155
        %v7655 = vpack.c.b16 %v5205, %v5156
        %v7656 = vpack.c.b16 %v5206, %v5157
        %v7657 = vpack.c.b16 %v5207, %v5158
        %v7658 = vpack.c.b16 %v5208, %v5159
        %v7659 = vpack.c.b16 %v5209, %v5160
        %v7660 = vpack.c.b16 %v5210, %v5161
        %v7661 = vpack.c.b16 %v5211, %v5162
        %v7662 = vpack.c.b16 %v5212, %v5163
        %v7663 = vpack.c.b16 %v5213, %v5164
        %v7664 = vpack.c.b16 %v5214, %v5165
        %v7665 = vpack.c.b16 %v5215, %v5166
        %v7666 = vpack.c.b16 %v5216, %v5167
        %v7667 = vpack.c.b16 %v5266, %v5217
        %v7668 = vpack.c.b16 %v5267, %v5218
        %v7669 = vpack.c.b16 %v5268, %v5219
        %v7670 = vpack.c.b16 %v5269, %v5220
        %v7671 = vpack.c.b16 %v5270, %v5221
        %v7672 = vpack.c.b16 %v5271, %v5222
        %v7673 = vpack.c.b16 %v5272, %v5223
        %v7674 = vpack.c.b16 %v5273, %v5224
        %v7675 = vpack.c.b16 %v5274, %v5225
        %v7676 = vpack.c.b16 %v5275, %v5226
        %v7677 = vpack.c.b16 %v5276, %v5227
        %v7678 = vpack.c.b16 %v5277, %v5228
        %v7679 = vpack.c.b16 %v5278, %v5229
        %v7680 = vpack.c.b16 %v5279, %v5230
        %v7681 = vpack.c.b16 %v5280, %v5231
        %v7682 = vpack.c.b16 %v5281, %v5232
        %v7683 = vpack.c.b16 %v5282, %v5233
        %v7684 = vpack.c.b16 %v5283, %v5234
        %v7685 = vpack.c.b16 %v5284, %v5235
        %v7686 = vpack.c.b16 %v5285, %v5236
        %v7687 = vpack.c.b16 %v5286, %v5237
        %v7688 = vpack.c.b16 %v5287, %v5238
        %v7689 = vpack.c.b16 %v5288, %v5239
        %v7690 = vpack.c.b16 %v5289, %v5240
        %v7691 = vpack.c.b16 %v5290, %v5241
        %v7692 = vpack.c.b16 %v5291, %v5242
        %v7693 = vpack.c.b16 %v5292, %v5243
        %v7694 = vpack.c.b16 %v5293, %v5244
        %v7695 = vpack.c.b16 %v5294, %v5245
        %v7696 = vpack.c.b16 %v5295, %v5246
        %v7697 = vpack.c.b16 %v5296, %v5247
        %v7698 = vpack.c.b16 %v5297, %v5248
        %v7699 = vpack.c.b16 %v5298, %v5249
        %v7700 = vpack.c.b16 %v5299, %v5250
        %v7701 = vpack.c.b16 %v5300, %v5251
        %v7702 = vpack.c.b16 %v5301, %v5252
        %v7703 = vpack.c.b16 %v5302, %v5253
        %v7704 = vpack.c.b16 %v5303, %v5254
        %v7705 = vpack.c.b16 %v5304, %v5255
        %v7706 = vpack.c.b16 %v5305, %v5256
        %v7707 = vpack.c.b16 %v5306, %v5257
        %v7708 = vpack.c.b16 %v5307, %v5258
        %v7709 = vpack.c.b16 %v5308, %v5259
        %v7710 = vpack.c.b16 %v5309, %v5260
        %v7711 = vpack.c.b16 %v5310, %v5261
        %v7712 = vpack.c.b16 %v5311, %v5262
        %v7713 = vpack.c.b16 %v5312, %v5263
        %v7714 = vpack.c.b16 %v5313, %v5264
        %v7715 = vpack.c.b16 %v5314, %v5265
        %v7716 = vpack.c.b16 %v5364, %v5315
        %v7717 = vpack.c.b16 %v5365, %v5316
        %v7718 = vpack.c.b16 %v5366, %v5317
        %v7719 = vpack.c.b16 %v5367, %v5318
        %v7720 = vpack.c.b16 %v5368, %v5319
        %v7721 = vpack.c.b16 %v5369, %v5320
        %v7722 = vpack.c.b16 %v5370, %v5321
        %v7723 = vpack.c.b16 %v5371, %v5322
        %v7724 = vpack.c.b16 %v5372, %v5323
        %v7725 = vpack.c.b16 %v5373, %v5324
        %v7726 = vpack.c.b16 %v5374, %v5325
        %v7727 = vpack.c.b16 %v5375, %v5326
        %v7728 = vpack.c.b16 %v5376, %v5327
        %v7729 = vpack.c.b16 %v5377, %v5328
        %v7730 = vpack.c.b16 %v5378, %v5329
        %v7731 = vpack.c.b16 %v5379, %v5330
        %v7732 = vpack.c.b16 %v5380, %v5331
        %v7733 = vpack.c.b16 %v5381, %v5332
        %v7734 = vpack.c.b16 %v5382, %v5333
        %v7735 = vpack.c.b16 %v5383, %v5334
        %v7736 = vpack.c.b16 %v5384, %v5335
        %v7737 = vpack.c.b16 %v5385, %v5336
        %v7738 = vpack.c.b16 %v5386, %v5337
        %v7739 = vpack.c.b16 %v5387, %v5338
        %v7740 = vpack.c.b16 %v5388, %v5339
        %v7741 = vpack.c.b16 %v5389, %v5340
        %v7742 = vpack.c.b16 %v5390, %v5341
        %v7743 = vpack.c.b16 %v5391, %v5342
        %v7744 = vpack.c.b16 %v5392, %v5343
        %v7745 = vpack.c.b16 %v5393, %v5344
        %v7746 = vpack.c.b16 %v5394, %v5345
        %v7747 = vpack.c.b16 %v5395, %v5346
        %v7748 = vpack.c.b16 %v5396, %v5347
        %v7749 = vpack.c.b16 %v5397, %v5348
        %v7750 = vpack.c.b16 %v5398, %v5349
        %v7751 = vpack.c.b16 %v5399, %v5350
        %v7752 = vpack.c.b16 %v5400, %v5351
        %v7753 = vpack.c.b16 %v5401, %v5352
        %v7754 = vpack.c.b16 %v5402, %v5353
        %v7755 = vpack.c.b16 %v5403, %v5354
        %v7756 = vpack.c.b16 %v5404, %v5355
        %v7757 = vpack.c.b16 %v5405, %v5356
        %v7758 = vpack.c.b16 %v5406, %v5357
        %v7759 = vpack.c.b16 %v5407, %v5358
        %v7760 = vpack.c.b16 %v5408, %v5359
        %v7761 = vpack.c.b16 %v5409, %v5360
        %v7762 = vpack.c.b16 %v5410, %v5361
        %v7763 = vpack.c.b16 %v5411, %v5362
        %v7764 = vpack.c.b16 %v5412, %v5363
        %v7765 = vpack.c.b16 %v5462, %v5413
        %v7766 = vpack.c.b16 %v5463, %v5414
        %v7767 = vpack.c.b16 %v5464, %v5415
        %v7768 = vpack.c.b16 %v5465, %v5416
        %v7769 = vpack.c.b16 %v5466, %v5417
        %v7770 = vpack.c.b16 %v5467, %v5418
        %v7771 = vpack.c.b16 %v5468, %v5419
        %v7772 = vpack.c.b16 %v5469, %v5420
        %v7773 = vpack.c.b16 %v5470, %v5421
        %v7774 = vpack.c.b16 %v5471, %v5422
        %v7775 = vpack.c.b16 %v5472, %v5423
        %v7776 = vpack.c.b16 %v5473, %v5424
        %v7777 = vpack.c.b16 %v5474, %v5425
        %v7778 = vpack.c.b16 %v5475, %v5426
        %v7779 = vpack.c.b16 %v5476, %v5427
        %v7780 = vpack.c.b16 %v5477, %v5428
        %v7781 = vpack.c.b16 %v5478, %v5429
        %v7782 = vpack.c.b16 %v5479, %v5430
        %v7783 = vpack.c.b16 %v5480, %v5431
        %v7784 = vpack.c.b16 %v5481, %v5432
        %v7785 = vpack.c.b16 %v5482, %v5433
        %v7786 = vpack.c.b16 %v5483, %v5434
        %v7787 = vpack.c.b16 %v5484, %v5435
        %v7788 = vpack.c.b16 %v5485, %v5436
        %v7789 = vpack.c.b16 %v5486, %v5437
        %v7790 = vpack.c.b16 %v5487, %v5438
        %v7791 = vpack.c.b16 %v5488, %v5439
        %v7792 = vpack.c.b16 %v5489, %v5440
        %v7793 = vpack.c.b16 %v5490, %v5441
        %v7794 = vpack.c.b16 %v5491, %v5442
        %v7795 = vpack.c.b16 %v5492, %v5443
        %v7796 = vpack.c.b16 %v5493, %v5444
        %v7797 = vpack.c.b16 %v5494, %v5445
        %v7798 = vpack.c.b16 %v5495, %v5446
        %v7799 = vpack.c.b16 %v5496, %v5447
        %v7800 = vpack.c.b16 %v5497, %v5448
        %v7801 = vpack.c.b16 %v5498, %v5449
        %v7802 = vpack.c.b16 %v5499, %v5450
        %v7803 = vpack.c.b16 %v5500, %v5451
        %v7804 = vpack.c.b16 %v5501, %v5452
        %v7805 = vpack.c.b16 %v5502, %v5453
        %v7806 = vpack.c.b16 %v5503, %v5454
        %v7807 = vpack.c.b16 %v5504, %v5455
        %v7808 = vpack.c.b16 %v5505, %v5456
        %v7809 = vpack.c.b16 %v5506, %v5457
        %v7810 = vpack.c.b16 %v5507, %v5458
        %v7811 = vpack.c.b16 %v5508, %v5459
        %v7812 = vpack.c.b16 %v5509, %v5460
        %v7813 = vpack.c.b16 %v5510, %v5461
        %v7814 = vpack.c.b16 %v5560, %v5511
        %v7815 = vpack.c.b16 %v5561, %v5512
        %v7816 = vpack.c.b16 %v5562, %v5513
        %v7817 = vpack.c.b16 %v5563, %v5514
        %v7818 = vpack.c.b16 %v5564, %v5515
        %v7819 = vpack.c.b16 %v5565, %v5516
        %v7820 = vpack.c.b16 %v5566, %v5517
        %v7821 = vpack.c.b16 %v5567, %v5518
        %v7822 = vpack.c.b16 %v5568, %v5519
        %v7823 = vpack.c.b16 %v5569, %v5520
        %v7824 = vpack.c.b16 %v5570, %v5521
        %v7825 = vpack.c.b16 %v5571, %v5522
        %v7826 = vpack.c.b16 %v5572, %v5523
        %v7827 = vpack.c.b16 %v5573, %v5524
        %v7828 = vpack.c.b16 %v5574, %v5525
        %v7829 = vpack.c.b16 %v5575, %v5526
        %v7830 = vpack.c.b16 %v5576, %v5527
        %v7831 = vpack.c.b16 %v5577, %v5528
        %v7832 = vpack.c.b16 %v5578, %v5529
        %v7833 = vpack.c.b16 %v5579, %v5530
        %v7834 = vpack.c.b16 %v5580, %v5531
        %v7835 = vpack.c.b16 %v5581, %v5532
        %v7836 = vpack.c.b16 %v5582, %v5533
        %v7837 = vpack.c.b16 %v5583, %v5534
        %v7838 = vpack.c.b16 %v5584, %v5535
        %v7839 = vpack.c.b16 %v5585, %v5536
        %v7840 = vpack.c.b16 %v5586, %v5537
        %v7841 = vpack.c.b16 %v5587, %v5538
        %v7842 = vpack.c.b16 %v5588, %v5539
        %v7843 = vpack.c.b16 %v5589, %v5540
        %v7844 = vpack.c.b16 %v5590, %v5541
        %v7845 = vpack.c.b16 %v5591, %v5542
        %v7846 = vpack.c.b16 %v5592, %v5543
        %v7847 = vpack.c.b16 %v5593, %v5544
        %v7848 = vpack.c.b16 %v5594, %v5545
        %v7849 = vpack.c.b16 %v5595, %v5546
        %v7850 = vpack.c.b16 %v5596, %v5547
        %v7851 = vpack.c.b16 %v5597, %v5548
        %v7852 = vpack.c.b16 %v5598, %v5549
        %v7853 = vpack.c.b16 %v5599, %v5550
        %v7854 = vpack.c.b16 %v5600, %v5551
        %v7855 = vpack.c.b16 %v5601, %v5552
        %v7856 = vpack.c.b16 %v5602, %v5553
        %v7857 = vpack.c.b16 %v5603, %v5554
        %v7858 = vpack.c.b16 %v5604, %v5555
        %v7859 = vpack.c.b16 %v5605, %v5556
        %v7860 = vpack.c.b16 %v5606, %v5557
        %v7861 = vpack.c.b16 %v5607, %v5558
        %v7862 = vpack.c.b16 %v5608, %v5559
        %v7863 = vpack.c.b16 %v5658, %v5609
        %v7864 = vpack.c.b16 %v5659, %v5610
        %v7865 = vpack.c.b16 %v5660, %v5611
        %v7866 = vpack.c.b16 %v5661, %v5612
        %v7867 = vpack.c.b16 %v5662, %v5613
        %v7868 = vpack.c.b16 %v5663, %v5614
        %v7869 = vpack.c.b16 %v5664, %v5615
        %v7870 = vpack.c.b16 %v5665, %v5616
        %v7871 = vpack.c.b16 %v5666, %v5617
        %v7872 = vpack.c.b16 %v5667, %v5618
        %v7873 = vpack.c.b16 %v5668, %v5619
        %v7874 = vpack.c.b16 %v5669, %v5620
        %v7875 = vpack.c.b16 %v5670, %v5621
        %v7876 = vpack.c.b16 %v5671, %v5622
        %v7877 = vpack.c.b16 %v5672, %v5623
        %v7878 = vpack.c.b16 %v5673, %v5624
        %v7879 = vpack.c.b16 %v5674, %v5625
        %v7880 = vpack.c.b16 %v5675, %v5626
        %v7881 = vpack.c.b16 %v5676, %v5627
        %v7882 = vpack.c.b16 %v5677, %v5628
        %v7883 = vpack.c.b16 %v5678, %v5629
        %v7884 = vpack.c.b16 %v5679, %v5630
        %v7885 = vpack.c.b16 %v5680, %v5631
        %v7886 = vpack.c.b16 %v5681, %v5632
        %v7887 = vpack.c.b16 %v5682, %v5633
        %v7888 = vpack.c.b16 %v5683, %v5634
        %v7889 = vpack.c.b16 %v5684, %v5635
        %v7890 = vpack.c.b16 %v5685, %v5636
        %v7891 = vpack.c.b16 %v5686, %v5637
        %v7892 = vpack.c.b16 %v5687, %v5638
        %v7893 = vpack.c.b16 %v5688, %v5639
        %v7894 = vpack.c.b16 %v5689, %v5640
        %v7895 = vpack.c.b16 %v5690, %v5641
        %v7896 = vpack.c.b16 %v5691, %v5642
        %v7897 = vpack.c.b16 %v5692, %v5643
        %v7898 = vpack.c.b16 %v5693, %v5644
        %v7899 = vpack.c.b16 %v5694, %v5645
        %v7900 = vpack.c.b16 %v5695, %v5646
        %v7901 = vpack.c.b16 %v5696, %v5647
        %v7902 = vpack.c.b16 %v5697, %v5648
        %v7903 = vpack.c.b16 %v5698, %v5649
        %v7904 = vpack.c.b16 %v5699, %v5650
        %v7905 = vpack.c.b16 %v5700, %v5651
        %v7906 = vpack.c.b16 %v5701, %v5652
        %v7907 = vpack.c.b16 %v5702, %v5653
        %v7908 = vpack.c.b16 %v5703, %v5654
        %v7909 = vpack.c.b16 %v5704, %v5655
        %v7910 = vpack.c.b16 %v5705, %v5656
        %v7911 = vpack.c.b16 %v5706, %v5657
        %v7912 = vpack.c.b16 %v5756, %v5707
        %v7913 = vpack.c.b16 %v5757, %v5708
        %v7914 = vpack.c.b16 %v5758, %v5709
        %v7915 = vpack.c.b16 %v5759, %v5710
        %v7916 = vpack.c.b16 %v5760, %v5711
        %v7917 = vpack.c.b16 %v5761, %v5712
        %v7918 = vpack.c.b16 %v5762, %v5713
        %v7919 = vpack.c.b16 %v5763, %v5714
        %v7920 = vpack.c.b16 %v5764, %v5715
        %v7921 = vpack.c.b16 %v5765, %v5716
        %v7922 = vpack.c.b16 %v5766, %v5717
        %v7923 = vpack.c.b16 %v5767, %v5718
        %v7924 = vpack.c.b16 %v5768, %v5719
        %v7925 = vpack.c.b16 %v5769, %v5720
        %v7926 = vpack.c.b16 %v5770, %v5721
        %v7927 = vpack.c.b16 %v5771, %v5722
        %v7928 = vpack.c.b16 %v5772, %v5723
        %v7929 = vpack.c.b16 %v5773, %v5724
        %v7930 = vpack.c.b16 %v5774, %v5725
        %v7931 = vpack.c.b16 %v5775, %v5726
        %v7932 = vpack.c.b16 %v5776, %v5727
        %v7933 = vpack.c.b16 %v5777, %v5728
        %v7934 = vpack.c.b16 %v5778, %v5729
        %v7935 = vpack.c.b16 %v5779, %v5730
        %v7936 = vpack.c.b16 %v5780, %v5731
        %v7937 = vpack.c.b16 %v5781, %v5732
        %v7938 = vpack.c.b16 %v5782, %v5733
        %v7939 = vpack.c.b16 %v5783, %v5734
        %v7940 = vpack.c.b16 %v5784, %v5735
        %v7941 = vpack.c.b16 %v5785, %v5736
        %v7942 = vpack.c.b16 %v5786, %v5737
        %v7943 = vpack.c.b16 %v5787, %v5738
        %v7944 = vpack.c.b16 %v5788, %v5739
        %v7945 = vpack.c.b16 %v5789, %v5740
        %v7946 = vpack.c.b16 %v5790, %v5741
        %v7947 = vpack.c.b16 %v5791, %v5742
        %v7948 = vpack.c.b16 %v5792, %v5743
        %v7949 = vpack.c.b16 %v5793, %v5744
        %v7950 = vpack.c.b16 %v5794, %v5745
        %v7951 = vpack.c.b16 %v5795, %v5746
        %v7952 = vpack.c.b16 %v5796, %v5747
        %v7953 = vpack.c.b16 %v5797, %v5748
        %v7954 = vpack.c.b16 %v5798, %v5749
        %v7955 = vpack.c.b16 %v5799, %v5750
        %v7956 = vpack.c.b16 %v5800, %v5751
        %v7957 = vpack.c.b16 %v5801, %v5752
        %v7958 = vpack.c.b16 %v5802, %v5753
        %v7959 = vpack.c.b16 %v5803, %v5754
        %v7960 = vpack.c.b16 %v5804, %v5755
        %v7961 = vpack.c.b16 %v5854, %v5805
        %v7962 = vpack.c.b16 %v5855, %v5806
        %v7963 = vpack.c.b16 %v5856, %v5807
        %v7964 = vpack.c.b16 %v5857, %v5808
        %v7965 = vpack.c.b16 %v5858, %v5809
        %v7966 = vpack.c.b16 %v5859, %v5810
        %v7967 = vpack.c.b16 %v5860, %v5811
        %v7968 = vpack.c.b16 %v5861, %v5812
        %v7969 = vpack.c.b16 %v5862, %v5813
        %v7970 = vpack.c.b16 %v5863, %v5814
        %v7971 = vpack.c.b16 %v5864, %v5815
        %v7972 = vpack.c.b16 %v5865, %v5816
        %v7973 = vpack.c.b16 %v5866, %v5817
        %v7974 = vpack.c.b16 %v5867, %v5818
        %v7975 = vpack.c.b16 %v5868, %v5819
        %v7976 = vpack.c.b16 %v5869, %v5820
        %v7977 = vpack.c.b16 %v5870, %v5821
        %v7978 = vpack.c.b16 %v5871, %v5822
        %v7979 = vpack.c.b16 %v5872, %v5823
        %v7980 = vpack.c.b16 %v5873, %v5824
        %v7981 = vpack.c.b16 %v5874, %v5825
        %v7982 = vpack.c.b16 %v5875, %v5826
        %v7983 = vpack.c.b16 %v5876, %v5827
        %v7984 = vpack.c.b16 %v5877, %v5828
        %v7985 = vpack.c.b16 %v5878, %v5829
        %v7986 = vpack.c.b16 %v5879, %v5830
        %v7987 = vpack.c.b16 %v5880, %v5831
        %v7988 = vpack.c.b16 %v5881, %v5832
        %v7989 = vpack.c.b16 %v5882, %v5833
        %v7990 = vpack.c.b16 %v5883, %v5834
        %v7991 = vpack.c.b16 %v5884, %v5835
        %v7992 = vpack.c.b16 %v5885, %v5836
        %v7993 = vpack.c.b16 %v5886, %v5837
        %v7994 = vpack.c.b16 %v5887, %v5838
        %v7995 = vpack.c.b16 %v5888, %v5839
        %v7996 = vpack.c.b16 %v5889, %v5840
        %v7997 = vpack.c.b16 %v5890, %v5841
        %v7998 = vpack.c.b16 %v5891, %v5842
        %v7999 = vpack.c.b16 %v5892, %v5843
        %v8000 = vpack.c.b16 %v5893, %v5844
        %v8001 = vpack.c.b16 %v5894, %v5845
        %v8002 = vpack.c.b16 %v5895, %v5846
        %v8003 = vpack.c.b16 %v5896, %v5847
        %v8004 = vpack.c.b16 %v5897, %v5848
        %v8005 = vpack.c.b16 %v5898, %v5849
        %v8006 = vpack.c.b16 %v5899, %v5850
        %v8007 = vpack.c.b16 %v5900, %v5851
        %v8008 = vpack.c.b16 %v5901, %v5852
        %v8009 = vpack.c.b16 %v5902, %v5853
        %v8010 = vpack.c.b16 %v5952, %v5903
        %v8011 = vpack.c.b16 %v5953, %v5904
        %v8012 = vpack.c.b16 %v5954, %v5905
        %v8013 = vpack.c.b16 %v5955, %v5906
        %v8014 = vpack.c.b16 %v5956, %v5907
        %v8015 = vpack.c.b16 %v5957, %v5908
        %v8016 = vpack.c.b16 %v5958, %v5909
        %v8017 = vpack.c.b16 %v5959, %v5910
        %v8018 = vpack.c.b16 %v5960, %v5911
        %v8019 = vpack.c.b16 %v5961, %v5912
        %v8020 = vpack.c.b16 %v5962, %v5913
        %v8021 = vpack.c.b16 %v5963, %v5914
        %v8022 = vpack.c.b16 %v5964, %v5915
        %v8023 = vpack.c.b16 %v5965, %v5916
        %v8024 = vpack.c.b16 %v5966, %v5917
        %v8025 = vpack.c.b16 %v5967, %v5918
        %v8026 = vpack.c.b16 %v5968, %v5919
        %v8027 = vpack.c.b16 %v5969, %v5920
        %v8028 = vpack.c.b16 %v5970, %v5921
        %v8029 = vpack.c.b16 %v5971, %v5922
        %v8030 = vpack.c.b16 %v5972, %v5923
        %v8031 = vpack.c.b16 %v5973, %v5924
        %v8032 = vpack.c.b16 %v5974, %v5925
        %v8033 = vpack.c.b16 %v5975, %v5926
        %v8034 = vpack.c.b16 %v5976, %v5927
        %v8035 = vpack.c.b16 %v5977, %v5928
        %v8036 = vpack.c.b16 %v5978, %v5929
        %v8037 = vpack.c.b16 %v5979, %v5930
        %v8038 = vpack.c.b16 %v5980, %v5931
        %v8039 = vpack.c.b16 %v5981, %v5932
        %v8040 = vpack.c.b16 %v5982, %v5933
        %v8041 = vpack.c.b16 %v5983, %v5934
        %v8042 = vpack.c.b16 %v5984, %v5935
        %v8043 = vpack.c.b16 %v5985, %v5936
        %v8044 = vpack.c.b16 %v5986, %v5937
        %v8045 = vpack.c.b16 %v5987, %v5938
        %v8046 = vpack.c.b16 %v5988, %v5939
        %v8047 = vpack.c.b16 %v5989, %v5940
        %v8048 = vpack.c.b16 %v5990, %v5941
        %v8049 = vpack.c.b16 %v5991, %v5942
        %v8050 = vpack.c.b16 %v5992, %v5943
        %v8051 = vpack.c.b16 %v5993, %v5944
        %v8052 = vpack.c.b16 %v5994, %v5945
        %v8053 = vpack.c.b16 %v5995, %v5946
        %v8054 = vpack.c.b16 %v5996, %v5947
        %v8055 = vpack.c.b16 %v5997, %v5948
        %v8056 = vpack.c.b16 %v5998, %v5949
        %v8057 = vpack.c.b16 %v5999, %v5950
        %v8058 = vpack.c.b16 %v6000, %v5951
        %v8059 = vpack.c.b16 %v6050, %v6001
        %v8060 = vpack.c.b16 %v6051, %v6002
        %v8061 = vpack.c.b16 %v6052, %v6003
        %v8062 = vpack.c.b16 %v6053, %v6004
        %v8063 = vpack.c.b16 %v6054, %v6005
        %v8064 = vpack.c.b16 %v6055, %v6006
        %v8065 = vpack.c.b16 %v6056, %v6007
        %v8066 = vpack.c.b16 %v6057, %v6008
        %v8067 = vpack.c.b16 %v6058, %v6009
        %v8068 = vpack.c.b16 %v6059, %v6010
        %v8069 = vpack.c.b16 %v6060, %v6011
        %v8070 = vpack.c.b16 %v6061, %v6012
        %v8071 = vpack.c.b16 %v6062, %v6013
        %v8072 = vpack.c.b16 %v6063, %v6014
        %v8073 = vpack.c.b16 %v6064, %v6015
        %v8074 = vpack.c.b16 %v6065, %v6016
        %v8075 = vpack.c.b16 %v6066, %v6017
        %v8076 = vpack.c.b16 %v6067, %v6018
        %v8077 = vpack.c.b16 %v6068, %v6019
        %v8078 = vpack.c.b16 %v6069, %v6020
        %v8079 = vpack.c.b16 %v6070, %v6021
        %v8080 = vpack.c.b16 %v6071, %v6022
        %v8081 = vpack.c.b16 %v6072, %v6023
        %v8082 = vpack.c.b16 %v6073, %v6024
        %v8083 = vpack.c.b16 %v6074, %v6025
        %v8084 = vpack.c.b16 %v6075, %v6026
        %v8085 = vpack.c.b16 %v6076, %v6027
        %v8086 = vpack.c.b16 %v6077, %v6028
        %v8087 = vpack.c.b16 %v6078, %v6029
        %v8088 = vpack.c.b16 %v6079, %v6030
        %v8089 = vpack.c.b16 %v6080, %v6031
        %v8090 = vpack.c.b16 %v6081, %v6032
        %v8091 = vpack.c.b16 %v6082, %v6033
        %v8092 = vpack.c.b16 %v6083, %v6034
        %v8093 = vpack.c.b16 %v6084, %v6035
        %v8094 = vpack.c.b16 %v6085, %v6036
        %v8095 = vpack.c.b16 %v6086, %v6037
        %v8096 = vpack.c.b16 %v6087, %v6038
        %v8097 = vpack.c.b16 %v6088, %v6039
        %v8098 = vpack.c.b16 %v6089, %v6040
        %v8099 = vpack.c.b16 %v6090, %v6041
        %v8100 = vpack.c.b16 %v6091, %v6042
        %v8101 = vpack.c.b16 %v6092, %v6043
        %v8102 = vpack.c.b16 %v6093, %v6044
        %v8103 = vpack.c.b16 %v6094, %v6045
        %v8104 = vpack.c.b16 %v6095, %v6046
        %v8105 = vpack.c.b16 %v6096, %v6047
        %v8106 = vpack.c.b16 %v6097, %v6048
        %v8107 = vpack.c.b16 %v6098, %v6049
        %v8108 = vpack.c.b16 %v6148, %v6099
        %v8109 = vpack.c.b16 %v6149, %v6100
        %v8110 = vpack.c.b16 %v6150, %v6101
        %v8111 = vpack.c.b16 %v6151, %v6102
        %v8112 = vpack.c.b16 %v6152, %v6103
        %v8113 = vpack.c.b16 %v6153, %v6104
        %v8114 = vpack.c.b16 %v6154, %v6105
        %v8115 = vpack.c.b16 %v6155, %v6106
        %v8116 = vpack.c.b16 %v6156, %v6107
        %v8117 = vpack.c.b16 %v6157, %v6108
        %v8118 = vpack.c.b16 %v6158, %v6109
        %v8119 = vpack.c.b16 %v6159, %v6110
        %v8120 = vpack.c.b16 %v6160, %v6111
        %v8121 = vpack.c.b16 %v6161, %v6112
        %v8122 = vpack.c.b16 %v6162, %v6113
        %v8123 = vpack.c.b16 %v6163, %v6114
        %v8124 = vpack.c.b16 %v6164, %v6115
        %v8125 = vpack.c.b16 %v6165, %v6116
        %v8126 = vpack.c.b16 %v6166, %v6117
        %v8127 = vpack.c.b16 %v6167, %v6118
        %v8128 = vpack.c.b16 %v6168, %v6119
        %v8129 = vpack.c.b16 %v6169, %v6120
        %v8130 = vpack.c.b16 %v6170, %v6121
        %v8131 = vpack.c.b16 %v6171, %v6122
        %v8132 = vpack.c.b16 %v6172, %v6123
        %v8133 = vpack.c.b16 %v6173, %v6124
        %v8134 = vpack.c.b16 %v6174, %v6125
        %v8135 = vpack.c.b16 %v6175, %v6126
        %v8136 = vpack.c.b16 %v6176, %v6127
        %v8137 = vpack.c.b16 %v6177, %v6128
        %v8138 = vpack.c.b16 %v6178, %v6129
        %v8139 = vpack.c.b16 %v6179, %v6130
        %v8140 = vpack.c.b16 %v6180, %v6131
        %v8141 = vpack.c.b16 %v6181, %v6132
        %v8142 = vpack.c.b16 %v6182, %v6133
        %v8143 = vpack.c.b16 %v6183, %v6134
        %v8144 = vpack.c.b16 %v6184, %v6135
        %v8145 = vpack.c.b16 %v6185, %v6136
        %v8146 = vpack.c.b16 %v6186, %v6137
        %v8147 = vpack.c.b16 %v6187, %v6138
        %v8148 = vpack.c.b16 %v6188, %v6139
        %v8149 = vpack.c.b16 %v6189, %v6140
        %v8150 = vpack.c.b16 %v6190, %v6141
        %v8151 = vpack.c.b16 %v6191, %v6142
        %v8152 = vpack.c.b16 %v6192, %v6143
        %v8153 = vpack.c.b16 %v6193, %v6144
        %v8154 = vpack.c.b16 %v6194, %v6145
        %v8155 = vpack.c.b16 %v6195, %v6146
        %v8156 = vpack.c.b16 %v6196, %v6147
        %v8157 = vpack.c.b16 %v6246, %v6197
        %v8158 = vpack.c.b16 %v6247, %v6198
        %v8159 = vpack.c.b16 %v6248, %v6199
        %v8160 = vpack.c.b16 %v6249, %v6200
        %v8161 = vpack.c.b16 %v6250, %v6201
        %v8162 = vpack.c.b16 %v6251, %v6202
        %v8163 = vpack.c.b16 %v6252, %v6203
        %v8164 = vpack.c.b16 %v6253, %v6204
        %v8165 = vpack.c.b16 %v6254, %v6205
        %v8166 = vpack.c.b16 %v6255, %v6206
        %v8167 = vpack.c.b16 %v6256, %v6207
        %v8168 = vpack.c.b16 %v6257, %v6208
        %v8169 = vpack.c.b16 %v6258, %v6209
        %v8170 = vpack.c.b16 %v6259, %v6210
        %v8171 = vpack.c.b16 %v6260, %v6211
        %v8172 = vpack.c.b16 %v6261, %v6212
        %v8173 = vpack.c.b16 %v6262, %v6213
        %v8174 = vpack.c.b16 %v6263, %v6214
        %v8175 = vpack.c.b16 %v6264, %v6215
        %v8176 = vpack.c.b16 %v6265, %v6216
        %v8177 = vpack.c.b16 %v6266, %v6217
        %v8178 = vpack.c.b16 %v6267, %v6218
        %v8179 = vpack.c.b16 %v6268, %v6219
        %v8180 = vpack.c.b16 %v6269, %v6220
        %v8181 = vpack.c.b16 %v6270, %v6221
        %v8182 = vpack.c.b16 %v6271, %v6222
        %v8183 = vpack.c.b16 %v6272, %v6223
        %v8184 = vpack.c.b16 %v6273, %v6224
        %v8185 = vpack.c.b16 %v6274, %v6225
        %v8186 = vpack.c.b16 %v6275, %v6226
        %v8187 = vpack.c.b16 %v6276, %v6227
        %v8188 = vpack.c.b16 %v6277, %v6228
        %v8189 = vpack.c.b16 %v6278, %v6229
        %v8190 = vpack.c.b16 %v6279, %v6230
        %v8191 = vpack.c.b16 %v6280, %v6231
        %v8192 = vpack.c.b16 %v6281, %v6232
        %v8193 = vpack.c.b16 %v6282, %v6233
        %v8194 = vpack.c.b16 %v6283, %v6234
        %v8195 = vpack.c.b16 %v6284, %v6235
        %v8196 = vpack.c.b16 %v6285, %v6236
        %v8197 = vpack.c.b16 %v6286, %v6237
        %v8198 = vpack.c.b16 %v6287, %v6238
        %v8199 = vpack.c.b16 %v6288, %v6239
        %v8200 = vpack.c.b16 %v6289, %v6240
        %v8201 = vpack.c.b16 %v6290, %v6241
        %v8202 = vpack.c.b16 %v6291, %v6242
        %v8203 = vpack.c.b16 %v6292, %v6243
        %v8204 = vpack.c.b16 %v6293, %v6244
        %v8205 = vpack.c.b16 %v6294, %v6245
        %v8206 = vpack.c.b16 %v6344, %v6295
        %v8207 = vpack.c.b16 %v6345, %v6296
        %v8208 = vpack.c.b16 %v6346, %v6297
        %v8209 = vpack.c.b16 %v6347, %v6298
        %v8210 = vpack.c.b16 %v6348, %v6299
        %v8211 = vpack.c.b16 %v6349, %v6300
        %v8212 = vpack.c.b16 %v6350, %v6301
        %v8213 = vpack.c.b16 %v6351, %v6302
        %v8214 = vpack.c.b16 %v6352, %v6303
        %v8215 = vpack.c.b16 %v6353, %v6304
        %v8216 = vpack.c.b16 %v6354, %v6305
        %v8217 = vpack.c.b16 %v6355, %v6306
        %v8218 = vpack.c.b16 %v6356, %v6307
        %v8219 = vpack.c.b16 %v6357, %v6308
        %v8220 = vpack.c.b16 %v6358, %v6309
        %v8221 = vpack.c.b16 %v6359, %v6310
        %v8222 = vpack.c.b16 %v6360, %v6311
        %v8223 = vpack.c.b16 %v6361, %v6312
        %v8224 = vpack.c.b16 %v6362, %v6313
        %v8225 = vpack.c.b16 %v6363, %v6314
        %v8226 = vpack.c.b16 %v6364, %v6315
        %v8227 = vpack.c.b16 %v6365, %v6316
        %v8228 = vpack.c.b16 %v6366, %v6317
        %v8229 = vpack.c.b16 %v6367, %v6318
        %v8230 = vpack.c.b16 %v6368, %v6319
        %v8231 = vpack.c.b16 %v6369, %v6320
        %v8232 = vpack.c.b16 %v6370, %v6321
        %v8233 = vpack.c.b16 %v6371, %v6322
        %v8234 = vpack.c.b16 %v6372, %v6323
        %v8235 = vpack.c.b16 %v6373, %v6324
        %v8236 = vpack.c.b16 %v6374, %v6325
        %v8237 = vpack.c.b16 %v6375, %v6326
        %v8238 = vpack.c.b16 %v6376, %v6327
        %v8239 = vpack.c.b16 %v6377, %v6328
        %v8240 = vpack.c.b16 %v6378, %v6329
        %v8241 = vpack.c.b16 %v6379, %v6330
        %v8242 = vpack.c.b16 %v6380, %v6331
        %v8243 = vpack.c.b16 %v6381, %v6332
        %v8244 = vpack.c.b16 %v6382, %v6333
        %v8245 = vpack.c.b16 %v6383, %v6334
        %v8246 = vpack.c.b16 %v6384, %v6335
        %v8247 = vpack.c.b16 %v6385, %v6336
        %v8248 = vpack.c.b16 %v6386, %v6337
        %v8249 = vpack.c.b16 %v6387, %v6338
        %v8250 = vpack.c.b16 %v6388, %v6339
        %v8251 = vpack.c.b16 %v6389, %v6340
        %v8252 = vpack.c.b16 %v6390, %v6341
        %v8253 = vpack.c.b16 %v6391, %v6342
        %v8254 = vpack.c.b16 %v6392, %v6343
        %v8255 = vpack.c.b16 %v6442, %v6393
        %v8256 = vpack.c.b16 %v6443, %v6394
        %v8257 = vpack.c.b16 %v6444, %v6395
        %v8258 = vpack.c.b16 %v6445, %v6396
        %v8259 = vpack.c.b16 %v6446, %v6397
        %v8260 = vpack.c.b16 %v6447, %v6398
        %v8261 = vpack.c.b16 %v6448, %v6399
        %v8262 = vpack.c.b16 %v6449, %v6400
        %v8263 = vpack.c.b16 %v6450, %v6401
        %v8264 = vpack.c.b16 %v6451, %v6402
        %v8265 = vpack.c.b16 %v6452, %v6403
        %v8266 = vpack.c.b16 %v6453, %v6404
        %v8267 = vpack.c.b16 %v6454, %v6405
        %v8268 = vpack.c.b16 %v6455, %v6406
        %v8269 = vpack.c.b16 %v6456, %v6407
        %v8270 = vpack.c.b16 %v6457, %v6408
        %v8271 = vpack.c.b16 %v6458, %v6409
        %v8272 = vpack.c.b16 %v6459, %v6410
        %v8273 = vpack.c.b16 %v6460, %v6411
        %v8274 = vpack.c.b16 %v6461, %v6412
        %v8275 = vpack.c.b16 %v6462, %v6413
        %v8276 = vpack.c.b16 %v6463, %v6414
        %v8277 = vpack.c.b16 %v6464, %v6415
        %v8278 = vpack.c.b16 %v6465, %v6416
        %v8279 = vpack.c.b16 %v6466, %v6417
        %v8280 = vpack.c.b16 %v6467, %v6418
        %v8281 = vpack.c.b16 %v6468, %v6419
        %v8282 = vpack.c.b16 %v6469, %v6420
        %v8283 = vpack.c.b16 %v6470, %v6421
        %v8284 = vpack.c.b16 %v6471, %v6422
        %v8285 = vpack.c.b16 %v6472, %v6423
        %v8286 = vpack.c.b16 %v6473, %v6424
        %v8287 = vpack.c.b16 %v6474, %v6425
        %v8288 = vpack.c.b16 %v6475, %v6426
        %v8289 = vpack.c.b16 %v6476, %v6427
        %v8290 = vpack.c.b16 %v6477, %v6428
        %v8291 = vpack.c.b16 %v6478, %v6429
        %v8292 = vpack.c.b16 %v6479, %v6430
        %v8293 = vpack.c.b16 %v6480, %v6431
        %v8294 = vpack.c.b16 %v6481, %v6432
        %v8295 = vpack.c.b16 %v6482, %v6433
        %v8296 = vpack.c.b16 %v6483, %v6434
        %v8297 = vpack.c.b16 %v6484, %v6435
        %v8298 = vpack.c.b16 %v6485, %v6436
        %v8299 = vpack.c.b16 %v6486, %v6437
        %v8300 = vpack.c.b16 %v6487, %v6438
        %v8301 = vpack.c.b16 %v6488, %v6439
        %v8302 = vpack.c.b16 %v6489, %v6440
        %v8303 = vpack.c.b16 %v6490, %v6441
        %v8304 = vpack.c.b16 %v6540, %v6491
        %v8305 = vpack.c.b16 %v6541, %v6492
        %v8306 = vpack.c.b16 %v6542, %v6493
        %v8307 = vpack.c.b16 %v6543, %v6494
        %v8308 = vpack.c.b16 %v6544, %v6495
        %v8309 = vpack.c.b16 %v6545, %v6496
        %v8310 = vpack.c.b16 %v6546, %v6497
        %v8311 = vpack.c.b16 %v6547, %v6498
        %v8312 = vpack.c.b16 %v6548, %v6499
        %v8313 = vpack.c.b16 %v6549, %v6500
        %v8314 = vpack.c.b16 %v6550, %v6501
        %v8315 = vpack.c.b16 %v6551, %v6502
        %v8316 = vpack.c.b16 %v6552, %v6503
        %v8317 = vpack.c.b16 %v6553, %v6504
        %v8318 = vpack.c.b16 %v6554, %v6505
        %v8319 = vpack.c.b16 %v6555, %v6506
        %v8320 = vpack.c.b16 %v6556, %v6507
        %v8321 = vpack.c.b16 %v6557, %v6508
        %v8322 = vpack.c.b16 %v6558, %v6509
        %v8323 = vpack.c.b16 %v6559, %v6510
        %v8324 = vpack.c.b16 %v6560, %v6511
        %v8325 = vpack.c.b16 %v6561, %v6512
        %v8326 = vpack.c.b16 %v6562, %v6513
        %v8327 = vpack.c.b16 %v6563, %v6514
        %v8328 = vpack.c.b16 %v6564, %v6515
        %v8329 = vpack.c.b16 %v6565, %v6516
        %v8330 = vpack.c.b16 %v6566, %v6517
        %v8331 = vpack.c.b16 %v6567, %v6518
        %v8332 = vpack.c.b16 %v6568, %v6519
        %v8333 = vpack.c.b16 %v6569, %v6520
        %v8334 = vpack.c.b16 %v6570, %v6521
        %v8335 = vpack.c.b16 %v6571, %v6522
        %v8336 = vpack.c.b16 %v6572, %v6523
        %v8337 = vpack.c.b16 %v6573, %v6524
        %v8338 = vpack.c.b16 %v6574, %v6525
        %v8339 = vpack.c.b16 %v6575, %v6526
        %v8340 = vpack.c.b16 %v6576, %v6527
        %v8341 = vpack.c.b16 %v6577, %v6528
        %v8342 = vpack.c.b16 %v6578, %v6529
        %v8343 = vpack.c.b16 %v6579, %v6530
        %v8344 = vpack.c.b16 %v6580, %v6531
        %v8345 = vpack.c.b16 %v6581, %v6532
        %v8346 = vpack.c.b16 %v6582, %v6533
        %v8347 = vpack.c.b16 %v6583, %v6534
        %v8348 = vpack.c.b16 %v6584, %v6535
        %v8349 = vpack.c.b16 %v6585, %v6536
        %v8350 = vpack.c.b16 %v6586, %v6537
        %v8351 = vpack.c.b16 %v6587, %v6538
        %v8352 = vpack.c.b16 %v6588, %v6539
        %v8353 = vpack.c.b16 %v6638, %v6589
        %v8354 = vpack.c.b16 %v6639, %v6590
        %v8355 = vpack.c.b16 %v6640, %v6591
        %v8356 = vpack.c.b16 %v6641, %v6592
        %v8357 = vpack.c.b16 %v6642, %v6593
        %v8358 = vpack.c.b16 %v6643, %v6594
        %v8359 = vpack.c.b16 %v6644, %v6595
        %v8360 = vpack.c.b16 %v6645, %v6596
        %v8361 = vpack.c.b16 %v6646, %v6597
        %v8362 = vpack.c.b16 %v6647, %v6598
        %v8363 = vpack.c.b16 %v6648, %v6599
        %v8364 = vpack.c.b16 %v6649, %v6600
        %v8365 = vpack.c.b16 %v6650, %v6601
        %v8366 = vpack.c.b16 %v6651, %v6602
        %v8367 = vpack.c.b16 %v6652, %v6603
        %v8368 = vpack.c.b16 %v6653, %v6604
        %v8369 = vpack.c.b16 %v6654, %v6605
        %v8370 = vpack.c.b16 %v6655, %v6606
        %v8371 = vpack.c.b16 %v6656, %v6607
        %v8372 = vpack.c.b16 %v6657, %v6608
        %v8373 = vpack.c.b16 %v6658, %v6609
        %v8374 = vpack.c.b16 %v6659, %v6610
        %v8375 = vpack.c.b16 %v6660, %v6611
        %v8376 = vpack.c.b16 %v6661, %v6612
        %v8377 = vpack.c.b16 %v6662, %v6613
        %v8378 = vpack.c.b16 %v6663, %v6614
        %v8379 = vpack.c.b16 %v6664, %v6615
        %v8380 = vpack.c.b16 %v6665, %v6616
        %v8381 = vpack.c.b16 %v6666, %v6617
        %v8382 = vpack.c.b16 %v6667, %v6618
        %v8383 = vpack.c.b16 %v6668, %v6619
        %v8384 = vpack.c.b16 %v6669, %v6620
        %v8385 = vpack.c.b16 %v6670, %v6621
        %v8386 = vpack.c.b16 %v6671, %v6622
        %v8387 = vpack.c.b16 %v6672, %v6623
        %v8388 = vpack.c.b16 %v6673, %v6624
        %v8389 = vpack.c.b16 %v6674, %v6625
        %v8390 = vpack.c.b16 %v6675, %v6626
        %v8391 = vpack.c.b16 %v6676, %v6627
        %v8392 = vpack.c.b16 %v6677, %v6628
        %v8393 = vpack.c.b16 %v6678, %v6629
        %v8394 = vpack.c.b16 %v6679, %v6630
        %v8395 = vpack.c.b16 %v6680, %v6631
        %v8396 = vpack.c.b16 %v6681, %v6632
        %v8397 = vpack.c.b16 %v6682, %v6633
        %v8398 = vpack.c.b16 %v6683, %v6634
        %v8399 = vpack.c.b16 %v6684, %v6635
        %v8400 = vpack.c.b16 %v6685, %v6636
        %v8401 = vpack.c.b16 %v6686, %v6637
        %v8402 = vpack.c.b16 %v6736, %v6687
        %v8403 = vpack.c.b16 %v6737, %v6688
        %v8404 = vpack.c.b16 %v6738, %v6689
        %v8405 = vpack.c.b16 %v6739, %v6690
        %v8406 = vpack.c.b16 %v6740, %v6691
        %v8407 = vpack.c.b16 %v6741, %v6692
        %v8408 = vpack.c.b16 %v6742, %v6693
        %v8409 = vpack.c.b16 %v6743, %v6694
        %v8410 = vpack.c.b16 %v6744, %v6695
        %v8411 = vpack.c.b16 %v6745, %v6696
        %v8412 = vpack.c.b16 %v6746, %v6697
        %v8413 = vpack.c.b16 %v6747, %v6698
        %v8414 = vpack.c.b16 %v6748, %v6699
        %v8415 = vpack.c.b16 %v6749, %v6700
        %v8416 = vpack.c.b16 %v6750, %v6701
        %v8417 = vpack.c.b16 %v6751, %v6702
        %v8418 = vpack.c.b16 %v6752, %v6703
        %v8419 = vpack.c.b16 %v6753, %v6704
        %v8420 = vpack.c.b16 %v6754, %v6705
        %v8421 = vpack.c.b16 %v6755, %v6706
        %v8422 = vpack.c.b16 %v6756, %v6707
        %v8423 = vpack.c.b16 %v6757, %v6708
        %v8424 = vpack.c.b16 %v6758, %v6709
        %v8425 = vpack.c.b16 %v6759, %v6710
        %v8426 = vpack.c.b16 %v6760, %v6711
        %v8427 = vpack.c.b16 %v6761, %v6712
        %v8428 = vpack.c.b16 %v6762, %v6713
        %v8429 = vpack.c.b16 %v6763, %v6714
        %v8430 = vpack.c.b16 %v6764, %v6715
        %v8431 = vpack.c.b16 %v6765, %v6716
        %v8432 = vpack.c.b16 %v6766, %v6717
        %v8433 = vpack.c.b16 %v6767, %v6718
        %v8434 = vpack.c.b16 %v6768, %v6719
        %v8435 = vpack.c.b16 %v6769, %v6720
        %v8436 = vpack.c.b16 %v6770, %v6721
        %v8437 = vpack.c.b16 %v6771, %v6722
        %v8438 = vpack.c.b16 %v6772, %v6723
        %v8439 = vpack.c.b16 %v6773, %v6724
        %v8440 = vpack.c.b16 %v6774, %v6725
        %v8441 = vpack.c.b16 %v6775, %v6726
        %v8442 = vpack.c.b16 %v6776, %v6727
        %v8443 = vpack.c.b16 %v6777, %v6728
        %v8444 = vpack.c.b16 %v6778, %v6729
        %v8445 = vpack.c.b16 %v6779, %v6730
        %v8446 = vpack.c.b16 %v6780, %v6731
        %v8447 = vpack.c.b16 %v6781, %v6732
        %v8448 = vpack.c.b16 %v6782, %v6733
        %v8449 = vpack.c.b16 %v6783, %v6734
        %v8450 = vpack.c.b16 %v6784, %v6735
        %v8451 = vpack.c.b16 %v6834, %v6785
        %v8452 = vpack.c.b16 %v6835, %v6786
        %v8453 = vpack.c.b16 %v6836, %v6787
        %v8454 = vpack.c.b16 %v6837, %v6788
        %v8455 = vpack.c.b16 %v6838, %v6789
        %v8456 = vpack.c.b16 %v6839, %v6790
        %v8457 = vpack.c.b16 %v6840, %v6791
        %v8458 = vpack.c.b16 %v6841, %v6792
        %v8459 = vpack.c.b16 %v6842, %v6793
        %v8460 = vpack.c.b16 %v6843, %v6794
        %v8461 = vpack.c.b16 %v6844, %v6795
        %v8462 = vpack.c.b16 %v6845, %v6796
        %v8463 = vpack.c.b16 %v6846, %v6797
        %v8464 = vpack.c.b16 %v6847, %v6798
        %v8465 = vpack.c.b16 %v6848, %v6799
        %v8466 = vpack.c.b16 %v6849, %v6800
        %v8467 = vpack.c.b16 %v6850, %v6801
        %v8468 = vpack.c.b16 %v6851, %v6802
        %v8469 = vpack.c.b16 %v6852, %v6803
        %v8470 = vpack.c.b16 %v6853, %v6804
        %v8471 = vpack.c.b16 %v6854, %v6805
        %v8472 = vpack.c.b16 %v6855, %v6806
        %v8473 = vpack.c.b16 %v6856, %v6807
        %v8474 = vpack.c.b16 %v6857, %v6808
        %v8475 = vpack.c.b16 %v6858, %v6809
        %v8476 = vpack.c.b16 %v6859, %v6810
        %v8477 = vpack.c.b16 %v6860, %v6811
        %v8478 = vpack.c.b16 %v6861, %v6812
        %v8479 = vpack.c.b16 %v6862, %v6813
        %v8480 = vpack.c.b16 %v6863, %v6814
        %v8481 = vpack.c.b16 %v6864, %v6815
        %v8482 = vpack.c.b16 %v6865, %v6816
        %v8483 = vpack.c.b16 %v6866, %v6817
        %v8484 = vpack.c.b16 %v6867, %v6818
        %v8485 = vpack.c.b16 %v6868, %v6819
        %v8486 = vpack.c.b16 %v6869, %v6820
        %v8487 = vpack.c.b16 %v6870, %v6821
        %v8488 = vpack.c.b16 %v6871, %v6822
        %v8489 = vpack.c.b16 %v6872, %v6823
        %v8490 = vpack.c.b16 %v6873, %v6824
        %v8491 = vpack.c.b16 %v6874, %v6825
        %v8492 = vpack.c.b16 %v6875, %v6826
        %v8493 = vpack.c.b16 %v6876, %v6827
        %v8494 = vpack.c.b16 %v6877, %v6828
        %v8495 = vpack.c.b16 %v6878, %v6829
        %v8496 = vpack.c.b16 %v6879, %v6830
        %v8497 = vpack.c.b16 %v6880, %v6831
        %v8498 = vpack.c.b16 %v6881, %v6832
        %v8499 = vpack.c.b16 %v6882, %v6833
        %v8500 = vpack.c.b16 %v6932, %v6883
        %v8501 = vpack.c.b16 %v6933, %v6884
        %v8502 = vpack.c.b16 %v6934, %v6885
        %v8503 = vpack.c.b16 %v6935, %v6886
        %v8504 = vpack.c.b16 %v6936, %v6887
        %v8505 = vpack.c.b16 %v6937, %v6888
        %v8506 = vpack.c.b16 %v6938, %v6889
        %v8507 = vpack.c.b16 %v6939, %v6890
        %v8508 = vpack.c.b16 %v6940, %v6891
        %v8509 = vpack.c.b16 %v6941, %v6892
        %v8510 = vpack.c.b16 %v6942, %v6893
        %v8511 = vpack.c.b16 %v6943, %v6894
        %v8512 = vpack.c.b16 %v6944, %v6895
        %v8513 = vpack.c.b16 %v6945, %v6896
        %v8514 = vpack.c.b16 %v6946, %v6897
        %v8515 = vpack.c.b16 %v6947, %v6898
        %v8516 = vpack.c.b16 %v6948, %v6899
        %v8517 = vpack.c.b16 %v6949, %v6900
        %v8518 = vpack.c.b16 %v6950, %v6901
        %v8519 = vpack.c.b16 %v6951, %v6902
        %v8520 = vpack.c.b16 %v6952, %v6903
        %v8521 = vpack.c.b16 %v6953, %v6904
        %v8522 = vpack.c.b16 %v6954, %v6905
        %v8523 = vpack.c.b16 %v6955, %v6906
        %v8524 = vpack.c.b16 %v6956, %v6907
        %v8525 = vpack.c.b16 %v6957, %v6908
        %v8526 = vpack.c.b16 %v6958, %v6909
        %v8527 = vpack.c.b16 %v6959, %v6910
        %v8528 = vpack.c.b16 %v6960, %v6911
        %v8529 = vpack.c.b16 %v6961, %v6912
        %v8530 = vpack.c.b16 %v6962, %v6913
        %v8531 = vpack.c.b16 %v6963, %v6914
        %v8532 = vpack.c.b16 %v6964, %v6915
        %v8533 = vpack.c.b16 %v6965, %v6916
        %v8534 = vpack.c.b16 %v6966, %v6917
        %v8535 = vpack.c.b16 %v6967, %v6918
        %v8536 = vpack.c.b16 %v6968, %v6919
        %v8537 = vpack.c.b16 %v6969, %v6920
        %v8538 = vpack.c.b16 %v6970, %v6921
        %v8539 = vpack.c.b16 %v6971, %v6922
        %v8540 = vpack.c.b16 %v6972, %v6923
        %v8541 = vpack.c.b16 %v6973, %v6924
        %v8542 = vpack.c.b16 %v6974, %v6925
        %v8543 = vpack.c.b16 %v6975, %v6926
        %v8544 = vpack.c.b16 %v6976, %v6927
        %v8545 = vpack.c.b16 %v6977, %v6928
        %v8546 = vpack.c.b16 %v6978, %v6929
        %v8547 = vpack.c.b16 %v6979, %v6930
        %v8548 = vpack.c.b16 %v6980, %v6931
        %10117 = vmatprep.subr.bf16.mxu0 %v7325
        %10118 = vmatpush1.bf16.xpose.msra.mxu0 %v7324
        %10119 = vmatprep.subr.bf16.mxu0 %v7276
        %10120 = vmatpush1.bf16.xpose.msra.mxu0 %v7275
        %10121 = vmatprep.subr.bf16.mxu0 %v7227
        %10122 = vmatpush1.bf16.xpose.msra.mxu0 %v7226
        %10123 = vmatprep.subr.bf16.mxu0 %v7178
        %10124 = vmatpush1.bf16.xpose.msra.mxu0 %v7177
        %10125 = vmatprep.subr.bf16.mxu0 %v7129
        %10126 = vmatpush1.bf16.xpose.msra.mxu0 %v7128
        %10127 = vmatprep.subr.bf16.mxu0 %v7080
        %10128 = vmatpush1.bf16.xpose.msra.mxu0 %v7079
        %10129 = vmatprep.subr.bf16.mxu0 %v7031
        %10130 = vmatpush1.bf16.xpose.msra.mxu0 %v7030
        %10131 = vmatprep.subr.bf16.mxu0 %v6982
        %10132 = vmatpush1.bf16.xpose.msra.mxu0 %v6981
        %10133 = vmatprep.subr.bf16.mxu0 %v7717
        %10134 = vmatpush2.bf16.xpose.msra.mxu0 %v7716
        %10135 = vmatprep.subr.bf16.mxu0 %v7668
        %10136 = vmatpush2.bf16.xpose.msra.mxu0 %v7667
        %10137 = vmatprep.subr.bf16.mxu0 %v7619
        %10138 = vmatpush2.bf16.xpose.msra.mxu0 %v7618
        %10139 = vmatprep.subr.bf16.mxu0 %v7570
        %10140 = vmatpush2.bf16.xpose.msra.mxu0 %v7569
        %10141 = vmatprep.subr.bf16.mxu0 %v7521
        %10142 = vmatpush2.bf16.xpose.msra.mxu0 %v7520
        %10143 = vmatprep.subr.bf16.mxu0 %v7472
        %10144 = vmatpush2.bf16.xpose.msra.mxu0 %v7471
        %10145 = vmatprep.subr.bf16.mxu0 %v7423
        %10146 = vmatpush2.bf16.xpose.msra.mxu0 %v7422
        %10147 = vmatprep.subr.bf16.mxu0 %v7374
        %10148 = vmatpush2.bf16.xpose.msra.mxu0 %v7373
        %10149 = vmatprep.mubr.bf16.mxu0 %v1925
        %10150 = vmatmul.mubr.bf16.gmra.mxu0 %v1911
        %v10151 = vpop.f32.mrf.mxu0
        %v10152 = vadd.f32 0.0, %v10151
        %v10153 = vpop.f32.mrf.mxu0
        %v10154 = vadd.f32 0.0, %v10153
        %v10155 = vpop.f32.mrf.mxu0
        %v10156 = vpop.f32.mrf.mxu0
        %10157 = vdwg.mxu0
        %10158 = vmatprep.subr.bf16.mxu0 %v7327
        %10159 = vmatpush1.bf16.xpose.msra.mxu0 %v7326
        %10160 = vmatprep.subr.bf16.mxu0 %v7278
        %10161 = vmatpush1.bf16.xpose.msra.mxu0 %v7277
        %10162 = vmatprep.subr.bf16.mxu0 %v7229
        %10163 = vmatpush1.bf16.xpose.msra.mxu0 %v7228
        %10164 = vmatprep.subr.bf16.mxu0 %v7180
        %10165 = vmatpush1.bf16.xpose.msra.mxu0 %v7179
        %10166 = vmatprep.subr.bf16.mxu0 %v7131
        %10167 = vmatpush1.bf16.xpose.msra.mxu0 %v7130
        %10168 = vmatprep.subr.bf16.mxu0 %v7082
        %10169 = vmatpush1.bf16.xpose.msra.mxu0 %v7081
        %10170 = vmatprep.subr.bf16.mxu0 %v7033
        %10171 = vmatpush1.bf16.xpose.msra.mxu0 %v7032
        %10172 = vmatprep.subr.bf16.mxu0 %v6984
        %10173 = vmatpush1.bf16.xpose.msra.mxu0 %v6983
        %10174 = vmatprep.subr.bf16.mxu0 %v7719
        %10175 = vmatpush2.bf16.xpose.msra.mxu0 %v7718
        %10176 = vmatprep.subr.bf16.mxu0 %v7670
        %10177 = vmatpush2.bf16.xpose.msra.mxu0 %v7669
        %10178 = vmatprep.subr.bf16.mxu0 %v7621
        %10179 = vmatpush2.bf16.xpose.msra.mxu0 %v7620
        %10180 = vmatprep.subr.bf16.mxu0 %v7572
        %10181 = vmatpush2.bf16.xpose.msra.mxu0 %v7571
        %10182 = vmatprep.subr.bf16.mxu0 %v7523
        %10183 = vmatpush2.bf16.xpose.msra.mxu0 %v7522
        %10184 = vmatprep.subr.bf16.mxu0 %v7474
        %10185 = vmatpush2.bf16.xpose.msra.mxu0 %v7473
        %10186 = vmatprep.subr.bf16.mxu0 %v7425
        %10187 = vmatpush2.bf16.xpose.msra.mxu0 %v7424
        %10188 = vmatprep.subr.bf16.mxu0 %v7376
        %10189 = vmatpush2.bf16.xpose.msra.mxu0 %v7375
        %10190 = vmatprep.mubr.bf16.mxu0 %v1935
        %10191 = vmatmul.mubr.bf16.gmra.mxu0 %v1933
        %v10192 = vpop.f32.mrf.mxu0
        %v10193 = vadd.f32 %v10152, %v10192
        %v10194 = vpop.f32.mrf.mxu0
        %v10195 = vadd.f32 %v10154, %v10194
        %v10196 = vpop.f32.mrf.mxu0
        %v10197 = vpop.f32.mrf.mxu0
        %10198 = vdwg.mxu0
        %10199 = vmatprep.subr.bf16.mxu0 %v7329
        %10200 = vmatpush1.bf16.xpose.msra.mxu0 %v7328
        %10201 = vmatprep.subr.bf16.mxu0 %v7280
        %10202 = vmatpush1.bf16.xpose.msra.mxu0 %v7279
        %10203 = vmatprep.subr.bf16.mxu0 %v7231
        %10204 = vmatpush1.bf16.xpose.msra.mxu0 %v7230
        %10205 = vmatprep.subr.bf16.mxu0 %v7182
        %10206 = vmatpush1.bf16.xpose.msra.mxu0 %v7181
        %10207 = vmatprep.subr.bf16.mxu0 %v7133
        %10208 = vmatpush1.bf16.xpose.msra.mxu0 %v7132
        %10209 = vmatprep.subr.bf16.mxu0 %v7084
        %10210 = vmatpush1.bf16.xpose.msra.mxu0 %v7083
        %10211 = vmatprep.subr.bf16.mxu0 %v7035
        %10212 = vmatpush1.bf16.xpose.msra.mxu0 %v7034
        %10213 = vmatprep.subr.bf16.mxu0 %v6986
        %10214 = vmatpush1.bf16.xpose.msra.mxu0 %v6985
        %10215 = vmatprep.subr.bf16.mxu0 %v7721
        %10216 = vmatpush2.bf16.xpose.msra.mxu0 %v7720
        %10217 = vmatprep.subr.bf16.mxu0 %v7672
        %10218 = vmatpush2.bf16.xpose.msra.mxu0 %v7671
        %10219 = vmatprep.subr.bf16.mxu0 %v7623
        %10220 = vmatpush2.bf16.xpose.msra.mxu0 %v7622
        %10221 = vmatprep.subr.bf16.mxu0 %v7574
        %10222 = vmatpush2.bf16.xpose.msra.mxu0 %v7573
        %10223 = vmatprep.subr.bf16.mxu0 %v7525
        %10224 = vmatpush2.bf16.xpose.msra.mxu0 %v7524
        %10225 = vmatprep.subr.bf16.mxu0 %v7476
        %10226 = vmatpush2.bf16.xpose.msra.mxu0 %v7475
        %10227 = vmatprep.subr.bf16.mxu0 %v7427
        %10228 = vmatpush2.bf16.xpose.msra.mxu0 %v7426
        %10229 = vmatprep.subr.bf16.mxu0 %v7378
        %10230 = vmatpush2.bf16.xpose.msra.mxu0 %v7377
        %10231 = vmatprep.mubr.bf16.mxu0 %v1932
        %10232 = vmatmul.mubr.bf16.gmra.mxu0 %v1918
        %v10233 = vpop.f32.mrf.mxu0
        %v10234 = vadd.f32 %v10193, %v10233
        %v10235 = vpop.f32.mrf.mxu0
        %v10236 = vadd.f32 %v10195, %v10235
        %v10237 = vpop.f32.mrf.mxu0
        %v10238 = vpop.f32.mrf.mxu0
        %10239 = vdwg.mxu0
        %10240 = vmatprep.subr.bf16.mxu0 %v7331
        %10241 = vmatpush1.bf16.xpose.msra.mxu0 %v7330
        %10242 = vmatprep.subr.bf16.mxu0 %v7282
        %10243 = vmatpush1.bf16.xpose.msra.mxu0 %v7281
        %10244 = vmatprep.subr.bf16.mxu0 %v7233
        %10245 = vmatpush1.bf16.xpose.msra.mxu0 %v7232
        %10246 = vmatprep.subr.bf16.mxu0 %v7184
        %10247 = vmatpush1.bf16.xpose.msra.mxu0 %v7183
        %10248 = vmatprep.subr.bf16.mxu0 %v7135
        %10249 = vmatpush1.bf16.xpose.msra.mxu0 %v7134
        %10250 = vmatprep.subr.bf16.mxu0 %v7086
        %10251 = vmatpush1.bf16.xpose.msra.mxu0 %v7085
        %10252 = vmatprep.subr.bf16.mxu0 %v7037
        %10253 = vmatpush1.bf16.xpose.msra.mxu0 %v7036
        %10254 = vmatprep.subr.bf16.mxu0 %v6988
        %10255 = vmatpush1.bf16.xpose.msra.mxu0 %v6987
        %10256 = vmatprep.subr.bf16.mxu0 %v7723
        %10257 = vmatpush2.bf16.xpose.msra.mxu0 %v7722
        %10258 = vmatprep.subr.bf16.mxu0 %v7674
        %10259 = vmatpush2.bf16.xpose.msra.mxu0 %v7673
        %10260 = vmatprep.subr.bf16.mxu0 %v7625
        %10261 = vmatpush2.bf16.xpose.msra.mxu0 %v7624
        %10262 = vmatprep.subr.bf16.mxu0 %v7576
        %10263 = vmatpush2.bf16.xpose.msra.mxu0 %v7575
        %10264 = vmatprep.subr.bf16.mxu0 %v7527
        %10265 = vmatpush2.bf16.xpose.msra.mxu0 %v7526
        %10266 = vmatprep.subr.bf16.mxu0 %v7478
        %10267 = vmatpush2.bf16.xpose.msra.mxu0 %v7477
        %10268 = vmatprep.subr.bf16.mxu0 %v7429
        %10269 = vmatpush2.bf16.xpose.msra.mxu0 %v7428
        %10270 = vmatprep.subr.bf16.mxu0 %v7380
        %10271 = vmatpush2.bf16.xpose.msra.mxu0 %v7379
        %10272 = vmatprep.mubr.bf16.mxu0 %v1936
        %10273 = vmatmul.mubr.bf16.gmra.mxu0 %v1934
        %v10274 = vpop.f32.mrf.mxu0
        %v10275 = vadd.f32 %v10234, %v10274
        %v10276 = vpop.f32.mrf.mxu0
        %v10277 = vadd.f32 %v10236, %v10276
        %v10278 = vpop.f32.mrf.mxu0
        %v10279 = vpop.f32.mrf.mxu0
        %10280 = vdwg.mxu0
        %10281 = vmatprep.subr.bf16.mxu0 %v7333
        %10282 = vmatpush1.bf16.xpose.msra.mxu0 %v7332
        %10283 = vmatprep.subr.bf16.mxu0 %v7284
        %10284 = vmatpush1.bf16.xpose.msra.mxu0 %v7283
        %10285 = vmatprep.subr.bf16.mxu0 %v7235
        %10286 = vmatpush1.bf16.xpose.msra.mxu0 %v7234
        %10287 = vmatprep.subr.bf16.mxu0 %v7186
        %10288 = vmatpush1.bf16.xpose.msra.mxu0 %v7185
        %10289 = vmatprep.subr.bf16.mxu0 %v7137
        %10290 = vmatpush1.bf16.xpose.msra.mxu0 %v7136
        %10291 = vmatprep.subr.bf16.mxu0 %v7088
        %10292 = vmatpush1.bf16.xpose.msra.mxu0 %v7087
        %10293 = vmatprep.subr.bf16.mxu0 %v7039
        %10294 = vmatpush1.bf16.xpose.msra.mxu0 %v7038
        %10295 = vmatprep.subr.bf16.mxu0 %v6990
        %10296 = vmatpush1.bf16.xpose.msra.mxu0 %v6989
        %10297 = vmatprep.subr.bf16.mxu0 %v7725
        %10298 = vmatpush2.bf16.xpose.msra.mxu0 %v7724
        %10299 = vmatprep.subr.bf16.mxu0 %v7676
        %10300 = vmatpush2.bf16.xpose.msra.mxu0 %v7675
        %10301 = vmatprep.subr.bf16.mxu0 %v7627
        %10302 = vmatpush2.bf16.xpose.msra.mxu0 %v7626
        %10303 = vmatprep.subr.bf16.mxu0 %v7578
        %10304 = vmatpush2.bf16.xpose.msra.mxu0 %v7577
        %10305 = vmatprep.subr.bf16.mxu0 %v7529
        %10306 = vmatpush2.bf16.xpose.msra.mxu0 %v7528
        %10307 = vmatprep.subr.bf16.mxu0 %v7480
        %10308 = vmatpush2.bf16.xpose.msra.mxu0 %v7479
        %10309 = vmatprep.subr.bf16.mxu0 %v7431
        %10310 = vmatpush2.bf16.xpose.msra.mxu0 %v7430
        %10311 = vmatprep.subr.bf16.mxu0 %v7382
        %10312 = vmatpush2.bf16.xpose.msra.mxu0 %v7381
        %10313 = vmatprep.mubr.bf16.mxu0 %v1974
        %10314 = vmatmul.mubr.bf16.gmra.mxu0 %v1960
        %v10315 = vpop.f32.mrf.mxu0
        %v10316 = vadd.f32 %v10275, %v10315
        %v10317 = vpop.f32.mrf.mxu0
        %v10318 = vadd.f32 %v10277, %v10317
        %v10319 = vpop.f32.mrf.mxu0
        %v10320 = vpop.f32.mrf.mxu0
        %10321 = vdwg.mxu0
        %10322 = vmatprep.subr.bf16.mxu0 %v7335
        %10323 = vmatpush1.bf16.xpose.msra.mxu0 %v7334
        %10324 = vmatprep.subr.bf16.mxu0 %v7286
        %10325 = vmatpush1.bf16.xpose.msra.mxu0 %v7285
        %10326 = vmatprep.subr.bf16.mxu0 %v7237
        %10327 = vmatpush1.bf16.xpose.msra.mxu0 %v7236
        %10328 = vmatprep.subr.bf16.mxu0 %v7188
        %10329 = vmatpush1.bf16.xpose.msra.mxu0 %v7187
        %10330 = vmatprep.subr.bf16.mxu0 %v7139
        %10331 = vmatpush1.bf16.xpose.msra.mxu0 %v7138
        %10332 = vmatprep.subr.bf16.mxu0 %v7090
        %10333 = vmatpush1.bf16.xpose.msra.mxu0 %v7089
        %10334 = vmatprep.subr.bf16.mxu0 %v7041
        %10335 = vmatpush1.bf16.xpose.msra.mxu0 %v7040
        %10336 = vmatprep.subr.bf16.mxu0 %v6992
        %10337 = vmatpush1.bf16.xpose.msra.mxu0 %v6991
        %10338 = vmatprep.subr.bf16.mxu0 %v7727
        %10339 = vmatpush2.bf16.xpose.msra.mxu0 %v7726
        %10340 = vmatprep.subr.bf16.mxu0 %v7678
        %10341 = vmatpush2.bf16.xpose.msra.mxu0 %v7677
        %10342 = vmatprep.subr.bf16.mxu0 %v7629
        %10343 = vmatpush2.bf16.xpose.msra.mxu0 %v7628
        %10344 = vmatprep.subr.bf16.mxu0 %v7580
        %10345 = vmatpush2.bf16.xpose.msra.mxu0 %v7579
        %10346 = vmatprep.subr.bf16.mxu0 %v7531
        %10347 = vmatpush2.bf16.xpose.msra.mxu0 %v7530
        %10348 = vmatprep.subr.bf16.mxu0 %v7482
        %10349 = vmatpush2.bf16.xpose.msra.mxu0 %v7481
        %10350 = vmatprep.subr.bf16.mxu0 %v7433
        %10351 = vmatpush2.bf16.xpose.msra.mxu0 %v7432
        %10352 = vmatprep.subr.bf16.mxu0 %v7384
        %10353 = vmatpush2.bf16.xpose.msra.mxu0 %v7383
        %10354 = vmatprep.mubr.bf16.mxu0 %v1984
        %10355 = vmatmul.mubr.bf16.gmra.mxu0 %v1982
        %v10356 = vpop.f32.mrf.mxu0
        %v10357 = vadd.f32 %v10316, %v10356
        %v10358 = vpop.f32.mrf.mxu0
        %v10359 = vadd.f32 %v10318, %v10358
        %v10360 = vpop.f32.mrf.mxu0
        %v10361 = vpop.f32.mrf.mxu0
        %10362 = vdwg.mxu0
        %10363 = vmatprep.subr.bf16.mxu0 %v7337
        %10364 = vmatpush1.bf16.xpose.msra.mxu0 %v7336
        %10365 = vmatprep.subr.bf16.mxu0 %v7288
        %10366 = vmatpush1.bf16.xpose.msra.mxu0 %v7287
        %10367 = vmatprep.subr.bf16.mxu0 %v7239
        %10368 = vmatpush1.bf16.xpose.msra.mxu0 %v7238
        %10369 = vmatprep.subr.bf16.mxu0 %v7190
        %10370 = vmatpush1.bf16.xpose.msra.mxu0 %v7189
        %10371 = vmatprep.subr.bf16.mxu0 %v7141
        %10372 = vmatpush1.bf16.xpose.msra.mxu0 %v7140
        %10373 = vmatprep.subr.bf16.mxu0 %v7092
        %10374 = vmatpush1.bf16.xpose.msra.mxu0 %v7091
        %10375 = vmatprep.subr.bf16.mxu0 %v7043
        %10376 = vmatpush1.bf16.xpose.msra.mxu0 %v7042
        %10377 = vmatprep.subr.bf16.mxu0 %v6994
        %10378 = vmatpush1.bf16.xpose.msra.mxu0 %v6993
        %10379 = vmatprep.subr.bf16.mxu0 %v7729
        %10380 = vmatpush2.bf16.xpose.msra.mxu0 %v7728
        %10381 = vmatprep.subr.bf16.mxu0 %v7680
        %10382 = vmatpush2.bf16.xpose.msra.mxu0 %v7679
        %10383 = vmatprep.subr.bf16.mxu0 %v7631
        %10384 = vmatpush2.bf16.xpose.msra.mxu0 %v7630
        %10385 = vmatprep.subr.bf16.mxu0 %v7582
        %10386 = vmatpush2.bf16.xpose.msra.mxu0 %v7581
        %10387 = vmatprep.subr.bf16.mxu0 %v7533
        %10388 = vmatpush2.bf16.xpose.msra.mxu0 %v7532
        %10389 = vmatprep.subr.bf16.mxu0 %v7484
        %10390 = vmatpush2.bf16.xpose.msra.mxu0 %v7483
        %10391 = vmatprep.subr.bf16.mxu0 %v7435
        %10392 = vmatpush2.bf16.xpose.msra.mxu0 %v7434
        %10393 = vmatprep.subr.bf16.mxu0 %v7386
        %10394 = vmatpush2.bf16.xpose.msra.mxu0 %v7385
        %10395 = vmatprep.mubr.bf16.mxu0 %v1981
        %10396 = vmatmul.mubr.bf16.gmra.mxu0 %v1967
        %v10397 = vpop.f32.mrf.mxu0
        %v10398 = vadd.f32 %v10357, %v10397
        %v10399 = vpop.f32.mrf.mxu0
        %v10400 = vadd.f32 %v10359, %v10399
        %v10401 = vpop.f32.mrf.mxu0
        %v10402 = vpop.f32.mrf.mxu0
        %10403 = vdwg.mxu0
        %10404 = vmatprep.subr.bf16.mxu0 %v7339
        %10405 = vmatpush1.bf16.xpose.msra.mxu0 %v7338
        %10406 = vmatprep.subr.bf16.mxu0 %v7290
        %10407 = vmatpush1.bf16.xpose.msra.mxu0 %v7289
        %10408 = vmatprep.subr.bf16.mxu0 %v7241
        %10409 = vmatpush1.bf16.xpose.msra.mxu0 %v7240
        %10410 = vmatprep.subr.bf16.mxu0 %v7192
        %10411 = vmatpush1.bf16.xpose.msra.mxu0 %v7191
        %10412 = vmatprep.subr.bf16.mxu0 %v7143
        %10413 = vmatpush1.bf16.xpose.msra.mxu0 %v7142
        %10414 = vmatprep.subr.bf16.mxu0 %v7094
        %10415 = vmatpush1.bf16.xpose.msra.mxu0 %v7093
        %10416 = vmatprep.subr.bf16.mxu0 %v7045
        %10417 = vmatpush1.bf16.xpose.msra.mxu0 %v7044
        %10418 = vmatprep.subr.bf16.mxu0 %v6996
        %10419 = vmatpush1.bf16.xpose.msra.mxu0 %v6995
        %10420 = vmatprep.subr.bf16.mxu0 %v7731
        %10421 = vmatpush2.bf16.xpose.msra.mxu0 %v7730
        %10422 = vmatprep.subr.bf16.mxu0 %v7682
        %10423 = vmatpush2.bf16.xpose.msra.mxu0 %v7681
        %10424 = vmatprep.subr.bf16.mxu0 %v7633
        %10425 = vmatpush2.bf16.xpose.msra.mxu0 %v7632
        %10426 = vmatprep.subr.bf16.mxu0 %v7584
        %10427 = vmatpush2.bf16.xpose.msra.mxu0 %v7583
        %10428 = vmatprep.subr.bf16.mxu0 %v7535
        %10429 = vmatpush2.bf16.xpose.msra.mxu0 %v7534
        %10430 = vmatprep.subr.bf16.mxu0 %v7486
        %10431 = vmatpush2.bf16.xpose.msra.mxu0 %v7485
        %10432 = vmatprep.subr.bf16.mxu0 %v7437
        %10433 = vmatpush2.bf16.xpose.msra.mxu0 %v7436
        %10434 = vmatprep.subr.bf16.mxu0 %v7388
        %10435 = vmatpush2.bf16.xpose.msra.mxu0 %v7387
        %10436 = vmatprep.mubr.bf16.mxu0 %v1985
        %10437 = vmatmul.mubr.bf16.gmra.mxu0 %v1983
        %v10438 = vpop.f32.mrf.mxu0
        %v10439 = vadd.f32 %v10398, %v10438
        %v10440 = vpop.f32.mrf.mxu0
        %v10441 = vadd.f32 %v10400, %v10440
        %v10442 = vpop.f32.mrf.mxu0
        %v10443 = vpop.f32.mrf.mxu0
        %10444 = vdwg.mxu0
        %10445 = vmatprep.subr.bf16.mxu0 %v7341
        %10446 = vmatpush1.bf16.xpose.msra.mxu0 %v7340
        %10447 = vmatprep.subr.bf16.mxu0 %v7292
        %10448 = vmatpush1.bf16.xpose.msra.mxu0 %v7291
        %10449 = vmatprep.subr.bf16.mxu0 %v7243
        %10450 = vmatpush1.bf16.xpose.msra.mxu0 %v7242
        %10451 = vmatprep.subr.bf16.mxu0 %v7194
        %10452 = vmatpush1.bf16.xpose.msra.mxu0 %v7193
        %10453 = vmatprep.subr.bf16.mxu0 %v7145
        %10454 = vmatpush1.bf16.xpose.msra.mxu0 %v7144
        %10455 = vmatprep.subr.bf16.mxu0 %v7096
        %10456 = vmatpush1.bf16.xpose.msra.mxu0 %v7095
        %10457 = vmatprep.subr.bf16.mxu0 %v7047
        %10458 = vmatpush1.bf16.xpose.msra.mxu0 %v7046
        %10459 = vmatprep.subr.bf16.mxu0 %v6998
        %10460 = vmatpush1.bf16.xpose.msra.mxu0 %v6997
        %10461 = vmatprep.subr.bf16.mxu0 %v7733
        %10462 = vmatpush2.bf16.xpose.msra.mxu0 %v7732
        %10463 = vmatprep.subr.bf16.mxu0 %v7684
        %10464 = vmatpush2.bf16.xpose.msra.mxu0 %v7683
        %10465 = vmatprep.subr.bf16.mxu0 %v7635
        %10466 = vmatpush2.bf16.xpose.msra.mxu0 %v7634
        %10467 = vmatprep.subr.bf16.mxu0 %v7586
        %10468 = vmatpush2.bf16.xpose.msra.mxu0 %v7585
        %10469 = vmatprep.subr.bf16.mxu0 %v7537
        %10470 = vmatpush2.bf16.xpose.msra.mxu0 %v7536
        %10471 = vmatprep.subr.bf16.mxu0 %v7488
        %10472 = vmatpush2.bf16.xpose.msra.mxu0 %v7487
        %10473 = vmatprep.subr.bf16.mxu0 %v7439
        %10474 = vmatpush2.bf16.xpose.msra.mxu0 %v7438
        %10475 = vmatprep.subr.bf16.mxu0 %v7390
        %10476 = vmatpush2.bf16.xpose.msra.mxu0 %v7389
        %10477 = vmatprep.mubr.bf16.mxu0 %v2023
        %10478 = vmatmul.mubr.bf16.gmra.mxu0 %v2009
        %v10479 = vpop.f32.mrf.mxu0
        %v10480 = vadd.f32 %v10439, %v10479
        %v10481 = vpop.f32.mrf.mxu0
        %v10482 = vadd.f32 %v10441, %v10481
        %v10483 = vpop.f32.mrf.mxu0
        %v10484 = vpop.f32.mrf.mxu0
        %10485 = vdwg.mxu0
        %10486 = vmatprep.subr.bf16.mxu0 %v7343
        %10487 = vmatpush1.bf16.xpose.msra.mxu0 %v7342
        %10488 = vmatprep.subr.bf16.mxu0 %v7294
        %10489 = vmatpush1.bf16.xpose.msra.mxu0 %v7293
        %10490 = vmatprep.subr.bf16.mxu0 %v7245
        %10491 = vmatpush1.bf16.xpose.msra.mxu0 %v7244
        %10492 = vmatprep.subr.bf16.mxu0 %v7196
        %10493 = vmatpush1.bf16.xpose.msra.mxu0 %v7195
        %10494 = vmatprep.subr.bf16.mxu0 %v7147
        %10495 = vmatpush1.bf16.xpose.msra.mxu0 %v7146
        %10496 = vmatprep.subr.bf16.mxu0 %v7098
        %10497 = vmatpush1.bf16.xpose.msra.mxu0 %v7097
        %10498 = vmatprep.subr.bf16.mxu0 %v7049
        %10499 = vmatpush1.bf16.xpose.msra.mxu0 %v7048
        %10500 = vmatprep.subr.bf16.mxu0 %v7000
        %10501 = vmatpush1.bf16.xpose.msra.mxu0 %v6999
        %10502 = vmatprep.subr.bf16.mxu0 %v7735
        %10503 = vmatpush2.bf16.xpose.msra.mxu0 %v7734
        %10504 = vmatprep.subr.bf16.mxu0 %v7686
        %10505 = vmatpush2.bf16.xpose.msra.mxu0 %v7685
        %10506 = vmatprep.subr.bf16.mxu0 %v7637
        %10507 = vmatpush2.bf16.xpose.msra.mxu0 %v7636
        %10508 = vmatprep.subr.bf16.mxu0 %v7588
        %10509 = vmatpush2.bf16.xpose.msra.mxu0 %v7587
        %10510 = vmatprep.subr.bf16.mxu0 %v7539
        %10511 = vmatpush2.bf16.xpose.msra.mxu0 %v7538
        %10512 = vmatprep.subr.bf16.mxu0 %v7490
        %10513 = vmatpush2.bf16.xpose.msra.mxu0 %v7489
        %10514 = vmatprep.subr.bf16.mxu0 %v7441
        %10515 = vmatpush2.bf16.xpose.msra.mxu0 %v7440
        %10516 = vmatprep.subr.bf16.mxu0 %v7392
        %10517 = vmatpush2.bf16.xpose.msra.mxu0 %v7391
        %10518 = vmatprep.mubr.bf16.mxu0 %v2033
        %10519 = vmatmul.mubr.bf16.gmra.mxu0 %v2031
        %v10520 = vpop.f32.mrf.mxu0
        %v10521 = vadd.f32 %v10480, %v10520
        %v10522 = vpop.f32.mrf.mxu0
        %v10523 = vadd.f32 %v10482, %v10522
        %v10524 = vpop.f32.mrf.mxu0
        %v10525 = vpop.f32.mrf.mxu0
        %10526 = vdwg.mxu0
        %10527 = vmatprep.subr.bf16.mxu0 %v7345
        %10528 = vmatpush1.bf16.xpose.msra.mxu0 %v7344
        %10529 = vmatprep.subr.bf16.mxu0 %v7296
        %10530 = vmatpush1.bf16.xpose.msra.mxu0 %v7295
        %10531 = vmatprep.subr.bf16.mxu0 %v7247
        %10532 = vmatpush1.bf16.xpose.msra.mxu0 %v7246
        %10533 = vmatprep.subr.bf16.mxu0 %v7198
        %10534 = vmatpush1.bf16.xpose.msra.mxu0 %v7197
        %10535 = vmatprep.subr.bf16.mxu0 %v7149
        %10536 = vmatpush1.bf16.xpose.msra.mxu0 %v7148
        %10537 = vmatprep.subr.bf16.mxu0 %v7100
        %10538 = vmatpush1.bf16.xpose.msra.mxu0 %v7099
        %10539 = vmatprep.subr.bf16.mxu0 %v7051
        %10540 = vmatpush1.bf16.xpose.msra.mxu0 %v7050
        %10541 = vmatprep.subr.bf16.mxu0 %v7002
        %10542 = vmatpush1.bf16.xpose.msra.mxu0 %v7001
        %10543 = vmatprep.subr.bf16.mxu0 %v7737
        %10544 = vmatpush2.bf16.xpose.msra.mxu0 %v7736
        %10545 = vmatprep.subr.bf16.mxu0 %v7688
        %10546 = vmatpush2.bf16.xpose.msra.mxu0 %v7687
        %10547 = vmatprep.subr.bf16.mxu0 %v7639
        %10548 = vmatpush2.bf16.xpose.msra.mxu0 %v7638
        %10549 = vmatprep.subr.bf16.mxu0 %v7590
        %10550 = vmatpush2.bf16.xpose.msra.mxu0 %v7589
        %10551 = vmatprep.subr.bf16.mxu0 %v7541
        %10552 = vmatpush2.bf16.xpose.msra.mxu0 %v7540
        %10553 = vmatprep.subr.bf16.mxu0 %v7492
        %10554 = vmatpush2.bf16.xpose.msra.mxu0 %v7491
        %10555 = vmatprep.subr.bf16.mxu0 %v7443
        %10556 = vmatpush2.bf16.xpose.msra.mxu0 %v7442
        %10557 = vmatprep.subr.bf16.mxu0 %v7394
        %10558 = vmatpush2.bf16.xpose.msra.mxu0 %v7393
        %10559 = vmatprep.mubr.bf16.mxu0 %v2030
        %10560 = vmatmul.mubr.bf16.gmra.mxu0 %v2016
        %v10561 = vpop.f32.mrf.mxu0
        %v10562 = vadd.f32 %v10521, %v10561
        %v10563 = vpop.f32.mrf.mxu0
        %v10564 = vadd.f32 %v10523, %v10563
        %v10565 = vpop.f32.mrf.mxu0
        %v10566 = vpop.f32.mrf.mxu0
        %10567 = vdwg.mxu0
        %10568 = vmatprep.subr.bf16.mxu0 %v7347
        %10569 = vmatpush1.bf16.xpose.msra.mxu0 %v7346
        %10570 = vmatprep.subr.bf16.mxu0 %v7298
        %10571 = vmatpush1.bf16.xpose.msra.mxu0 %v7297
        %10572 = vmatprep.subr.bf16.mxu0 %v7249
        %10573 = vmatpush1.bf16.xpose.msra.mxu0 %v7248
        %10574 = vmatprep.subr.bf16.mxu0 %v7200
        %10575 = vmatpush1.bf16.xpose.msra.mxu0 %v7199
        %10576 = vmatprep.subr.bf16.mxu0 %v7151
        %10577 = vmatpush1.bf16.xpose.msra.mxu0 %v7150
        %10578 = vmatprep.subr.bf16.mxu0 %v7102
        %10579 = vmatpush1.bf16.xpose.msra.mxu0 %v7101
        %10580 = vmatprep.subr.bf16.mxu0 %v7053
        %10581 = vmatpush1.bf16.xpose.msra.mxu0 %v7052
        %10582 = vmatprep.subr.bf16.mxu0 %v7004
        %10583 = vmatpush1.bf16.xpose.msra.mxu0 %v7003
        %10584 = vmatprep.subr.bf16.mxu0 %v7739
        %10585 = vmatpush2.bf16.xpose.msra.mxu0 %v7738
        %10586 = vmatprep.subr.bf16.mxu0 %v7690
        %10587 = vmatpush2.bf16.xpose.msra.mxu0 %v7689
        %10588 = vmatprep.subr.bf16.mxu0 %v7641
        %10589 = vmatpush2.bf16.xpose.msra.mxu0 %v7640
        %10590 = vmatprep.subr.bf16.mxu0 %v7592
        %10591 = vmatpush2.bf16.xpose.msra.mxu0 %v7591
        %10592 = vmatprep.subr.bf16.mxu0 %v7543
        %10593 = vmatpush2.bf16.xpose.msra.mxu0 %v7542
        %10594 = vmatprep.subr.bf16.mxu0 %v7494
        %10595 = vmatpush2.bf16.xpose.msra.mxu0 %v7493
        %10596 = vmatprep.subr.bf16.mxu0 %v7445
        %10597 = vmatpush2.bf16.xpose.msra.mxu0 %v7444
        %10598 = vmatprep.subr.bf16.mxu0 %v7396
        %10599 = vmatpush2.bf16.xpose.msra.mxu0 %v7395
        %10600 = vmatprep.mubr.bf16.mxu0 %v2034
        %10601 = vmatmul.mubr.bf16.gmra.mxu0 %v2032
        %v10602 = vpop.f32.mrf.mxu0
        %v10603 = vadd.f32 %v10562, %v10602
        %v10604 = vpop.f32.mrf.mxu0
        %v10605 = vadd.f32 %v10564, %v10604
        %v10606 = vpop.f32.mrf.mxu0
        %v10607 = vpop.f32.mrf.mxu0
        %10608 = vdwg.mxu0
        %10609 = vmatprep.subr.bf16.mxu0 %v7349
        %10610 = vmatpush1.bf16.xpose.msra.mxu0 %v7348
        %10611 = vmatprep.subr.bf16.mxu0 %v7300
        %10612 = vmatpush1.bf16.xpose.msra.mxu0 %v7299
        %10613 = vmatprep.subr.bf16.mxu0 %v7251
        %10614 = vmatpush1.bf16.xpose.msra.mxu0 %v7250
        %10615 = vmatprep.subr.bf16.mxu0 %v7202
        %10616 = vmatpush1.bf16.xpose.msra.mxu0 %v7201
        %10617 = vmatprep.subr.bf16.mxu0 %v7153
        %10618 = vmatpush1.bf16.xpose.msra.mxu0 %v7152
        %10619 = vmatprep.subr.bf16.mxu0 %v7104
        %10620 = vmatpush1.bf16.xpose.msra.mxu0 %v7103
        %10621 = vmatprep.subr.bf16.mxu0 %v7055
        %10622 = vmatpush1.bf16.xpose.msra.mxu0 %v7054
        %10623 = vmatprep.subr.bf16.mxu0 %v7006
        %10624 = vmatpush1.bf16.xpose.msra.mxu0 %v7005
        %10625 = vmatprep.subr.bf16.mxu0 %v7741
        %10626 = vmatpush2.bf16.xpose.msra.mxu0 %v7740
        %10627 = vmatprep.subr.bf16.mxu0 %v7692
        %10628 = vmatpush2.bf16.xpose.msra.mxu0 %v7691
        %10629 = vmatprep.subr.bf16.mxu0 %v7643
        %10630 = vmatpush2.bf16.xpose.msra.mxu0 %v7642
        %10631 = vmatprep.subr.bf16.mxu0 %v7594
        %10632 = vmatpush2.bf16.xpose.msra.mxu0 %v7593
        %10633 = vmatprep.subr.bf16.mxu0 %v7545
        %10634 = vmatpush2.bf16.xpose.msra.mxu0 %v7544
        %10635 = vmatprep.subr.bf16.mxu0 %v7496
        %10636 = vmatpush2.bf16.xpose.msra.mxu0 %v7495
        %10637 = vmatprep.subr.bf16.mxu0 %v7447
        %10638 = vmatpush2.bf16.xpose.msra.mxu0 %v7446
        %10639 = vmatprep.subr.bf16.mxu0 %v7398
        %10640 = vmatpush2.bf16.xpose.msra.mxu0 %v7397
        %10641 = vmatprep.mubr.bf16.mxu0 %v2072
        %10642 = vmatmul.mubr.bf16.gmra.mxu0 %v2058
        %v10643 = vpop.f32.mrf.mxu0
        %v10644 = vadd.f32 %v10603, %v10643
        %v10645 = vpop.f32.mrf.mxu0
        %v10646 = vadd.f32 %v10605, %v10645
        %v10647 = vpop.f32.mrf.mxu0
        %v10648 = vpop.f32.mrf.mxu0
        %10649 = vdwg.mxu0
        %10650 = vmatprep.subr.bf16.mxu0 %v7351
        %10651 = vmatpush1.bf16.xpose.msra.mxu0 %v7350
        %10652 = vmatprep.subr.bf16.mxu0 %v7302
        %10653 = vmatpush1.bf16.xpose.msra.mxu0 %v7301
        %10654 = vmatprep.subr.bf16.mxu0 %v7253
        %10655 = vmatpush1.bf16.xpose.msra.mxu0 %v7252
        %10656 = vmatprep.subr.bf16.mxu0 %v7204
        %10657 = vmatpush1.bf16.xpose.msra.mxu0 %v7203
        %10658 = vmatprep.subr.bf16.mxu0 %v7155
        %10659 = vmatpush1.bf16.xpose.msra.mxu0 %v7154
        %10660 = vmatprep.subr.bf16.mxu0 %v7106
        %10661 = vmatpush1.bf16.xpose.msra.mxu0 %v7105
        %10662 = vmatprep.subr.bf16.mxu0 %v7057
        %10663 = vmatpush1.bf16.xpose.msra.mxu0 %v7056
        %10664 = vmatprep.subr.bf16.mxu0 %v7008
        %10665 = vmatpush1.bf16.xpose.msra.mxu0 %v7007
        %10666 = vmatprep.subr.bf16.mxu0 %v7743
        %10667 = vmatpush2.bf16.xpose.msra.mxu0 %v7742
        %10668 = vmatprep.subr.bf16.mxu0 %v7694
        %10669 = vmatpush2.bf16.xpose.msra.mxu0 %v7693
        %10670 = vmatprep.subr.bf16.mxu0 %v7645
        %10671 = vmatpush2.bf16.xpose.msra.mxu0 %v7644
        %10672 = vmatprep.subr.bf16.mxu0 %v7596
        %10673 = vmatpush2.bf16.xpose.msra.mxu0 %v7595
        %10674 = vmatprep.subr.bf16.mxu0 %v7547
        %10675 = vmatpush2.bf16.xpose.msra.mxu0 %v7546
        %10676 = vmatprep.subr.bf16.mxu0 %v7498
        %10677 = vmatpush2.bf16.xpose.msra.mxu0 %v7497
        %10678 = vmatprep.subr.bf16.mxu0 %v7449
        %10679 = vmatpush2.bf16.xpose.msra.mxu0 %v7448
        %10680 = vmatprep.subr.bf16.mxu0 %v7400
        %10681 = vmatpush2.bf16.xpose.msra.mxu0 %v7399
        %10682 = vmatprep.mubr.bf16.mxu0 %v2082
        %10683 = vmatmul.mubr.bf16.gmra.mxu0 %v2080
        %v10684 = vpop.f32.mrf.mxu0
        %v10685 = vadd.f32 %v10644, %v10684
        %v10686 = vpop.f32.mrf.mxu0
        %v10687 = vadd.f32 %v10646, %v10686
        %v10688 = vpop.f32.mrf.mxu0
        %v10689 = vpop.f32.mrf.mxu0
        %10690 = vdwg.mxu0
        %10691 = vmatprep.subr.bf16.mxu0 %v7353
        %10692 = vmatpush1.bf16.xpose.msra.mxu0 %v7352
        %10693 = vmatprep.subr.bf16.mxu0 %v7304
        %10694 = vmatpush1.bf16.xpose.msra.mxu0 %v7303
        %10695 = vmatprep.subr.bf16.mxu0 %v7255
        %10696 = vmatpush1.bf16.xpose.msra.mxu0 %v7254
        %10697 = vmatprep.subr.bf16.mxu0 %v7206
        %10698 = vmatpush1.bf16.xpose.msra.mxu0 %v7205
        %10699 = vmatprep.subr.bf16.mxu0 %v7157
        %10700 = vmatpush1.bf16.xpose.msra.mxu0 %v7156
        %10701 = vmatprep.subr.bf16.mxu0 %v7108
        %10702 = vmatpush1.bf16.xpose.msra.mxu0 %v7107
        %10703 = vmatprep.subr.bf16.mxu0 %v7059
        %10704 = vmatpush1.bf16.xpose.msra.mxu0 %v7058
        %10705 = vmatprep.subr.bf16.mxu0 %v7010
        %10706 = vmatpush1.bf16.xpose.msra.mxu0 %v7009
        %10707 = vmatprep.subr.bf16.mxu0 %v7745
        %10708 = vmatpush2.bf16.xpose.msra.mxu0 %v7744
        %10709 = vmatprep.subr.bf16.mxu0 %v7696
        %10710 = vmatpush2.bf16.xpose.msra.mxu0 %v7695
        %10711 = vmatprep.subr.bf16.mxu0 %v7647
        %10712 = vmatpush2.bf16.xpose.msra.mxu0 %v7646
        %10713 = vmatprep.subr.bf16.mxu0 %v7598
        %10714 = vmatpush2.bf16.xpose.msra.mxu0 %v7597
        %10715 = vmatprep.subr.bf16.mxu0 %v7549
        %10716 = vmatpush2.bf16.xpose.msra.mxu0 %v7548
        %10717 = vmatprep.subr.bf16.mxu0 %v7500
        %10718 = vmatpush2.bf16.xpose.msra.mxu0 %v7499
        %10719 = vmatprep.subr.bf16.mxu0 %v7451
        %10720 = vmatpush2.bf16.xpose.msra.mxu0 %v7450
        %10721 = vmatprep.subr.bf16.mxu0 %v7402
        %10722 = vmatpush2.bf16.xpose.msra.mxu0 %v7401
        %10723 = vmatprep.mubr.bf16.mxu0 %v2079
        %10724 = vmatmul.mubr.bf16.gmra.mxu0 %v2065
        %v10725 = vpop.f32.mrf.mxu0
        %v10726 = vadd.f32 %v10685, %v10725
        %v10727 = vpop.f32.mrf.mxu0
        %v10728 = vadd.f32 %v10687, %v10727
        %v10729 = vpop.f32.mrf.mxu0
        %v10730 = vpop.f32.mrf.mxu0
        %10731 = vdwg.mxu0
        %10732 = vmatprep.subr.bf16.mxu0 %v7355
        %10733 = vmatpush1.bf16.xpose.msra.mxu0 %v7354
        %10734 = vmatprep.subr.bf16.mxu0 %v7306
        %10735 = vmatpush1.bf16.xpose.msra.mxu0 %v7305
        %10736 = vmatprep.subr.bf16.mxu0 %v7257
        %10737 = vmatpush1.bf16.xpose.msra.mxu0 %v7256
        %10738 = vmatprep.subr.bf16.mxu0 %v7208
        %10739 = vmatpush1.bf16.xpose.msra.mxu0 %v7207
        %10740 = vmatprep.subr.bf16.mxu0 %v7159
        %10741 = vmatpush1.bf16.xpose.msra.mxu0 %v7158
        %10742 = vmatprep.subr.bf16.mxu0 %v7110
        %10743 = vmatpush1.bf16.xpose.msra.mxu0 %v7109
        %10744 = vmatprep.subr.bf16.mxu0 %v7061
        %10745 = vmatpush1.bf16.xpose.msra.mxu0 %v7060
        %10746 = vmatprep.subr.bf16.mxu0 %v7012
        %10747 = vmatpush1.bf16.xpose.msra.mxu0 %v7011
        %10748 = vmatprep.subr.bf16.mxu0 %v7747
        %10749 = vmatpush2.bf16.xpose.msra.mxu0 %v7746
        %10750 = vmatprep.subr.bf16.mxu0 %v7698
        %10751 = vmatpush2.bf16.xpose.msra.mxu0 %v7697
        %10752 = vmatprep.subr.bf16.mxu0 %v7649
        %10753 = vmatpush2.bf16.xpose.msra.mxu0 %v7648
        %10754 = vmatprep.subr.bf16.mxu0 %v7600
        %10755 = vmatpush2.bf16.xpose.msra.mxu0 %v7599
        %10756 = vmatprep.subr.bf16.mxu0 %v7551
        %10757 = vmatpush2.bf16.xpose.msra.mxu0 %v7550
        %10758 = vmatprep.subr.bf16.mxu0 %v7502
        %10759 = vmatpush2.bf16.xpose.msra.mxu0 %v7501
        %10760 = vmatprep.subr.bf16.mxu0 %v7453
        %10761 = vmatpush2.bf16.xpose.msra.mxu0 %v7452
        %10762 = vmatprep.subr.bf16.mxu0 %v7404
        %10763 = vmatpush2.bf16.xpose.msra.mxu0 %v7403
        %10764 = vmatprep.mubr.bf16.mxu0 %v2083
        %10765 = vmatmul.mubr.bf16.gmra.mxu0 %v2081
        %v10766 = vpop.f32.mrf.mxu0
        %v10767 = vadd.f32 %v10726, %v10766
        %v10768 = vpop.f32.mrf.mxu0
        %v10769 = vadd.f32 %v10728, %v10768
        %v10770 = vpop.f32.mrf.mxu0
        %v10771 = vpop.f32.mrf.mxu0
        %10772 = vdwg.mxu0
        %10773 = vmatprep.subr.bf16.mxu0 %v7357
        %10774 = vmatpush1.bf16.xpose.msra.mxu0 %v7356
        %10775 = vmatprep.subr.bf16.mxu0 %v7308
        %10776 = vmatpush1.bf16.xpose.msra.mxu0 %v7307
        %10777 = vmatprep.subr.bf16.mxu0 %v7259
        %10778 = vmatpush1.bf16.xpose.msra.mxu0 %v7258
        %10779 = vmatprep.subr.bf16.mxu0 %v7210
        %10780 = vmatpush1.bf16.xpose.msra.mxu0 %v7209
        %10781 = vmatprep.subr.bf16.mxu0 %v7161
        %10782 = vmatpush1.bf16.xpose.msra.mxu0 %v7160
        %10783 = vmatprep.subr.bf16.mxu0 %v7112
        %10784 = vmatpush1.bf16.xpose.msra.mxu0 %v7111
        %10785 = vmatprep.subr.bf16.mxu0 %v7063
        %10786 = vmatpush1.bf16.xpose.msra.mxu0 %v7062
        %10787 = vmatprep.subr.bf16.mxu0 %v7014
        %10788 = vmatpush1.bf16.xpose.msra.mxu0 %v7013
        %10789 = vmatprep.subr.bf16.mxu0 %v7749
        %10790 = vmatpush2.bf16.xpose.msra.mxu0 %v7748
        %10791 = vmatprep.subr.bf16.mxu0 %v7700
        %10792 = vmatpush2.bf16.xpose.msra.mxu0 %v7699
        %10793 = vmatprep.subr.bf16.mxu0 %v7651
        %10794 = vmatpush2.bf16.xpose.msra.mxu0 %v7650
        %10795 = vmatprep.subr.bf16.mxu0 %v7602
        %10796 = vmatpush2.bf16.xpose.msra.mxu0 %v7601
        %10797 = vmatprep.subr.bf16.mxu0 %v7553
        %10798 = vmatpush2.bf16.xpose.msra.mxu0 %v7552
        %10799 = vmatprep.subr.bf16.mxu0 %v7504
        %10800 = vmatpush2.bf16.xpose.msra.mxu0 %v7503
        %10801 = vmatprep.subr.bf16.mxu0 %v7455
        %10802 = vmatpush2.bf16.xpose.msra.mxu0 %v7454
        %10803 = vmatprep.subr.bf16.mxu0 %v7406
        %10804 = vmatpush2.bf16.xpose.msra.mxu0 %v7405
        %10805 = vmatprep.mubr.bf16.mxu0 %v2121
        %10806 = vmatmul.mubr.bf16.gmra.mxu0 %v2107
        %v10807 = vpop.f32.mrf.mxu0
        %v10808 = vadd.f32 %v10767, %v10807
        %v10809 = vpop.f32.mrf.mxu0
        %v10810 = vadd.f32 %v10769, %v10809
        %v10811 = vpop.f32.mrf.mxu0
        %v10812 = vpop.f32.mrf.mxu0
        %10813 = vdwg.mxu0
        %10814 = vmatprep.subr.bf16.mxu0 %v7359
        %10815 = vmatpush1.bf16.xpose.msra.mxu0 %v7358
        %10816 = vmatprep.subr.bf16.mxu0 %v7310
        %10817 = vmatpush1.bf16.xpose.msra.mxu0 %v7309
        %10818 = vmatprep.subr.bf16.mxu0 %v7261
        %10819 = vmatpush1.bf16.xpose.msra.mxu0 %v7260
        %10820 = vmatprep.subr.bf16.mxu0 %v7212
        %10821 = vmatpush1.bf16.xpose.msra.mxu0 %v7211
        %10822 = vmatprep.subr.bf16.mxu0 %v7163
        %10823 = vmatpush1.bf16.xpose.msra.mxu0 %v7162
        %10824 = vmatprep.subr.bf16.mxu0 %v7114
        %10825 = vmatpush1.bf16.xpose.msra.mxu0 %v7113
        %10826 = vmatprep.subr.bf16.mxu0 %v7065
        %10827 = vmatpush1.bf16.xpose.msra.mxu0 %v7064
        %10828 = vmatprep.subr.bf16.mxu0 %v7016
        %10829 = vmatpush1.bf16.xpose.msra.mxu0 %v7015
        %10830 = vmatprep.subr.bf16.mxu0 %v7751
        %10831 = vmatpush2.bf16.xpose.msra.mxu0 %v7750
        %10832 = vmatprep.subr.bf16.mxu0 %v7702
        %10833 = vmatpush2.bf16.xpose.msra.mxu0 %v7701
        %10834 = vmatprep.subr.bf16.mxu0 %v7653
        %10835 = vmatpush2.bf16.xpose.msra.mxu0 %v7652
        %10836 = vmatprep.subr.bf16.mxu0 %v7604
        %10837 = vmatpush2.bf16.xpose.msra.mxu0 %v7603
        %10838 = vmatprep.subr.bf16.mxu0 %v7555
        %10839 = vmatpush2.bf16.xpose.msra.mxu0 %v7554
        %10840 = vmatprep.subr.bf16.mxu0 %v7506
        %10841 = vmatpush2.bf16.xpose.msra.mxu0 %v7505
        %10842 = vmatprep.subr.bf16.mxu0 %v7457
        %10843 = vmatpush2.bf16.xpose.msra.mxu0 %v7456
        %10844 = vmatprep.subr.bf16.mxu0 %v7408
        %10845 = vmatpush2.bf16.xpose.msra.mxu0 %v7407
        %10846 = vmatprep.mubr.bf16.mxu0 %v2131
        %10847 = vmatmul.mubr.bf16.gmra.mxu0 %v2129
        %v10848 = vpop.f32.mrf.mxu0
        %v10849 = vadd.f32 %v10808, %v10848
        %v10850 = vpop.f32.mrf.mxu0
        %v10851 = vadd.f32 %v10810, %v10850
        %v10852 = vpop.f32.mrf.mxu0
        %v10853 = vpop.f32.mrf.mxu0
        %10854 = vdwg.mxu0
        %10855 = vmatprep.subr.bf16.mxu0 %v7361
        %10856 = vmatpush1.bf16.xpose.msra.mxu0 %v7360
        %10857 = vmatprep.subr.bf16.mxu0 %v7312
        %10858 = vmatpush1.bf16.xpose.msra.mxu0 %v7311
        %10859 = vmatprep.subr.bf16.mxu0 %v7263
        %10860 = vmatpush1.bf16.xpose.msra.mxu0 %v7262
        %10861 = vmatprep.subr.bf16.mxu0 %v7214
        %10862 = vmatpush1.bf16.xpose.msra.mxu0 %v7213
        %10863 = vmatprep.subr.bf16.mxu0 %v7165
        %10864 = vmatpush1.bf16.xpose.msra.mxu0 %v7164
        %10865 = vmatprep.subr.bf16.mxu0 %v7116
        %10866 = vmatpush1.bf16.xpose.msra.mxu0 %v7115
        %10867 = vmatprep.subr.bf16.mxu0 %v7067
        %10868 = vmatpush1.bf16.xpose.msra.mxu0 %v7066
        %10869 = vmatprep.subr.bf16.mxu0 %v7018
        %10870 = vmatpush1.bf16.xpose.msra.mxu0 %v7017
        %10871 = vmatprep.subr.bf16.mxu0 %v7753
        %10872 = vmatpush2.bf16.xpose.msra.mxu0 %v7752
        %10873 = vmatprep.subr.bf16.mxu0 %v7704
        %10874 = vmatpush2.bf16.xpose.msra.mxu0 %v7703
        %10875 = vmatprep.subr.bf16.mxu0 %v7655
        %10876 = vmatpush2.bf16.xpose.msra.mxu0 %v7654
        %10877 = vmatprep.subr.bf16.mxu0 %v7606
        %10878 = vmatpush2.bf16.xpose.msra.mxu0 %v7605
        %10879 = vmatprep.subr.bf16.mxu0 %v7557
        %10880 = vmatpush2.bf16.xpose.msra.mxu0 %v7556
        %10881 = vmatprep.subr.bf16.mxu0 %v7508
        %10882 = vmatpush2.bf16.xpose.msra.mxu0 %v7507
        %10883 = vmatprep.subr.bf16.mxu0 %v7459
        %10884 = vmatpush2.bf16.xpose.msra.mxu0 %v7458
        %10885 = vmatprep.subr.bf16.mxu0 %v7410
        %10886 = vmatpush2.bf16.xpose.msra.mxu0 %v7409
        %10887 = vmatprep.mubr.bf16.mxu0 %v2128
        %10888 = vmatmul.mubr.bf16.gmra.mxu0 %v2114
        %v10889 = vpop.f32.mrf.mxu0
        %v10890 = vadd.f32 %v10849, %v10889
        %v10891 = vpop.f32.mrf.mxu0
        %v10892 = vadd.f32 %v10851, %v10891
        %v10893 = vpop.f32.mrf.mxu0
        %v10894 = vpop.f32.mrf.mxu0
        %10895 = vdwg.mxu0
        %10896 = vmatprep.subr.bf16.mxu0 %v7363
        %10897 = vmatpush1.bf16.xpose.msra.mxu0 %v7362
        %10898 = vmatprep.subr.bf16.mxu0 %v7314
        %10899 = vmatpush1.bf16.xpose.msra.mxu0 %v7313
        %10900 = vmatprep.subr.bf16.mxu0 %v7265
        %10901 = vmatpush1.bf16.xpose.msra.mxu0 %v7264
        %10902 = vmatprep.subr.bf16.mxu0 %v7216
        %10903 = vmatpush1.bf16.xpose.msra.mxu0 %v7215
        %10904 = vmatprep.subr.bf16.mxu0 %v7167
        %10905 = vmatpush1.bf16.xpose.msra.mxu0 %v7166
        %10906 = vmatprep.subr.bf16.mxu0 %v7118
        %10907 = vmatpush1.bf16.xpose.msra.mxu0 %v7117
        %10908 = vmatprep.subr.bf16.mxu0 %v7069
        %10909 = vmatpush1.bf16.xpose.msra.mxu0 %v7068
        %10910 = vmatprep.subr.bf16.mxu0 %v7020
        %10911 = vmatpush1.bf16.xpose.msra.mxu0 %v7019
        %10912 = vmatprep.subr.bf16.mxu0 %v7755
        %10913 = vmatpush2.bf16.xpose.msra.mxu0 %v7754
        %10914 = vmatprep.subr.bf16.mxu0 %v7706
        %10915 = vmatpush2.bf16.xpose.msra.mxu0 %v7705
        %10916 = vmatprep.subr.bf16.mxu0 %v7657
        %10917 = vmatpush2.bf16.xpose.msra.mxu0 %v7656
        %10918 = vmatprep.subr.bf16.mxu0 %v7608
        %10919 = vmatpush2.bf16.xpose.msra.mxu0 %v7607
        %10920 = vmatprep.subr.bf16.mxu0 %v7559
        %10921 = vmatpush2.bf16.xpose.msra.mxu0 %v7558
        %10922 = vmatprep.subr.bf16.mxu0 %v7510
        %10923 = vmatpush2.bf16.xpose.msra.mxu0 %v7509
        %10924 = vmatprep.subr.bf16.mxu0 %v7461
        %10925 = vmatpush2.bf16.xpose.msra.mxu0 %v7460
        %10926 = vmatprep.subr.bf16.mxu0 %v7412
        %10927 = vmatpush2.bf16.xpose.msra.mxu0 %v7411
        %10928 = vmatprep.mubr.bf16.mxu0 %v2132
        %10929 = vmatmul.mubr.bf16.gmra.mxu0 %v2130
        %v10930 = vpop.f32.mrf.mxu0
        %v10931 = vadd.f32 %v10890, %v10930
        %v10932 = vpop.f32.mrf.mxu0
        %v10933 = vadd.f32 %v10892, %v10932
        %v10934 = vpop.f32.mrf.mxu0
        %v10935 = vpop.f32.mrf.mxu0
        %10936 = vdwg.mxu0
        %10937 = vmatprep.subr.bf16.mxu0 %v7365
        %10938 = vmatpush1.bf16.xpose.msra.mxu0 %v7364
        %10939 = vmatprep.subr.bf16.mxu0 %v7316
        %10940 = vmatpush1.bf16.xpose.msra.mxu0 %v7315
        %10941 = vmatprep.subr.bf16.mxu0 %v7267
        %10942 = vmatpush1.bf16.xpose.msra.mxu0 %v7266
        %10943 = vmatprep.subr.bf16.mxu0 %v7218
        %10944 = vmatpush1.bf16.xpose.msra.mxu0 %v7217
        %10945 = vmatprep.subr.bf16.mxu0 %v7169
        %10946 = vmatpush1.bf16.xpose.msra.mxu0 %v7168
        %10947 = vmatprep.subr.bf16.mxu0 %v7120
        %10948 = vmatpush1.bf16.xpose.msra.mxu0 %v7119
        %10949 = vmatprep.subr.bf16.mxu0 %v7071
        %10950 = vmatpush1.bf16.xpose.msra.mxu0 %v7070
        %10951 = vmatprep.subr.bf16.mxu0 %v7022
        %10952 = vmatpush1.bf16.xpose.msra.mxu0 %v7021
        %10953 = vmatprep.subr.bf16.mxu0 %v7757
        %10954 = vmatpush2.bf16.xpose.msra.mxu0 %v7756
        %10955 = vmatprep.subr.bf16.mxu0 %v7708
        %10956 = vmatpush2.bf16.xpose.msra.mxu0 %v7707
        %10957 = vmatprep.subr.bf16.mxu0 %v7659
        %10958 = vmatpush2.bf16.xpose.msra.mxu0 %v7658
        %10959 = vmatprep.subr.bf16.mxu0 %v7610
        %10960 = vmatpush2.bf16.xpose.msra.mxu0 %v7609
        %10961 = vmatprep.subr.bf16.mxu0 %v7561
        %10962 = vmatpush2.bf16.xpose.msra.mxu0 %v7560
        %10963 = vmatprep.subr.bf16.mxu0 %v7512
        %10964 = vmatpush2.bf16.xpose.msra.mxu0 %v7511
        %10965 = vmatprep.subr.bf16.mxu0 %v7463
        %10966 = vmatpush2.bf16.xpose.msra.mxu0 %v7462
        %10967 = vmatprep.subr.bf16.mxu0 %v7414
        %10968 = vmatpush2.bf16.xpose.msra.mxu0 %v7413
        %10969 = vmatprep.mubr.bf16.mxu0 %v2170
        %10970 = vmatmul.mubr.bf16.gmra.mxu0 %v2156
        %v10971 = vpop.f32.mrf.mxu0
        %v10972 = vadd.f32 %v10931, %v10971
        %v10973 = vpop.f32.mrf.mxu0
        %v10974 = vadd.f32 %v10933, %v10973
        %v10975 = vpop.f32.mrf.mxu0
        %v10976 = vpop.f32.mrf.mxu0
        %10977 = vdwg.mxu0
        %10978 = vmatprep.subr.bf16.mxu0 %v7367
        %10979 = vmatpush1.bf16.xpose.msra.mxu0 %v7366
        %10980 = vmatprep.subr.bf16.mxu0 %v7318
        %10981 = vmatpush1.bf16.xpose.msra.mxu0 %v7317
        %10982 = vmatprep.subr.bf16.mxu0 %v7269
        %10983 = vmatpush1.bf16.xpose.msra.mxu0 %v7268
        %10984 = vmatprep.subr.bf16.mxu0 %v7220
        %10985 = vmatpush1.bf16.xpose.msra.mxu0 %v7219
        %10986 = vmatprep.subr.bf16.mxu0 %v7171
        %10987 = vmatpush1.bf16.xpose.msra.mxu0 %v7170
        %10988 = vmatprep.subr.bf16.mxu0 %v7122
        %10989 = vmatpush1.bf16.xpose.msra.mxu0 %v7121
        %10990 = vmatprep.subr.bf16.mxu0 %v7073
        %10991 = vmatpush1.bf16.xpose.msra.mxu0 %v7072
        %10992 = vmatprep.subr.bf16.mxu0 %v7024
        %10993 = vmatpush1.bf16.xpose.msra.mxu0 %v7023
        %10994 = vmatprep.subr.bf16.mxu0 %v7759
        %10995 = vmatpush2.bf16.xpose.msra.mxu0 %v7758
        %10996 = vmatprep.subr.bf16.mxu0 %v7710
        %10997 = vmatpush2.bf16.xpose.msra.mxu0 %v7709
        %10998 = vmatprep.subr.bf16.mxu0 %v7661
        %10999 = vmatpush2.bf16.xpose.msra.mxu0 %v7660
        %11000 = vmatprep.subr.bf16.mxu0 %v7612
        %11001 = vmatpush2.bf16.xpose.msra.mxu0 %v7611
        %11002 = vmatprep.subr.bf16.mxu0 %v7563
        %11003 = vmatpush2.bf16.xpose.msra.mxu0 %v7562
        %11004 = vmatprep.subr.bf16.mxu0 %v7514
        %11005 = vmatpush2.bf16.xpose.msra.mxu0 %v7513
        %11006 = vmatprep.subr.bf16.mxu0 %v7465
        %11007 = vmatpush2.bf16.xpose.msra.mxu0 %v7464
        %11008 = vmatprep.subr.bf16.mxu0 %v7416
        %11009 = vmatpush2.bf16.xpose.msra.mxu0 %v7415
        %11010 = vmatprep.mubr.bf16.mxu0 %v2180
        %11011 = vmatmul.mubr.bf16.gmra.mxu0 %v2178
        %v11012 = vpop.f32.mrf.mxu0
        %v11013 = vadd.f32 %v10972, %v11012
        %v11014 = vpop.f32.mrf.mxu0
        %v11015 = vadd.f32 %v10974, %v11014
        %v11016 = vpop.f32.mrf.mxu0
        %v11017 = vpop.f32.mrf.mxu0
        %11018 = vdwg.mxu0
        %11019 = vmatprep.subr.bf16.mxu0 %v7369
        %11020 = vmatpush1.bf16.xpose.msra.mxu0 %v7368
        %11021 = vmatprep.subr.bf16.mxu0 %v7320
        %11022 = vmatpush1.bf16.xpose.msra.mxu0 %v7319
        %11023 = vmatprep.subr.bf16.mxu0 %v7271
        %11024 = vmatpush1.bf16.xpose.msra.mxu0 %v7270
        %11025 = vmatprep.subr.bf16.mxu0 %v7222
        %11026 = vmatpush1.bf16.xpose.msra.mxu0 %v7221
        %11027 = vmatprep.subr.bf16.mxu0 %v7173
        %11028 = vmatpush1.bf16.xpose.msra.mxu0 %v7172
        %11029 = vmatprep.subr.bf16.mxu0 %v7124
        %11030 = vmatpush1.bf16.xpose.msra.mxu0 %v7123
        %11031 = vmatprep.subr.bf16.mxu0 %v7075
        %11032 = vmatpush1.bf16.xpose.msra.mxu0 %v7074
        %11033 = vmatprep.subr.bf16.mxu0 %v7026
        %11034 = vmatpush1.bf16.xpose.msra.mxu0 %v7025
        %11035 = vmatprep.subr.bf16.mxu0 %v7761
        %11036 = vmatpush2.bf16.xpose.msra.mxu0 %v7760
        %11037 = vmatprep.subr.bf16.mxu0 %v7712
        %11038 = vmatpush2.bf16.xpose.msra.mxu0 %v7711
        %11039 = vmatprep.subr.bf16.mxu0 %v7663
        %11040 = vmatpush2.bf16.xpose.msra.mxu0 %v7662
        %11041 = vmatprep.subr.bf16.mxu0 %v7614
        %11042 = vmatpush2.bf16.xpose.msra.mxu0 %v7613
        %11043 = vmatprep.subr.bf16.mxu0 %v7565
        %11044 = vmatpush2.bf16.xpose.msra.mxu0 %v7564
        %11045 = vmatprep.subr.bf16.mxu0 %v7516
        %11046 = vmatpush2.bf16.xpose.msra.mxu0 %v7515
        %11047 = vmatprep.subr.bf16.mxu0 %v7467
        %11048 = vmatpush2.bf16.xpose.msra.mxu0 %v7466
        %11049 = vmatprep.subr.bf16.mxu0 %v7418
        %11050 = vmatpush2.bf16.xpose.msra.mxu0 %v7417
        %11051 = vmatprep.mubr.bf16.mxu0 %v2177
        %11052 = vmatmul.mubr.bf16.gmra.mxu0 %v2163
        %v11053 = vpop.f32.mrf.mxu0
        %v11054 = vadd.f32 %v11013, %v11053
        %v11055 = vpop.f32.mrf.mxu0
        %v11056 = vadd.f32 %v11015, %v11055
        %v11057 = vpop.f32.mrf.mxu0
        %v11058 = vpop.f32.mrf.mxu0
        %11059 = vdwg.mxu0
        %11060 = vmatprep.subr.bf16.mxu0 %v7371
        %11061 = vmatpush1.bf16.xpose.msra.mxu0 %v7370
        %11062 = vmatprep.subr.bf16.mxu0 %v7322
        %11063 = vmatpush1.bf16.xpose.msra.mxu0 %v7321
        %11064 = vmatprep.subr.bf16.mxu0 %v7273
        %11065 = vmatpush1.bf16.xpose.msra.mxu0 %v7272
        %11066 = vmatprep.subr.bf16.mxu0 %v7224
        %11067 = vmatpush1.bf16.xpose.msra.mxu0 %v7223
        %11068 = vmatprep.subr.bf16.mxu0 %v7175
        %11069 = vmatpush1.bf16.xpose.msra.mxu0 %v7174
        %11070 = vmatprep.subr.bf16.mxu0 %v7126
        %11071 = vmatpush1.bf16.xpose.msra.mxu0 %v7125
        %11072 = vmatprep.subr.bf16.mxu0 %v7077
        %11073 = vmatpush1.bf16.xpose.msra.mxu0 %v7076
        %11074 = vmatprep.subr.bf16.mxu0 %v7028
        %11075 = vmatpush1.bf16.xpose.msra.mxu0 %v7027
        %11076 = vmatprep.subr.bf16.mxu0 %v7763
        %11077 = vmatpush2.bf16.xpose.msra.mxu0 %v7762
        %11078 = vmatprep.subr.bf16.mxu0 %v7714
        %11079 = vmatpush2.bf16.xpose.msra.mxu0 %v7713
        %11080 = vmatprep.subr.bf16.mxu0 %v7665
        %11081 = vmatpush2.bf16.xpose.msra.mxu0 %v7664
        %11082 = vmatprep.subr.bf16.mxu0 %v7616
        %11083 = vmatpush2.bf16.xpose.msra.mxu0 %v7615
        %11084 = vmatprep.subr.bf16.mxu0 %v7567
        %11085 = vmatpush2.bf16.xpose.msra.mxu0 %v7566
        %11086 = vmatprep.subr.bf16.mxu0 %v7518
        %11087 = vmatpush2.bf16.xpose.msra.mxu0 %v7517
        %11088 = vmatprep.subr.bf16.mxu0 %v7469
        %11089 = vmatpush2.bf16.xpose.msra.mxu0 %v7468
        %11090 = vmatprep.subr.bf16.mxu0 %v7420
        %11091 = vmatpush2.bf16.xpose.msra.mxu0 %v7419
        %11092 = vmatprep.mubr.bf16.mxu0 %v2181
        %11093 = vmatmul.mubr.bf16.gmra.mxu0 %v2179
        %v11094 = vpop.f32.mrf.mxu0
        %v11095 = vadd.f32 %v11054, %v11094
        %v11096 = vpop.f32.mrf.mxu0
        %v11097 = vadd.f32 %v11056, %v11096
        %v11098 = vpop.f32.mrf.mxu0
        %v11099 = vpop.f32.mrf.mxu0
        %11100 = vdwg.mxu0
        %11101 = vmatprep.subr.bf16.mxu0 0
        %11102 = vmatpush1.bf16.xpose.msra.mxu0 %v7372
        %11103 = vmatprep.subr.bf16.mxu0 0
        %11104 = vmatpush1.bf16.xpose.msra.mxu0 %v7323
        %11105 = vmatprep.subr.bf16.mxu0 0
        %11106 = vmatpush1.bf16.xpose.msra.mxu0 %v7274
        %11107 = vmatprep.subr.bf16.mxu0 0
        %11108 = vmatpush1.bf16.xpose.msra.mxu0 %v7225
        %11109 = vmatprep.subr.bf16.mxu0 0
        %11110 = vmatpush1.bf16.xpose.msra.mxu0 %v7176
        %11111 = vmatprep.subr.bf16.mxu0 0
        %11112 = vmatpush1.bf16.xpose.msra.mxu0 %v7127
        %11113 = vmatprep.subr.bf16.mxu0 0
        %11114 = vmatpush1.bf16.xpose.msra.mxu0 %v7078
        %11115 = vmatprep.subr.bf16.mxu0 0
        %11116 = vmatpush1.bf16.xpose.msra.mxu0 %v7029
        %11117 = vmatprep.subr.bf16.mxu0 0
        %11118 = vmatpush2.bf16.xpose.msra.mxu0 %v7764
        %11119 = vmatprep.subr.bf16.mxu0 0
        %11120 = vmatpush2.bf16.xpose.msra.mxu0 %v7715
        %11121 = vmatprep.subr.bf16.mxu0 0
        %11122 = vmatpush2.bf16.xpose.msra.mxu0 %v7666
        %11123 = vmatprep.subr.bf16.mxu0 0
        %11124 = vmatpush2.bf16.xpose.msra.mxu0 %v7617
        %11125 = vmatprep.subr.bf16.mxu0 0
        %11126 = vmatpush2.bf16.xpose.msra.mxu0 %v7568
        %11127 = vmatprep.subr.bf16.mxu0 0
        %11128 = vmatpush2.bf16.xpose.msra.mxu0 %v7519
        %11129 = vmatprep.subr.bf16.mxu0 0
        %11130 = vmatpush2.bf16.xpose.msra.mxu0 %v7470
        %11131 = vmatprep.subr.bf16.mxu0 0
        %11132 = vmatpush2.bf16.xpose.msra.mxu0 %v7421
        %11133 = vmatprep.mubr.bf16.mxu0 0
        %11134 = vmatmul.mubr.bf16.gmra.mxu0 %v2195
        %v11135 = vpop.f32.mrf.mxu0
        %v11136 = vadd.f32 %v11095, %v11135
        %v11137 = vpop.f32.mrf.mxu0
        %v11138 = vadd.f32 %v11097, %v11137
        %v11139 = vpop.f32.mrf.mxu0
        %v11140 = vpop.f32.mrf.mxu0
        %11141 = vdwg.mxu0
        %11142 = vmatprep.subr.bf16.mxu0 %v8109
        %11143 = vmatpush1.bf16.xpose.msra.mxu0 %v8108
        %11144 = vmatprep.subr.bf16.mxu0 %v8060
        %11145 = vmatpush1.bf16.xpose.msra.mxu0 %v8059
        %11146 = vmatprep.subr.bf16.mxu0 %v8011
        %11147 = vmatpush1.bf16.xpose.msra.mxu0 %v8010
        %11148 = vmatprep.subr.bf16.mxu0 %v7962
        %11149 = vmatpush1.bf16.xpose.msra.mxu0 %v7961
        %11150 = vmatprep.subr.bf16.mxu0 %v7913
        %11151 = vmatpush1.bf16.xpose.msra.mxu0 %v7912
        %11152 = vmatprep.subr.bf16.mxu0 %v7864
        %11153 = vmatpush1.bf16.xpose.msra.mxu0 %v7863
        %11154 = vmatprep.subr.bf16.mxu0 %v7815
        %11155 = vmatpush1.bf16.xpose.msra.mxu0 %v7814
        %11156 = vmatprep.subr.bf16.mxu0 %v7766
        %11157 = vmatpush1.bf16.xpose.msra.mxu0 %v7765
        %11158 = vmatprep.subr.bf16.mxu0 %v8501
        %11159 = vmatpush2.bf16.xpose.msra.mxu0 %v8500
        %11160 = vmatprep.subr.bf16.mxu0 %v8452
        %11161 = vmatpush2.bf16.xpose.msra.mxu0 %v8451
        %11162 = vmatprep.subr.bf16.mxu0 %v8403
        %11163 = vmatpush2.bf16.xpose.msra.mxu0 %v8402
        %11164 = vmatprep.subr.bf16.mxu0 %v8354
        %11165 = vmatpush2.bf16.xpose.msra.mxu0 %v8353
        %11166 = vmatprep.subr.bf16.mxu0 %v8305
        %11167 = vmatpush2.bf16.xpose.msra.mxu0 %v8304
        %11168 = vmatprep.subr.bf16.mxu0 %v8256
        %11169 = vmatpush2.bf16.xpose.msra.mxu0 %v8255
        %11170 = vmatprep.subr.bf16.mxu0 %v8207
        %11171 = vmatpush2.bf16.xpose.msra.mxu0 %v8206
        %11172 = vmatprep.subr.bf16.mxu0 %v8158
        %11173 = vmatpush2.bf16.xpose.msra.mxu0 %v8157
        %11174 = vmatprep.mubr.bf16.mxu0 %v1925
        %11175 = vmatmul.mubr.bf16.gmra.mxu0 %v1911
        %v11176 = vpop.f32.mrf.mxu0
        %v11177 = vadd.f32 0.0, %v11176
        %v11178 = vpop.f32.mrf.mxu0
        %v11179 = vadd.f32 0.0, %v11178
        %v11180 = vpop.f32.mrf.mxu0
        %v11181 = vpop.f32.mrf.mxu0
        %11182 = vdwg.mxu0
        %11183 = vmatprep.subr.bf16.mxu0 %v8111
        %11184 = vmatpush1.bf16.xpose.msra.mxu0 %v8110
        %11185 = vmatprep.subr.bf16.mxu0 %v8062
        %11186 = vmatpush1.bf16.xpose.msra.mxu0 %v8061
        %11187 = vmatprep.subr.bf16.mxu0 %v8013
        %11188 = vmatpush1.bf16.xpose.msra.mxu0 %v8012
        %11189 = vmatprep.subr.bf16.mxu0 %v7964
        %11190 = vmatpush1.bf16.xpose.msra.mxu0 %v7963
        %11191 = vmatprep.subr.bf16.mxu0 %v7915
        %11192 = vmatpush1.bf16.xpose.msra.mxu0 %v7914
        %11193 = vmatprep.subr.bf16.mxu0 %v7866
        %11194 = vmatpush1.bf16.xpose.msra.mxu0 %v7865
        %11195 = vmatprep.subr.bf16.mxu0 %v7817
        %11196 = vmatpush1.bf16.xpose.msra.mxu0 %v7816
        %11197 = vmatprep.subr.bf16.mxu0 %v7768
        %11198 = vmatpush1.bf16.xpose.msra.mxu0 %v7767
        %11199 = vmatprep.subr.bf16.mxu0 %v8503
        %11200 = vmatpush2.bf16.xpose.msra.mxu0 %v8502
        %11201 = vmatprep.subr.bf16.mxu0 %v8454
        %11202 = vmatpush2.bf16.xpose.msra.mxu0 %v8453
        %11203 = vmatprep.subr.bf16.mxu0 %v8405
        %11204 = vmatpush2.bf16.xpose.msra.mxu0 %v8404
        %11205 = vmatprep.subr.bf16.mxu0 %v8356
        %11206 = vmatpush2.bf16.xpose.msra.mxu0 %v8355
        %11207 = vmatprep.subr.bf16.mxu0 %v8307
        %11208 = vmatpush2.bf16.xpose.msra.mxu0 %v8306
        %11209 = vmatprep.subr.bf16.mxu0 %v8258
        %11210 = vmatpush2.bf16.xpose.msra.mxu0 %v8257
        %11211 = vmatprep.subr.bf16.mxu0 %v8209
        %11212 = vmatpush2.bf16.xpose.msra.mxu0 %v8208
        %11213 = vmatprep.subr.bf16.mxu0 %v8160
        %11214 = vmatpush2.bf16.xpose.msra.mxu0 %v8159
        %11215 = vmatprep.mubr.bf16.mxu0 %v1935
        %11216 = vmatmul.mubr.bf16.gmra.mxu0 %v1933
        %v11217 = vpop.f32.mrf.mxu0
        %v11218 = vadd.f32 %v11177, %v11217
        %v11219 = vpop.f32.mrf.mxu0
        %v11220 = vadd.f32 %v11179, %v11219
        %v11221 = vpop.f32.mrf.mxu0
        %v11222 = vpop.f32.mrf.mxu0
        %11223 = vdwg.mxu0
        %11224 = vmatprep.subr.bf16.mxu0 %v8113
        %11225 = vmatpush1.bf16.xpose.msra.mxu0 %v8112
        %11226 = vmatprep.subr.bf16.mxu0 %v8064
        %11227 = vmatpush1.bf16.xpose.msra.mxu0 %v8063
        %11228 = vmatprep.subr.bf16.mxu0 %v8015
        %11229 = vmatpush1.bf16.xpose.msra.mxu0 %v8014
        %11230 = vmatprep.subr.bf16.mxu0 %v7966
        %11231 = vmatpush1.bf16.xpose.msra.mxu0 %v7965
        %11232 = vmatprep.subr.bf16.mxu0 %v7917
        %11233 = vmatpush1.bf16.xpose.msra.mxu0 %v7916
        %11234 = vmatprep.subr.bf16.mxu0 %v7868
        %11235 = vmatpush1.bf16.xpose.msra.mxu0 %v7867
        %11236 = vmatprep.subr.bf16.mxu0 %v7819
        %11237 = vmatpush1.bf16.xpose.msra.mxu0 %v7818
        %11238 = vmatprep.subr.bf16.mxu0 %v7770
        %11239 = vmatpush1.bf16.xpose.msra.mxu0 %v7769
        %11240 = vmatprep.subr.bf16.mxu0 %v8505
        %11241 = vmatpush2.bf16.xpose.msra.mxu0 %v8504
        %11242 = vmatprep.subr.bf16.mxu0 %v8456
        %11243 = vmatpush2.bf16.xpose.msra.mxu0 %v8455
        %11244 = vmatprep.subr.bf16.mxu0 %v8407
        %11245 = vmatpush2.bf16.xpose.msra.mxu0 %v8406
        %11246 = vmatprep.subr.bf16.mxu0 %v8358
        %11247 = vmatpush2.bf16.xpose.msra.mxu0 %v8357
        %11248 = vmatprep.subr.bf16.mxu0 %v8309
        %11249 = vmatpush2.bf16.xpose.msra.mxu0 %v8308
        %11250 = vmatprep.subr.bf16.mxu0 %v8260
        %11251 = vmatpush2.bf16.xpose.msra.mxu0 %v8259
        %11252 = vmatprep.subr.bf16.mxu0 %v8211
        %11253 = vmatpush2.bf16.xpose.msra.mxu0 %v8210
        %11254 = vmatprep.subr.bf16.mxu0 %v8162
        %11255 = vmatpush2.bf16.xpose.msra.mxu0 %v8161
        %11256 = vmatprep.mubr.bf16.mxu0 %v1932
        %11257 = vmatmul.mubr.bf16.gmra.mxu0 %v1918
        %v11258 = vpop.f32.mrf.mxu0
        %v11259 = vadd.f32 %v11218, %v11258
        %v11260 = vpop.f32.mrf.mxu0
        %v11261 = vadd.f32 %v11220, %v11260
        %v11262 = vpop.f32.mrf.mxu0
        %v11263 = vpop.f32.mrf.mxu0
        %11264 = vdwg.mxu0
        %11265 = vmatprep.subr.bf16.mxu0 %v8115
        %11266 = vmatpush1.bf16.xpose.msra.mxu0 %v8114
        %11267 = vmatprep.subr.bf16.mxu0 %v8066
        %11268 = vmatpush1.bf16.xpose.msra.mxu0 %v8065
        %11269 = vmatprep.subr.bf16.mxu0 %v8017
        %11270 = vmatpush1.bf16.xpose.msra.mxu0 %v8016
        %11271 = vmatprep.subr.bf16.mxu0 %v7968
        %11272 = vmatpush1.bf16.xpose.msra.mxu0 %v7967
        %11273 = vmatprep.subr.bf16.mxu0 %v7919
        %11274 = vmatpush1.bf16.xpose.msra.mxu0 %v7918
        %11275 = vmatprep.subr.bf16.mxu0 %v7870
        %11276 = vmatpush1.bf16.xpose.msra.mxu0 %v7869
        %11277 = vmatprep.subr.bf16.mxu0 %v7821
        %11278 = vmatpush1.bf16.xpose.msra.mxu0 %v7820
        %11279 = vmatprep.subr.bf16.mxu0 %v7772
        %11280 = vmatpush1.bf16.xpose.msra.mxu0 %v7771
        %11281 = vmatprep.subr.bf16.mxu0 %v8507
        %11282 = vmatpush2.bf16.xpose.msra.mxu0 %v8506
        %11283 = vmatprep.subr.bf16.mxu0 %v8458
        %11284 = vmatpush2.bf16.xpose.msra.mxu0 %v8457
        %11285 = vmatprep.subr.bf16.mxu0 %v8409
        %11286 = vmatpush2.bf16.xpose.msra.mxu0 %v8408
        %11287 = vmatprep.subr.bf16.mxu0 %v8360
        %11288 = vmatpush2.bf16.xpose.msra.mxu0 %v8359
        %11289 = vmatprep.subr.bf16.mxu0 %v8311
        %11290 = vmatpush2.bf16.xpose.msra.mxu0 %v8310
        %11291 = vmatprep.subr.bf16.mxu0 %v8262
        %11292 = vmatpush2.bf16.xpose.msra.mxu0 %v8261
        %11293 = vmatprep.subr.bf16.mxu0 %v8213
        %11294 = vmatpush2.bf16.xpose.msra.mxu0 %v8212
        %11295 = vmatprep.subr.bf16.mxu0 %v8164
        %11296 = vmatpush2.bf16.xpose.msra.mxu0 %v8163
        %11297 = vmatprep.mubr.bf16.mxu0 %v1936
        %11298 = vmatmul.mubr.bf16.gmra.mxu0 %v1934
        %v11299 = vpop.f32.mrf.mxu0
        %v11300 = vadd.f32 %v11259, %v11299
        %v11301 = vpop.f32.mrf.mxu0
        %v11302 = vadd.f32 %v11261, %v11301
        %v11303 = vpop.f32.mrf.mxu0
        %v11304 = vpop.f32.mrf.mxu0
        %11305 = vdwg.mxu0
        %11306 = vmatprep.subr.bf16.mxu0 %v8117
        %11307 = vmatpush1.bf16.xpose.msra.mxu0 %v8116
        %11308 = vmatprep.subr.bf16.mxu0 %v8068
        %11309 = vmatpush1.bf16.xpose.msra.mxu0 %v8067
        %11310 = vmatprep.subr.bf16.mxu0 %v8019
        %11311 = vmatpush1.bf16.xpose.msra.mxu0 %v8018
        %11312 = vmatprep.subr.bf16.mxu0 %v7970
        %11313 = vmatpush1.bf16.xpose.msra.mxu0 %v7969
        %11314 = vmatprep.subr.bf16.mxu0 %v7921
        %11315 = vmatpush1.bf16.xpose.msra.mxu0 %v7920
        %11316 = vmatprep.subr.bf16.mxu0 %v7872
        %11317 = vmatpush1.bf16.xpose.msra.mxu0 %v7871
        %11318 = vmatprep.subr.bf16.mxu0 %v7823
        %11319 = vmatpush1.bf16.xpose.msra.mxu0 %v7822
        %11320 = vmatprep.subr.bf16.mxu0 %v7774
        %11321 = vmatpush1.bf16.xpose.msra.mxu0 %v7773
        %11322 = vmatprep.subr.bf16.mxu0 %v8509
        %11323 = vmatpush2.bf16.xpose.msra.mxu0 %v8508
        %11324 = vmatprep.subr.bf16.mxu0 %v8460
        %11325 = vmatpush2.bf16.xpose.msra.mxu0 %v8459
        %11326 = vmatprep.subr.bf16.mxu0 %v8411
        %11327 = vmatpush2.bf16.xpose.msra.mxu0 %v8410
        %11328 = vmatprep.subr.bf16.mxu0 %v8362
        %11329 = vmatpush2.bf16.xpose.msra.mxu0 %v8361
        %11330 = vmatprep.subr.bf16.mxu0 %v8313
        %11331 = vmatpush2.bf16.xpose.msra.mxu0 %v8312
        %11332 = vmatprep.subr.bf16.mxu0 %v8264
        %11333 = vmatpush2.bf16.xpose.msra.mxu0 %v8263
        %11334 = vmatprep.subr.bf16.mxu0 %v8215
        %11335 = vmatpush2.bf16.xpose.msra.mxu0 %v8214
        %11336 = vmatprep.subr.bf16.mxu0 %v8166
        %11337 = vmatpush2.bf16.xpose.msra.mxu0 %v8165
        %11338 = vmatprep.mubr.bf16.mxu0 %v1974
        %11339 = vmatmul.mubr.bf16.gmra.mxu0 %v1960
        %v11340 = vpop.f32.mrf.mxu0
        %v11341 = vadd.f32 %v11300, %v11340
        %v11342 = vpop.f32.mrf.mxu0
        %v11343 = vadd.f32 %v11302, %v11342
        %v11344 = vpop.f32.mrf.mxu0
        %v11345 = vpop.f32.mrf.mxu0
        %11346 = vdwg.mxu0
        %11347 = vmatprep.subr.bf16.mxu0 %v8119
        %11348 = vmatpush1.bf16.xpose.msra.mxu0 %v8118
        %11349 = vmatprep.subr.bf16.mxu0 %v8070
        %11350 = vmatpush1.bf16.xpose.msra.mxu0 %v8069
        %11351 = vmatprep.subr.bf16.mxu0 %v8021
        %11352 = vmatpush1.bf16.xpose.msra.mxu0 %v8020
        %11353 = vmatprep.subr.bf16.mxu0 %v7972
        %11354 = vmatpush1.bf16.xpose.msra.mxu0 %v7971
        %11355 = vmatprep.subr.bf16.mxu0 %v7923
        %11356 = vmatpush1.bf16.xpose.msra.mxu0 %v7922
        %11357 = vmatprep.subr.bf16.mxu0 %v7874
        %11358 = vmatpush1.bf16.xpose.msra.mxu0 %v7873
        %11359 = vmatprep.subr.bf16.mxu0 %v7825
        %11360 = vmatpush1.bf16.xpose.msra.mxu0 %v7824
        %11361 = vmatprep.subr.bf16.mxu0 %v7776
        %11362 = vmatpush1.bf16.xpose.msra.mxu0 %v7775
        %11363 = vmatprep.subr.bf16.mxu0 %v8511
        %11364 = vmatpush2.bf16.xpose.msra.mxu0 %v8510
        %11365 = vmatprep.subr.bf16.mxu0 %v8462
        %11366 = vmatpush2.bf16.xpose.msra.mxu0 %v8461
        %11367 = vmatprep.subr.bf16.mxu0 %v8413
        %11368 = vmatpush2.bf16.xpose.msra.mxu0 %v8412
        %11369 = vmatprep.subr.bf16.mxu0 %v8364
        %11370 = vmatpush2.bf16.xpose.msra.mxu0 %v8363
        %11371 = vmatprep.subr.bf16.mxu0 %v8315
        %11372 = vmatpush2.bf16.xpose.msra.mxu0 %v8314
        %11373 = vmatprep.subr.bf16.mxu0 %v8266
        %11374 = vmatpush2.bf16.xpose.msra.mxu0 %v8265
        %11375 = vmatprep.subr.bf16.mxu0 %v8217
        %11376 = vmatpush2.bf16.xpose.msra.mxu0 %v8216
        %11377 = vmatprep.subr.bf16.mxu0 %v8168
        %11378 = vmatpush2.bf16.xpose.msra.mxu0 %v8167
        %11379 = vmatprep.mubr.bf16.mxu0 %v1984
        %11380 = vmatmul.mubr.bf16.gmra.mxu0 %v1982
        %v11381 = vpop.f32.mrf.mxu0
        %v11382 = vadd.f32 %v11341, %v11381
        %v11383 = vpop.f32.mrf.mxu0
        %v11384 = vadd.f32 %v11343, %v11383
        %v11385 = vpop.f32.mrf.mxu0
        %v11386 = vpop.f32.mrf.mxu0
        %11387 = vdwg.mxu0
        %11388 = vmatprep.subr.bf16.mxu0 %v8121
        %11389 = vmatpush1.bf16.xpose.msra.mxu0 %v8120
        %11390 = vmatprep.subr.bf16.mxu0 %v8072
        %11391 = vmatpush1.bf16.xpose.msra.mxu0 %v8071
        %11392 = vmatprep.subr.bf16.mxu0 %v8023
        %11393 = vmatpush1.bf16.xpose.msra.mxu0 %v8022
        %11394 = vmatprep.subr.bf16.mxu0 %v7974
        %11395 = vmatpush1.bf16.xpose.msra.mxu0 %v7973
        %11396 = vmatprep.subr.bf16.mxu0 %v7925
        %11397 = vmatpush1.bf16.xpose.msra.mxu0 %v7924
        %11398 = vmatprep.subr.bf16.mxu0 %v7876
        %11399 = vmatpush1.bf16.xpose.msra.mxu0 %v7875
        %11400 = vmatprep.subr.bf16.mxu0 %v7827
        %11401 = vmatpush1.bf16.xpose.msra.mxu0 %v7826
        %11402 = vmatprep.subr.bf16.mxu0 %v7778
        %11403 = vmatpush1.bf16.xpose.msra.mxu0 %v7777
        %11404 = vmatprep.subr.bf16.mxu0 %v8513
        %11405 = vmatpush2.bf16.xpose.msra.mxu0 %v8512
        %11406 = vmatprep.subr.bf16.mxu0 %v8464
        %11407 = vmatpush2.bf16.xpose.msra.mxu0 %v8463
        %11408 = vmatprep.subr.bf16.mxu0 %v8415
        %11409 = vmatpush2.bf16.xpose.msra.mxu0 %v8414
        %11410 = vmatprep.subr.bf16.mxu0 %v8366
        %11411 = vmatpush2.bf16.xpose.msra.mxu0 %v8365
        %11412 = vmatprep.subr.bf16.mxu0 %v8317
        %11413 = vmatpush2.bf16.xpose.msra.mxu0 %v8316
        %11414 = vmatprep.subr.bf16.mxu0 %v8268
        %11415 = vmatpush2.bf16.xpose.msra.mxu0 %v8267
        %11416 = vmatprep.subr.bf16.mxu0 %v8219
        %11417 = vmatpush2.bf16.xpose.msra.mxu0 %v8218
        %11418 = vmatprep.subr.bf16.mxu0 %v8170
        %11419 = vmatpush2.bf16.xpose.msra.mxu0 %v8169
        %11420 = vmatprep.mubr.bf16.mxu0 %v1981
        %11421 = vmatmul.mubr.bf16.gmra.mxu0 %v1967
        %v11422 = vpop.f32.mrf.mxu0
        %v11423 = vadd.f32 %v11382, %v11422
        %v11424 = vpop.f32.mrf.mxu0
        %v11425 = vadd.f32 %v11384, %v11424
        %v11426 = vpop.f32.mrf.mxu0
        %v11427 = vpop.f32.mrf.mxu0
        %11428 = vdwg.mxu0
        %11429 = vmatprep.subr.bf16.mxu0 %v8123
        %11430 = vmatpush1.bf16.xpose.msra.mxu0 %v8122
        %11431 = vmatprep.subr.bf16.mxu0 %v8074
        %11432 = vmatpush1.bf16.xpose.msra.mxu0 %v8073
        %11433 = vmatprep.subr.bf16.mxu0 %v8025
        %11434 = vmatpush1.bf16.xpose.msra.mxu0 %v8024
        %11435 = vmatprep.subr.bf16.mxu0 %v7976
        %11436 = vmatpush1.bf16.xpose.msra.mxu0 %v7975
        %11437 = vmatprep.subr.bf16.mxu0 %v7927
        %11438 = vmatpush1.bf16.xpose.msra.mxu0 %v7926
        %11439 = vmatprep.subr.bf16.mxu0 %v7878
        %11440 = vmatpush1.bf16.xpose.msra.mxu0 %v7877
        %11441 = vmatprep.subr.bf16.mxu0 %v7829
        %11442 = vmatpush1.bf16.xpose.msra.mxu0 %v7828
        %11443 = vmatprep.subr.bf16.mxu0 %v7780
        %11444 = vmatpush1.bf16.xpose.msra.mxu0 %v7779
        %11445 = vmatprep.subr.bf16.mxu0 %v8515
        %11446 = vmatpush2.bf16.xpose.msra.mxu0 %v8514
        %11447 = vmatprep.subr.bf16.mxu0 %v8466
        %11448 = vmatpush2.bf16.xpose.msra.mxu0 %v8465
        %11449 = vmatprep.subr.bf16.mxu0 %v8417
        %11450 = vmatpush2.bf16.xpose.msra.mxu0 %v8416
        %11451 = vmatprep.subr.bf16.mxu0 %v8368
        %11452 = vmatpush2.bf16.xpose.msra.mxu0 %v8367
        %11453 = vmatprep.subr.bf16.mxu0 %v8319
        %11454 = vmatpush2.bf16.xpose.msra.mxu0 %v8318
        %11455 = vmatprep.subr.bf16.mxu0 %v8270
        %11456 = vmatpush2.bf16.xpose.msra.mxu0 %v8269
        %11457 = vmatprep.subr.bf16.mxu0 %v8221
        %11458 = vmatpush2.bf16.xpose.msra.mxu0 %v8220
        %11459 = vmatprep.subr.bf16.mxu0 %v8172
        %11460 = vmatpush2.bf16.xpose.msra.mxu0 %v8171
        %11461 = vmatprep.mubr.bf16.mxu0 %v1985
        %11462 = vmatmul.mubr.bf16.gmra.mxu0 %v1983
        %v11463 = vpop.f32.mrf.mxu0
        %v11464 = vadd.f32 %v11423, %v11463
        %v11465 = vpop.f32.mrf.mxu0
        %v11466 = vadd.f32 %v11425, %v11465
        %v11467 = vpop.f32.mrf.mxu0
        %v11468 = vpop.f32.mrf.mxu0
        %11469 = vdwg.mxu0
        %11470 = vmatprep.subr.bf16.mxu0 %v8125
        %11471 = vmatpush1.bf16.xpose.msra.mxu0 %v8124
        %11472 = vmatprep.subr.bf16.mxu0 %v8076
        %11473 = vmatpush1.bf16.xpose.msra.mxu0 %v8075
        %11474 = vmatprep.subr.bf16.mxu0 %v8027
        %11475 = vmatpush1.bf16.xpose.msra.mxu0 %v8026
        %11476 = vmatprep.subr.bf16.mxu0 %v7978
        %11477 = vmatpush1.bf16.xpose.msra.mxu0 %v7977
        %11478 = vmatprep.subr.bf16.mxu0 %v7929
        %11479 = vmatpush1.bf16.xpose.msra.mxu0 %v7928
        %11480 = vmatprep.subr.bf16.mxu0 %v7880
        %11481 = vmatpush1.bf16.xpose.msra.mxu0 %v7879
        %11482 = vmatprep.subr.bf16.mxu0 %v7831
        %11483 = vmatpush1.bf16.xpose.msra.mxu0 %v7830
        %11484 = vmatprep.subr.bf16.mxu0 %v7782
        %11485 = vmatpush1.bf16.xpose.msra.mxu0 %v7781
        %11486 = vmatprep.subr.bf16.mxu0 %v8517
        %11487 = vmatpush2.bf16.xpose.msra.mxu0 %v8516
        %11488 = vmatprep.subr.bf16.mxu0 %v8468
        %11489 = vmatpush2.bf16.xpose.msra.mxu0 %v8467
        %11490 = vmatprep.subr.bf16.mxu0 %v8419
        %11491 = vmatpush2.bf16.xpose.msra.mxu0 %v8418
        %11492 = vmatprep.subr.bf16.mxu0 %v8370
        %11493 = vmatpush2.bf16.xpose.msra.mxu0 %v8369
        %11494 = vmatprep.subr.bf16.mxu0 %v8321
        %11495 = vmatpush2.bf16.xpose.msra.mxu0 %v8320
        %11496 = vmatprep.subr.bf16.mxu0 %v8272
        %11497 = vmatpush2.bf16.xpose.msra.mxu0 %v8271
        %11498 = vmatprep.subr.bf16.mxu0 %v8223
        %11499 = vmatpush2.bf16.xpose.msra.mxu0 %v8222
        %11500 = vmatprep.subr.bf16.mxu0 %v8174
        %11501 = vmatpush2.bf16.xpose.msra.mxu0 %v8173
        %11502 = vmatprep.mubr.bf16.mxu0 %v2023
        %11503 = vmatmul.mubr.bf16.gmra.mxu0 %v2009
        %v11504 = vpop.f32.mrf.mxu0
        %v11505 = vadd.f32 %v11464, %v11504
        %v11506 = vpop.f32.mrf.mxu0
        %v11507 = vadd.f32 %v11466, %v11506
        %v11508 = vpop.f32.mrf.mxu0
        %v11509 = vpop.f32.mrf.mxu0
        %11510 = vdwg.mxu0
        %11511 = vmatprep.subr.bf16.mxu0 %v8127
        %11512 = vmatpush1.bf16.xpose.msra.mxu0 %v8126
        %11513 = vmatprep.subr.bf16.mxu0 %v8078
        %11514 = vmatpush1.bf16.xpose.msra.mxu0 %v8077
        %11515 = vmatprep.subr.bf16.mxu0 %v8029
        %11516 = vmatpush1.bf16.xpose.msra.mxu0 %v8028
        %11517 = vmatprep.subr.bf16.mxu0 %v7980
        %11518 = vmatpush1.bf16.xpose.msra.mxu0 %v7979
        %11519 = vmatprep.subr.bf16.mxu0 %v7931
        %11520 = vmatpush1.bf16.xpose.msra.mxu0 %v7930
        %11521 = vmatprep.subr.bf16.mxu0 %v7882
        %11522 = vmatpush1.bf16.xpose.msra.mxu0 %v7881
        %11523 = vmatprep.subr.bf16.mxu0 %v7833
        %11524 = vmatpush1.bf16.xpose.msra.mxu0 %v7832
        %11525 = vmatprep.subr.bf16.mxu0 %v7784
        %11526 = vmatpush1.bf16.xpose.msra.mxu0 %v7783
        %11527 = vmatprep.subr.bf16.mxu0 %v8519
        %11528 = vmatpush2.bf16.xpose.msra.mxu0 %v8518
        %11529 = vmatprep.subr.bf16.mxu0 %v8470
        %11530 = vmatpush2.bf16.xpose.msra.mxu0 %v8469
        %11531 = vmatprep.subr.bf16.mxu0 %v8421
        %11532 = vmatpush2.bf16.xpose.msra.mxu0 %v8420
        %11533 = vmatprep.subr.bf16.mxu0 %v8372
        %11534 = vmatpush2.bf16.xpose.msra.mxu0 %v8371
        %11535 = vmatprep.subr.bf16.mxu0 %v8323
        %11536 = vmatpush2.bf16.xpose.msra.mxu0 %v8322
        %11537 = vmatprep.subr.bf16.mxu0 %v8274
        %11538 = vmatpush2.bf16.xpose.msra.mxu0 %v8273
        %11539 = vmatprep.subr.bf16.mxu0 %v8225
        %11540 = vmatpush2.bf16.xpose.msra.mxu0 %v8224
        %11541 = vmatprep.subr.bf16.mxu0 %v8176
        %11542 = vmatpush2.bf16.xpose.msra.mxu0 %v8175
        %11543 = vmatprep.mubr.bf16.mxu0 %v2033
        %11544 = vmatmul.mubr.bf16.gmra.mxu0 %v2031
        %v11545 = vpop.f32.mrf.mxu0
        %v11546 = vadd.f32 %v11505, %v11545
        %v11547 = vpop.f32.mrf.mxu0
        %v11548 = vadd.f32 %v11507, %v11547
        %v11549 = vpop.f32.mrf.mxu0
        %v11550 = vpop.f32.mrf.mxu0
        %11551 = vdwg.mxu0
        %11552 = vmatprep.subr.bf16.mxu0 %v8129
        %11553 = vmatpush1.bf16.xpose.msra.mxu0 %v8128
        %11554 = vmatprep.subr.bf16.mxu0 %v8080
        %11555 = vmatpush1.bf16.xpose.msra.mxu0 %v8079
        %11556 = vmatprep.subr.bf16.mxu0 %v8031
        %11557 = vmatpush1.bf16.xpose.msra.mxu0 %v8030
        %11558 = vmatprep.subr.bf16.mxu0 %v7982
        %11559 = vmatpush1.bf16.xpose.msra.mxu0 %v7981
        %11560 = vmatprep.subr.bf16.mxu0 %v7933
        %11561 = vmatpush1.bf16.xpose.msra.mxu0 %v7932
        %11562 = vmatprep.subr.bf16.mxu0 %v7884
        %11563 = vmatpush1.bf16.xpose.msra.mxu0 %v7883
        %11564 = vmatprep.subr.bf16.mxu0 %v7835
        %11565 = vmatpush1.bf16.xpose.msra.mxu0 %v7834
        %11566 = vmatprep.subr.bf16.mxu0 %v7786
        %11567 = vmatpush1.bf16.xpose.msra.mxu0 %v7785
        %11568 = vmatprep.subr.bf16.mxu0 %v8521
        %11569 = vmatpush2.bf16.xpose.msra.mxu0 %v8520
        %11570 = vmatprep.subr.bf16.mxu0 %v8472
        %11571 = vmatpush2.bf16.xpose.msra.mxu0 %v8471
        %11572 = vmatprep.subr.bf16.mxu0 %v8423
        %11573 = vmatpush2.bf16.xpose.msra.mxu0 %v8422
        %11574 = vmatprep.subr.bf16.mxu0 %v8374
        %11575 = vmatpush2.bf16.xpose.msra.mxu0 %v8373
        %11576 = vmatprep.subr.bf16.mxu0 %v8325
        %11577 = vmatpush2.bf16.xpose.msra.mxu0 %v8324
        %11578 = vmatprep.subr.bf16.mxu0 %v8276
        %11579 = vmatpush2.bf16.xpose.msra.mxu0 %v8275
        %11580 = vmatprep.subr.bf16.mxu0 %v8227
        %11581 = vmatpush2.bf16.xpose.msra.mxu0 %v8226
        %11582 = vmatprep.subr.bf16.mxu0 %v8178
        %11583 = vmatpush2.bf16.xpose.msra.mxu0 %v8177
        %11584 = vmatprep.mubr.bf16.mxu0 %v2030
        %11585 = vmatmul.mubr.bf16.gmra.mxu0 %v2016
        %v11586 = vpop.f32.mrf.mxu0
        %v11587 = vadd.f32 %v11546, %v11586
        %v11588 = vpop.f32.mrf.mxu0
        %v11589 = vadd.f32 %v11548, %v11588
        %v11590 = vpop.f32.mrf.mxu0
        %v11591 = vpop.f32.mrf.mxu0
        %11592 = vdwg.mxu0
        %11593 = vmatprep.subr.bf16.mxu0 %v8131
        %11594 = vmatpush1.bf16.xpose.msra.mxu0 %v8130
        %11595 = vmatprep.subr.bf16.mxu0 %v8082
        %11596 = vmatpush1.bf16.xpose.msra.mxu0 %v8081
        %11597 = vmatprep.subr.bf16.mxu0 %v8033
        %11598 = vmatpush1.bf16.xpose.msra.mxu0 %v8032
        %11599 = vmatprep.subr.bf16.mxu0 %v7984
        %11600 = vmatpush1.bf16.xpose.msra.mxu0 %v7983
        %11601 = vmatprep.subr.bf16.mxu0 %v7935
        %11602 = vmatpush1.bf16.xpose.msra.mxu0 %v7934
        %11603 = vmatprep.subr.bf16.mxu0 %v7886
        %11604 = vmatpush1.bf16.xpose.msra.mxu0 %v7885
        %11605 = vmatprep.subr.bf16.mxu0 %v7837
        %11606 = vmatpush1.bf16.xpose.msra.mxu0 %v7836
        %11607 = vmatprep.subr.bf16.mxu0 %v7788
        %11608 = vmatpush1.bf16.xpose.msra.mxu0 %v7787
        %11609 = vmatprep.subr.bf16.mxu0 %v8523
        %11610 = vmatpush2.bf16.xpose.msra.mxu0 %v8522
        %11611 = vmatprep.subr.bf16.mxu0 %v8474
        %11612 = vmatpush2.bf16.xpose.msra.mxu0 %v8473
        %11613 = vmatprep.subr.bf16.mxu0 %v8425
        %11614 = vmatpush2.bf16.xpose.msra.mxu0 %v8424
        %11615 = vmatprep.subr.bf16.mxu0 %v8376
        %11616 = vmatpush2.bf16.xpose.msra.mxu0 %v8375
        %11617 = vmatprep.subr.bf16.mxu0 %v8327
        %11618 = vmatpush2.bf16.xpose.msra.mxu0 %v8326
        %11619 = vmatprep.subr.bf16.mxu0 %v8278
        %11620 = vmatpush2.bf16.xpose.msra.mxu0 %v8277
        %11621 = vmatprep.subr.bf16.mxu0 %v8229
        %11622 = vmatpush2.bf16.xpose.msra.mxu0 %v8228
        %11623 = vmatprep.subr.bf16.mxu0 %v8180
        %11624 = vmatpush2.bf16.xpose.msra.mxu0 %v8179
        %11625 = vmatprep.mubr.bf16.mxu0 %v2034
        %11626 = vmatmul.mubr.bf16.gmra.mxu0 %v2032
        %v11627 = vpop.f32.mrf.mxu0
        %v11628 = vadd.f32 %v11587, %v11627
        %v11629 = vpop.f32.mrf.mxu0
        %v11630 = vadd.f32 %v11589, %v11629
        %v11631 = vpop.f32.mrf.mxu0
        %v11632 = vpop.f32.mrf.mxu0
        %11633 = vdwg.mxu0
        %11634 = vmatprep.subr.bf16.mxu0 %v8133
        %11635 = vmatpush1.bf16.xpose.msra.mxu0 %v8132
        %11636 = vmatprep.subr.bf16.mxu0 %v8084
        %11637 = vmatpush1.bf16.xpose.msra.mxu0 %v8083
        %11638 = vmatprep.subr.bf16.mxu0 %v8035
        %11639 = vmatpush1.bf16.xpose.msra.mxu0 %v8034
        %11640 = vmatprep.subr.bf16.mxu0 %v7986
        %11641 = vmatpush1.bf16.xpose.msra.mxu0 %v7985
        %11642 = vmatprep.subr.bf16.mxu0 %v7937
        %11643 = vmatpush1.bf16.xpose.msra.mxu0 %v7936
        %11644 = vmatprep.subr.bf16.mxu0 %v7888
        %11645 = vmatpush1.bf16.xpose.msra.mxu0 %v7887
        %11646 = vmatprep.subr.bf16.mxu0 %v7839
        %11647 = vmatpush1.bf16.xpose.msra.mxu0 %v7838
        %11648 = vmatprep.subr.bf16.mxu0 %v7790
        %11649 = vmatpush1.bf16.xpose.msra.mxu0 %v7789
        %11650 = vmatprep.subr.bf16.mxu0 %v8525
        %11651 = vmatpush2.bf16.xpose.msra.mxu0 %v8524
        %11652 = vmatprep.subr.bf16.mxu0 %v8476
        %11653 = vmatpush2.bf16.xpose.msra.mxu0 %v8475
        %11654 = vmatprep.subr.bf16.mxu0 %v8427
        %11655 = vmatpush2.bf16.xpose.msra.mxu0 %v8426
        %11656 = vmatprep.subr.bf16.mxu0 %v8378
        %11657 = vmatpush2.bf16.xpose.msra.mxu0 %v8377
        %11658 = vmatprep.subr.bf16.mxu0 %v8329
        %11659 = vmatpush2.bf16.xpose.msra.mxu0 %v8328
        %11660 = vmatprep.subr.bf16.mxu0 %v8280
        %11661 = vmatpush2.bf16.xpose.msra.mxu0 %v8279
        %11662 = vmatprep.subr.bf16.mxu0 %v8231
        %11663 = vmatpush2.bf16.xpose.msra.mxu0 %v8230
        %11664 = vmatprep.subr.bf16.mxu0 %v8182
        %11665 = vmatpush2.bf16.xpose.msra.mxu0 %v8181
        %11666 = vmatprep.mubr.bf16.mxu0 %v2072
        %11667 = vmatmul.mubr.bf16.gmra.mxu0 %v2058
        %v11668 = vpop.f32.mrf.mxu0
        %v11669 = vadd.f32 %v11628, %v11668
        %v11670 = vpop.f32.mrf.mxu0
        %v11671 = vadd.f32 %v11630, %v11670
        %v11672 = vpop.f32.mrf.mxu0
        %v11673 = vpop.f32.mrf.mxu0
        %11674 = vdwg.mxu0
        %11675 = vmatprep.subr.bf16.mxu0 %v8135
        %11676 = vmatpush1.bf16.xpose.msra.mxu0 %v8134
        %11677 = vmatprep.subr.bf16.mxu0 %v8086
        %11678 = vmatpush1.bf16.xpose.msra.mxu0 %v8085
        %11679 = vmatprep.subr.bf16.mxu0 %v8037
        %11680 = vmatpush1.bf16.xpose.msra.mxu0 %v8036
        %11681 = vmatprep.subr.bf16.mxu0 %v7988
        %11682 = vmatpush1.bf16.xpose.msra.mxu0 %v7987
        %11683 = vmatprep.subr.bf16.mxu0 %v7939
        %11684 = vmatpush1.bf16.xpose.msra.mxu0 %v7938
        %11685 = vmatprep.subr.bf16.mxu0 %v7890
        %11686 = vmatpush1.bf16.xpose.msra.mxu0 %v7889
        %11687 = vmatprep.subr.bf16.mxu0 %v7841
        %11688 = vmatpush1.bf16.xpose.msra.mxu0 %v7840
        %11689 = vmatprep.subr.bf16.mxu0 %v7792
        %11690 = vmatpush1.bf16.xpose.msra.mxu0 %v7791
        %11691 = vmatprep.subr.bf16.mxu0 %v8527
        %11692 = vmatpush2.bf16.xpose.msra.mxu0 %v8526
        %11693 = vmatprep.subr.bf16.mxu0 %v8478
        %11694 = vmatpush2.bf16.xpose.msra.mxu0 %v8477
        %11695 = vmatprep.subr.bf16.mxu0 %v8429
        %11696 = vmatpush2.bf16.xpose.msra.mxu0 %v8428
        %11697 = vmatprep.subr.bf16.mxu0 %v8380
        %11698 = vmatpush2.bf16.xpose.msra.mxu0 %v8379
        %11699 = vmatprep.subr.bf16.mxu0 %v8331
        %11700 = vmatpush2.bf16.xpose.msra.mxu0 %v8330
        %11701 = vmatprep.subr.bf16.mxu0 %v8282
        %11702 = vmatpush2.bf16.xpose.msra.mxu0 %v8281
        %11703 = vmatprep.subr.bf16.mxu0 %v8233
        %11704 = vmatpush2.bf16.xpose.msra.mxu0 %v8232
        %11705 = vmatprep.subr.bf16.mxu0 %v8184
        %11706 = vmatpush2.bf16.xpose.msra.mxu0 %v8183
        %11707 = vmatprep.mubr.bf16.mxu0 %v2082
        %11708 = vmatmul.mubr.bf16.gmra.mxu0 %v2080
        %v11709 = vpop.f32.mrf.mxu0
        %v11710 = vadd.f32 %v11669, %v11709
        %v11711 = vpop.f32.mrf.mxu0
        %v11712 = vadd.f32 %v11671, %v11711
        %v11713 = vpop.f32.mrf.mxu0
        %v11714 = vpop.f32.mrf.mxu0
        %11715 = vdwg.mxu0
        %11716 = vmatprep.subr.bf16.mxu0 %v8137
        %11717 = vmatpush1.bf16.xpose.msra.mxu0 %v8136
        %11718 = vmatprep.subr.bf16.mxu0 %v8088
        %11719 = vmatpush1.bf16.xpose.msra.mxu0 %v8087
        %11720 = vmatprep.subr.bf16.mxu0 %v8039
        %11721 = vmatpush1.bf16.xpose.msra.mxu0 %v8038
        %11722 = vmatprep.subr.bf16.mxu0 %v7990
        %11723 = vmatpush1.bf16.xpose.msra.mxu0 %v7989
        %11724 = vmatprep.subr.bf16.mxu0 %v7941
        %11725 = vmatpush1.bf16.xpose.msra.mxu0 %v7940
        %11726 = vmatprep.subr.bf16.mxu0 %v7892
        %11727 = vmatpush1.bf16.xpose.msra.mxu0 %v7891
        %11728 = vmatprep.subr.bf16.mxu0 %v7843
        %11729 = vmatpush1.bf16.xpose.msra.mxu0 %v7842
        %11730 = vmatprep.subr.bf16.mxu0 %v7794
        %11731 = vmatpush1.bf16.xpose.msra.mxu0 %v7793
        %11732 = vmatprep.subr.bf16.mxu0 %v8529
        %11733 = vmatpush2.bf16.xpose.msra.mxu0 %v8528
        %11734 = vmatprep.subr.bf16.mxu0 %v8480
        %11735 = vmatpush2.bf16.xpose.msra.mxu0 %v8479
        %11736 = vmatprep.subr.bf16.mxu0 %v8431
        %11737 = vmatpush2.bf16.xpose.msra.mxu0 %v8430
        %11738 = vmatprep.subr.bf16.mxu0 %v8382
        %11739 = vmatpush2.bf16.xpose.msra.mxu0 %v8381
        %11740 = vmatprep.subr.bf16.mxu0 %v8333
        %11741 = vmatpush2.bf16.xpose.msra.mxu0 %v8332
        %11742 = vmatprep.subr.bf16.mxu0 %v8284
        %11743 = vmatpush2.bf16.xpose.msra.mxu0 %v8283
        %11744 = vmatprep.subr.bf16.mxu0 %v8235
        %11745 = vmatpush2.bf16.xpose.msra.mxu0 %v8234
        %11746 = vmatprep.subr.bf16.mxu0 %v8186
        %11747 = vmatpush2.bf16.xpose.msra.mxu0 %v8185
        %11748 = vmatprep.mubr.bf16.mxu0 %v2079
        %11749 = vmatmul.mubr.bf16.gmra.mxu0 %v2065
        %v11750 = vpop.f32.mrf.mxu0
        %v11751 = vadd.f32 %v11710, %v11750
        %v11752 = vpop.f32.mrf.mxu0
        %v11753 = vadd.f32 %v11712, %v11752
        %v11754 = vpop.f32.mrf.mxu0
        %v11755 = vpop.f32.mrf.mxu0
        %11756 = vdwg.mxu0
        %11757 = vmatprep.subr.bf16.mxu0 %v8139
        %11758 = vmatpush1.bf16.xpose.msra.mxu0 %v8138
        %11759 = vmatprep.subr.bf16.mxu0 %v8090
        %11760 = vmatpush1.bf16.xpose.msra.mxu0 %v8089
        %11761 = vmatprep.subr.bf16.mxu0 %v8041
        %11762 = vmatpush1.bf16.xpose.msra.mxu0 %v8040
        %11763 = vmatprep.subr.bf16.mxu0 %v7992
        %11764 = vmatpush1.bf16.xpose.msra.mxu0 %v7991
        %11765 = vmatprep.subr.bf16.mxu0 %v7943
        %11766 = vmatpush1.bf16.xpose.msra.mxu0 %v7942
        %11767 = vmatprep.subr.bf16.mxu0 %v7894
        %11768 = vmatpush1.bf16.xpose.msra.mxu0 %v7893
        %11769 = vmatprep.subr.bf16.mxu0 %v7845
        %11770 = vmatpush1.bf16.xpose.msra.mxu0 %v7844
        %11771 = vmatprep.subr.bf16.mxu0 %v7796
        %11772 = vmatpush1.bf16.xpose.msra.mxu0 %v7795
        %11773 = vmatprep.subr.bf16.mxu0 %v8531
        %11774 = vmatpush2.bf16.xpose.msra.mxu0 %v8530
        %11775 = vmatprep.subr.bf16.mxu0 %v8482
        %11776 = vmatpush2.bf16.xpose.msra.mxu0 %v8481
        %11777 = vmatprep.subr.bf16.mxu0 %v8433
        %11778 = vmatpush2.bf16.xpose.msra.mxu0 %v8432
        %11779 = vmatprep.subr.bf16.mxu0 %v8384
        %11780 = vmatpush2.bf16.xpose.msra.mxu0 %v8383
        %11781 = vmatprep.subr.bf16.mxu0 %v8335
        %11782 = vmatpush2.bf16.xpose.msra.mxu0 %v8334
        %11783 = vmatprep.subr.bf16.mxu0 %v8286
        %11784 = vmatpush2.bf16.xpose.msra.mxu0 %v8285
        %11785 = vmatprep.subr.bf16.mxu0 %v8237
        %11786 = vmatpush2.bf16.xpose.msra.mxu0 %v8236
        %11787 = vmatprep.subr.bf16.mxu0 %v8188
        %11788 = vmatpush2.bf16.xpose.msra.mxu0 %v8187
        %11789 = vmatprep.mubr.bf16.mxu0 %v2083
        %11790 = vmatmul.mubr.bf16.gmra.mxu0 %v2081
        %v11791 = vpop.f32.mrf.mxu0
        %v11792 = vadd.f32 %v11751, %v11791
        %v11793 = vpop.f32.mrf.mxu0
        %v11794 = vadd.f32 %v11753, %v11793
        %v11795 = vpop.f32.mrf.mxu0
        %v11796 = vpop.f32.mrf.mxu0
        %11797 = vdwg.mxu0
        %11798 = vmatprep.subr.bf16.mxu0 %v8141
        %11799 = vmatpush1.bf16.xpose.msra.mxu0 %v8140
        %11800 = vmatprep.subr.bf16.mxu0 %v8092
        %11801 = vmatpush1.bf16.xpose.msra.mxu0 %v8091
        %11802 = vmatprep.subr.bf16.mxu0 %v8043
        %11803 = vmatpush1.bf16.xpose.msra.mxu0 %v8042
        %11804 = vmatprep.subr.bf16.mxu0 %v7994
        %11805 = vmatpush1.bf16.xpose.msra.mxu0 %v7993
        %11806 = vmatprep.subr.bf16.mxu0 %v7945
        %11807 = vmatpush1.bf16.xpose.msra.mxu0 %v7944
        %11808 = vmatprep.subr.bf16.mxu0 %v7896
        %11809 = vmatpush1.bf16.xpose.msra.mxu0 %v7895
        %11810 = vmatprep.subr.bf16.mxu0 %v7847
        %11811 = vmatpush1.bf16.xpose.msra.mxu0 %v7846
        %11812 = vmatprep.subr.bf16.mxu0 %v7798
        %11813 = vmatpush1.bf16.xpose.msra.mxu0 %v7797
        %11814 = vmatprep.subr.bf16.mxu0 %v8533
        %11815 = vmatpush2.bf16.xpose.msra.mxu0 %v8532
        %11816 = vmatprep.subr.bf16.mxu0 %v8484
        %11817 = vmatpush2.bf16.xpose.msra.mxu0 %v8483
        %11818 = vmatprep.subr.bf16.mxu0 %v8435
        %11819 = vmatpush2.bf16.xpose.msra.mxu0 %v8434
        %11820 = vmatprep.subr.bf16.mxu0 %v8386
        %11821 = vmatpush2.bf16.xpose.msra.mxu0 %v8385
        %11822 = vmatprep.subr.bf16.mxu0 %v8337
        %11823 = vmatpush2.bf16.xpose.msra.mxu0 %v8336
        %11824 = vmatprep.subr.bf16.mxu0 %v8288
        %11825 = vmatpush2.bf16.xpose.msra.mxu0 %v8287
        %11826 = vmatprep.subr.bf16.mxu0 %v8239
        %11827 = vmatpush2.bf16.xpose.msra.mxu0 %v8238
        %11828 = vmatprep.subr.bf16.mxu0 %v8190
        %11829 = vmatpush2.bf16.xpose.msra.mxu0 %v8189
        %11830 = vmatprep.mubr.bf16.mxu0 %v2121
        %11831 = vmatmul.mubr.bf16.gmra.mxu0 %v2107
        %v11832 = vpop.f32.mrf.mxu0
        %v11833 = vadd.f32 %v11792, %v11832
        %v11834 = vpop.f32.mrf.mxu0
        %v11835 = vadd.f32 %v11794, %v11834
        %v11836 = vpop.f32.mrf.mxu0
        %v11837 = vpop.f32.mrf.mxu0
        %11838 = vdwg.mxu0
        %11839 = vmatprep.subr.bf16.mxu0 %v8143
        %11840 = vmatpush1.bf16.xpose.msra.mxu0 %v8142
        %11841 = vmatprep.subr.bf16.mxu0 %v8094
        %11842 = vmatpush1.bf16.xpose.msra.mxu0 %v8093
        %11843 = vmatprep.subr.bf16.mxu0 %v8045
        %11844 = vmatpush1.bf16.xpose.msra.mxu0 %v8044
        %11845 = vmatprep.subr.bf16.mxu0 %v7996
        %11846 = vmatpush1.bf16.xpose.msra.mxu0 %v7995
        %11847 = vmatprep.subr.bf16.mxu0 %v7947
        %11848 = vmatpush1.bf16.xpose.msra.mxu0 %v7946
        %11849 = vmatprep.subr.bf16.mxu0 %v7898
        %11850 = vmatpush1.bf16.xpose.msra.mxu0 %v7897
        %11851 = vmatprep.subr.bf16.mxu0 %v7849
        %11852 = vmatpush1.bf16.xpose.msra.mxu0 %v7848
        %11853 = vmatprep.subr.bf16.mxu0 %v7800
        %11854 = vmatpush1.bf16.xpose.msra.mxu0 %v7799
        %11855 = vmatprep.subr.bf16.mxu0 %v8535
        %11856 = vmatpush2.bf16.xpose.msra.mxu0 %v8534
        %11857 = vmatprep.subr.bf16.mxu0 %v8486
        %11858 = vmatpush2.bf16.xpose.msra.mxu0 %v8485
        %11859 = vmatprep.subr.bf16.mxu0 %v8437
        %11860 = vmatpush2.bf16.xpose.msra.mxu0 %v8436
        %11861 = vmatprep.subr.bf16.mxu0 %v8388
        %11862 = vmatpush2.bf16.xpose.msra.mxu0 %v8387
        %11863 = vmatprep.subr.bf16.mxu0 %v8339
        %11864 = vmatpush2.bf16.xpose.msra.mxu0 %v8338
        %11865 = vmatprep.subr.bf16.mxu0 %v8290
        %11866 = vmatpush2.bf16.xpose.msra.mxu0 %v8289
        %11867 = vmatprep.subr.bf16.mxu0 %v8241
        %11868 = vmatpush2.bf16.xpose.msra.mxu0 %v8240
        %11869 = vmatprep.subr.bf16.mxu0 %v8192
        %11870 = vmatpush2.bf16.xpose.msra.mxu0 %v8191
        %11871 = vmatprep.mubr.bf16.mxu0 %v2131
        %11872 = vmatmul.mubr.bf16.gmra.mxu0 %v2129
        %v11873 = vpop.f32.mrf.mxu0
        %v11874 = vadd.f32 %v11833, %v11873
        %v11875 = vpop.f32.mrf.mxu0
        %v11876 = vadd.f32 %v11835, %v11875
        %v11877 = vpop.f32.mrf.mxu0
        %v11878 = vpop.f32.mrf.mxu0
        %11879 = vdwg.mxu0
        %11880 = vmatprep.subr.bf16.mxu0 %v8145
        %11881 = vmatpush1.bf16.xpose.msra.mxu0 %v8144
        %11882 = vmatprep.subr.bf16.mxu0 %v8096
        %11883 = vmatpush1.bf16.xpose.msra.mxu0 %v8095
        %11884 = vmatprep.subr.bf16.mxu0 %v8047
        %11885 = vmatpush1.bf16.xpose.msra.mxu0 %v8046
        %11886 = vmatprep.subr.bf16.mxu0 %v7998
        %11887 = vmatpush1.bf16.xpose.msra.mxu0 %v7997
        %11888 = vmatprep.subr.bf16.mxu0 %v7949
        %11889 = vmatpush1.bf16.xpose.msra.mxu0 %v7948
        %11890 = vmatprep.subr.bf16.mxu0 %v7900
        %11891 = vmatpush1.bf16.xpose.msra.mxu0 %v7899
        %11892 = vmatprep.subr.bf16.mxu0 %v7851
        %11893 = vmatpush1.bf16.xpose.msra.mxu0 %v7850
        %11894 = vmatprep.subr.bf16.mxu0 %v7802
        %11895 = vmatpush1.bf16.xpose.msra.mxu0 %v7801
        %11896 = vmatprep.subr.bf16.mxu0 %v8537
        %11897 = vmatpush2.bf16.xpose.msra.mxu0 %v8536
        %11898 = vmatprep.subr.bf16.mxu0 %v8488
        %11899 = vmatpush2.bf16.xpose.msra.mxu0 %v8487
        %11900 = vmatprep.subr.bf16.mxu0 %v8439
        %11901 = vmatpush2.bf16.xpose.msra.mxu0 %v8438
        %11902 = vmatprep.subr.bf16.mxu0 %v8390
        %11903 = vmatpush2.bf16.xpose.msra.mxu0 %v8389
        %11904 = vmatprep.subr.bf16.mxu0 %v8341
        %11905 = vmatpush2.bf16.xpose.msra.mxu0 %v8340
        %11906 = vmatprep.subr.bf16.mxu0 %v8292
        %11907 = vmatpush2.bf16.xpose.msra.mxu0 %v8291
        %11908 = vmatprep.subr.bf16.mxu0 %v8243
        %11909 = vmatpush2.bf16.xpose.msra.mxu0 %v8242
        %11910 = vmatprep.subr.bf16.mxu0 %v8194
        %11911 = vmatpush2.bf16.xpose.msra.mxu0 %v8193
        %11912 = vmatprep.mubr.bf16.mxu0 %v2128
        %11913 = vmatmul.mubr.bf16.gmra.mxu0 %v2114
        %v11914 = vpop.f32.mrf.mxu0
        %v11915 = vadd.f32 %v11874, %v11914
        %v11916 = vpop.f32.mrf.mxu0
        %v11917 = vadd.f32 %v11876, %v11916
        %v11918 = vpop.f32.mrf.mxu0
        %v11919 = vpop.f32.mrf.mxu0
        %11920 = vdwg.mxu0
        %11921 = vmatprep.subr.bf16.mxu0 %v8147
        %11922 = vmatpush1.bf16.xpose.msra.mxu0 %v8146
        %11923 = vmatprep.subr.bf16.mxu0 %v8098
        %11924 = vmatpush1.bf16.xpose.msra.mxu0 %v8097
        %11925 = vmatprep.subr.bf16.mxu0 %v8049
        %11926 = vmatpush1.bf16.xpose.msra.mxu0 %v8048
        %11927 = vmatprep.subr.bf16.mxu0 %v8000
        %11928 = vmatpush1.bf16.xpose.msra.mxu0 %v7999
        %11929 = vmatprep.subr.bf16.mxu0 %v7951
        %11930 = vmatpush1.bf16.xpose.msra.mxu0 %v7950
        %11931 = vmatprep.subr.bf16.mxu0 %v7902
        %11932 = vmatpush1.bf16.xpose.msra.mxu0 %v7901
        %11933 = vmatprep.subr.bf16.mxu0 %v7853
        %11934 = vmatpush1.bf16.xpose.msra.mxu0 %v7852
        %11935 = vmatprep.subr.bf16.mxu0 %v7804
        %11936 = vmatpush1.bf16.xpose.msra.mxu0 %v7803
        %11937 = vmatprep.subr.bf16.mxu0 %v8539
        %11938 = vmatpush2.bf16.xpose.msra.mxu0 %v8538
        %11939 = vmatprep.subr.bf16.mxu0 %v8490
        %11940 = vmatpush2.bf16.xpose.msra.mxu0 %v8489
        %11941 = vmatprep.subr.bf16.mxu0 %v8441
        %11942 = vmatpush2.bf16.xpose.msra.mxu0 %v8440
        %11943 = vmatprep.subr.bf16.mxu0 %v8392
        %11944 = vmatpush2.bf16.xpose.msra.mxu0 %v8391
        %11945 = vmatprep.subr.bf16.mxu0 %v8343
        %11946 = vmatpush2.bf16.xpose.msra.mxu0 %v8342
        %11947 = vmatprep.subr.bf16.mxu0 %v8294
        %11948 = vmatpush2.bf16.xpose.msra.mxu0 %v8293
        %11949 = vmatprep.subr.bf16.mxu0 %v8245
        %11950 = vmatpush2.bf16.xpose.msra.mxu0 %v8244
        %11951 = vmatprep.subr.bf16.mxu0 %v8196
        %11952 = vmatpush2.bf16.xpose.msra.mxu0 %v8195
        %11953 = vmatprep.mubr.bf16.mxu0 %v2132
        %11954 = vmatmul.mubr.bf16.gmra.mxu0 %v2130
        %v11955 = vpop.f32.mrf.mxu0
        %v11956 = vadd.f32 %v11915, %v11955
        %v11957 = vpop.f32.mrf.mxu0
        %v11958 = vadd.f32 %v11917, %v11957
        %v11959 = vpop.f32.mrf.mxu0
        %v11960 = vpop.f32.mrf.mxu0
        %11961 = vdwg.mxu0
        %11962 = vmatprep.subr.bf16.mxu0 %v8149
        %11963 = vmatpush1.bf16.xpose.msra.mxu0 %v8148
        %11964 = vmatprep.subr.bf16.mxu0 %v8100
        %11965 = vmatpush1.bf16.xpose.msra.mxu0 %v8099
        %11966 = vmatprep.subr.bf16.mxu0 %v8051
        %11967 = vmatpush1.bf16.xpose.msra.mxu0 %v8050
        %11968 = vmatprep.subr.bf16.mxu0 %v8002
        %11969 = vmatpush1.bf16.xpose.msra.mxu0 %v8001
        %11970 = vmatprep.subr.bf16.mxu0 %v7953
        %11971 = vmatpush1.bf16.xpose.msra.mxu0 %v7952
        %11972 = vmatprep.subr.bf16.mxu0 %v7904
        %11973 = vmatpush1.bf16.xpose.msra.mxu0 %v7903
        %11974 = vmatprep.subr.bf16.mxu0 %v7855
        %11975 = vmatpush1.bf16.xpose.msra.mxu0 %v7854
        %11976 = vmatprep.subr.bf16.mxu0 %v7806
        %11977 = vmatpush1.bf16.xpose.msra.mxu0 %v7805
        %11978 = vmatprep.subr.bf16.mxu0 %v8541
        %11979 = vmatpush2.bf16.xpose.msra.mxu0 %v8540
        %11980 = vmatprep.subr.bf16.mxu0 %v8492
        %11981 = vmatpush2.bf16.xpose.msra.mxu0 %v8491
        %11982 = vmatprep.subr.bf16.mxu0 %v8443
        %11983 = vmatpush2.bf16.xpose.msra.mxu0 %v8442
        %11984 = vmatprep.subr.bf16.mxu0 %v8394
        %11985 = vmatpush2.bf16.xpose.msra.mxu0 %v8393
        %11986 = vmatprep.subr.bf16.mxu0 %v8345
        %11987 = vmatpush2.bf16.xpose.msra.mxu0 %v8344
        %11988 = vmatprep.subr.bf16.mxu0 %v8296
        %11989 = vmatpush2.bf16.xpose.msra.mxu0 %v8295
        %11990 = vmatprep.subr.bf16.mxu0 %v8247
        %11991 = vmatpush2.bf16.xpose.msra.mxu0 %v8246
        %11992 = vmatprep.subr.bf16.mxu0 %v8198
        %11993 = vmatpush2.bf16.xpose.msra.mxu0 %v8197
        %11994 = vmatprep.mubr.bf16.mxu0 %v2170
        %11995 = vmatmul.mubr.bf16.gmra.mxu0 %v2156
        %v11996 = vpop.f32.mrf.mxu0
        %v11997 = vadd.f32 %v11956, %v11996
        %v11998 = vpop.f32.mrf.mxu0
        %v11999 = vadd.f32 %v11958, %v11998
        %v12000 = vpop.f32.mrf.mxu0
        %v12001 = vpop.f32.mrf.mxu0
        %12002 = vdwg.mxu0
        %12003 = vmatprep.subr.bf16.mxu0 %v8151
        %12004 = vmatpush1.bf16.xpose.msra.mxu0 %v8150
        %12005 = vmatprep.subr.bf16.mxu0 %v8102
        %12006 = vmatpush1.bf16.xpose.msra.mxu0 %v8101
        %12007 = vmatprep.subr.bf16.mxu0 %v8053
        %12008 = vmatpush1.bf16.xpose.msra.mxu0 %v8052
        %12009 = vmatprep.subr.bf16.mxu0 %v8004
        %12010 = vmatpush1.bf16.xpose.msra.mxu0 %v8003
        %12011 = vmatprep.subr.bf16.mxu0 %v7955
        %12012 = vmatpush1.bf16.xpose.msra.mxu0 %v7954
        %12013 = vmatprep.subr.bf16.mxu0 %v7906
        %12014 = vmatpush1.bf16.xpose.msra.mxu0 %v7905
        %12015 = vmatprep.subr.bf16.mxu0 %v7857
        %12016 = vmatpush1.bf16.xpose.msra.mxu0 %v7856
        %12017 = vmatprep.subr.bf16.mxu0 %v7808
        %12018 = vmatpush1.bf16.xpose.msra.mxu0 %v7807
        %12019 = vmatprep.subr.bf16.mxu0 %v8543
        %12020 = vmatpush2.bf16.xpose.msra.mxu0 %v8542
        %12021 = vmatprep.subr.bf16.mxu0 %v8494
        %12022 = vmatpush2.bf16.xpose.msra.mxu0 %v8493
        %12023 = vmatprep.subr.bf16.mxu0 %v8445
        %12024 = vmatpush2.bf16.xpose.msra.mxu0 %v8444
        %12025 = vmatprep.subr.bf16.mxu0 %v8396
        %12026 = vmatpush2.bf16.xpose.msra.mxu0 %v8395
        %12027 = vmatprep.subr.bf16.mxu0 %v8347
        %12028 = vmatpush2.bf16.xpose.msra.mxu0 %v8346
        %12029 = vmatprep.subr.bf16.mxu0 %v8298
        %12030 = vmatpush2.bf16.xpose.msra.mxu0 %v8297
        %12031 = vmatprep.subr.bf16.mxu0 %v8249
        %12032 = vmatpush2.bf16.xpose.msra.mxu0 %v8248
        %12033 = vmatprep.subr.bf16.mxu0 %v8200
        %12034 = vmatpush2.bf16.xpose.msra.mxu0 %v8199
        %12035 = vmatprep.mubr.bf16.mxu0 %v2180
        %12036 = vmatmul.mubr.bf16.gmra.mxu0 %v2178
        %v12037 = vpop.f32.mrf.mxu0
        %v12038 = vadd.f32 %v11997, %v12037
        %v12039 = vpop.f32.mrf.mxu0
        %v12040 = vadd.f32 %v11999, %v12039
        %v12041 = vpop.f32.mrf.mxu0
        %v12042 = vpop.f32.mrf.mxu0
        %12043 = vdwg.mxu0
        %12044 = vmatprep.subr.bf16.mxu0 %v8153
        %12045 = vmatpush1.bf16.xpose.msra.mxu0 %v8152
        %12046 = vmatprep.subr.bf16.mxu0 %v8104
        %12047 = vmatpush1.bf16.xpose.msra.mxu0 %v8103
        %12048 = vmatprep.subr.bf16.mxu0 %v8055
        %12049 = vmatpush1.bf16.xpose.msra.mxu0 %v8054
        %12050 = vmatprep.subr.bf16.mxu0 %v8006
        %12051 = vmatpush1.bf16.xpose.msra.mxu0 %v8005
        %12052 = vmatprep.subr.bf16.mxu0 %v7957
        %12053 = vmatpush1.bf16.xpose.msra.mxu0 %v7956
        %12054 = vmatprep.subr.bf16.mxu0 %v7908
        %12055 = vmatpush1.bf16.xpose.msra.mxu0 %v7907
        %12056 = vmatprep.subr.bf16.mxu0 %v7859
        %12057 = vmatpush1.bf16.xpose.msra.mxu0 %v7858
        %12058 = vmatprep.subr.bf16.mxu0 %v7810
        %12059 = vmatpush1.bf16.xpose.msra.mxu0 %v7809
        %12060 = vmatprep.subr.bf16.mxu0 %v8545
        %12061 = vmatpush2.bf16.xpose.msra.mxu0 %v8544
        %12062 = vmatprep.subr.bf16.mxu0 %v8496
        %12063 = vmatpush2.bf16.xpose.msra.mxu0 %v8495
        %12064 = vmatprep.subr.bf16.mxu0 %v8447
        %12065 = vmatpush2.bf16.xpose.msra.mxu0 %v8446
        %12066 = vmatprep.subr.bf16.mxu0 %v8398
        %12067 = vmatpush2.bf16.xpose.msra.mxu0 %v8397
        %12068 = vmatprep.subr.bf16.mxu0 %v8349
        %12069 = vmatpush2.bf16.xpose.msra.mxu0 %v8348
        %12070 = vmatprep.subr.bf16.mxu0 %v8300
        %12071 = vmatpush2.bf16.xpose.msra.mxu0 %v8299
        %12072 = vmatprep.subr.bf16.mxu0 %v8251
        %12073 = vmatpush2.bf16.xpose.msra.mxu0 %v8250
        %12074 = vmatprep.subr.bf16.mxu0 %v8202
        %12075 = vmatpush2.bf16.xpose.msra.mxu0 %v8201
        %12076 = vmatprep.mubr.bf16.mxu0 %v2177
        %12077 = vmatmul.mubr.bf16.gmra.mxu0 %v2163
        %v12078 = vpop.f32.mrf.mxu0
        %v12079 = vadd.f32 %v12038, %v12078
        %v12080 = vpop.f32.mrf.mxu0
        %v12081 = vadd.f32 %v12040, %v12080
        %v12082 = vpop.f32.mrf.mxu0
        %v12083 = vpop.f32.mrf.mxu0
        %12084 = vdwg.mxu0
        %12085 = vmatprep.subr.bf16.mxu0 %v8155
        %12086 = vmatpush1.bf16.xpose.msra.mxu0 %v8154
        %12087 = vmatprep.subr.bf16.mxu0 %v8106
        %12088 = vmatpush1.bf16.xpose.msra.mxu0 %v8105
        %12089 = vmatprep.subr.bf16.mxu0 %v8057
        %12090 = vmatpush1.bf16.xpose.msra.mxu0 %v8056
        %12091 = vmatprep.subr.bf16.mxu0 %v8008
        %12092 = vmatpush1.bf16.xpose.msra.mxu0 %v8007
        %12093 = vmatprep.subr.bf16.mxu0 %v7959
        %12094 = vmatpush1.bf16.xpose.msra.mxu0 %v7958
        %12095 = vmatprep.subr.bf16.mxu0 %v7910
        %12096 = vmatpush1.bf16.xpose.msra.mxu0 %v7909
        %12097 = vmatprep.subr.bf16.mxu0 %v7861
        %12098 = vmatpush1.bf16.xpose.msra.mxu0 %v7860
        %12099 = vmatprep.subr.bf16.mxu0 %v7812
        %12100 = vmatpush1.bf16.xpose.msra.mxu0 %v7811
        %12101 = vmatprep.subr.bf16.mxu0 %v8547
        %12102 = vmatpush2.bf16.xpose.msra.mxu0 %v8546
        %12103 = vmatprep.subr.bf16.mxu0 %v8498
        %12104 = vmatpush2.bf16.xpose.msra.mxu0 %v8497
        %12105 = vmatprep.subr.bf16.mxu0 %v8449
        %12106 = vmatpush2.bf16.xpose.msra.mxu0 %v8448
        %12107 = vmatprep.subr.bf16.mxu0 %v8400
        %12108 = vmatpush2.bf16.xpose.msra.mxu0 %v8399
        %12109 = vmatprep.subr.bf16.mxu0 %v8351
        %12110 = vmatpush2.bf16.xpose.msra.mxu0 %v8350
        %12111 = vmatprep.subr.bf16.mxu0 %v8302
        %12112 = vmatpush2.bf16.xpose.msra.mxu0 %v8301
        %12113 = vmatprep.subr.bf16.mxu0 %v8253
        %12114 = vmatpush2.bf16.xpose.msra.mxu0 %v8252
        %12115 = vmatprep.subr.bf16.mxu0 %v8204
        %12116 = vmatpush2.bf16.xpose.msra.mxu0 %v8203
        %12117 = vmatprep.mubr.bf16.mxu0 %v2181
        %12118 = vmatmul.mubr.bf16.gmra.mxu0 %v2179
        %v12119 = vpop.f32.mrf.mxu0
        %v12120 = vadd.f32 %v12079, %v12119
        %v12121 = vpop.f32.mrf.mxu0
        %v12122 = vadd.f32 %v12081, %v12121
        %v12123 = vpop.f32.mrf.mxu0
        %v12124 = vpop.f32.mrf.mxu0
        %12125 = vdwg.mxu0
        %12126 = vmatprep.subr.bf16.mxu0 0
        %12127 = vmatpush1.bf16.xpose.msra.mxu0 %v8156
        %12128 = vmatprep.subr.bf16.mxu0 0
        %12129 = vmatpush1.bf16.xpose.msra.mxu0 %v8107
        %12130 = vmatprep.subr.bf16.mxu0 0
        %12131 = vmatpush1.bf16.xpose.msra.mxu0 %v8058
        %12132 = vmatprep.subr.bf16.mxu0 0
        %12133 = vmatpush1.bf16.xpose.msra.mxu0 %v8009
        %12134 = vmatprep.subr.bf16.mxu0 0
        %12135 = vmatpush1.bf16.xpose.msra.mxu0 %v7960
        %12136 = vmatprep.subr.bf16.mxu0 0
        %12137 = vmatpush1.bf16.xpose.msra.mxu0 %v7911
        %12138 = vmatprep.subr.bf16.mxu0 0
        %12139 = vmatpush1.bf16.xpose.msra.mxu0 %v7862
        %12140 = vmatprep.subr.bf16.mxu0 0
        %12141 = vmatpush1.bf16.xpose.msra.mxu0 %v7813
        %12142 = vmatprep.subr.bf16.mxu0 0
        %12143 = vmatpush2.bf16.xpose.msra.mxu0 %v8548
        %12144 = vmatprep.subr.bf16.mxu0 0
        %12145 = vmatpush2.bf16.xpose.msra.mxu0 %v8499
        %12146 = vmatprep.subr.bf16.mxu0 0
        %12147 = vmatpush2.bf16.xpose.msra.mxu0 %v8450
        %12148 = vmatprep.subr.bf16.mxu0 0
        %12149 = vmatpush2.bf16.xpose.msra.mxu0 %v8401
        %12150 = vmatprep.subr.bf16.mxu0 0
        %12151 = vmatpush2.bf16.xpose.msra.mxu0 %v8352
        %12152 = vmatprep.subr.bf16.mxu0 0
        %12153 = vmatpush2.bf16.xpose.msra.mxu0 %v8303
        %12154 = vmatprep.subr.bf16.mxu0 0
        %12155 = vmatpush2.bf16.xpose.msra.mxu0 %v8254
        %12156 = vmatprep.subr.bf16.mxu0 0
        %12157 = vmatpush2.bf16.xpose.msra.mxu0 %v8205
        %12158 = vmatprep.mubr.bf16.mxu0 0
        %12159 = vmatmul.mubr.bf16.gmra.mxu0 %v2195
        %v12160 = vpop.f32.mrf.mxu0
        %v12161 = vadd.f32 %v12120, %v12160
        %v12162 = vpop.f32.mrf.mxu0
        %v12163 = vadd.f32 %v12122, %v12162
        %v12164 = vpop.f32.mrf.mxu0
        %v12165 = vpop.f32.mrf.mxu0
        %12166 = vdwg.mxu0
        %v12171 = vcombine.low %v11136, %v11138
        %v12172 = vcombine.low %v12161, %v12163
        %v12174 = vunpack.c.l.s4 1983009808
        %v12175 = vunpack.c.0.s8 %v12174
        %v12176 = vlaneseq
        %v12177 = vshrl.u32 %v12176, 7
        %v12178 = vsub.s32 %v12175, %v12177
        %v12179 = vrot.slane %v12171, %v12178
        %v12181 = vunpack.c.l.s4 1983009808
        %v12182 = vunpack.c.0.s8 %v12181
        %v12183 = vlaneseq
        %v12184 = vshrl.u32 %v12183, 7
        %v12185 = vsub.s32 %v12182, %v12184
        %v12186 = vrot.slane %v12172, %v12185
        %v12187 = vcombine.low %v12179, %v12186
        %v12189 = vadd.f32 %v273, %v12187
        %12190 = vst [vmem:[%s257] sm:$0xff] %v12189
        %p12191 = scmp.eq.s32.totalorder %s28, 3
        // Predicated region
        $region45: #{decoder_head.1} parent=31 // pred_check
          %p12192 = pneg %p12191
        $region46: #{decoder_head.1} parent=31 // pred_check_branch
          %12194 = sbr.rel (%p12192) target = $region48
        $region47: #{decoder_head.1} parent=31 // pred_region
          %v12195 = vld [vmem:[%s257] sm:$0xff]
          %v12196 = vld [vmem:[%s226] sm:$0xf]
          %v12198 = vlaneseq
          %v12199 = vshrl.u32 %v12198, 7
          %v12200 = vsub.s32 0, %v12199
          %v12201 = vrot.slane %v12196, %v12200
          %v12202 = vlaneseq
          %v12203 = vshrl.u32 %v12202, 7
          %v12204 = vsub.s32 1, %v12203
          %v12205 = vrot.slane %v12196, %v12204
          %v12206 = vlaneseq
          %v12207 = vshrl.u32 %v12206, 7
          %v12208 = vsub.s32 2, %v12207
          %v12209 = vrot.slane %v12196, %v12208
          %v12210 = vlaneseq
          %v12211 = vshrl.u32 %v12210, 7
          %v12212 = vsub.s32 3, %v12211
          %v12213 = vrot.slane %v12196, %v12212
          %v12214 = vcombine.low %v12201, %v12205
          %v12215 = vcombine.low %v12209, %v12213
          %v12217 = vunpack.c.l.s4 1983009808
          %v12218 = vunpack.c.0.s8 %v12217
          %v12219 = vlaneseq
          %v12220 = vshrl.u32 %v12219, 7
          %v12221 = vsub.s32 %v12218, %v12220
          %v12222 = vrot.slane %v12214, %v12221
          %v12224 = vunpack.c.l.s4 1983009808
          %v12225 = vunpack.c.0.s8 %v12224
          %v12226 = vlaneseq
          %v12227 = vshrl.u32 %v12226, 7
          %v12228 = vsub.s32 %v12225, %v12227
          %v12229 = vrot.slane %v12215, %v12228
          %v12230 = vcombine.low %v12222, %v12229
          %v12232 = vadd.f32 %v12195, %v12230
          %12233 = vst [vmem:[%s257] sm:$0xff] %v12232
        $region48: #{decoder_head.1} parent=31 // pred_fallthru
          _
        %s12234 = sand.u32 %s123, 1
        %s12235 = scalar_lea.sflag [#allocation4], %s12234
        %s12236 = sand.u32 %s123, 1
        %s12237 = smul.addr %s12236, 8
        %s12238 = scalar_lea.vmem [#allocation7], %s12237
        // Predicated region
        $region49: #{decoder_head.1} parent=31 // pred_check
          %p12239 = pneg %p133
        $region50: #{decoder_head.1} parent=31 // pred_check_branch
          %12241 = sbr.rel (%p12239) target = $region52
        $region51: #{decoder_head.1} parent=31 // pred_region
          %s12242 = smul.u32 4, %s27
          %s12244 = ssub.s32 128, 128
          %12245 = vsyncadd %s12235, %s12244
          %s12246 = smul.addr %s12242, 32
          %s12247 = scalar_lea.hbm %s3, %s12246
          %s12249 = sshll.u32 %s12238, 4
          %s12250 = int_to_ptr.vmem [resolvable:$true] %s12249
          %12252 = dma.vmem_to_hbm [thread:$0]  %s12250, 128, %s12247, %s12235
        $region52: #{decoder_head.1} parent=31 // pred_fallthru
          _
      $region32: #{decoder_head.1} parent=5 // pred_fallthru
        _
      %p12253 = scmp.le.s32.totalorder 2, %s18
      // Predicated region
      $region53: #{decoder_head.1} parent=5 // pred_check
        %p12254 = pneg %p12253
      $region54: #{decoder_head.1} parent=5 // pred_check_branch
        %12256 = sbr.rel (%p12254) target = $region56
      $region55: #{decoder_head.1} parent=5 // pred_region
        %s12257 = ssub.s32 %s18, 2
        // Predicated region
        $region57: #{decoder_head.1} parent=55 // pred_check
          %p12258 = pneg %p139
        $region58: #{decoder_head.1} parent=55 // pred_check_branch
          %12260 = sbr.rel (%p12258) target = $region60
        $region59: #{decoder_head.1} parent=55 // pred_region
          %s12261 = sand.u32 %s124, 1
          %s12262 = scalar_lea.sflag [#allocation4], %s12261
          %s12263 = sand.u32 %s124, 1
          %s12264 = smul.addr %s12263, 8
          %s12265 = scalar_lea.vmem [#allocation7], %s12264
          %12266 = dma.done %s12262, 128
        $region60: #{decoder_head.1} parent=55 // pred_fallthru
          _
      $region56: #{decoder_head.1} parent=5 // pred_fallthru
        _
    $region6: #{decoder_head.1} parent=1 // loop_footer
      %s22 = sadd.s32 1, %s18
    $region7: #{decoder_head.1} parent=1 // loop_footer_branch
      %17 = sbr.rel target = $region3
    $region8: #{decoder_head.1} parent=1 // loop_exit
      _
    %12267 = vsyncpa [#allocation3], 1
    %s12268 = scalar_lea.sflag [#allocation3], 1
    %12269 = vsyncpa %s12268, 1
    %12270 = vsyncpa [#allocation6], 1
    %s12271 = scalar_lea.sflag [#allocation6], 1
    %12272 = vsyncpa %s12271, 1
    %12273 = vsyncpa [#allocation4], 1
    %s12274 = scalar_lea.sflag [#allocation4], 1
    %12275 = vsyncpa %s12274, 1

</llo_original>
